<compile_context>
chip_gen: v6e
topology: v6e:2x2x1
jax: 0.10.0
libtpu: 0.0.40
codegen_flags: <defaults>
</compile_context>

<pallas_src>
import jax
import jax.numpy as jnp
from jax import lax
from jax.experimental import pallas as pl
from jax.experimental.pallas import tpu as pltpu

NEG_INF = -1e9
LANE = 128
SUBLANE = 8


# ----------------------------------------------------------------------------
# Shared in-kernel LSTM gate update (PyTorch gate order i, f, g, o)
# ----------------------------------------------------------------------------
def _gate_update(gates, c_prev, H):
    i_g = jax.nn.sigmoid(gates[:, 0 * H:1 * H])
    f_g = jax.nn.sigmoid(gates[:, 1 * H:2 * H])
    g_g = jnp.tanh(gates[:, 2 * H:3 * H])
    o_g = jax.nn.sigmoid(gates[:, 3 * H:4 * H])
    c_new = f_g * c_prev + i_g * g_g
    h_new = o_g * jnp.tanh(c_new)
    return h_new, c_new


# ----------------------------------------------------------------------------
# Fused Seq2Seq kernel: encoder recurrence + decoder generation in ONE call
# ----------------------------------------------------------------------------
def make_seq2seq_kernel(n_layers, src_len, trg_len, Bp, H, E, Vin_p, Vp):
    n_in = 5 + 6 * n_layers + 2   # number of input refs

    def kernel(*refs):
        tf_ref      = refs[0]                 # SMEM [trg_len] int32 (1 = teacher force)
        src_ref     = refs[1]                 # VMEM [src_len*Bp, 1] int32
        trg_ref     = refs[2]                 # VMEM [trg_len*Bp, 1] int32
        emb_enc_ref = refs[3]                 # VMEM [Vin_p, E]
        emb_dec_ref = refs[4]                 # VMEM [Vp, E]
        i = 5
        enc_wih = refs[i:i + n_layers]; i += n_layers   # layer0 [E,4H], rest [H,4H]
        enc_whh = refs[i:i + n_layers]; i += n_layers   # [H,4H]
        enc_b   = refs[i:i + n_layers]; i += n_layers   # [1,4H]
        dec_wih = refs[i:i + n_layers]; i += n_layers   # layer0 [E,4H], rest [H,4H]
        dec_whh = refs[i:i + n_layers]; i += n_layers   # [H,4H]
        dec_b   = refs[i:i + n_layers]; i += n_layers   # [1,4H]
        wout_ref = refs[i]                    # [H, Vp]
        bout_ref = refs[i + 1]                # [1, Vp] (-1e9 on pad lanes)
        out_ref  = refs[n_in]                 # [trg_len, Bp, Vp] (output)
        x_scr    = refs[n_in + 1]             # [Bp, E] scratch (pl.when branch carry)

        f32 = jnp.float32

        # ===================== Encoder =====================
        # In-kernel embedding lookup (one-hot @ table) and hoisted, time-independent
        # layer-0 input projection: fat MXU matmuls off the serial recurrence path.
        src_tok = src_ref[...].astype(f32)                                  # [src_len*Bp, 1]
        iota_in = lax.broadcasted_iota(jnp.int32, (src_len * Bp, Vin_p), 1).astype(f32)
        src_1h = (iota_in == src_tok).astype(f32)                           # [src_len*Bp, Vin_p]
        x0 = jnp.dot(src_1h, emb_enc_ref[...], preferred_element_type=f32)  # [src_len*Bp, E]
        xg = (jnp.dot(x0, enc_wih[0][...], preferred_element_type=f32)
              + enc_b[0][...])                                              # [src_len*Bp, 4H]

        # Fully-unrolled recurrence; h/c are pure vreg carries (no VMEM round-trips).
        # PyTorch nn.LSTM default: zero initial state.
        h = [jnp.zeros((Bp, H), f32) for _ in range(n_layers)]
        c = [jnp.zeros((Bp, H), f32) for _ in range(n_layers)]
        for t in range(src_len):
            # layer 0: only the recurrent matmul sits on the serial path
            gates = xg[t * Bp:(t + 1) * Bp, :] + jnp.dot(
                h[0], enc_whh[0][...], preferred_element_type=f32)
            h[0], c[0] = _gate_update(gates, c[0], H)
            x = h[0]
            # layers 1..n-1: two accumulating matmuls per cell (no concat)
            for l in range(1, n_layers):
                gates = (jnp.dot(x, enc_wih[l][...], preferred_element_type=f32)
                         + jnp.dot(h[l], enc_whh[l][...], preferred_element_type=f32)
                         + enc_b[l][...])
                h[l], c[l] = _gate_update(gates, c[l], H)
                x = h[l]

        # ===================== Decoder =====================
        # Teacher-forced inputs precomputed in EMBEDDING space (E lanes, not Vp):
        # one fat matmul, off the serial path.  (dropout = identity / eval mode)
        trg_tok = trg_ref[...].astype(f32)                                  # [trg_len*Bp, 1]
        iota_out = lax.broadcasted_iota(jnp.int32, (trg_len * Bp, Vp), 1).astype(f32)
        trg_1h = (iota_out == trg_tok).astype(f32)
        trg_emb = jnp.dot(trg_1h, emb_dec_ref[...], preferred_element_type=f32)  # [trg_len*Bp, E]

        # Initial decoder input = decoder-embedding of src[-1] (as in the PyTorch module).
        iota_v = lax.broadcasted_iota(jnp.int32, (Bp, Vp), 1).astype(f32)
        last_tok = src_tok[(src_len - 1) * Bp:src_len * Bp, :]              # [Bp, 1]
        init_1h = (iota_v == last_tok).astype(f32)
        x = jnp.dot(init_1h, emb_dec_ref[...], preferred_element_type=f32)  # [Bp, E]

        for t in range(trg_len):
            for l in range(n_layers):
                gates = (jnp.dot(x, dec_wih[l][...], preferred_element_type=f32)
                         + jnp.dot(h[l], dec_whh[l][...], preferred_element_type=f32)
                         + dec_b[l][...])
                h[l], c[l] = _gate_update(gates, c[l], H)
                x = h[l]
            # Lane-dense fc_out (pad lanes get -1e9 bias -> argmax never picks them).
            logits = (jnp.dot(x, wout_ref[...], preferred_element_type=f32)
                      + bout_ref[...])
            out_ref[t] = logits

            if t + 1 < trg_len:   # the last step's next-input is never consumed
                # Default: teacher-forced embedding (already in E space).
                x_scr[...] = trg_emb[t * Bp:(t + 1) * Bp, :]

                # Greedy path only when NOT teacher forcing: argmax + embed matmul skipped
                # entirely on teacher-forced steps.
                @pl.when(tf_ref[t] == 0)
                def _():
                    maxv = jnp.max(logits, axis=-1, keepdims=True)
                    cand = jnp.where(logits >= maxv, iota_v, float(Vp))
                    top1 = jnp.min(cand, axis=-1, keepdims=True)      # first index of max
                    top1_1h = (iota_v == top1).astype(f32)
                    x_scr[...] = jnp.dot(top1_1h, emb_dec_ref[...],
                                         preferred_element_type=f32)

                x = x_scr[...]

    return kernel


# ----------------------------------------------------------------------------
# Parameter construction / packing (PyTorch LSTM layout, gate order i,f,g,o)
# ----------------------------------------------------------------------------
def make_lstm_raw(key, n_layers, in_dim, hid_dim):
    layers = []
    for l in range(n_layers):
        k1, k2, k3, k4, key = jax.random.split(key, 5)
        layer_in = in_dim if l == 0 else hid_dim
        wih = 0.1 * jax.random.normal(k1, (4 * hid_dim, layer_in), jnp.float32)
        whh = 0.1 * jax.random.normal(k2, (4 * hid_dim, hid_dim), jnp.float32)
        b_ih = 0.1 * jax.random.normal(k3, (4 * hid_dim,), jnp.float32)
        b_hh = 0.1 * jax.random.normal(k4, (4 * hid_dim,), jnp.float32)
        layers.append((wih, whh, b_ih, b_hh))
    return layers, key


def pack_lstm(layers):
    """Transpose to [in, 4H] / [H, 4H]; fold b_ih + b_hh into one [1, 4H] bias."""
    wih_t = tuple(jnp.transpose(w_ih) for (w_ih, _, _, _) in layers)
    whh_t = tuple(jnp.transpose(w_hh) for (_, w_hh, _, _) in layers)
    bs = tuple((b_ih + b_hh)[None, :] for (_, _, b_ih, b_hh) in layers)
    return wih_t, whh_t, bs


# ----------------------------------------------------------------------------
# Seq2Seq forward (matches the PyTorch module: input = src[-1], outputs[t] = pred_t)
# ----------------------------------------------------------------------------
def seq2seq_forward(src, trg, params, tf_key, *, out_dim, teacher_forcing_ratio=0.5):
    (emb_enc_pad, enc_wih, enc_whh, enc_b,
     emb_dec_pad, dec_wih, dec_whh, dec_b,
     w_out_pad, b_out_pad) = params

    src_len, B = src.shape
    trg_len = trg.shape[0]
    n_layers = len(dec_wih)
    H = dec_whh[0].shape[0]
    E = emb_dec_pad.shape[1]
    Vin_p = emb_enc_pad.shape[0]
    Vp = emb_dec_pad.shape[0]

    # Pad batch to the 8-sublane boundary; padded rows are sliced away at the end.
    Bp = ((B + SUBLANE - 1) // SUBLANE) * SUBLANE
    src_p = jnp.pad(src, ((0, 0), (0, Bp - B)))
    trg_p = jnp.pad(trg, ((0, 0), (0, Bp - B)))
    src_tok = src_p.reshape(src_len * Bp, 1).astype(jnp.int32)
    trg_tok = trg_p.reshape(trg_len * Bp, 1).astype(jnp.int32)

    # TODO(synk): PyTorch draws teacher forcing with python random.random(); here one
    # jax.random Bernoulli(ratio) per step (same distribution, not bitwise identical).
    tf_flags = (jax.random.uniform(tf_key, (trg_len,))
                < teacher_forcing_ratio).astype(jnp.int32)

    n_vmem_inputs = 4 + 6 * n_layers + 2
    out_pad = pl.pallas_call(
        make_seq2seq_kernel(n_layers, src_len, trg_len, Bp, H, E, Vin_p, Vp),
        out_shape=jax.ShapeDtypeStruct((trg_len, Bp, Vp), jnp.float32),
        in_specs=(
            [pl.BlockSpec(memory_space=pltpu.MemorySpace.SMEM)]
            + [pl.BlockSpec(memory_space=pltpu.MemorySpace.VMEM)] * n_vmem_inputs
        ),
        out_specs=pl.BlockSpec(memory_space=pltpu.MemorySpace.VMEM),
        scratch_shapes=[pltpu.VMEM((Bp, E), jnp.float32)],
    )(tf_flags, src_tok, trg_tok, emb_enc_pad, emb_dec_pad,
      *enc_wih, *enc_whh, *enc_b, *dec_wih, *dec_whh, *dec_b,
      w_out_pad, b_out_pad)

    return out_pad[:, :B, :out_dim]                                   # [trg_len, B, V]


# ----------------------------------------------------------------------------
# Driver
# ----------------------------------------------------------------------------
if __name__ == "__main__":
    INPUT_DIM = 16      # encoder vocab
    OUTPUT_DIM = 16     # decoder vocab
    EMB_DIM = 32
    HID_DIM = 32
    N_LAYERS = 2
    SRC_LEN = 8
    TRG_LEN = 8
    BATCH = 4

    key = jax.random.PRNGKey(0)
    k_e1, k_e2, k_fc_w, k_fc_b, k_src, k_trg, k_tf, key = jax.random.split(key, 8)

    # Encoder params (vocab padded to lane-dense 128 so the in-kernel one-hot matmul
    # has K=128; pad rows are zero and never selected).
    Vin_p = ((INPUT_DIM + LANE - 1) // LANE) * LANE
    emb_enc = 0.1 * jax.random.normal(k_e1, (INPUT_DIM, EMB_DIM), jnp.float32)
    emb_enc_pad = jnp.zeros((Vin_p, EMB_DIM), jnp.float32).at[:INPUT_DIM].set(emb_enc)
    enc_layers, key = make_lstm_raw(key, N_LAYERS, EMB_DIM, HID_DIM)
    enc_wih, enc_whh, enc_b = pack_lstm(enc_layers)

    # Decoder params (vocab padded to lane-dense 128)
    Vp = ((OUTPUT_DIM + LANE - 1) // LANE) * LANE
    emb_dec = 0.1 * jax.random.normal(k_e2, (OUTPUT_DIM, EMB_DIM), jnp.float32)
    emb_dec_pad = jnp.zeros((Vp, EMB_DIM), jnp.float32).at[:OUTPUT_DIM].set(emb_dec)
    dec_layers, key = make_lstm_raw(key, N_LAYERS, EMB_DIM, HID_DIM)
    dec_wih, dec_whh, dec_b = pack_lstm(dec_layers)
    w_out = 0.1 * jax.random.normal(k_fc_w, (OUTPUT_DIM, HID_DIM), jnp.float32)
    b_out = 0.1 * jax.random.normal(k_fc_b, (OUTPUT_DIM,), jnp.float32)
    w_out_pad = jnp.zeros((HID_DIM, Vp), jnp.float32).at[:, :OUTPUT_DIM].set(w_out.T)
    b_out_pad = jnp.full((1, Vp), NEG_INF, jnp.float32).at[0, :OUTPUT_DIM].set(b_out)

    params = (emb_enc_pad, enc_wih, enc_whh, enc_b,
              emb_dec_pad, dec_wih, dec_whh, dec_b,
              w_out_pad, b_out_pad)

    # Inputs: [seq_len, batch] int32 token ids
    src = jax.random.randint(k_src, (SRC_LEN, BATCH), 0, INPUT_DIM, jnp.int32)
    trg = jax.random.randint(k_trg, (TRG_LEN, BATCH), 0, OUTPUT_DIM, jnp.int32)

    fwd = jax.jit(seq2seq_forward,
                  static_argnames=("out_dim", "teacher_forcing_ratio"))
    outputs = fwd(src, trg, params, k_tf, out_dim=OUTPUT_DIM,
                  teacher_forcing_ratio=0.5)
    outputs = jax.block_until_ready(outputs)

    assert outputs.shape == (TRG_LEN, BATCH, OUTPUT_DIM), outputs.shape
    assert outputs.dtype == jnp.float32
    assert bool(jnp.all(jnp.isfinite(outputs)))
    print("KERNEL_OK")
</pallas_src>

<mosaic_0001>
module attributes {stable_mosaic.version = 11 : i64} {
  func.func @kernel(%arg0: memref<8xi32, #tpu.memory_space<smem>>, %arg1: memref<64x1xi32, #tpu.memory_space<vmem>>, %arg2: memref<64x1xi32, #tpu.memory_space<vmem>>, %arg3: memref<128x32xf32, #tpu.memory_space<vmem>>, %arg4: memref<128x32xf32, #tpu.memory_space<vmem>>, %arg5: memref<32x128xf32, #tpu.memory_space<vmem>>, %arg6: memref<32x128xf32, #tpu.memory_space<vmem>>, %arg7: memref<32x128xf32, #tpu.memory_space<vmem>>, %arg8: memref<32x128xf32, #tpu.memory_space<vmem>>, %arg9: memref<1x128xf32, #tpu.memory_space<vmem>>, %arg10: memref<1x128xf32, #tpu.memory_space<vmem>>, %arg11: memref<32x128xf32, #tpu.memory_space<vmem>>, %arg12: memref<32x128xf32, #tpu.memory_space<vmem>>, %arg13: memref<32x128xf32, #tpu.memory_space<vmem>>, %arg14: memref<32x128xf32, #tpu.memory_space<vmem>>, %arg15: memref<1x128xf32, #tpu.memory_space<vmem>>, %arg16: memref<1x128xf32, #tpu.memory_space<vmem>>, %arg17: memref<32x128xf32, #tpu.memory_space<vmem>>, %arg18: memref<1x128xf32, #tpu.memory_space<vmem>>, %arg19: memref<8x8x128xf32, #tpu.memory_space<vmem>>, %arg20: memref<8x32xf32, #tpu.memory_space<vmem>>) attributes {dimension_semantics = [], scalar_prefetch = 0 : i64, scratch_operands = 1 : i64, tpu.core_type = #tpu.core_type<tc>} {
    %c0 = arith.constant 0 : index
    %c0_0 = arith.constant 0 : index
    %0 = vector.load %arg1[%c0, %c0_0] : memref<64x1xi32, #tpu.memory_space<vmem>>, vector<64x1xi32>
    %1 = arith.sitofp %0 : vector<64x1xi32> to vector<64x1xf32>
    %2 = tpu.iota {dimensions = array<i32: 1>} : vector<64x128xi32>
    %3 = arith.sitofp %2 : vector<64x128xi32> to vector<64x128xf32>
    %4 = vector.broadcast %1 : vector<64x1xf32> to vector<64x128xf32>
    %5 = arith.cmpf oeq, %3, %4 : vector<64x128xf32>
    %6 = arith.extui %5 : vector<64x128xi1> to vector<64x128xi32>
    %7 = arith.sitofp %6 : vector<64x128xi32> to vector<64x128xf32>
    %c0_1 = arith.constant 0 : index
    %c0_2 = arith.constant 0 : index
    %8 = vector.load %arg3[%c0_1, %c0_2] : memref<128x32xf32, #tpu.memory_space<vmem>>, vector<128x32xf32>
    %cst = arith.constant dense<0.000000e+00> : vector<64x32xf32>
    %9 = tpu.matmul %7, %8, %cst {dimension_numbers = #tpu.dot_dimension_numbers<[1], [0], [0], [1], [0, 0, 1, 1], [], []>} : vector<64x128xf32>, vector<128x32xf32>, vector<64x32xf32> -> vector<64x32xf32>
    %c0_3 = arith.constant 0 : index
    %c0_4 = arith.constant 0 : index
    %10 = vector.load %arg5[%c0_3, %c0_4] : memref<32x128xf32, #tpu.memory_space<vmem>>, vector<32x128xf32>
    %cst_5 = arith.constant dense<0.000000e+00> : vector<64x128xf32>
    %11 = tpu.matmul %9, %10, %cst_5 {dimension_numbers = #tpu.dot_dimension_numbers<[1], [0], [0], [1], [0, 0, 1, 1], [], []>} : vector<64x32xf32>, vector<32x128xf32>, vector<64x128xf32> -> vector<64x128xf32>
    %c0_6 = arith.constant 0 : index
    %c0_7 = arith.constant 0 : index
    %12 = vector.load %arg9[%c0_6, %c0_7] : memref<1x128xf32, #tpu.memory_space<vmem>>, vector<1x128xf32>
    %13 = vector.broadcast %12 : vector<1x128xf32> to vector<64x128xf32>
    %14 = arith.addf %11, %13 : vector<64x128xf32>
    %cst_8 = arith.constant 0.000000e+00 : f32
    %15 = vector.broadcast %cst_8 : f32 to vector<8x32xf32>
    %cst_9 = arith.constant 0.000000e+00 : f32
    %16 = vector.broadcast %cst_9 : f32 to vector<8x32xf32>
    %cst_10 = arith.constant 0.000000e+00 : f32
    %17 = vector.broadcast %cst_10 : f32 to vector<8x32xf32>
    %cst_11 = arith.constant 0.000000e+00 : f32
    %18 = vector.broadcast %cst_11 : f32 to vector<8x32xf32>
    %19 = vector.extract_strided_slice %14 {offsets = [0, 0], sizes = [8, 128], strides = [1, 1]} : vector<64x128xf32> to vector<8x128xf32>
    %c0_12 = arith.constant 0 : index
    %c0_13 = arith.constant 0 : index
    %20 = vector.load %arg7[%c0_12, %c0_13] : memref<32x128xf32, #tpu.memory_space<vmem>>, vector<32x128xf32>
    %cst_14 = arith.constant dense<0.000000e+00> : vector<8x128xf32>
    %21 = tpu.matmul %15, %20, %cst_14 {dimension_numbers = #tpu.dot_dimension_numbers<[1], [0], [0], [1], [0, 0, 1, 1], [], []>} : vector<8x32xf32>, vector<32x128xf32>, vector<8x128xf32> -> vector<8x128xf32>
    %22 = arith.addf %19, %21 : vector<8x128xf32>
    %23 = vector.extract_strided_slice %22 {offsets = [0, 0], sizes = [8, 32], strides = [1, 1]} : vector<8x128xf32> to vector<8x32xf32>
    %24 = arith.negf %23 : vector<8x32xf32>
    %25 = math.exp %24 : vector<8x32xf32>
    %cst_15 = arith.constant 1.000000e+00 : f32
    %26 = vector.broadcast %cst_15 : f32 to vector<8x32xf32>
    %27 = arith.addf %26, %25 : vector<8x32xf32>
    %28 = arith.divf %26, %27 : vector<8x32xf32>
    %29 = vector.extract_strided_slice %22 {offsets = [0, 32], sizes = [8, 32], strides = [1, 1]} : vector<8x128xf32> to vector<8x32xf32>
    %30 = arith.negf %29 : vector<8x32xf32>
    %31 = math.exp %30 : vector<8x32xf32>
    %cst_16 = arith.constant 1.000000e+00 : f32
    %32 = vector.broadcast %cst_16 : f32 to vector<8x32xf32>
    %33 = arith.addf %32, %31 : vector<8x32xf32>
    %34 = arith.divf %32, %33 : vector<8x32xf32>
    %35 = vector.extract_strided_slice %22 {offsets = [0, 64], sizes = [8, 32], strides = [1, 1]} : vector<8x128xf32> to vector<8x32xf32>
    %36 = math.tanh %35 : vector<8x32xf32>
    %37 = vector.extract_strided_slice %22 {offsets = [0, 96], sizes = [8, 32], strides = [1, 1]} : vector<8x128xf32> to vector<8x32xf32>
    %38 = arith.negf %37 : vector<8x32xf32>
    %39 = math.exp %38 : vector<8x32xf32>
    %cst_17 = arith.constant 1.000000e+00 : f32
    %40 = vector.broadcast %cst_17 : f32 to vector<8x32xf32>
    %41 = arith.addf %40, %39 : vector<8x32xf32>
    %42 = arith.divf %40, %41 : vector<8x32xf32>
    %43 = arith.mulf %34, %17 : vector<8x32xf32>
    %44 = arith.mulf %28, %36 : vector<8x32xf32>
    %45 = arith.addf %43, %44 : vector<8x32xf32>
    %46 = math.tanh %45 : vector<8x32xf32>
    %47 = arith.mulf %42, %46 : vector<8x32xf32>
    %c0_18 = arith.constant 0 : index
    %c0_19 = arith.constant 0 : index
    %48 = vector.load %arg6[%c0_18, %c0_19] : memref<32x128xf32, #tpu.memory_space<vmem>>, vector<32x128xf32>
    %cst_20 = arith.constant dense<0.000000e+00> : vector<8x128xf32>
    %49 = tpu.matmul %47, %48, %cst_20 {dimension_numbers = #tpu.dot_dimension_numbers<[1], [0], [0], [1], [0, 0, 1, 1], [], []>} : vector<8x32xf32>, vector<32x128xf32>, vector<8x128xf32> -> vector<8x128xf32>
    %c0_21 = arith.constant 0 : index
    %c0_22 = arith.constant 0 : index
    %50 = vector.load %arg8[%c0_21, %c0_22] : memref<32x128xf32, #tpu.memory_space<vmem>>, vector<32x128xf32>
    %cst_23 = arith.constant dense<0.000000e+00> : vector<8x128xf32>
    %51 = tpu.matmul %16, %50, %cst_23 {dimension_numbers = #tpu.dot_dimension_numbers<[1], [0], [0], [1], [0, 0, 1, 1], [], []>} : vector<8x32xf32>, vector<32x128xf32>, vector<8x128xf32> -> vector<8x128xf32>
    %52 = arith.addf %49, %51 : vector<8x128xf32>
    %c0_24 = arith.constant 0 : index
    %c0_25 = arith.constant 0 : index
    %53 = vector.load %arg10[%c0_24, %c0_25] : memref<1x128xf32, #tpu.memory_space<vmem>>, vector<1x128xf32>
    %54 = vector.broadcast %53 : vector<1x128xf32> to vector<8x128xf32>
    %55 = arith.addf %52, %54 : vector<8x128xf32>
    %56 = vector.extract_strided_slice %55 {offsets = [0, 0], sizes = [8, 32], strides = [1, 1]} : vector<8x128xf32> to vector<8x32xf32>
    %57 = arith.negf %56 : vector<8x32xf32>
    %58 = math.exp %57 : vector<8x32xf32>
    %cst_26 = arith.constant 1.000000e+00 : f32
    %59 = vector.broadcast %cst_26 : f32 to vector<8x32xf32>
    %60 = arith.addf %59, %58 : vector<8x32xf32>
    %61 = arith.divf %59, %60 : vector<8x32xf32>
    %62 = vector.extract_strided_slice %55 {offsets = [0, 32], sizes = [8, 32], strides = [1, 1]} : vector<8x128xf32> to vector<8x32xf32>
    %63 = arith.negf %62 : vector<8x32xf32>
    %64 = math.exp %63 : vector<8x32xf32>
    %cst_27 = arith.constant 1.000000e+00 : f32
    %65 = vector.broadcast %cst_27 : f32 to vector<8x32xf32>
    %66 = arith.addf %65, %64 : vector<8x32xf32>
    %67 = arith.divf %65, %66 : vector<8x32xf32>
    %68 = vector.extract_strided_slice %55 {offsets = [0, 64], sizes = [8, 32], strides = [1, 1]} : vector<8x128xf32> to vector<8x32xf32>
    %69 = math.tanh %68 : vector<8x32xf32>
    %70 = vector.extract_strided_slice %55 {offsets = [0, 96], sizes = [8, 32], strides = [1, 1]} : vector<8x128xf32> to vector<8x32xf32>
    %71 = arith.negf %70 : vector<8x32xf32>
    %72 = math.exp %71 : vector<8x32xf32>
    %cst_28 = arith.constant 1.000000e+00 : f32
    %73 = vector.broadcast %cst_28 : f32 to vector<8x32xf32>
    %74 = arith.addf %73, %72 : vector<8x32xf32>
    %75 = arith.divf %73, %74 : vector<8x32xf32>
    %76 = arith.mulf %67, %18 : vector<8x32xf32>
    %77 = arith.mulf %61, %69 : vector<8x32xf32>
    %78 = arith.addf %76, %77 : vector<8x32xf32>
    %79 = math.tanh %78 : vector<8x32xf32>
    %80 = arith.mulf %75, %79 : vector<8x32xf32>
    %81 = vector.extract_strided_slice %14 {offsets = [8, 0], sizes = [8, 128], strides = [1, 1]} : vector<64x128xf32> to vector<8x128xf32>
    %c0_29 = arith.constant 0 : index
    %c0_30 = arith.constant 0 : index
    %82 = vector.load %arg7[%c0_29, %c0_30] : memref<32x128xf32, #tpu.memory_space<vmem>>, vector<32x128xf32>
    %cst_31 = arith.constant dense<0.000000e+00> : vector<8x128xf32>
    %83 = tpu.matmul %47, %82, %cst_31 {dimension_numbers = #tpu.dot_dimension_numbers<[1], [0], [0], [1], [0, 0, 1, 1], [], []>} : vector<8x32xf32>, vector<32x128xf32>, vector<8x128xf32> -> vector<8x128xf32>
    %84 = arith.addf %81, %83 : vector<8x128xf32>
    %85 = vector.extract_strided_slice %84 {offsets = [0, 0], sizes = [8, 32], strides = [1, 1]} : vector<8x128xf32> to vector<8x32xf32>
    %86 = arith.negf %85 : vector<8x32xf32>
    %87 = math.exp %86 : vector<8x32xf32>
    %cst_32 = arith.constant 1.000000e+00 : f32
    %88 = vector.broadcast %cst_32 : f32 to vector<8x32xf32>
    %89 = arith.addf %88, %87 : vector<8x32xf32>
    %90 = arith.divf %88, %89 : vector<8x32xf32>
    %91 = vector.extract_strided_slice %84 {offsets = [0, 32], sizes = [8, 32], strides = [1, 1]} : vector<8x128xf32> to vector<8x32xf32>
    %92 = arith.negf %91 : vector<8x32xf32>
    %93 = math.exp %92 : vector<8x32xf32>
    %cst_33 = arith.constant 1.000000e+00 : f32
    %94 = vector.broadcast %cst_33 : f32 to vector<8x32xf32>
    %95 = arith.addf %94, %93 : vector<8x32xf32>
    %96 = arith.divf %94, %95 : vector<8x32xf32>
    %97 = vector.extract_strided_slice %84 {offsets = [0, 64], sizes = [8, 32], strides = [1, 1]} : vector<8x128xf32> to vector<8x32xf32>
    %98 = math.tanh %97 : vector<8x32xf32>
    %99 = vector.extract_strided_slice %84 {offsets = [0, 96], sizes = [8, 32], strides = [1, 1]} : vector<8x128xf32> to vector<8x32xf32>
    %100 = arith.negf %99 : vector<8x32xf32>
    %101 = math.exp %100 : vector<8x32xf32>
    %cst_34 = arith.constant 1.000000e+00 : f32
    %102 = vector.broadcast %cst_34 : f32 to vector<8x32xf32>
    %103 = arith.addf %102, %101 : vector<8x32xf32>
    %104 = arith.divf %102, %103 : vector<8x32xf32>
    %105 = arith.mulf %96, %45 : vector<8x32xf32>
    %106 = arith.mulf %90, %98 : vector<8x32xf32>
    %107 = arith.addf %105, %106 : vector<8x32xf32>
    %108 = math.tanh %107 : vector<8x32xf32>
    %109 = arith.mulf %104, %108 : vector<8x32xf32>
    %c0_35 = arith.constant 0 : index
    %c0_36 = arith.constant 0 : index
    %110 = vector.load %arg6[%c0_35, %c0_36] : memref<32x128xf32, #tpu.memory_space<vmem>>, vector<32x128xf32>
    %cst_37 = arith.constant dense<0.000000e+00> : vector<8x128xf32>
    %111 = tpu.matmul %109, %110, %cst_37 {dimension_numbers = #tpu.dot_dimension_numbers<[1], [0], [0], [1], [0, 0, 1, 1], [], []>} : vector<8x32xf32>, vector<32x128xf32>, vector<8x128xf32> -> vector<8x128xf32>
    %c0_38 = arith.constant 0 : index
    %c0_39 = arith.constant 0 : index
    %112 = vector.load %arg8[%c0_38, %c0_39] : memref<32x128xf32, #tpu.memory_space<vmem>>, vector<32x128xf32>
    %cst_40 = arith.constant dense<0.000000e+00> : vector<8x128xf32>
    %113 = tpu.matmul %80, %112, %cst_40 {dimension_numbers = #tpu.dot_dimension_numbers<[1], [0], [0], [1], [0, 0, 1, 1], [], []>} : vector<8x32xf32>, vector<32x128xf32>, vector<8x128xf32> -> vector<8x128xf32>
    %114 = arith.addf %111, %113 : vector<8x128xf32>
    %c0_41 = arith.constant 0 : index
    %c0_42 = arith.constant 0 : index
    %115 = vector.load %arg10[%c0_41, %c0_42] : memref<1x128xf32, #tpu.memory_space<vmem>>, vector<1x128xf32>
    %116 = vector.broadcast %115 : vector<1x128xf32> to vector<8x128xf32>
    %117 = arith.addf %114, %116 : vector<8x128xf32>
    %118 = vector.extract_strided_slice %117 {offsets = [0, 0], sizes = [8, 32], strides = [1, 1]} : vector<8x128xf32> to vector<8x32xf32>
    %119 = arith.negf %118 : vector<8x32xf32>
    %120 = math.exp %119 : vector<8x32xf32>
    %cst_43 = arith.constant 1.000000e+00 : f32
    %121 = vector.broadcast %cst_43 : f32 to vector<8x32xf32>
    %122 = arith.addf %121, %120 : vector<8x32xf32>
    %123 = arith.divf %121, %122 : vector<8x32xf32>
    %124 = vector.extract_strided_slice %117 {offsets = [0, 32], sizes = [8, 32], strides = [1, 1]} : vector<8x128xf32> to vector<8x32xf32>
    %125 = arith.negf %124 : vector<8x32xf32>
    %126 = math.exp %125 : vector<8x32xf32>
    %cst_44 = arith.constant 1.000000e+00 : f32
    %127 = vector.broadcast %cst_44 : f32 to vector<8x32xf32>
    %128 = arith.addf %127, %126 : vector<8x32xf32>
    %129 = arith.divf %127, %128 : vector<8x32xf32>
    %130 = vector.extract_strided_slice %117 {offsets = [0, 64], sizes = [8, 32], strides = [1, 1]} : vector<8x128xf32> to vector<8x32xf32>
    %131 = math.tanh %130 : vector<8x32xf32>
    %132 = vector.extract_strided_slice %117 {offsets = [0, 96], sizes = [8, 32], strides = [1, 1]} : vector<8x128xf32> to vector<8x32xf32>
    %133 = arith.negf %132 : vector<8x32xf32>
    %134 = math.exp %133 : vector<8x32xf32>
    %cst_45 = arith.constant 1.000000e+00 : f32
    %135 = vector.broadcast %cst_45 : f32 to vector<8x32xf32>
    %136 = arith.addf %135, %134 : vector<8x32xf32>
    %137 = arith.divf %135, %136 : vector<8x32xf32>
    %138 = arith.mulf %129, %78 : vector<8x32xf32>
    %139 = arith.mulf %123, %131 : vector<8x32xf32>
    %140 = arith.addf %138, %139 : vector<8x32xf32>
    %141 = math.tanh %140 : vector<8x32xf32>
    %142 = arith.mulf %137, %141 : vector<8x32xf32>
    %143 = vector.extract_strided_slice %14 {offsets = [16, 0], sizes = [8, 128], strides = [1, 1]} : vector<64x128xf32> to vector<8x128xf32>
    %c0_46 = arith.constant 0 : index
    %c0_47 = arith.constant 0 : index
    %144 = vector.load %arg7[%c0_46, %c0_47] : memref<32x128xf32, #tpu.memory_space<vmem>>, vector<32x128xf32>
    %cst_48 = arith.constant dense<0.000000e+00> : vector<8x128xf32>
    %145 = tpu.matmul %109, %144, %cst_48 {dimension_numbers = #tpu.dot_dimension_numbers<[1], [0], [0], [1], [0, 0, 1, 1], [], []>} : vector<8x32xf32>, vector<32x128xf32>, vector<8x128xf32> -> vector<8x128xf32>
    %146 = arith.addf %143, %145 : vector<8x128xf32>
    %147 = vector.extract_strided_slice %146 {offsets = [0, 0], sizes = [8, 32], strides = [1, 1]} : vector<8x128xf32> to vector<8x32xf32>
    %148 = arith.negf %147 : vector<8x32xf32>
    %149 = math.exp %148 : vector<8x32xf32>
    %cst_49 = arith.constant 1.000000e+00 : f32
    %150 = vector.broadcast %cst_49 : f32 to vector<8x32xf32>
    %151 = arith.addf %150, %149 : vector<8x32xf32>
    %152 = arith.divf %150, %151 : vector<8x32xf32>
    %153 = vector.extract_strided_slice %146 {offsets = [0, 32], sizes = [8, 32], strides = [1, 1]} : vector<8x128xf32> to vector<8x32xf32>
    %154 = arith.negf %153 : vector<8x32xf32>
    %155 = math.exp %154 : vector<8x32xf32>
    %cst_50 = arith.constant 1.000000e+00 : f32
    %156 = vector.broadcast %cst_50 : f32 to vector<8x32xf32>
    %157 = arith.addf %156, %155 : vector<8x32xf32>
    %158 = arith.divf %156, %157 : vector<8x32xf32>
    %159 = vector.extract_strided_slice %146 {offsets = [0, 64], sizes = [8, 32], strides = [1, 1]} : vector<8x128xf32> to vector<8x32xf32>
    %160 = math.tanh %159 : vector<8x32xf32>
    %161 = vector.extract_strided_slice %146 {offsets = [0, 96], sizes = [8, 32], strides = [1, 1]} : vector<8x128xf32> to vector<8x32xf32>
    %162 = arith.negf %161 : vector<8x32xf32>
    %163 = math.exp %162 : vector<8x32xf32>
    %cst_51 = arith.constant 1.000000e+00 : f32
    %164 = vector.broadcast %cst_51 : f32 to vector<8x32xf32>
    %165 = arith.addf %164, %163 : vector<8x32xf32>
    %166 = arith.divf %164, %165 : vector<8x32xf32>
    %167 = arith.mulf %158, %107 : vector<8x32xf32>
    %168 = arith.mulf %152, %160 : vector<8x32xf32>
    %169 = arith.addf %167, %168 : vector<8x32xf32>
    %170 = math.tanh %169 : vector<8x32xf32>
    %171 = arith.mulf %166, %170 : vector<8x32xf32>
    %c0_52 = arith.constant 0 : index
    %c0_53 = arith.constant 0 : index
    %172 = vector.load %arg6[%c0_52, %c0_53] : memref<32x128xf32, #tpu.memory_space<vmem>>, vector<32x128xf32>
    %cst_54 = arith.constant dense<0.000000e+00> : vector<8x128xf32>
    %173 = tpu.matmul %171, %172, %cst_54 {dimension_numbers = #tpu.dot_dimension_numbers<[1], [0], [0], [1], [0, 0, 1, 1], [], []>} : vector<8x32xf32>, vector<32x128xf32>, vector<8x128xf32> -> vector<8x128xf32>
    %c0_55 = arith.constant 0 : index
    %c0_56 = arith.constant 0 : index
    %174 = vector.load %arg8[%c0_55, %c0_56] : memref<32x128xf32, #tpu.memory_space<vmem>>, vector<32x128xf32>
    %cst_57 = arith.constant dense<0.000000e+00> : vector<8x128xf32>
    %175 = tpu.matmul %142, %174, %cst_57 {dimension_numbers = #tpu.dot_dimension_numbers<[1], [0], [0], [1], [0, 0, 1, 1], [], []>} : vector<8x32xf32>, vector<32x128xf32>, vector<8x128xf32> -> vector<8x128xf32>
    %176 = arith.addf %173, %175 : vector<8x128xf32>
    %c0_58 = arith.constant 0 : index
    %c0_59 = arith.constant 0 : index
    %177 = vector.load %arg10[%c0_58, %c0_59] : memref<1x128xf32, #tpu.memory_space<vmem>>, vector<1x128xf32>
    %178 = vector.broadcast %177 : vector<1x128xf32> to vector<8x128xf32>
    %179 = arith.addf %176, %178 : vector<8x128xf32>
    %180 = vector.extract_strided_slice %179 {offsets = [0, 0], sizes = [8, 32], strides = [1, 1]} : vector<8x128xf32> to vector<8x32xf32>
    %181 = arith.negf %180 : vector<8x32xf32>
    %182 = math.exp %181 : vector<8x32xf32>
    %cst_60 = arith.constant 1.000000e+00 : f32
    %183 = vector.broadcast %cst_60 : f32 to vector<8x32xf32>
    %184 = arith.addf %183, %182 : vector<8x32xf32>
    %185 = arith.divf %183, %184 : vector<8x32xf32>
    %186 = vector.extract_strided_slice %179 {offsets = [0, 32], sizes = [8, 32], strides = [1, 1]} : vector<8x128xf32> to vector<8x32xf32>
    %187 = arith.negf %186 : vector<8x32xf32>
    %188 = math.exp %187 : vector<8x32xf32>
    %cst_61 = arith.constant 1.000000e+00 : f32
    %189 = vector.broadcast %cst_61 : f32 to vector<8x32xf32>
    %190 = arith.addf %189, %188 : vector<8x32xf32>
    %191 = arith.divf %189, %190 : vector<8x32xf32>
    %192 = vector.extract_strided_slice %179 {offsets = [0, 64], sizes = [8, 32], strides = [1, 1]} : vector<8x128xf32> to vector<8x32xf32>
    %193 = math.tanh %192 : vector<8x32xf32>
    %194 = vector.extract_strided_slice %179 {offsets = [0, 96], sizes = [8, 32], strides = [1, 1]} : vector<8x128xf32> to vector<8x32xf32>
    %195 = arith.negf %194 : vector<8x32xf32>
    %196 = math.exp %195 : vector<8x32xf32>
    %cst_62 = arith.constant 1.000000e+00 : f32
    %197 = vector.broadcast %cst_62 : f32 to vector<8x32xf32>
    %198 = arith.addf %197, %196 : vector<8x32xf32>
    %199 = arith.divf %197, %198 : vector<8x32xf32>
    %200 = arith.mulf %191, %140 : vector<8x32xf32>
    %201 = arith.mulf %185, %193 : vector<8x32xf32>
    %202 = arith.addf %200, %201 : vector<8x32xf32>
    %203 = math.tanh %202 : vector<8x32xf32>
    %204 = arith.mulf %199, %203 : vector<8x32xf32>
    %205 = vector.extract_strided_slice %14 {offsets = [24, 0], sizes = [8, 128], strides = [1, 1]} : vector<64x128xf32> to vector<8x128xf32>
    %c0_63 = arith.constant 0 : index
    %c0_64 = arith.constant 0 : index
    %206 = vector.load %arg7[%c0_63, %c0_64] : memref<32x128xf32, #tpu.memory_space<vmem>>, vector<32x128xf32>
    %cst_65 = arith.constant dense<0.000000e+00> : vector<8x128xf32>
    %207 = tpu.matmul %171, %206, %cst_65 {dimension_numbers = #tpu.dot_dimension_numbers<[1], [0], [0], [1], [0, 0, 1, 1], [], []>} : vector<8x32xf32>, vector<32x128xf32>, vector<8x128xf32> -> vector<8x128xf32>
    %208 = arith.addf %205, %207 : vector<8x128xf32>
    %209 = vector.extract_strided_slice %208 {offsets = [0, 0], sizes = [8, 32], strides = [1, 1]} : vector<8x128xf32> to vector<8x32xf32>
    %210 = arith.negf %209 : vector<8x32xf32>
    %211 = math.exp %210 : vector<8x32xf32>
    %cst_66 = arith.constant 1.000000e+00 : f32
    %212 = vector.broadcast %cst_66 : f32 to vector<8x32xf32>
    %213 = arith.addf %212, %211 : vector<8x32xf32>
    %214 = arith.divf %212, %213 : vector<8x32xf32>
    %215 = vector.extract_strided_slice %208 {offsets = [0, 32], sizes = [8, 32], strides = [1, 1]} : vector<8x128xf32> to vector<8x32xf32>
    %216 = arith.negf %215 : vector<8x32xf32>
    %217 = math.exp %216 : vector<8x32xf32>
    %cst_67 = arith.constant 1.000000e+00 : f32
    %218 = vector.broadcast %cst_67 : f32 to vector<8x32xf32>
    %219 = arith.addf %218, %217 : vector<8x32xf32>
    %220 = arith.divf %218, %219 : vector<8x32xf32>
    %221 = vector.extract_strided_slice %208 {offsets = [0, 64], sizes = [8, 32], strides = [1, 1]} : vector<8x128xf32> to vector<8x32xf32>
    %222 = math.tanh %221 : vector<8x32xf32>
    %223 = vector.extract_strided_slice %208 {offsets = [0, 96], sizes = [8, 32], strides = [1, 1]} : vector<8x128xf32> to vector<8x32xf32>
    %224 = arith.negf %223 : vector<8x32xf32>
    %225 = math.exp %224 : vector<8x32xf32>
    %cst_68 = arith.constant 1.000000e+00 : f32
    %226 = vector.broadcast %cst_68 : f32 to vector<8x32xf32>
    %227 = arith.addf %226, %225 : vector<8x32xf32>
    %228 = arith.divf %226, %227 : vector<8x32xf32>
    %229 = arith.mulf %220, %169 : vector<8x32xf32>
    %230 = arith.mulf %214, %222 : vector<8x32xf32>
    %231 = arith.addf %229, %230 : vector<8x32xf32>
    %232 = math.tanh %231 : vector<8x32xf32>
    %233 = arith.mulf %228, %232 : vector<8x32xf32>
    %c0_69 = arith.constant 0 : index
    %c0_70 = arith.constant 0 : index
    %234 = vector.load %arg6[%c0_69, %c0_70] : memref<32x128xf32, #tpu.memory_space<vmem>>, vector<32x128xf32>
    %cst_71 = arith.constant dense<0.000000e+00> : vector<8x128xf32>
    %235 = tpu.matmul %233, %234, %cst_71 {dimension_numbers = #tpu.dot_dimension_numbers<[1], [0], [0], [1], [0, 0, 1, 1], [], []>} : vector<8x32xf32>, vector<32x128xf32>, vector<8x128xf32> -> vector<8x128xf32>
    %c0_72 = arith.constant 0 : index
    %c0_73 = arith.constant 0 : index
    %236 = vector.load %arg8[%c0_72, %c0_73] : memref<32x128xf32, #tpu.memory_space<vmem>>, vector<32x128xf32>
    %cst_74 = arith.constant dense<0.000000e+00> : vector<8x128xf32>
    %237 = tpu.matmul %204, %236, %cst_74 {dimension_numbers = #tpu.dot_dimension_numbers<[1], [0], [0], [1], [0, 0, 1, 1], [], []>} : vector<8x32xf32>, vector<32x128xf32>, vector<8x128xf32> -> vector<8x128xf32>
    %238 = arith.addf %235, %237 : vector<8x128xf32>
    %c0_75 = arith.constant 0 : index
    %c0_76 = arith.constant 0 : index
    %239 = vector.load %arg10[%c0_75, %c0_76] : memref<1x128xf32, #tpu.memory_space<vmem>>, vector<1x128xf32>
    %240 = vector.broadcast %239 : vector<1x128xf32> to vector<8x128xf32>
    %241 = arith.addf %238, %240 : vector<8x128xf32>
    %242 = vector.extract_strided_slice %241 {offsets = [0, 0], sizes = [8, 32], strides = [1, 1]} : vector<8x128xf32> to vector<8x32xf32>
    %243 = arith.negf %242 : vector<8x32xf32>
    %244 = math.exp %243 : vector<8x32xf32>
    %cst_77 = arith.constant 1.000000e+00 : f32
    %245 = vector.broadcast %cst_77 : f32 to vector<8x32xf32>
    %246 = arith.addf %245, %244 : vector<8x32xf32>
    %247 = arith.divf %245, %246 : vector<8x32xf32>
    %248 = vector.extract_strided_slice %241 {offsets = [0, 32], sizes = [8, 32], strides = [1, 1]} : vector<8x128xf32> to vector<8x32xf32>
    %249 = arith.negf %248 : vector<8x32xf32>
    %250 = math.exp %249 : vector<8x32xf32>
    %cst_78 = arith.constant 1.000000e+00 : f32
    %251 = vector.broadcast %cst_78 : f32 to vector<8x32xf32>
    %252 = arith.addf %251, %250 : vector<8x32xf32>
    %253 = arith.divf %251, %252 : vector<8x32xf32>
    %254 = vector.extract_strided_slice %241 {offsets = [0, 64], sizes = [8, 32], strides = [1, 1]} : vector<8x128xf32> to vector<8x32xf32>
    %255 = math.tanh %254 : vector<8x32xf32>
    %256 = vector.extract_strided_slice %241 {offsets = [0, 96], sizes = [8, 32], strides = [1, 1]} : vector<8x128xf32> to vector<8x32xf32>
    %257 = arith.negf %256 : vector<8x32xf32>
    %258 = math.exp %257 : vector<8x32xf32>
    %cst_79 = arith.constant 1.000000e+00 : f32
    %259 = vector.broadcast %cst_79 : f32 to vector<8x32xf32>
    %260 = arith.addf %259, %258 : vector<8x32xf32>
    %261 = arith.divf %259, %260 : vector<8x32xf32>
    %262 = arith.mulf %253, %202 : vector<8x32xf32>
    %263 = arith.mulf %247, %255 : vector<8x32xf32>
    %264 = arith.addf %262, %263 : vector<8x32xf32>
    %265 = math.tanh %264 : vector<8x32xf32>
    %266 = arith.mulf %261, %265 : vector<8x32xf32>
    %267 = vector.extract_strided_slice %14 {offsets = [32, 0], sizes = [8, 128], strides = [1, 1]} : vector<64x128xf32> to vector<8x128xf32>
    %c0_80 = arith.constant 0 : index
    %c0_81 = arith.constant 0 : index
    %268 = vector.load %arg7[%c0_80, %c0_81] : memref<32x128xf32, #tpu.memory_space<vmem>>, vector<32x128xf32>
    %cst_82 = arith.constant dense<0.000000e+00> : vector<8x128xf32>
    %269 = tpu.matmul %233, %268, %cst_82 {dimension_numbers = #tpu.dot_dimension_numbers<[1], [0], [0], [1], [0, 0, 1, 1], [], []>} : vector<8x32xf32>, vector<32x128xf32>, vector<8x128xf32> -> vector<8x128xf32>
    %270 = arith.addf %267, %269 : vector<8x128xf32>
    %271 = vector.extract_strided_slice %270 {offsets = [0, 0], sizes = [8, 32], strides = [1, 1]} : vector<8x128xf32> to vector<8x32xf32>
    %272 = arith.negf %271 : vector<8x32xf32>
    %273 = math.exp %272 : vector<8x32xf32>
    %cst_83 = arith.constant 1.000000e+00 : f32
    %274 = vector.broadcast %cst_83 : f32 to vector<8x32xf32>
    %275 = arith.addf %274, %273 : vector<8x32xf32>
    %276 = arith.divf %274, %275 : vector<8x32xf32>
    %277 = vector.extract_strided_slice %270 {offsets = [0, 32], sizes = [8, 32], strides = [1, 1]} : vector<8x128xf32> to vector<8x32xf32>
    %278 = arith.negf %277 : vector<8x32xf32>
    %279 = math.exp %278 : vector<8x32xf32>
    %cst_84 = arith.constant 1.000000e+00 : f32
    %280 = vector.broadcast %cst_84 : f32 to vector<8x32xf32>
    %281 = arith.addf %280, %279 : vector<8x32xf32>
    %282 = arith.divf %280, %281 : vector<8x32xf32>
    %283 = vector.extract_strided_slice %270 {offsets = [0, 64], sizes = [8, 32], strides = [1, 1]} : vector<8x128xf32> to vector<8x32xf32>
    %284 = math.tanh %283 : vector<8x32xf32>
    %285 = vector.extract_strided_slice %270 {offsets = [0, 96], sizes = [8, 32], strides = [1, 1]} : vector<8x128xf32> to vector<8x32xf32>
    %286 = arith.negf %285 : vector<8x32xf32>
    %287 = math.exp %286 : vector<8x32xf32>
    %cst_85 = arith.constant 1.000000e+00 : f32
    %288 = vector.broadcast %cst_85 : f32 to vector<8x32xf32>
    %289 = arith.addf %288, %287 : vector<8x32xf32>
    %290 = arith.divf %288, %289 : vector<8x32xf32>
    %291 = arith.mulf %282, %231 : vector<8x32xf32>
    %292 = arith.mulf %276, %284 : vector<8x32xf32>
    %293 = arith.addf %291, %292 : vector<8x32xf32>
    %294 = math.tanh %293 : vector<8x32xf32>
    %295 = arith.mulf %290, %294 : vector<8x32xf32>
    %c0_86 = arith.constant 0 : index
    %c0_87 = arith.constant 0 : index
    %296 = vector.load %arg6[%c0_86, %c0_87] : memref<32x128xf32, #tpu.memory_space<vmem>>, vector<32x128xf32>
    %cst_88 = arith.constant dense<0.000000e+00> : vector<8x128xf32>
    %297 = tpu.matmul %295, %296, %cst_88 {dimension_numbers = #tpu.dot_dimension_numbers<[1], [0], [0], [1], [0, 0, 1, 1], [], []>} : vector<8x32xf32>, vector<32x128xf32>, vector<8x128xf32> -> vector<8x128xf32>
    %c0_89 = arith.constant 0 : index
    %c0_90 = arith.constant 0 : index
    %298 = vector.load %arg8[%c0_89, %c0_90] : memref<32x128xf32, #tpu.memory_space<vmem>>, vector<32x128xf32>
    %cst_91 = arith.constant dense<0.000000e+00> : vector<8x128xf32>
    %299 = tpu.matmul %266, %298, %cst_91 {dimension_numbers = #tpu.dot_dimension_numbers<[1], [0], [0], [1], [0, 0, 1, 1], [], []>} : vector<8x32xf32>, vector<32x128xf32>, vector<8x128xf32> -> vector<8x128xf32>
    %300 = arith.addf %297, %299 : vector<8x128xf32>
    %c0_92 = arith.constant 0 : index
    %c0_93 = arith.constant 0 : index
    %301 = vector.load %arg10[%c0_92, %c0_93] : memref<1x128xf32, #tpu.memory_space<vmem>>, vector<1x128xf32>
    %302 = vector.broadcast %301 : vector<1x128xf32> to vector<8x128xf32>
    %303 = arith.addf %300, %302 : vector<8x128xf32>
    %304 = vector.extract_strided_slice %303 {offsets = [0, 0], sizes = [8, 32], strides = [1, 1]} : vector<8x128xf32> to vector<8x32xf32>
    %305 = arith.negf %304 : vector<8x32xf32>
    %306 = math.exp %305 : vector<8x32xf32>
    %cst_94 = arith.constant 1.000000e+00 : f32
    %307 = vector.broadcast %cst_94 : f32 to vector<8x32xf32>
    %308 = arith.addf %307, %306 : vector<8x32xf32>
    %309 = arith.divf %307, %308 : vector<8x32xf32>
    %310 = vector.extract_strided_slice %303 {offsets = [0, 32], sizes = [8, 32], strides = [1, 1]} : vector<8x128xf32> to vector<8x32xf32>
    %311 = arith.negf %310 : vector<8x32xf32>
    %312 = math.exp %311 : vector<8x32xf32>
    %cst_95 = arith.constant 1.000000e+00 : f32
    %313 = vector.broadcast %cst_95 : f32 to vector<8x32xf32>
    %314 = arith.addf %313, %312 : vector<8x32xf32>
    %315 = arith.divf %313, %314 : vector<8x32xf32>
    %316 = vector.extract_strided_slice %303 {offsets = [0, 64], sizes = [8, 32], strides = [1, 1]} : vector<8x128xf32> to vector<8x32xf32>
    %317 = math.tanh %316 : vector<8x32xf32>
    %318 = vector.extract_strided_slice %303 {offsets = [0, 96], sizes = [8, 32], strides = [1, 1]} : vector<8x128xf32> to vector<8x32xf32>
    %319 = arith.negf %318 : vector<8x32xf32>
    %320 = math.exp %319 : vector<8x32xf32>
    %cst_96 = arith.constant 1.000000e+00 : f32
    %321 = vector.broadcast %cst_96 : f32 to vector<8x32xf32>
    %322 = arith.addf %321, %320 : vector<8x32xf32>
    %323 = arith.divf %321, %322 : vector<8x32xf32>
    %324 = arith.mulf %315, %264 : vector<8x32xf32>
    %325 = arith.mulf %309, %317 : vector<8x32xf32>
    %326 = arith.addf %324, %325 : vector<8x32xf32>
    %327 = math.tanh %326 : vector<8x32xf32>
    %328 = arith.mulf %323, %327 : vector<8x32xf32>
    %329 = vector.extract_strided_slice %14 {offsets = [40, 0], sizes = [8, 128], strides = [1, 1]} : vector<64x128xf32> to vector<8x128xf32>
    %c0_97 = arith.constant 0 : index
    %c0_98 = arith.constant 0 : index
    %330 = vector.load %arg7[%c0_97, %c0_98] : memref<32x128xf32, #tpu.memory_space<vmem>>, vector<32x128xf32>
    %cst_99 = arith.constant dense<0.000000e+00> : vector<8x128xf32>
    %331 = tpu.matmul %295, %330, %cst_99 {dimension_numbers = #tpu.dot_dimension_numbers<[1], [0], [0], [1], [0, 0, 1, 1], [], []>} : vector<8x32xf32>, vector<32x128xf32>, vector<8x128xf32> -> vector<8x128xf32>
    %332 = arith.addf %329, %331 : vector<8x128xf32>
    %333 = vector.extract_strided_slice %332 {offsets = [0, 0], sizes = [8, 32], strides = [1, 1]} : vector<8x128xf32> to vector<8x32xf32>
    %334 = arith.negf %333 : vector<8x32xf32>
    %335 = math.exp %334 : vector<8x32xf32>
    %cst_100 = arith.constant 1.000000e+00 : f32
    %336 = vector.broadcast %cst_100 : f32 to vector<8x32xf32>
    %337 = arith.addf %336, %335 : vector<8x32xf32>
    %338 = arith.divf %336, %337 : vector<8x32xf32>
    %339 = vector.extract_strided_slice %332 {offsets = [0, 32], sizes = [8, 32], strides = [1, 1]} : vector<8x128xf32> to vector<8x32xf32>
    %340 = arith.negf %339 : vector<8x32xf32>
    %341 = math.exp %340 : vector<8x32xf32>
    %cst_101 = arith.constant 1.000000e+00 : f32
    %342 = vector.broadcast %cst_101 : f32 to vector<8x32xf32>
    %343 = arith.addf %342, %341 : vector<8x32xf32>
    %344 = arith.divf %342, %343 : vector<8x32xf32>
    %345 = vector.extract_strided_slice %332 {offsets = [0, 64], sizes = [8, 32], strides = [1, 1]} : vector<8x128xf32> to vector<8x32xf32>
    %346 = math.tanh %345 : vector<8x32xf32>
    %347 = vector.extract_strided_slice %332 {offsets = [0, 96], sizes = [8, 32], strides = [1, 1]} : vector<8x128xf32> to vector<8x32xf32>
    %348 = arith.negf %347 : vector<8x32xf32>
    %349 = math.exp %348 : vector<8x32xf32>
    %cst_102 = arith.constant 1.000000e+00 : f32
    %350 = vector.broadcast %cst_102 : f32 to vector<8x32xf32>
    %351 = arith.addf %350, %349 : vector<8x32xf32>
    %352 = arith.divf %350, %351 : vector<8x32xf32>
    %353 = arith.mulf %344, %293 : vector<8x32xf32>
    %354 = arith.mulf %338, %346 : vector<8x32xf32>
    %355 = arith.addf %353, %354 : vector<8x32xf32>
    %356 = math.tanh %355 : vector<8x32xf32>
    %357 = arith.mulf %352, %356 : vector<8x32xf32>
    %c0_103 = arith.constant 0 : index
    %c0_104 = arith.constant 0 : index
    %358 = vector.load %arg6[%c0_103, %c0_104] : memref<32x128xf32, #tpu.memory_space<vmem>>, vector<32x128xf32>
    %cst_105 = arith.constant dense<0.000000e+00> : vector<8x128xf32>
    %359 = tpu.matmul %357, %358, %cst_105 {dimension_numbers = #tpu.dot_dimension_numbers<[1], [0], [0], [1], [0, 0, 1, 1], [], []>} : vector<8x32xf32>, vector<32x128xf32>, vector<8x128xf32> -> vector<8x128xf32>
    %c0_106 = arith.constant 0 : index
    %c0_107 = arith.constant 0 : index
    %360 = vector.load %arg8[%c0_106, %c0_107] : memref<32x128xf32, #tpu.memory_space<vmem>>, vector<32x128xf32>
    %cst_108 = arith.constant dense<0.000000e+00> : vector<8x128xf32>
    %361 = tpu.matmul %328, %360, %cst_108 {dimension_numbers = #tpu.dot_dimension_numbers<[1], [0], [0], [1], [0, 0, 1, 1], [], []>} : vector<8x32xf32>, vector<32x128xf32>, vector<8x128xf32> -> vector<8x128xf32>
    %362 = arith.addf %359, %361 : vector<8x128xf32>
    %c0_109 = arith.constant 0 : index
    %c0_110 = arith.constant 0 : index
    %363 = vector.load %arg10[%c0_109, %c0_110] : memref<1x128xf32, #tpu.memory_space<vmem>>, vector<1x128xf32>
    %364 = vector.broadcast %363 : vector<1x128xf32> to vector<8x128xf32>
    %365 = arith.addf %362, %364 : vector<8x128xf32>
    %366 = vector.extract_strided_slice %365 {offsets = [0, 0], sizes = [8, 32], strides = [1, 1]} : vector<8x128xf32> to vector<8x32xf32>
    %367 = arith.negf %366 : vector<8x32xf32>
    %368 = math.exp %367 : vector<8x32xf32>
    %cst_111 = arith.constant 1.000000e+00 : f32
    %369 = vector.broadcast %cst_111 : f32 to vector<8x32xf32>
    %370 = arith.addf %369, %368 : vector<8x32xf32>
    %371 = arith.divf %369, %370 : vector<8x32xf32>
    %372 = vector.extract_strided_slice %365 {offsets = [0, 32], sizes = [8, 32], strides = [1, 1]} : vector<8x128xf32> to vector<8x32xf32>
    %373 = arith.negf %372 : vector<8x32xf32>
    %374 = math.exp %373 : vector<8x32xf32>
    %cst_112 = arith.constant 1.000000e+00 : f32
    %375 = vector.broadcast %cst_112 : f32 to vector<8x32xf32>
    %376 = arith.addf %375, %374 : vector<8x32xf32>
    %377 = arith.divf %375, %376 : vector<8x32xf32>
    %378 = vector.extract_strided_slice %365 {offsets = [0, 64], sizes = [8, 32], strides = [1, 1]} : vector<8x128xf32> to vector<8x32xf32>
    %379 = math.tanh %378 : vector<8x32xf32>
    %380 = vector.extract_strided_slice %365 {offsets = [0, 96], sizes = [8, 32], strides = [1, 1]} : vector<8x128xf32> to vector<8x32xf32>
    %381 = arith.negf %380 : vector<8x32xf32>
    %382 = math.exp %381 : vector<8x32xf32>
    %cst_113 = arith.constant 1.000000e+00 : f32
    %383 = vector.broadcast %cst_113 : f32 to vector<8x32xf32>
    %384 = arith.addf %383, %382 : vector<8x32xf32>
    %385 = arith.divf %383, %384 : vector<8x32xf32>
    %386 = arith.mulf %377, %326 : vector<8x32xf32>
    %387 = arith.mulf %371, %379 : vector<8x32xf32>
    %388 = arith.addf %386, %387 : vector<8x32xf32>
    %389 = math.tanh %388 : vector<8x32xf32>
    %390 = arith.mulf %385, %389 : vector<8x32xf32>
    %391 = vector.extract_strided_slice %14 {offsets = [48, 0], sizes = [8, 128], strides = [1, 1]} : vector<64x128xf32> to vector<8x128xf32>
    %c0_114 = arith.constant 0 : index
    %c0_115 = arith.constant 0 : index
    %392 = vector.load %arg7[%c0_114, %c0_115] : memref<32x128xf32, #tpu.memory_space<vmem>>, vector<32x128xf32>
    %cst_116 = arith.constant dense<0.000000e+00> : vector<8x128xf32>
    %393 = tpu.matmul %357, %392, %cst_116 {dimension_numbers = #tpu.dot_dimension_numbers<[1], [0], [0], [1], [0, 0, 1, 1], [], []>} : vector<8x32xf32>, vector<32x128xf32>, vector<8x128xf32> -> vector<8x128xf32>
    %394 = arith.addf %391, %393 : vector<8x128xf32>
    %395 = vector.extract_strided_slice %394 {offsets = [0, 0], sizes = [8, 32], strides = [1, 1]} : vector<8x128xf32> to vector<8x32xf32>
    %396 = arith.negf %395 : vector<8x32xf32>
    %397 = math.exp %396 : vector<8x32xf32>
    %cst_117 = arith.constant 1.000000e+00 : f32
    %398 = vector.broadcast %cst_117 : f32 to vector<8x32xf32>
    %399 = arith.addf %398, %397 : vector<8x32xf32>
    %400 = arith.divf %398, %399 : vector<8x32xf32>
    %401 = vector.extract_strided_slice %394 {offsets = [0, 32], sizes = [8, 32], strides = [1, 1]} : vector<8x128xf32> to vector<8x32xf32>
    %402 = arith.negf %401 : vector<8x32xf32>
    %403 = math.exp %402 : vector<8x32xf32>
    %cst_118 = arith.constant 1.000000e+00 : f32
    %404 = vector.broadcast %cst_118 : f32 to vector<8x32xf32>
    %405 = arith.addf %404, %403 : vector<8x32xf32>
    %406 = arith.divf %404, %405 : vector<8x32xf32>
    %407 = vector.extract_strided_slice %394 {offsets = [0, 64], sizes = [8, 32], strides = [1, 1]} : vector<8x128xf32> to vector<8x32xf32>
    %408 = math.tanh %407 : vector<8x32xf32>
    %409 = vector.extract_strided_slice %394 {offsets = [0, 96], sizes = [8, 32], strides = [1, 1]} : vector<8x128xf32> to vector<8x32xf32>
    %410 = arith.negf %409 : vector<8x32xf32>
    %411 = math.exp %410 : vector<8x32xf32>
    %cst_119 = arith.constant 1.000000e+00 : f32
    %412 = vector.broadcast %cst_119 : f32 to vector<8x32xf32>
    %413 = arith.addf %412, %411 : vector<8x32xf32>
    %414 = arith.divf %412, %413 : vector<8x32xf32>
    %415 = arith.mulf %406, %355 : vector<8x32xf32>
    %416 = arith.mulf %400, %408 : vector<8x32xf32>
    %417 = arith.addf %415, %416 : vector<8x32xf32>
    %418 = math.tanh %417 : vector<8x32xf32>
    %419 = arith.mulf %414, %418 : vector<8x32xf32>
    %c0_120 = arith.constant 0 : index
    %c0_121 = arith.constant 0 : index
    %420 = vector.load %arg6[%c0_120, %c0_121] : memref<32x128xf32, #tpu.memory_space<vmem>>, vector<32x128xf32>
    %cst_122 = arith.constant dense<0.000000e+00> : vector<8x128xf32>
    %421 = tpu.matmul %419, %420, %cst_122 {dimension_numbers = #tpu.dot_dimension_numbers<[1], [0], [0], [1], [0, 0, 1, 1], [], []>} : vector<8x32xf32>, vector<32x128xf32>, vector<8x128xf32> -> vector<8x128xf32>
    %c0_123 = arith.constant 0 : index
    %c0_124 = arith.constant 0 : index
    %422 = vector.load %arg8[%c0_123, %c0_124] : memref<32x128xf32, #tpu.memory_space<vmem>>, vector<32x128xf32>
    %cst_125 = arith.constant dense<0.000000e+00> : vector<8x128xf32>
    %423 = tpu.matmul %390, %422, %cst_125 {dimension_numbers = #tpu.dot_dimension_numbers<[1], [0], [0], [1], [0, 0, 1, 1], [], []>} : vector<8x32xf32>, vector<32x128xf32>, vector<8x128xf32> -> vector<8x128xf32>
    %424 = arith.addf %421, %423 : vector<8x128xf32>
    %c0_126 = arith.constant 0 : index
    %c0_127 = arith.constant 0 : index
    %425 = vector.load %arg10[%c0_126, %c0_127] : memref<1x128xf32, #tpu.memory_space<vmem>>, vector<1x128xf32>
    %426 = vector.broadcast %425 : vector<1x128xf32> to vector<8x128xf32>
    %427 = arith.addf %424, %426 : vector<8x128xf32>
    %428 = vector.extract_strided_slice %427 {offsets = [0, 0], sizes = [8, 32], strides = [1, 1]} : vector<8x128xf32> to vector<8x32xf32>
    %429 = arith.negf %428 : vector<8x32xf32>
    %430 = math.exp %429 : vector<8x32xf32>
    %cst_128 = arith.constant 1.000000e+00 : f32
    %431 = vector.broadcast %cst_128 : f32 to vector<8x32xf32>
    %432 = arith.addf %431, %430 : vector<8x32xf32>
    %433 = arith.divf %431, %432 : vector<8x32xf32>
    %434 = vector.extract_strided_slice %427 {offsets = [0, 32], sizes = [8, 32], strides = [1, 1]} : vector<8x128xf32> to vector<8x32xf32>
    %435 = arith.negf %434 : vector<8x32xf32>
    %436 = math.exp %435 : vector<8x32xf32>
    %cst_129 = arith.constant 1.000000e+00 : f32
    %437 = vector.broadcast %cst_129 : f32 to vector<8x32xf32>
    %438 = arith.addf %437, %436 : vector<8x32xf32>
    %439 = arith.divf %437, %438 : vector<8x32xf32>
    %440 = vector.extract_strided_slice %427 {offsets = [0, 64], sizes = [8, 32], strides = [1, 1]} : vector<8x128xf32> to vector<8x32xf32>
    %441 = math.tanh %440 : vector<8x32xf32>
    %442 = vector.extract_strided_slice %427 {offsets = [0, 96], sizes = [8, 32], strides = [1, 1]} : vector<8x128xf32> to vector<8x32xf32>
    %443 = arith.negf %442 : vector<8x32xf32>
    %444 = math.exp %443 : vector<8x32xf32>
    %cst_130 = arith.constant 1.000000e+00 : f32
    %445 = vector.broadcast %cst_130 : f32 to vector<8x32xf32>
    %446 = arith.addf %445, %444 : vector<8x32xf32>
    %447 = arith.divf %445, %446 : vector<8x32xf32>
    %448 = arith.mulf %439, %388 : vector<8x32xf32>
    %449 = arith.mulf %433, %441 : vector<8x32xf32>
    %450 = arith.addf %448, %449 : vector<8x32xf32>
    %451 = math.tanh %450 : vector<8x32xf32>
    %452 = arith.mulf %447, %451 : vector<8x32xf32>
    %453 = vector.extract_strided_slice %14 {offsets = [56, 0], sizes = [8, 128], strides = [1, 1]} : vector<64x128xf32> to vector<8x128xf32>
    %c0_131 = arith.constant 0 : index
    %c0_132 = arith.constant 0 : index
    %454 = vector.load %arg7[%c0_131, %c0_132] : memref<32x128xf32, #tpu.memory_space<vmem>>, vector<32x128xf32>
    %cst_133 = arith.constant dense<0.000000e+00> : vector<8x128xf32>
    %455 = tpu.matmul %419, %454, %cst_133 {dimension_numbers = #tpu.dot_dimension_numbers<[1], [0], [0], [1], [0, 0, 1, 1], [], []>} : vector<8x32xf32>, vector<32x128xf32>, vector<8x128xf32> -> vector<8x128xf32>
    %456 = arith.addf %453, %455 : vector<8x128xf32>
    %457 = vector.extract_strided_slice %456 {offsets = [0, 0], sizes = [8, 32], strides = [1, 1]} : vector<8x128xf32> to vector<8x32xf32>
    %458 = arith.negf %457 : vector<8x32xf32>
    %459 = math.exp %458 : vector<8x32xf32>
    %cst_134 = arith.constant 1.000000e+00 : f32
    %460 = vector.broadcast %cst_134 : f32 to vector<8x32xf32>
    %461 = arith.addf %460, %459 : vector<8x32xf32>
    %462 = arith.divf %460, %461 : vector<8x32xf32>
    %463 = vector.extract_strided_slice %456 {offsets = [0, 32], sizes = [8, 32], strides = [1, 1]} : vector<8x128xf32> to vector<8x32xf32>
    %464 = arith.negf %463 : vector<8x32xf32>
    %465 = math.exp %464 : vector<8x32xf32>
    %cst_135 = arith.constant 1.000000e+00 : f32
    %466 = vector.broadcast %cst_135 : f32 to vector<8x32xf32>
    %467 = arith.addf %466, %465 : vector<8x32xf32>
    %468 = arith.divf %466, %467 : vector<8x32xf32>
    %469 = vector.extract_strided_slice %456 {offsets = [0, 64], sizes = [8, 32], strides = [1, 1]} : vector<8x128xf32> to vector<8x32xf32>
    %470 = math.tanh %469 : vector<8x32xf32>
    %471 = vector.extract_strided_slice %456 {offsets = [0, 96], sizes = [8, 32], strides = [1, 1]} : vector<8x128xf32> to vector<8x32xf32>
    %472 = arith.negf %471 : vector<8x32xf32>
    %473 = math.exp %472 : vector<8x32xf32>
    %cst_136 = arith.constant 1.000000e+00 : f32
    %474 = vector.broadcast %cst_136 : f32 to vector<8x32xf32>
    %475 = arith.addf %474, %473 : vector<8x32xf32>
    %476 = arith.divf %474, %475 : vector<8x32xf32>
    %477 = arith.mulf %468, %417 : vector<8x32xf32>
    %478 = arith.mulf %462, %470 : vector<8x32xf32>
    %479 = arith.addf %477, %478 : vector<8x32xf32>
    %480 = math.tanh %479 : vector<8x32xf32>
    %481 = arith.mulf %476, %480 : vector<8x32xf32>
    %c0_137 = arith.constant 0 : index
    %c0_138 = arith.constant 0 : index
    %482 = vector.load %arg6[%c0_137, %c0_138] : memref<32x128xf32, #tpu.memory_space<vmem>>, vector<32x128xf32>
    %cst_139 = arith.constant dense<0.000000e+00> : vector<8x128xf32>
    %483 = tpu.matmul %481, %482, %cst_139 {dimension_numbers = #tpu.dot_dimension_numbers<[1], [0], [0], [1], [0, 0, 1, 1], [], []>} : vector<8x32xf32>, vector<32x128xf32>, vector<8x128xf32> -> vector<8x128xf32>
    %c0_140 = arith.constant 0 : index
    %c0_141 = arith.constant 0 : index
    %484 = vector.load %arg8[%c0_140, %c0_141] : memref<32x128xf32, #tpu.memory_space<vmem>>, vector<32x128xf32>
    %cst_142 = arith.constant dense<0.000000e+00> : vector<8x128xf32>
    %485 = tpu.matmul %452, %484, %cst_142 {dimension_numbers = #tpu.dot_dimension_numbers<[1], [0], [0], [1], [0, 0, 1, 1], [], []>} : vector<8x32xf32>, vector<32x128xf32>, vector<8x128xf32> -> vector<8x128xf32>
    %486 = arith.addf %483, %485 : vector<8x128xf32>
    %c0_143 = arith.constant 0 : index
    %c0_144 = arith.constant 0 : index
    %487 = vector.load %arg10[%c0_143, %c0_144] : memref<1x128xf32, #tpu.memory_space<vmem>>, vector<1x128xf32>
    %488 = vector.broadcast %487 : vector<1x128xf32> to vector<8x128xf32>
    %489 = arith.addf %486, %488 : vector<8x128xf32>
    %490 = vector.extract_strided_slice %489 {offsets = [0, 0], sizes = [8, 32], strides = [1, 1]} : vector<8x128xf32> to vector<8x32xf32>
    %491 = arith.negf %490 : vector<8x32xf32>
    %492 = math.exp %491 : vector<8x32xf32>
    %cst_145 = arith.constant 1.000000e+00 : f32
    %493 = vector.broadcast %cst_145 : f32 to vector<8x32xf32>
    %494 = arith.addf %493, %492 : vector<8x32xf32>
    %495 = arith.divf %493, %494 : vector<8x32xf32>
    %496 = vector.extract_strided_slice %489 {offsets = [0, 32], sizes = [8, 32], strides = [1, 1]} : vector<8x128xf32> to vector<8x32xf32>
    %497 = arith.negf %496 : vector<8x32xf32>
    %498 = math.exp %497 : vector<8x32xf32>
    %cst_146 = arith.constant 1.000000e+00 : f32
    %499 = vector.broadcast %cst_146 : f32 to vector<8x32xf32>
    %500 = arith.addf %499, %498 : vector<8x32xf32>
    %501 = arith.divf %499, %500 : vector<8x32xf32>
    %502 = vector.extract_strided_slice %489 {offsets = [0, 64], sizes = [8, 32], strides = [1, 1]} : vector<8x128xf32> to vector<8x32xf32>
    %503 = math.tanh %502 : vector<8x32xf32>
    %504 = vector.extract_strided_slice %489 {offsets = [0, 96], sizes = [8, 32], strides = [1, 1]} : vector<8x128xf32> to vector<8x32xf32>
    %505 = arith.negf %504 : vector<8x32xf32>
    %506 = math.exp %505 : vector<8x32xf32>
    %cst_147 = arith.constant 1.000000e+00 : f32
    %507 = vector.broadcast %cst_147 : f32 to vector<8x32xf32>
    %508 = arith.addf %507, %506 : vector<8x32xf32>
    %509 = arith.divf %507, %508 : vector<8x32xf32>
    %510 = arith.mulf %501, %450 : vector<8x32xf32>
    %511 = arith.mulf %495, %503 : vector<8x32xf32>
    %512 = arith.addf %510, %511 : vector<8x32xf32>
    %513 = math.tanh %512 : vector<8x32xf32>
    %514 = arith.mulf %509, %513 : vector<8x32xf32>
    %c0_148 = arith.constant 0 : index
    %c0_149 = arith.constant 0 : index
    %515 = vector.load %arg2[%c0_148, %c0_149] : memref<64x1xi32, #tpu.memory_space<vmem>>, vector<64x1xi32>
    %516 = arith.sitofp %515 : vector<64x1xi32> to vector<64x1xf32>
    %517 = tpu.iota {dimensions = array<i32: 1>} : vector<64x128xi32>
    %518 = arith.sitofp %517 : vector<64x128xi32> to vector<64x128xf32>
    %519 = vector.broadcast %516 : vector<64x1xf32> to vector<64x128xf32>
    %520 = arith.cmpf oeq, %518, %519 : vector<64x128xf32>
    %521 = arith.extui %520 : vector<64x128xi1> to vector<64x128xi32>
    %522 = arith.sitofp %521 : vector<64x128xi32> to vector<64x128xf32>
    %c0_150 = arith.constant 0 : index
    %c0_151 = arith.constant 0 : index
    %523 = vector.load %arg4[%c0_150, %c0_151] : memref<128x32xf32, #tpu.memory_space<vmem>>, vector<128x32xf32>
    %cst_152 = arith.constant dense<0.000000e+00> : vector<64x32xf32>
    %524 = tpu.matmul %522, %523, %cst_152 {dimension_numbers = #tpu.dot_dimension_numbers<[1], [0], [0], [1], [0, 0, 1, 1], [], []>} : vector<64x128xf32>, vector<128x32xf32>, vector<64x32xf32> -> vector<64x32xf32>
    %525 = tpu.iota {dimensions = array<i32: 1>} : vector<8x128xi32>
    %526 = arith.sitofp %525 : vector<8x128xi32> to vector<8x128xf32>
    %527 = vector.extract_strided_slice %1 {offsets = [56, 0], sizes = [8, 1], strides = [1, 1]} : vector<64x1xf32> to vector<8x1xf32>
    %528 = vector.broadcast %527 : vector<8x1xf32> to vector<8x128xf32>
    %529 = arith.cmpf oeq, %526, %528 : vector<8x128xf32>
    %530 = arith.extui %529 : vector<8x128xi1> to vector<8x128xi32>
    %531 = arith.sitofp %530 : vector<8x128xi32> to vector<8x128xf32>
    %c0_153 = arith.constant 0 : index
    %c0_154 = arith.constant 0 : index
    %532 = vector.load %arg4[%c0_153, %c0_154] : memref<128x32xf32, #tpu.memory_space<vmem>>, vector<128x32xf32>
    %cst_155 = arith.constant dense<0.000000e+00> : vector<8x32xf32>
    %533 = tpu.matmul %531, %532, %cst_155 {dimension_numbers = #tpu.dot_dimension_numbers<[1], [0], [0], [1], [0, 0, 1, 1], [], []>} : vector<8x128xf32>, vector<128x32xf32>, vector<8x32xf32> -> vector<8x32xf32>
    %c0_156 = arith.constant 0 : index
    %c0_157 = arith.constant 0 : index
    %534 = vector.load %arg11[%c0_156, %c0_157] : memref<32x128xf32, #tpu.memory_space<vmem>>, vector<32x128xf32>
    %cst_158 = arith.constant dense<0.000000e+00> : vector<8x128xf32>
    %535 = tpu.matmul %533, %534, %cst_158 {dimension_numbers = #tpu.dot_dimension_numbers<[1], [0], [0], [1], [0, 0, 1, 1], [], []>} : vector<8x32xf32>, vector<32x128xf32>, vector<8x128xf32> -> vector<8x128xf32>
    %c0_159 = arith.constant 0 : index
    %c0_160 = arith.constant 0 : index
    %536 = vector.load %arg13[%c0_159, %c0_160] : memref<32x128xf32, #tpu.memory_space<vmem>>, vector<32x128xf32>
    %cst_161 = arith.constant dense<0.000000e+00> : vector<8x128xf32>
    %537 = tpu.matmul %481, %536, %cst_161 {dimension_numbers = #tpu.dot_dimension_numbers<[1], [0], [0], [1], [0, 0, 1, 1], [], []>} : vector<8x32xf32>, vector<32x128xf32>, vector<8x128xf32> -> vector<8x128xf32>
    %538 = arith.addf %535, %537 : vector<8x128xf32>
    %c0_162 = arith.constant 0 : index
    %c0_163 = arith.constant 0 : index
    %539 = vector.load %arg15[%c0_162, %c0_163] : memref<1x128xf32, #tpu.memory_space<vmem>>, vector<1x128xf32>
    %540 = vector.broadcast %539 : vector<1x128xf32> to vector<8x128xf32>
    %541 = arith.addf %538, %540 : vector<8x128xf32>
    %542 = vector.extract_strided_slice %541 {offsets = [0, 0], sizes = [8, 32], strides = [1, 1]} : vector<8x128xf32> to vector<8x32xf32>
    %543 = arith.negf %542 : vector<8x32xf32>
    %544 = math.exp %543 : vector<8x32xf32>
    %cst_164 = arith.constant 1.000000e+00 : f32
    %545 = vector.broadcast %cst_164 : f32 to vector<8x32xf32>
    %546 = arith.addf %545, %544 : vector<8x32xf32>
    %547 = arith.divf %545, %546 : vector<8x32xf32>
    %548 = vector.extract_strided_slice %541 {offsets = [0, 32], sizes = [8, 32], strides = [1, 1]} : vector<8x128xf32> to vector<8x32xf32>
    %549 = arith.negf %548 : vector<8x32xf32>
    %550 = math.exp %549 : vector<8x32xf32>
    %cst_165 = arith.constant 1.000000e+00 : f32
    %551 = vector.broadcast %cst_165 : f32 to vector<8x32xf32>
    %552 = arith.addf %551, %550 : vector<8x32xf32>
    %553 = arith.divf %551, %552 : vector<8x32xf32>
    %554 = vector.extract_strided_slice %541 {offsets = [0, 64], sizes = [8, 32], strides = [1, 1]} : vector<8x128xf32> to vector<8x32xf32>
    %555 = math.tanh %554 : vector<8x32xf32>
    %556 = vector.extract_strided_slice %541 {offsets = [0, 96], sizes = [8, 32], strides = [1, 1]} : vector<8x128xf32> to vector<8x32xf32>
    %557 = arith.negf %556 : vector<8x32xf32>
    %558 = math.exp %557 : vector<8x32xf32>
    %cst_166 = arith.constant 1.000000e+00 : f32
    %559 = vector.broadcast %cst_166 : f32 to vector<8x32xf32>
    %560 = arith.addf %559, %558 : vector<8x32xf32>
    %561 = arith.divf %559, %560 : vector<8x32xf32>
    %562 = arith.mulf %553, %479 : vector<8x32xf32>
    %563 = arith.mulf %547, %555 : vector<8x32xf32>
    %564 = arith.addf %562, %563 : vector<8x32xf32>
    %565 = math.tanh %564 : vector<8x32xf32>
    %566 = arith.mulf %561, %565 : vector<8x32xf32>
    %c0_167 = arith.constant 0 : index
    %c0_168 = arith.constant 0 : index
    %567 = vector.load %arg12[%c0_167, %c0_168] : memref<32x128xf32, #tpu.memory_space<vmem>>, vector<32x128xf32>
    %cst_169 = arith.constant dense<0.000000e+00> : vector<8x128xf32>
    %568 = tpu.matmul %566, %567, %cst_169 {dimension_numbers = #tpu.dot_dimension_numbers<[1], [0], [0], [1], [0, 0, 1, 1], [], []>} : vector<8x32xf32>, vector<32x128xf32>, vector<8x128xf32> -> vector<8x128xf32>
    %c0_170 = arith.constant 0 : index
    %c0_171 = arith.constant 0 : index
    %569 = vector.load %arg14[%c0_170, %c0_171] : memref<32x128xf32, #tpu.memory_space<vmem>>, vector<32x128xf32>
    %cst_172 = arith.constant dense<0.000000e+00> : vector<8x128xf32>
    %570 = tpu.matmul %514, %569, %cst_172 {dimension_numbers = #tpu.dot_dimension_numbers<[1], [0], [0], [1], [0, 0, 1, 1], [], []>} : vector<8x32xf32>, vector<32x128xf32>, vector<8x128xf32> -> vector<8x128xf32>
    %571 = arith.addf %568, %570 : vector<8x128xf32>
    %c0_173 = arith.constant 0 : index
    %c0_174 = arith.constant 0 : index
    %572 = vector.load %arg16[%c0_173, %c0_174] : memref<1x128xf32, #tpu.memory_space<vmem>>, vector<1x128xf32>
    %573 = vector.broadcast %572 : vector<1x128xf32> to vector<8x128xf32>
    %574 = arith.addf %571, %573 : vector<8x128xf32>
    %575 = vector.extract_strided_slice %574 {offsets = [0, 0], sizes = [8, 32], strides = [1, 1]} : vector<8x128xf32> to vector<8x32xf32>
    %576 = arith.negf %575 : vector<8x32xf32>
    %577 = math.exp %576 : vector<8x32xf32>
    %cst_175 = arith.constant 1.000000e+00 : f32
    %578 = vector.broadcast %cst_175 : f32 to vector<8x32xf32>
    %579 = arith.addf %578, %577 : vector<8x32xf32>
    %580 = arith.divf %578, %579 : vector<8x32xf32>
    %581 = vector.extract_strided_slice %574 {offsets = [0, 32], sizes = [8, 32], strides = [1, 1]} : vector<8x128xf32> to vector<8x32xf32>
    %582 = arith.negf %581 : vector<8x32xf32>
    %583 = math.exp %582 : vector<8x32xf32>
    %cst_176 = arith.constant 1.000000e+00 : f32
    %584 = vector.broadcast %cst_176 : f32 to vector<8x32xf32>
    %585 = arith.addf %584, %583 : vector<8x32xf32>
    %586 = arith.divf %584, %585 : vector<8x32xf32>
    %587 = vector.extract_strided_slice %574 {offsets = [0, 64], sizes = [8, 32], strides = [1, 1]} : vector<8x128xf32> to vector<8x32xf32>
    %588 = math.tanh %587 : vector<8x32xf32>
    %589 = vector.extract_strided_slice %574 {offsets = [0, 96], sizes = [8, 32], strides = [1, 1]} : vector<8x128xf32> to vector<8x32xf32>
    %590 = arith.negf %589 : vector<8x32xf32>
    %591 = math.exp %590 : vector<8x32xf32>
    %cst_177 = arith.constant 1.000000e+00 : f32
    %592 = vector.broadcast %cst_177 : f32 to vector<8x32xf32>
    %593 = arith.addf %592, %591 : vector<8x32xf32>
    %594 = arith.divf %592, %593 : vector<8x32xf32>
    %595 = arith.mulf %586, %512 : vector<8x32xf32>
    %596 = arith.mulf %580, %588 : vector<8x32xf32>
    %597 = arith.addf %595, %596 : vector<8x32xf32>
    %598 = math.tanh %597 : vector<8x32xf32>
    %599 = arith.mulf %594, %598 : vector<8x32xf32>
    %c0_178 = arith.constant 0 : index
    %c0_179 = arith.constant 0 : index
    %600 = vector.load %arg17[%c0_178, %c0_179] : memref<32x128xf32, #tpu.memory_space<vmem>>, vector<32x128xf32>
    %cst_180 = arith.constant dense<0.000000e+00> : vector<8x128xf32>
    %601 = tpu.matmul %599, %600, %cst_180 {dimension_numbers = #tpu.dot_dimension_numbers<[1], [0], [0], [1], [0, 0, 1, 1], [], []>} : vector<8x32xf32>, vector<32x128xf32>, vector<8x128xf32> -> vector<8x128xf32>
    %c0_181 = arith.constant 0 : index
    %c0_182 = arith.constant 0 : index
    %602 = vector.load %arg18[%c0_181, %c0_182] : memref<1x128xf32, #tpu.memory_space<vmem>>, vector<1x128xf32>
    %603 = vector.broadcast %602 : vector<1x128xf32> to vector<8x128xf32>
    %604 = arith.addf %601, %603 : vector<8x128xf32>
    %c0_183 = arith.constant 0 : index
    %c0_184 = arith.constant 0 : index
    %c0_185 = arith.constant 0 : index
    %605 = vector.load %arg19[%c0_183, %c0_184, %c0_185] : memref<8x8x128xf32, #tpu.memory_space<vmem>>, vector<1x8x128xf32>
    %606 = vector.shape_cast %605 : vector<1x8x128xf32> to vector<8x128xf32>
    %607 = vector.shape_cast %604 : vector<8x128xf32> to vector<1x8x128xf32>
    tpu.vector_store %arg19[%c0_183, %c0_184, %c0_185], %607 {strides = array<i32>} : memref<8x8x128xf32, #tpu.memory_space<vmem>>, vector<1x8x128xf32>,
    %608 = vector.extract_strided_slice %524 {offsets = [0, 0], sizes = [8, 32], strides = [1, 1]} : vector<64x32xf32> to vector<8x32xf32>
    %c0_186 = arith.constant 0 : index
    %c0_187 = arith.constant 0 : index
    %609 = vector.load %arg20[%c0_186, %c0_187] : memref<8x32xf32, #tpu.memory_space<vmem>>, vector<8x32xf32>
    tpu.vector_store %arg20[%c0_186, %c0_187], %608 {strides = array<i32>} : memref<8x32xf32, #tpu.memory_space<vmem>>, vector<8x32xf32>,
    %c0_188 = arith.constant 0 : index
    %610 = memref.load %arg0[%c0_188] : memref<8xi32, #tpu.memory_space<smem>>
    %c0_i32 = arith.constant 0 : i32
    %611 = arith.cmpi eq, %610, %c0_i32 : i32
    %612 = arith.extui %611 : i1 to i32
    %c0_i32_189 = arith.constant 0 : i32
    %613 = arith.cmpi ne, %612, %c0_i32_189 : i32
    scf.if %613 {
      %cst_437 = arith.constant dense<0xFF800000> : vector<8xf32>
      %1175 = vector.multi_reduction <maximumf>, %604, %cst_437 [1] : vector<8x128xf32> to vector<8xf32>
      %1176 = vector.shape_cast %1175 : vector<8xf32> to vector<8x1xf32>
      %1177 = vector.broadcast %1176 : vector<8x1xf32> to vector<8x128xf32>
      %1178 = arith.cmpf oge, %604, %1177 : vector<8x128xf32>
      %cst_438 = arith.constant 1.280000e+02 : f32
      %1179 = vector.broadcast %cst_438 : f32 to vector<8x128xf32>
      %1180 = arith.select %1178, %526, %1179 : vector<8x128xi1>, vector<8x128xf32>
      %cst_439 = arith.constant dense<0x7F800000> : vector<8xf32>
      %1181 = vector.multi_reduction <minimumf>, %1180, %cst_439 [1] : vector<8x128xf32> to vector<8xf32>
      %1182 = vector.shape_cast %1181 : vector<8xf32> to vector<8x1xf32>
      %1183 = vector.broadcast %1182 : vector<8x1xf32> to vector<8x128xf32>
      %1184 = arith.cmpf oeq, %526, %1183 : vector<8x128xf32>
      %1185 = arith.extui %1184 : vector<8x128xi1> to vector<8x128xi32>
      %1186 = arith.sitofp %1185 : vector<8x128xi32> to vector<8x128xf32>
      %c0_440 = arith.constant 0 : index
      %c0_441 = arith.constant 0 : index
      %1187 = vector.load %arg4[%c0_440, %c0_441] : memref<128x32xf32, #tpu.memory_space<vmem>>, vector<128x32xf32>
      %cst_442 = arith.constant dense<0.000000e+00> : vector<8x32xf32>
      %1188 = tpu.matmul %1186, %1187, %cst_442 {dimension_numbers = #tpu.dot_dimension_numbers<[1], [0], [0], [1], [0, 0, 1, 1], [], []>} : vector<8x128xf32>, vector<128x32xf32>, vector<8x32xf32> -> vector<8x32xf32>
      %c0_443 = arith.constant 0 : index
      %c0_444 = arith.constant 0 : index
      %1189 = vector.load %arg20[%c0_443, %c0_444] : memref<8x32xf32, #tpu.memory_space<vmem>>, vector<8x32xf32>
      tpu.vector_store %arg20[%c0_443, %c0_444], %1188 {strides = array<i32>} : memref<8x32xf32, #tpu.memory_space<vmem>>, vector<8x32xf32>,
    } else {
    }
    %c0_190 = arith.constant 0 : index
    %c0_191 = arith.constant 0 : index
    %614 = vector.load %arg20[%c0_190, %c0_191] : memref<8x32xf32, #tpu.memory_space<vmem>>, vector<8x32xf32>
    %c0_192 = arith.constant 0 : index
    %c0_193 = arith.constant 0 : index
    %615 = vector.load %arg11[%c0_192, %c0_193] : memref<32x128xf32, #tpu.memory_space<vmem>>, vector<32x128xf32>
    %cst_194 = arith.constant dense<0.000000e+00> : vector<8x128xf32>
    %616 = tpu.matmul %614, %615, %cst_194 {dimension_numbers = #tpu.dot_dimension_numbers<[1], [0], [0], [1], [0, 0, 1, 1], [], []>} : vector<8x32xf32>, vector<32x128xf32>, vector<8x128xf32> -> vector<8x128xf32>
    %c0_195 = arith.constant 0 : index
    %c0_196 = arith.constant 0 : index
    %617 = vector.load %arg13[%c0_195, %c0_196] : memref<32x128xf32, #tpu.memory_space<vmem>>, vector<32x128xf32>
    %cst_197 = arith.constant dense<0.000000e+00> : vector<8x128xf32>
    %618 = tpu.matmul %566, %617, %cst_197 {dimension_numbers = #tpu.dot_dimension_numbers<[1], [0], [0], [1], [0, 0, 1, 1], [], []>} : vector<8x32xf32>, vector<32x128xf32>, vector<8x128xf32> -> vector<8x128xf32>
    %619 = arith.addf %616, %618 : vector<8x128xf32>
    %c0_198 = arith.constant 0 : index
    %c0_199 = arith.constant 0 : index
    %620 = vector.load %arg15[%c0_198, %c0_199] : memref<1x128xf32, #tpu.memory_space<vmem>>, vector<1x128xf32>
    %621 = vector.broadcast %620 : vector<1x128xf32> to vector<8x128xf32>
    %622 = arith.addf %619, %621 : vector<8x128xf32>
    %623 = vector.extract_strided_slice %622 {offsets = [0, 0], sizes = [8, 32], strides = [1, 1]} : vector<8x128xf32> to vector<8x32xf32>
    %624 = arith.negf %623 : vector<8x32xf32>
    %625 = math.exp %624 : vector<8x32xf32>
    %cst_200 = arith.constant 1.000000e+00 : f32
    %626 = vector.broadcast %cst_200 : f32 to vector<8x32xf32>
    %627 = arith.addf %626, %625 : vector<8x32xf32>
    %628 = arith.divf %626, %627 : vector<8x32xf32>
    %629 = vector.extract_strided_slice %622 {offsets = [0, 32], sizes = [8, 32], strides = [1, 1]} : vector<8x128xf32> to vector<8x32xf32>
    %630 = arith.negf %629 : vector<8x32xf32>
    %631 = math.exp %630 : vector<8x32xf32>
    %cst_201 = arith.constant 1.000000e+00 : f32
    %632 = vector.broadcast %cst_201 : f32 to vector<8x32xf32>
    %633 = arith.addf %632, %631 : vector<8x32xf32>
    %634 = arith.divf %632, %633 : vector<8x32xf32>
    %635 = vector.extract_strided_slice %622 {offsets = [0, 64], sizes = [8, 32], strides = [1, 1]} : vector<8x128xf32> to vector<8x32xf32>
    %636 = math.tanh %635 : vector<8x32xf32>
    %637 = vector.extract_strided_slice %622 {offsets = [0, 96], sizes = [8, 32], strides = [1, 1]} : vector<8x128xf32> to vector<8x32xf32>
    %638 = arith.negf %637 : vector<8x32xf32>
    %639 = math.exp %638 : vector<8x32xf32>
    %cst_202 = arith.constant 1.000000e+00 : f32
    %640 = vector.broadcast %cst_202 : f32 to vector<8x32xf32>
    %641 = arith.addf %640, %639 : vector<8x32xf32>
    %642 = arith.divf %640, %641 : vector<8x32xf32>
    %643 = arith.mulf %634, %564 : vector<8x32xf32>
    %644 = arith.mulf %628, %636 : vector<8x32xf32>
    %645 = arith.addf %643, %644 : vector<8x32xf32>
    %646 = math.tanh %645 : vector<8x32xf32>
    %647 = arith.mulf %642, %646 : vector<8x32xf32>
    %c0_203 = arith.constant 0 : index
    %c0_204 = arith.constant 0 : index
    %648 = vector.load %arg12[%c0_203, %c0_204] : memref<32x128xf32, #tpu.memory_space<vmem>>, vector<32x128xf32>
    %cst_205 = arith.constant dense<0.000000e+00> : vector<8x128xf32>
    %649 = tpu.matmul %647, %648, %cst_205 {dimension_numbers = #tpu.dot_dimension_numbers<[1], [0], [0], [1], [0, 0, 1, 1], [], []>} : vector<8x32xf32>, vector<32x128xf32>, vector<8x128xf32> -> vector<8x128xf32>
    %c0_206 = arith.constant 0 : index
    %c0_207 = arith.constant 0 : index
    %650 = vector.load %arg14[%c0_206, %c0_207] : memref<32x128xf32, #tpu.memory_space<vmem>>, vector<32x128xf32>
    %cst_208 = arith.constant dense<0.000000e+00> : vector<8x128xf32>
    %651 = tpu.matmul %599, %650, %cst_208 {dimension_numbers = #tpu.dot_dimension_numbers<[1], [0], [0], [1], [0, 0, 1, 1], [], []>} : vector<8x32xf32>, vector<32x128xf32>, vector<8x128xf32> -> vector<8x128xf32>
    %652 = arith.addf %649, %651 : vector<8x128xf32>
    %c0_209 = arith.constant 0 : index
    %c0_210 = arith.constant 0 : index
    %653 = vector.load %arg16[%c0_209, %c0_210] : memref<1x128xf32, #tpu.memory_space<vmem>>, vector<1x128xf32>
    %654 = vector.broadcast %653 : vector<1x128xf32> to vector<8x128xf32>
    %655 = arith.addf %652, %654 : vector<8x128xf32>
    %656 = vector.extract_strided_slice %655 {offsets = [0, 0], sizes = [8, 32], strides = [1, 1]} : vector<8x128xf32> to vector<8x32xf32>
    %657 = arith.negf %656 : vector<8x32xf32>
    %658 = math.exp %657 : vector<8x32xf32>
    %cst_211 = arith.constant 1.000000e+00 : f32
    %659 = vector.broadcast %cst_211 : f32 to vector<8x32xf32>
    %660 = arith.addf %659, %658 : vector<8x32xf32>
    %661 = arith.divf %659, %660 : vector<8x32xf32>
    %662 = vector.extract_strided_slice %655 {offsets = [0, 32], sizes = [8, 32], strides = [1, 1]} : vector<8x128xf32> to vector<8x32xf32>
    %663 = arith.negf %662 : vector<8x32xf32>
    %664 = math.exp %663 : vector<8x32xf32>
    %cst_212 = arith.constant 1.000000e+00 : f32
    %665 = vector.broadcast %cst_212 : f32 to vector<8x32xf32>
    %666 = arith.addf %665, %664 : vector<8x32xf32>
    %667 = arith.divf %665, %666 : vector<8x32xf32>
    %668 = vector.extract_strided_slice %655 {offsets = [0, 64], sizes = [8, 32], strides = [1, 1]} : vector<8x128xf32> to vector<8x32xf32>
    %669 = math.tanh %668 : vector<8x32xf32>
    %670 = vector.extract_strided_slice %655 {offsets = [0, 96], sizes = [8, 32], strides = [1, 1]} : vector<8x128xf32> to vector<8x32xf32>
    %671 = arith.negf %670 : vector<8x32xf32>
    %672 = math.exp %671 : vector<8x32xf32>
    %cst_213 = arith.constant 1.000000e+00 : f32
    %673 = vector.broadcast %cst_213 : f32 to vector<8x32xf32>
    %674 = arith.addf %673, %672 : vector<8x32xf32>
    %675 = arith.divf %673, %674 : vector<8x32xf32>
    %676 = arith.mulf %667, %597 : vector<8x32xf32>
    %677 = arith.mulf %661, %669 : vector<8x32xf32>
    %678 = arith.addf %676, %677 : vector<8x32xf32>
    %679 = math.tanh %678 : vector<8x32xf32>
    %680 = arith.mulf %675, %679 : vector<8x32xf32>
    %c0_214 = arith.constant 0 : index
    %c0_215 = arith.constant 0 : index
    %681 = vector.load %arg17[%c0_214, %c0_215] : memref<32x128xf32, #tpu.memory_space<vmem>>, vector<32x128xf32>
    %cst_216 = arith.constant dense<0.000000e+00> : vector<8x128xf32>
    %682 = tpu.matmul %680, %681, %cst_216 {dimension_numbers = #tpu.dot_dimension_numbers<[1], [0], [0], [1], [0, 0, 1, 1], [], []>} : vector<8x32xf32>, vector<32x128xf32>, vector<8x128xf32> -> vector<8x128xf32>
    %c0_217 = arith.constant 0 : index
    %c0_218 = arith.constant 0 : index
    %683 = vector.load %arg18[%c0_217, %c0_218] : memref<1x128xf32, #tpu.memory_space<vmem>>, vector<1x128xf32>
    %684 = vector.broadcast %683 : vector<1x128xf32> to vector<8x128xf32>
    %685 = arith.addf %682, %684 : vector<8x128xf32>
    %c1 = arith.constant 1 : index
    %c0_219 = arith.constant 0 : index
    %c0_220 = arith.constant 0 : index
    %686 = vector.load %arg19[%c1, %c0_219, %c0_220] : memref<8x8x128xf32, #tpu.memory_space<vmem>>, vector<1x8x128xf32>
    %687 = vector.shape_cast %686 : vector<1x8x128xf32> to vector<8x128xf32>
    %688 = vector.shape_cast %685 : vector<8x128xf32> to vector<1x8x128xf32>
    tpu.vector_store %arg19[%c1, %c0_219, %c0_220], %688 {strides = array<i32>} : memref<8x8x128xf32, #tpu.memory_space<vmem>>, vector<1x8x128xf32>,
    %689 = vector.extract_strided_slice %524 {offsets = [8, 0], sizes = [8, 32], strides = [1, 1]} : vector<64x32xf32> to vector<8x32xf32>
    %c0_221 = arith.constant 0 : index
    %c0_222 = arith.constant 0 : index
    %690 = vector.load %arg20[%c0_221, %c0_222] : memref<8x32xf32, #tpu.memory_space<vmem>>, vector<8x32xf32>
    tpu.vector_store %arg20[%c0_221, %c0_222], %689 {strides = array<i32>} : memref<8x32xf32, #tpu.memory_space<vmem>>, vector<8x32xf32>,
    %c1_223 = arith.constant 1 : index
    %691 = memref.load %arg0[%c1_223] : memref<8xi32, #tpu.memory_space<smem>>
    %c0_i32_224 = arith.constant 0 : i32
    %692 = arith.cmpi eq, %691, %c0_i32_224 : i32
    %693 = arith.extui %692 : i1 to i32
    %c0_i32_225 = arith.constant 0 : i32
    %694 = arith.cmpi ne, %693, %c0_i32_225 : i32
    scf.if %694 {
      %cst_437 = arith.constant dense<0xFF800000> : vector<8xf32>
      %1175 = vector.multi_reduction <maximumf>, %685, %cst_437 [1] : vector<8x128xf32> to vector<8xf32>
      %1176 = vector.shape_cast %1175 : vector<8xf32> to vector<8x1xf32>
      %1177 = vector.broadcast %1176 : vector<8x1xf32> to vector<8x128xf32>
      %1178 = arith.cmpf oge, %685, %1177 : vector<8x128xf32>
      %cst_438 = arith.constant 1.280000e+02 : f32
      %1179 = vector.broadcast %cst_438 : f32 to vector<8x128xf32>
      %1180 = arith.select %1178, %526, %1179 : vector<8x128xi1>, vector<8x128xf32>
      %cst_439 = arith.constant dense<0x7F800000> : vector<8xf32>
      %1181 = vector.multi_reduction <minimumf>, %1180, %cst_439 [1] : vector<8x128xf32> to vector<8xf32>
      %1182 = vector.shape_cast %1181 : vector<8xf32> to vector<8x1xf32>
      %1183 = vector.broadcast %1182 : vector<8x1xf32> to vector<8x128xf32>
      %1184 = arith.cmpf oeq, %526, %1183 : vector<8x128xf32>
      %1185 = arith.extui %1184 : vector<8x128xi1> to vector<8x128xi32>
      %1186 = arith.sitofp %1185 : vector<8x128xi32> to vector<8x128xf32>
      %c0_440 = arith.constant 0 : index
      %c0_441 = arith.constant 0 : index
      %1187 = vector.load %arg4[%c0_440, %c0_441] : memref<128x32xf32, #tpu.memory_space<vmem>>, vector<128x32xf32>
      %cst_442 = arith.constant dense<0.000000e+00> : vector<8x32xf32>
      %1188 = tpu.matmul %1186, %1187, %cst_442 {dimension_numbers = #tpu.dot_dimension_numbers<[1], [0], [0], [1], [0, 0, 1, 1], [], []>} : vector<8x128xf32>, vector<128x32xf32>, vector<8x32xf32> -> vector<8x32xf32>
      %c0_443 = arith.constant 0 : index
      %c0_444 = arith.constant 0 : index
      %1189 = vector.load %arg20[%c0_443, %c0_444] : memref<8x32xf32, #tpu.memory_space<vmem>>, vector<8x32xf32>
      tpu.vector_store %arg20[%c0_443, %c0_444], %1188 {strides = array<i32>} : memref<8x32xf32, #tpu.memory_space<vmem>>, vector<8x32xf32>,
    } else {
    }
    %c0_226 = arith.constant 0 : index
    %c0_227 = arith.constant 0 : index
    %695 = vector.load %arg20[%c0_226, %c0_227] : memref<8x32xf32, #tpu.memory_space<vmem>>, vector<8x32xf32>
    %c0_228 = arith.constant 0 : index
    %c0_229 = arith.constant 0 : index
    %696 = vector.load %arg11[%c0_228, %c0_229] : memref<32x128xf32, #tpu.memory_space<vmem>>, vector<32x128xf32>
    %cst_230 = arith.constant dense<0.000000e+00> : vector<8x128xf32>
    %697 = tpu.matmul %695, %696, %cst_230 {dimension_numbers = #tpu.dot_dimension_numbers<[1], [0], [0], [1], [0, 0, 1, 1], [], []>} : vector<8x32xf32>, vector<32x128xf32>, vector<8x128xf32> -> vector<8x128xf32>
    %c0_231 = arith.constant 0 : index
    %c0_232 = arith.constant 0 : index
    %698 = vector.load %arg13[%c0_231, %c0_232] : memref<32x128xf32, #tpu.memory_space<vmem>>, vector<32x128xf32>
    %cst_233 = arith.constant dense<0.000000e+00> : vector<8x128xf32>
    %699 = tpu.matmul %647, %698, %cst_233 {dimension_numbers = #tpu.dot_dimension_numbers<[1], [0], [0], [1], [0, 0, 1, 1], [], []>} : vector<8x32xf32>, vector<32x128xf32>, vector<8x128xf32> -> vector<8x128xf32>
    %700 = arith.addf %697, %699 : vector<8x128xf32>
    %c0_234 = arith.constant 0 : index
    %c0_235 = arith.constant 0 : index
    %701 = vector.load %arg15[%c0_234, %c0_235] : memref<1x128xf32, #tpu.memory_space<vmem>>, vector<1x128xf32>
    %702 = vector.broadcast %701 : vector<1x128xf32> to vector<8x128xf32>
    %703 = arith.addf %700, %702 : vector<8x128xf32>
    %704 = vector.extract_strided_slice %703 {offsets = [0, 0], sizes = [8, 32], strides = [1, 1]} : vector<8x128xf32> to vector<8x32xf32>
    %705 = arith.negf %704 : vector<8x32xf32>
    %706 = math.exp %705 : vector<8x32xf32>
    %cst_236 = arith.constant 1.000000e+00 : f32
    %707 = vector.broadcast %cst_236 : f32 to vector<8x32xf32>
    %708 = arith.addf %707, %706 : vector<8x32xf32>
    %709 = arith.divf %707, %708 : vector<8x32xf32>
    %710 = vector.extract_strided_slice %703 {offsets = [0, 32], sizes = [8, 32], strides = [1, 1]} : vector<8x128xf32> to vector<8x32xf32>
    %711 = arith.negf %710 : vector<8x32xf32>
    %712 = math.exp %711 : vector<8x32xf32>
    %cst_237 = arith.constant 1.000000e+00 : f32
    %713 = vector.broadcast %cst_237 : f32 to vector<8x32xf32>
    %714 = arith.addf %713, %712 : vector<8x32xf32>
    %715 = arith.divf %713, %714 : vector<8x32xf32>
    %716 = vector.extract_strided_slice %703 {offsets = [0, 64], sizes = [8, 32], strides = [1, 1]} : vector<8x128xf32> to vector<8x32xf32>
    %717 = math.tanh %716 : vector<8x32xf32>
    %718 = vector.extract_strided_slice %703 {offsets = [0, 96], sizes = [8, 32], strides = [1, 1]} : vector<8x128xf32> to vector<8x32xf32>
    %719 = arith.negf %718 : vector<8x32xf32>
    %720 = math.exp %719 : vector<8x32xf32>
    %cst_238 = arith.constant 1.000000e+00 : f32
    %721 = vector.broadcast %cst_238 : f32 to vector<8x32xf32>
    %722 = arith.addf %721, %720 : vector<8x32xf32>
    %723 = arith.divf %721, %722 : vector<8x32xf32>
    %724 = arith.mulf %715, %645 : vector<8x32xf32>
    %725 = arith.mulf %709, %717 : vector<8x32xf32>
    %726 = arith.addf %724, %725 : vector<8x32xf32>
    %727 = math.tanh %726 : vector<8x32xf32>
    %728 = arith.mulf %723, %727 : vector<8x32xf32>
    %c0_239 = arith.constant 0 : index
    %c0_240 = arith.constant 0 : index
    %729 = vector.load %arg12[%c0_239, %c0_240] : memref<32x128xf32, #tpu.memory_space<vmem>>, vector<32x128xf32>
    %cst_241 = arith.constant dense<0.000000e+00> : vector<8x128xf32>
    %730 = tpu.matmul %728, %729, %cst_241 {dimension_numbers = #tpu.dot_dimension_numbers<[1], [0], [0], [1], [0, 0, 1, 1], [], []>} : vector<8x32xf32>, vector<32x128xf32>, vector<8x128xf32> -> vector<8x128xf32>
    %c0_242 = arith.constant 0 : index
    %c0_243 = arith.constant 0 : index
    %731 = vector.load %arg14[%c0_242, %c0_243] : memref<32x128xf32, #tpu.memory_space<vmem>>, vector<32x128xf32>
    %cst_244 = arith.constant dense<0.000000e+00> : vector<8x128xf32>
    %732 = tpu.matmul %680, %731, %cst_244 {dimension_numbers = #tpu.dot_dimension_numbers<[1], [0], [0], [1], [0, 0, 1, 1], [], []>} : vector<8x32xf32>, vector<32x128xf32>, vector<8x128xf32> -> vector<8x128xf32>
    %733 = arith.addf %730, %732 : vector<8x128xf32>
    %c0_245 = arith.constant 0 : index
    %c0_246 = arith.constant 0 : index
    %734 = vector.load %arg16[%c0_245, %c0_246] : memref<1x128xf32, #tpu.memory_space<vmem>>, vector<1x128xf32>
    %735 = vector.broadcast %734 : vector<1x128xf32> to vector<8x128xf32>
    %736 = arith.addf %733, %735 : vector<8x128xf32>
    %737 = vector.extract_strided_slice %736 {offsets = [0, 0], sizes = [8, 32], strides = [1, 1]} : vector<8x128xf32> to vector<8x32xf32>
    %738 = arith.negf %737 : vector<8x32xf32>
    %739 = math.exp %738 : vector<8x32xf32>
    %cst_247 = arith.constant 1.000000e+00 : f32
    %740 = vector.broadcast %cst_247 : f32 to vector<8x32xf32>
    %741 = arith.addf %740, %739 : vector<8x32xf32>
    %742 = arith.divf %740, %741 : vector<8x32xf32>
    %743 = vector.extract_strided_slice %736 {offsets = [0, 32], sizes = [8, 32], strides = [1, 1]} : vector<8x128xf32> to vector<8x32xf32>
    %744 = arith.negf %743 : vector<8x32xf32>
    %745 = math.exp %744 : vector<8x32xf32>
    %cst_248 = arith.constant 1.000000e+00 : f32
    %746 = vector.broadcast %cst_248 : f32 to vector<8x32xf32>
    %747 = arith.addf %746, %745 : vector<8x32xf32>
    %748 = arith.divf %746, %747 : vector<8x32xf32>
    %749 = vector.extract_strided_slice %736 {offsets = [0, 64], sizes = [8, 32], strides = [1, 1]} : vector<8x128xf32> to vector<8x32xf32>
    %750 = math.tanh %749 : vector<8x32xf32>
    %751 = vector.extract_strided_slice %736 {offsets = [0, 96], sizes = [8, 32], strides = [1, 1]} : vector<8x128xf32> to vector<8x32xf32>
    %752 = arith.negf %751 : vector<8x32xf32>
    %753 = math.exp %752 : vector<8x32xf32>
    %cst_249 = arith.constant 1.000000e+00 : f32
    %754 = vector.broadcast %cst_249 : f32 to vector<8x32xf32>
    %755 = arith.addf %754, %753 : vector<8x32xf32>
    %756 = arith.divf %754, %755 : vector<8x32xf32>
    %757 = arith.mulf %748, %678 : vector<8x32xf32>
    %758 = arith.mulf %742, %750 : vector<8x32xf32>
    %759 = arith.addf %757, %758 : vector<8x32xf32>
    %760 = math.tanh %759 : vector<8x32xf32>
    %761 = arith.mulf %756, %760 : vector<8x32xf32>
    %c0_250 = arith.constant 0 : index
    %c0_251 = arith.constant 0 : index
    %762 = vector.load %arg17[%c0_250, %c0_251] : memref<32x128xf32, #tpu.memory_space<vmem>>, vector<32x128xf32>
    %cst_252 = arith.constant dense<0.000000e+00> : vector<8x128xf32>
    %763 = tpu.matmul %761, %762, %cst_252 {dimension_numbers = #tpu.dot_dimension_numbers<[1], [0], [0], [1], [0, 0, 1, 1], [], []>} : vector<8x32xf32>, vector<32x128xf32>, vector<8x128xf32> -> vector<8x128xf32>
    %c0_253 = arith.constant 0 : index
    %c0_254 = arith.constant 0 : index
    %764 = vector.load %arg18[%c0_253, %c0_254] : memref<1x128xf32, #tpu.memory_space<vmem>>, vector<1x128xf32>
    %765 = vector.broadcast %764 : vector<1x128xf32> to vector<8x128xf32>
    %766 = arith.addf %763, %765 : vector<8x128xf32>
    %c2 = arith.constant 2 : index
    %c0_255 = arith.constant 0 : index
    %c0_256 = arith.constant 0 : index
    %767 = vector.load %arg19[%c2, %c0_255, %c0_256] : memref<8x8x128xf32, #tpu.memory_space<vmem>>, vector<1x8x128xf32>
    %768 = vector.shape_cast %767 : vector<1x8x128xf32> to vector<8x128xf32>
    %769 = vector.shape_cast %766 : vector<8x128xf32> to vector<1x8x128xf32>
    tpu.vector_store %arg19[%c2, %c0_255, %c0_256], %769 {strides = array<i32>} : memref<8x8x128xf32, #tpu.memory_space<vmem>>, vector<1x8x128xf32>,
    %770 = vector.extract_strided_slice %524 {offsets = [16, 0], sizes = [8, 32], strides = [1, 1]} : vector<64x32xf32> to vector<8x32xf32>
    %c0_257 = arith.constant 0 : index
    %c0_258 = arith.constant 0 : index
    %771 = vector.load %arg20[%c0_257, %c0_258] : memref<8x32xf32, #tpu.memory_space<vmem>>, vector<8x32xf32>
    tpu.vector_store %arg20[%c0_257, %c0_258], %770 {strides = array<i32>} : memref<8x32xf32, #tpu.memory_space<vmem>>, vector<8x32xf32>,
    %c2_259 = arith.constant 2 : index
    %772 = memref.load %arg0[%c2_259] : memref<8xi32, #tpu.memory_space<smem>>
    %c0_i32_260 = arith.constant 0 : i32
    %773 = arith.cmpi eq, %772, %c0_i32_260 : i32
    %774 = arith.extui %773 : i1 to i32
    %c0_i32_261 = arith.constant 0 : i32
    %775 = arith.cmpi ne, %774, %c0_i32_261 : i32
    scf.if %775 {
      %cst_437 = arith.constant dense<0xFF800000> : vector<8xf32>
      %1175 = vector.multi_reduction <maximumf>, %766, %cst_437 [1] : vector<8x128xf32> to vector<8xf32>
      %1176 = vector.shape_cast %1175 : vector<8xf32> to vector<8x1xf32>
      %1177 = vector.broadcast %1176 : vector<8x1xf32> to vector<8x128xf32>
      %1178 = arith.cmpf oge, %766, %1177 : vector<8x128xf32>
      %cst_438 = arith.constant 1.280000e+02 : f32
      %1179 = vector.broadcast %cst_438 : f32 to vector<8x128xf32>
      %1180 = arith.select %1178, %526, %1179 : vector<8x128xi1>, vector<8x128xf32>
      %cst_439 = arith.constant dense<0x7F800000> : vector<8xf32>
      %1181 = vector.multi_reduction <minimumf>, %1180, %cst_439 [1] : vector<8x128xf32> to vector<8xf32>
      %1182 = vector.shape_cast %1181 : vector<8xf32> to vector<8x1xf32>
      %1183 = vector.broadcast %1182 : vector<8x1xf32> to vector<8x128xf32>
      %1184 = arith.cmpf oeq, %526, %1183 : vector<8x128xf32>
      %1185 = arith.extui %1184 : vector<8x128xi1> to vector<8x128xi32>
      %1186 = arith.sitofp %1185 : vector<8x128xi32> to vector<8x128xf32>
      %c0_440 = arith.constant 0 : index
      %c0_441 = arith.constant 0 : index
      %1187 = vector.load %arg4[%c0_440, %c0_441] : memref<128x32xf32, #tpu.memory_space<vmem>>, vector<128x32xf32>
      %cst_442 = arith.constant dense<0.000000e+00> : vector<8x32xf32>
      %1188 = tpu.matmul %1186, %1187, %cst_442 {dimension_numbers = #tpu.dot_dimension_numbers<[1], [0], [0], [1], [0, 0, 1, 1], [], []>} : vector<8x128xf32>, vector<128x32xf32>, vector<8x32xf32> -> vector<8x32xf32>
      %c0_443 = arith.constant 0 : index
      %c0_444 = arith.constant 0 : index
      %1189 = vector.load %arg20[%c0_443, %c0_444] : memref<8x32xf32, #tpu.memory_space<vmem>>, vector<8x32xf32>
      tpu.vector_store %arg20[%c0_443, %c0_444], %1188 {strides = array<i32>} : memref<8x32xf32, #tpu.memory_space<vmem>>, vector<8x32xf32>,
    } else {
    }
    %c0_262 = arith.constant 0 : index
    %c0_263 = arith.constant 0 : index
    %776 = vector.load %arg20[%c0_262, %c0_263] : memref<8x32xf32, #tpu.memory_space<vmem>>, vector<8x32xf32>
    %c0_264 = arith.constant 0 : index
    %c0_265 = arith.constant 0 : index
    %777 = vector.load %arg11[%c0_264, %c0_265] : memref<32x128xf32, #tpu.memory_space<vmem>>, vector<32x128xf32>
    %cst_266 = arith.constant dense<0.000000e+00> : vector<8x128xf32>
    %778 = tpu.matmul %776, %777, %cst_266 {dimension_numbers = #tpu.dot_dimension_numbers<[1], [0], [0], [1], [0, 0, 1, 1], [], []>} : vector<8x32xf32>, vector<32x128xf32>, vector<8x128xf32> -> vector<8x128xf32>
    %c0_267 = arith.constant 0 : index
    %c0_268 = arith.constant 0 : index
    %779 = vector.load %arg13[%c0_267, %c0_268] : memref<32x128xf32, #tpu.memory_space<vmem>>, vector<32x128xf32>
    %cst_269 = arith.constant dense<0.000000e+00> : vector<8x128xf32>
    %780 = tpu.matmul %728, %779, %cst_269 {dimension_numbers = #tpu.dot_dimension_numbers<[1], [0], [0], [1], [0, 0, 1, 1], [], []>} : vector<8x32xf32>, vector<32x128xf32>, vector<8x128xf32> -> vector<8x128xf32>
    %781 = arith.addf %778, %780 : vector<8x128xf32>
    %c0_270 = arith.constant 0 : index
    %c0_271 = arith.constant 0 : index
    %782 = vector.load %arg15[%c0_270, %c0_271] : memref<1x128xf32, #tpu.memory_space<vmem>>, vector<1x128xf32>
    %783 = vector.broadcast %782 : vector<1x128xf32> to vector<8x128xf32>
    %784 = arith.addf %781, %783 : vector<8x128xf32>
    %785 = vector.extract_strided_slice %784 {offsets = [0, 0], sizes = [8, 32], strides = [1, 1]} : vector<8x128xf32> to vector<8x32xf32>
    %786 = arith.negf %785 : vector<8x32xf32>
    %787 = math.exp %786 : vector<8x32xf32>
    %cst_272 = arith.constant 1.000000e+00 : f32
    %788 = vector.broadcast %cst_272 : f32 to vector<8x32xf32>
    %789 = arith.addf %788, %787 : vector<8x32xf32>
    %790 = arith.divf %788, %789 : vector<8x32xf32>
    %791 = vector.extract_strided_slice %784 {offsets = [0, 32], sizes = [8, 32], strides = [1, 1]} : vector<8x128xf32> to vector<8x32xf32>
    %792 = arith.negf %791 : vector<8x32xf32>
    %793 = math.exp %792 : vector<8x32xf32>
    %cst_273 = arith.constant 1.000000e+00 : f32
    %794 = vector.broadcast %cst_273 : f32 to vector<8x32xf32>
    %795 = arith.addf %794, %793 : vector<8x32xf32>
    %796 = arith.divf %794, %795 : vector<8x32xf32>
    %797 = vector.extract_strided_slice %784 {offsets = [0, 64], sizes = [8, 32], strides = [1, 1]} : vector<8x128xf32> to vector<8x32xf32>
    %798 = math.tanh %797 : vector<8x32xf32>
    %799 = vector.extract_strided_slice %784 {offsets = [0, 96], sizes = [8, 32], strides = [1, 1]} : vector<8x128xf32> to vector<8x32xf32>
    %800 = arith.negf %799 : vector<8x32xf32>
    %801 = math.exp %800 : vector<8x32xf32>
    %cst_274 = arith.constant 1.000000e+00 : f32
    %802 = vector.broadcast %cst_274 : f32 to vector<8x32xf32>
    %803 = arith.addf %802, %801 : vector<8x32xf32>
    %804 = arith.divf %802, %803 : vector<8x32xf32>
    %805 = arith.mulf %796, %726 : vector<8x32xf32>
    %806 = arith.mulf %790, %798 : vector<8x32xf32>
    %807 = arith.addf %805, %806 : vector<8x32xf32>
    %808 = math.tanh %807 : vector<8x32xf32>
    %809 = arith.mulf %804, %808 : vector<8x32xf32>
    %c0_275 = arith.constant 0 : index
    %c0_276 = arith.constant 0 : index
    %810 = vector.load %arg12[%c0_275, %c0_276] : memref<32x128xf32, #tpu.memory_space<vmem>>, vector<32x128xf32>
    %cst_277 = arith.constant dense<0.000000e+00> : vector<8x128xf32>
    %811 = tpu.matmul %809, %810, %cst_277 {dimension_numbers = #tpu.dot_dimension_numbers<[1], [0], [0], [1], [0, 0, 1, 1], [], []>} : vector<8x32xf32>, vector<32x128xf32>, vector<8x128xf32> -> vector<8x128xf32>
    %c0_278 = arith.constant 0 : index
    %c0_279 = arith.constant 0 : index
    %812 = vector.load %arg14[%c0_278, %c0_279] : memref<32x128xf32, #tpu.memory_space<vmem>>, vector<32x128xf32>
    %cst_280 = arith.constant dense<0.000000e+00> : vector<8x128xf32>
    %813 = tpu.matmul %761, %812, %cst_280 {dimension_numbers = #tpu.dot_dimension_numbers<[1], [0], [0], [1], [0, 0, 1, 1], [], []>} : vector<8x32xf32>, vector<32x128xf32>, vector<8x128xf32> -> vector<8x128xf32>
    %814 = arith.addf %811, %813 : vector<8x128xf32>
    %c0_281 = arith.constant 0 : index
    %c0_282 = arith.constant 0 : index
    %815 = vector.load %arg16[%c0_281, %c0_282] : memref<1x128xf32, #tpu.memory_space<vmem>>, vector<1x128xf32>
    %816 = vector.broadcast %815 : vector<1x128xf32> to vector<8x128xf32>
    %817 = arith.addf %814, %816 : vector<8x128xf32>
    %818 = vector.extract_strided_slice %817 {offsets = [0, 0], sizes = [8, 32], strides = [1, 1]} : vector<8x128xf32> to vector<8x32xf32>
    %819 = arith.negf %818 : vector<8x32xf32>
    %820 = math.exp %819 : vector<8x32xf32>
    %cst_283 = arith.constant 1.000000e+00 : f32
    %821 = vector.broadcast %cst_283 : f32 to vector<8x32xf32>
    %822 = arith.addf %821, %820 : vector<8x32xf32>
    %823 = arith.divf %821, %822 : vector<8x32xf32>
    %824 = vector.extract_strided_slice %817 {offsets = [0, 32], sizes = [8, 32], strides = [1, 1]} : vector<8x128xf32> to vector<8x32xf32>
    %825 = arith.negf %824 : vector<8x32xf32>
    %826 = math.exp %825 : vector<8x32xf32>
    %cst_284 = arith.constant 1.000000e+00 : f32
    %827 = vector.broadcast %cst_284 : f32 to vector<8x32xf32>
    %828 = arith.addf %827, %826 : vector<8x32xf32>
    %829 = arith.divf %827, %828 : vector<8x32xf32>
    %830 = vector.extract_strided_slice %817 {offsets = [0, 64], sizes = [8, 32], strides = [1, 1]} : vector<8x128xf32> to vector<8x32xf32>
    %831 = math.tanh %830 : vector<8x32xf32>
    %832 = vector.extract_strided_slice %817 {offsets = [0, 96], sizes = [8, 32], strides = [1, 1]} : vector<8x128xf32> to vector<8x32xf32>
    %833 = arith.negf %832 : vector<8x32xf32>
    %834 = math.exp %833 : vector<8x32xf32>
    %cst_285 = arith.constant 1.000000e+00 : f32
    %835 = vector.broadcast %cst_285 : f32 to vector<8x32xf32>
    %836 = arith.addf %835, %834 : vector<8x32xf32>
    %837 = arith.divf %835, %836 : vector<8x32xf32>
    %838 = arith.mulf %829, %759 : vector<8x32xf32>
    %839 = arith.mulf %823, %831 : vector<8x32xf32>
    %840 = arith.addf %838, %839 : vector<8x32xf32>
    %841 = math.tanh %840 : vector<8x32xf32>
    %842 = arith.mulf %837, %841 : vector<8x32xf32>
    %c0_286 = arith.constant 0 : index
    %c0_287 = arith.constant 0 : index
    %843 = vector.load %arg17[%c0_286, %c0_287] : memref<32x128xf32, #tpu.memory_space<vmem>>, vector<32x128xf32>
    %cst_288 = arith.constant dense<0.000000e+00> : vector<8x128xf32>
    %844 = tpu.matmul %842, %843, %cst_288 {dimension_numbers = #tpu.dot_dimension_numbers<[1], [0], [0], [1], [0, 0, 1, 1], [], []>} : vector<8x32xf32>, vector<32x128xf32>, vector<8x128xf32> -> vector<8x128xf32>
    %c0_289 = arith.constant 0 : index
    %c0_290 = arith.constant 0 : index
    %845 = vector.load %arg18[%c0_289, %c0_290] : memref<1x128xf32, #tpu.memory_space<vmem>>, vector<1x128xf32>
    %846 = vector.broadcast %845 : vector<1x128xf32> to vector<8x128xf32>
    %847 = arith.addf %844, %846 : vector<8x128xf32>
    %c3 = arith.constant 3 : index
    %c0_291 = arith.constant 0 : index
    %c0_292 = arith.constant 0 : index
    %848 = vector.load %arg19[%c3, %c0_291, %c0_292] : memref<8x8x128xf32, #tpu.memory_space<vmem>>, vector<1x8x128xf32>
    %849 = vector.shape_cast %848 : vector<1x8x128xf32> to vector<8x128xf32>
    %850 = vector.shape_cast %847 : vector<8x128xf32> to vector<1x8x128xf32>
    tpu.vector_store %arg19[%c3, %c0_291, %c0_292], %850 {strides = array<i32>} : memref<8x8x128xf32, #tpu.memory_space<vmem>>, vector<1x8x128xf32>,
    %851 = vector.extract_strided_slice %524 {offsets = [24, 0], sizes = [8, 32], strides = [1, 1]} : vector<64x32xf32> to vector<8x32xf32>
    %c0_293 = arith.constant 0 : index
    %c0_294 = arith.constant 0 : index
    %852 = vector.load %arg20[%c0_293, %c0_294] : memref<8x32xf32, #tpu.memory_space<vmem>>, vector<8x32xf32>
    tpu.vector_store %arg20[%c0_293, %c0_294], %851 {strides = array<i32>} : memref<8x32xf32, #tpu.memory_space<vmem>>, vector<8x32xf32>,
    %c3_295 = arith.constant 3 : index
    %853 = memref.load %arg0[%c3_295] : memref<8xi32, #tpu.memory_space<smem>>
    %c0_i32_296 = arith.constant 0 : i32
    %854 = arith.cmpi eq, %853, %c0_i32_296 : i32
    %855 = arith.extui %854 : i1 to i32
    %c0_i32_297 = arith.constant 0 : i32
    %856 = arith.cmpi ne, %855, %c0_i32_297 : i32
    scf.if %856 {
      %cst_437 = arith.constant dense<0xFF800000> : vector<8xf32>
      %1175 = vector.multi_reduction <maximumf>, %847, %cst_437 [1] : vector<8x128xf32> to vector<8xf32>
      %1176 = vector.shape_cast %1175 : vector<8xf32> to vector<8x1xf32>
      %1177 = vector.broadcast %1176 : vector<8x1xf32> to vector<8x128xf32>
      %1178 = arith.cmpf oge, %847, %1177 : vector<8x128xf32>
      %cst_438 = arith.constant 1.280000e+02 : f32
      %1179 = vector.broadcast %cst_438 : f32 to vector<8x128xf32>
      %1180 = arith.select %1178, %526, %1179 : vector<8x128xi1>, vector<8x128xf32>
      %cst_439 = arith.constant dense<0x7F800000> : vector<8xf32>
      %1181 = vector.multi_reduction <minimumf>, %1180, %cst_439 [1] : vector<8x128xf32> to vector<8xf32>
      %1182 = vector.shape_cast %1181 : vector<8xf32> to vector<8x1xf32>
      %1183 = vector.broadcast %1182 : vector<8x1xf32> to vector<8x128xf32>
      %1184 = arith.cmpf oeq, %526, %1183 : vector<8x128xf32>
      %1185 = arith.extui %1184 : vector<8x128xi1> to vector<8x128xi32>
      %1186 = arith.sitofp %1185 : vector<8x128xi32> to vector<8x128xf32>
      %c0_440 = arith.constant 0 : index
      %c0_441 = arith.constant 0 : index
      %1187 = vector.load %arg4[%c0_440, %c0_441] : memref<128x32xf32, #tpu.memory_space<vmem>>, vector<128x32xf32>
      %cst_442 = arith.constant dense<0.000000e+00> : vector<8x32xf32>
      %1188 = tpu.matmul %1186, %1187, %cst_442 {dimension_numbers = #tpu.dot_dimension_numbers<[1], [0], [0], [1], [0, 0, 1, 1], [], []>} : vector<8x128xf32>, vector<128x32xf32>, vector<8x32xf32> -> vector<8x32xf32>
      %c0_443 = arith.constant 0 : index
      %c0_444 = arith.constant 0 : index
      %1189 = vector.load %arg20[%c0_443, %c0_444] : memref<8x32xf32, #tpu.memory_space<vmem>>, vector<8x32xf32>
      tpu.vector_store %arg20[%c0_443, %c0_444], %1188 {strides = array<i32>} : memref<8x32xf32, #tpu.memory_space<vmem>>, vector<8x32xf32>,
    } else {
    }
    %c0_298 = arith.constant 0 : index
    %c0_299 = arith.constant 0 : index
    %857 = vector.load %arg20[%c0_298, %c0_299] : memref<8x32xf32, #tpu.memory_space<vmem>>, vector<8x32xf32>
    %c0_300 = arith.constant 0 : index
    %c0_301 = arith.constant 0 : index
    %858 = vector.load %arg11[%c0_300, %c0_301] : memref<32x128xf32, #tpu.memory_space<vmem>>, vector<32x128xf32>
    %cst_302 = arith.constant dense<0.000000e+00> : vector<8x128xf32>
    %859 = tpu.matmul %857, %858, %cst_302 {dimension_numbers = #tpu.dot_dimension_numbers<[1], [0], [0], [1], [0, 0, 1, 1], [], []>} : vector<8x32xf32>, vector<32x128xf32>, vector<8x128xf32> -> vector<8x128xf32>
    %c0_303 = arith.constant 0 : index
    %c0_304 = arith.constant 0 : index
    %860 = vector.load %arg13[%c0_303, %c0_304] : memref<32x128xf32, #tpu.memory_space<vmem>>, vector<32x128xf32>
    %cst_305 = arith.constant dense<0.000000e+00> : vector<8x128xf32>
    %861 = tpu.matmul %809, %860, %cst_305 {dimension_numbers = #tpu.dot_dimension_numbers<[1], [0], [0], [1], [0, 0, 1, 1], [], []>} : vector<8x32xf32>, vector<32x128xf32>, vector<8x128xf32> -> vector<8x128xf32>
    %862 = arith.addf %859, %861 : vector<8x128xf32>
    %c0_306 = arith.constant 0 : index
    %c0_307 = arith.constant 0 : index
    %863 = vector.load %arg15[%c0_306, %c0_307] : memref<1x128xf32, #tpu.memory_space<vmem>>, vector<1x128xf32>
    %864 = vector.broadcast %863 : vector<1x128xf32> to vector<8x128xf32>
    %865 = arith.addf %862, %864 : vector<8x128xf32>
    %866 = vector.extract_strided_slice %865 {offsets = [0, 0], sizes = [8, 32], strides = [1, 1]} : vector<8x128xf32> to vector<8x32xf32>
    %867 = arith.negf %866 : vector<8x32xf32>
    %868 = math.exp %867 : vector<8x32xf32>
    %cst_308 = arith.constant 1.000000e+00 : f32
    %869 = vector.broadcast %cst_308 : f32 to vector<8x32xf32>
    %870 = arith.addf %869, %868 : vector<8x32xf32>
    %871 = arith.divf %869, %870 : vector<8x32xf32>
    %872 = vector.extract_strided_slice %865 {offsets = [0, 32], sizes = [8, 32], strides = [1, 1]} : vector<8x128xf32> to vector<8x32xf32>
    %873 = arith.negf %872 : vector<8x32xf32>
    %874 = math.exp %873 : vector<8x32xf32>
    %cst_309 = arith.constant 1.000000e+00 : f32
    %875 = vector.broadcast %cst_309 : f32 to vector<8x32xf32>
    %876 = arith.addf %875, %874 : vector<8x32xf32>
    %877 = arith.divf %875, %876 : vector<8x32xf32>
    %878 = vector.extract_strided_slice %865 {offsets = [0, 64], sizes = [8, 32], strides = [1, 1]} : vector<8x128xf32> to vector<8x32xf32>
    %879 = math.tanh %878 : vector<8x32xf32>
    %880 = vector.extract_strided_slice %865 {offsets = [0, 96], sizes = [8, 32], strides = [1, 1]} : vector<8x128xf32> to vector<8x32xf32>
    %881 = arith.negf %880 : vector<8x32xf32>
    %882 = math.exp %881 : vector<8x32xf32>
    %cst_310 = arith.constant 1.000000e+00 : f32
    %883 = vector.broadcast %cst_310 : f32 to vector<8x32xf32>
    %884 = arith.addf %883, %882 : vector<8x32xf32>
    %885 = arith.divf %883, %884 : vector<8x32xf32>
    %886 = arith.mulf %877, %807 : vector<8x32xf32>
    %887 = arith.mulf %871, %879 : vector<8x32xf32>
    %888 = arith.addf %886, %887 : vector<8x32xf32>
    %889 = math.tanh %888 : vector<8x32xf32>
    %890 = arith.mulf %885, %889 : vector<8x32xf32>
    %c0_311 = arith.constant 0 : index
    %c0_312 = arith.constant 0 : index
    %891 = vector.load %arg12[%c0_311, %c0_312] : memref<32x128xf32, #tpu.memory_space<vmem>>, vector<32x128xf32>
    %cst_313 = arith.constant dense<0.000000e+00> : vector<8x128xf32>
    %892 = tpu.matmul %890, %891, %cst_313 {dimension_numbers = #tpu.dot_dimension_numbers<[1], [0], [0], [1], [0, 0, 1, 1], [], []>} : vector<8x32xf32>, vector<32x128xf32>, vector<8x128xf32> -> vector<8x128xf32>
    %c0_314 = arith.constant 0 : index
    %c0_315 = arith.constant 0 : index
    %893 = vector.load %arg14[%c0_314, %c0_315] : memref<32x128xf32, #tpu.memory_space<vmem>>, vector<32x128xf32>
    %cst_316 = arith.constant dense<0.000000e+00> : vector<8x128xf32>
    %894 = tpu.matmul %842, %893, %cst_316 {dimension_numbers = #tpu.dot_dimension_numbers<[1], [0], [0], [1], [0, 0, 1, 1], [], []>} : vector<8x32xf32>, vector<32x128xf32>, vector<8x128xf32> -> vector<8x128xf32>
    %895 = arith.addf %892, %894 : vector<8x128xf32>
    %c0_317 = arith.constant 0 : index
    %c0_318 = arith.constant 0 : index
    %896 = vector.load %arg16[%c0_317, %c0_318] : memref<1x128xf32, #tpu.memory_space<vmem>>, vector<1x128xf32>
    %897 = vector.broadcast %896 : vector<1x128xf32> to vector<8x128xf32>
    %898 = arith.addf %895, %897 : vector<8x128xf32>
    %899 = vector.extract_strided_slice %898 {offsets = [0, 0], sizes = [8, 32], strides = [1, 1]} : vector<8x128xf32> to vector<8x32xf32>
    %900 = arith.negf %899 : vector<8x32xf32>
    %901 = math.exp %900 : vector<8x32xf32>
    %cst_319 = arith.constant 1.000000e+00 : f32
    %902 = vector.broadcast %cst_319 : f32 to vector<8x32xf32>
    %903 = arith.addf %902, %901 : vector<8x32xf32>
    %904 = arith.divf %902, %903 : vector<8x32xf32>
    %905 = vector.extract_strided_slice %898 {offsets = [0, 32], sizes = [8, 32], strides = [1, 1]} : vector<8x128xf32> to vector<8x32xf32>
    %906 = arith.negf %905 : vector<8x32xf32>
    %907 = math.exp %906 : vector<8x32xf32>
    %cst_320 = arith.constant 1.000000e+00 : f32
    %908 = vector.broadcast %cst_320 : f32 to vector<8x32xf32>
    %909 = arith.addf %908, %907 : vector<8x32xf32>
    %910 = arith.divf %908, %909 : vector<8x32xf32>
    %911 = vector.extract_strided_slice %898 {offsets = [0, 64], sizes = [8, 32], strides = [1, 1]} : vector<8x128xf32> to vector<8x32xf32>
    %912 = math.tanh %911 : vector<8x32xf32>
    %913 = vector.extract_strided_slice %898 {offsets = [0, 96], sizes = [8, 32], strides = [1, 1]} : vector<8x128xf32> to vector<8x32xf32>
    %914 = arith.negf %913 : vector<8x32xf32>
    %915 = math.exp %914 : vector<8x32xf32>
    %cst_321 = arith.constant 1.000000e+00 : f32
    %916 = vector.broadcast %cst_321 : f32 to vector<8x32xf32>
    %917 = arith.addf %916, %915 : vector<8x32xf32>
    %918 = arith.divf %916, %917 : vector<8x32xf32>
    %919 = arith.mulf %910, %840 : vector<8x32xf32>
    %920 = arith.mulf %904, %912 : vector<8x32xf32>
    %921 = arith.addf %919, %920 : vector<8x32xf32>
    %922 = math.tanh %921 : vector<8x32xf32>
    %923 = arith.mulf %918, %922 : vector<8x32xf32>
    %c0_322 = arith.constant 0 : index
    %c0_323 = arith.constant 0 : index
    %924 = vector.load %arg17[%c0_322, %c0_323] : memref<32x128xf32, #tpu.memory_space<vmem>>, vector<32x128xf32>
    %cst_324 = arith.constant dense<0.000000e+00> : vector<8x128xf32>
    %925 = tpu.matmul %923, %924, %cst_324 {dimension_numbers = #tpu.dot_dimension_numbers<[1], [0], [0], [1], [0, 0, 1, 1], [], []>} : vector<8x32xf32>, vector<32x128xf32>, vector<8x128xf32> -> vector<8x128xf32>
    %c0_325 = arith.constant 0 : index
    %c0_326 = arith.constant 0 : index
    %926 = vector.load %arg18[%c0_325, %c0_326] : memref<1x128xf32, #tpu.memory_space<vmem>>, vector<1x128xf32>
    %927 = vector.broadcast %926 : vector<1x128xf32> to vector<8x128xf32>
    %928 = arith.addf %925, %927 : vector<8x128xf32>
    %c4 = arith.constant 4 : index
    %c0_327 = arith.constant 0 : index
    %c0_328 = arith.constant 0 : index
    %929 = vector.load %arg19[%c4, %c0_327, %c0_328] : memref<8x8x128xf32, #tpu.memory_space<vmem>>, vector<1x8x128xf32>
    %930 = vector.shape_cast %929 : vector<1x8x128xf32> to vector<8x128xf32>
    %931 = vector.shape_cast %928 : vector<8x128xf32> to vector<1x8x128xf32>
    tpu.vector_store %arg19[%c4, %c0_327, %c0_328], %931 {strides = array<i32>} : memref<8x8x128xf32, #tpu.memory_space<vmem>>, vector<1x8x128xf32>,
    %932 = vector.extract_strided_slice %524 {offsets = [32, 0], sizes = [8, 32], strides = [1, 1]} : vector<64x32xf32> to vector<8x32xf32>
    %c0_329 = arith.constant 0 : index
    %c0_330 = arith.constant 0 : index
    %933 = vector.load %arg20[%c0_329, %c0_330] : memref<8x32xf32, #tpu.memory_space<vmem>>, vector<8x32xf32>
    tpu.vector_store %arg20[%c0_329, %c0_330], %932 {strides = array<i32>} : memref<8x32xf32, #tpu.memory_space<vmem>>, vector<8x32xf32>,
    %c4_331 = arith.constant 4 : index
    %934 = memref.load %arg0[%c4_331] : memref<8xi32, #tpu.memory_space<smem>>
    %c0_i32_332 = arith.constant 0 : i32
    %935 = arith.cmpi eq, %934, %c0_i32_332 : i32
    %936 = arith.extui %935 : i1 to i32
    %c0_i32_333 = arith.constant 0 : i32
    %937 = arith.cmpi ne, %936, %c0_i32_333 : i32
    scf.if %937 {
      %cst_437 = arith.constant dense<0xFF800000> : vector<8xf32>
      %1175 = vector.multi_reduction <maximumf>, %928, %cst_437 [1] : vector<8x128xf32> to vector<8xf32>
      %1176 = vector.shape_cast %1175 : vector<8xf32> to vector<8x1xf32>
      %1177 = vector.broadcast %1176 : vector<8x1xf32> to vector<8x128xf32>
      %1178 = arith.cmpf oge, %928, %1177 : vector<8x128xf32>
      %cst_438 = arith.constant 1.280000e+02 : f32
      %1179 = vector.broadcast %cst_438 : f32 to vector<8x128xf32>
      %1180 = arith.select %1178, %526, %1179 : vector<8x128xi1>, vector<8x128xf32>
      %cst_439 = arith.constant dense<0x7F800000> : vector<8xf32>
      %1181 = vector.multi_reduction <minimumf>, %1180, %cst_439 [1] : vector<8x128xf32> to vector<8xf32>
      %1182 = vector.shape_cast %1181 : vector<8xf32> to vector<8x1xf32>
      %1183 = vector.broadcast %1182 : vector<8x1xf32> to vector<8x128xf32>
      %1184 = arith.cmpf oeq, %526, %1183 : vector<8x128xf32>
      %1185 = arith.extui %1184 : vector<8x128xi1> to vector<8x128xi32>
      %1186 = arith.sitofp %1185 : vector<8x128xi32> to vector<8x128xf32>
      %c0_440 = arith.constant 0 : index
      %c0_441 = arith.constant 0 : index
      %1187 = vector.load %arg4[%c0_440, %c0_441] : memref<128x32xf32, #tpu.memory_space<vmem>>, vector<128x32xf32>
      %cst_442 = arith.constant dense<0.000000e+00> : vector<8x32xf32>
      %1188 = tpu.matmul %1186, %1187, %cst_442 {dimension_numbers = #tpu.dot_dimension_numbers<[1], [0], [0], [1], [0, 0, 1, 1], [], []>} : vector<8x128xf32>, vector<128x32xf32>, vector<8x32xf32> -> vector<8x32xf32>
      %c0_443 = arith.constant 0 : index
      %c0_444 = arith.constant 0 : index
      %1189 = vector.load %arg20[%c0_443, %c0_444] : memref<8x32xf32, #tpu.memory_space<vmem>>, vector<8x32xf32>
      tpu.vector_store %arg20[%c0_443, %c0_444], %1188 {strides = array<i32>} : memref<8x32xf32, #tpu.memory_space<vmem>>, vector<8x32xf32>,
    } else {
    }
    %c0_334 = arith.constant 0 : index
    %c0_335 = arith.constant 0 : index
    %938 = vector.load %arg20[%c0_334, %c0_335] : memref<8x32xf32, #tpu.memory_space<vmem>>, vector<8x32xf32>
    %c0_336 = arith.constant 0 : index
    %c0_337 = arith.constant 0 : index
    %939 = vector.load %arg11[%c0_336, %c0_337] : memref<32x128xf32, #tpu.memory_space<vmem>>, vector<32x128xf32>
    %cst_338 = arith.constant dense<0.000000e+00> : vector<8x128xf32>
    %940 = tpu.matmul %938, %939, %cst_338 {dimension_numbers = #tpu.dot_dimension_numbers<[1], [0], [0], [1], [0, 0, 1, 1], [], []>} : vector<8x32xf32>, vector<32x128xf32>, vector<8x128xf32> -> vector<8x128xf32>
    %c0_339 = arith.constant 0 : index
    %c0_340 = arith.constant 0 : index
    %941 = vector.load %arg13[%c0_339, %c0_340] : memref<32x128xf32, #tpu.memory_space<vmem>>, vector<32x128xf32>
    %cst_341 = arith.constant dense<0.000000e+00> : vector<8x128xf32>
    %942 = tpu.matmul %890, %941, %cst_341 {dimension_numbers = #tpu.dot_dimension_numbers<[1], [0], [0], [1], [0, 0, 1, 1], [], []>} : vector<8x32xf32>, vector<32x128xf32>, vector<8x128xf32> -> vector<8x128xf32>
    %943 = arith.addf %940, %942 : vector<8x128xf32>
    %c0_342 = arith.constant 0 : index
    %c0_343 = arith.constant 0 : index
    %944 = vector.load %arg15[%c0_342, %c0_343] : memref<1x128xf32, #tpu.memory_space<vmem>>, vector<1x128xf32>
    %945 = vector.broadcast %944 : vector<1x128xf32> to vector<8x128xf32>
    %946 = arith.addf %943, %945 : vector<8x128xf32>
    %947 = vector.extract_strided_slice %946 {offsets = [0, 0], sizes = [8, 32], strides = [1, 1]} : vector<8x128xf32> to vector<8x32xf32>
    %948 = arith.negf %947 : vector<8x32xf32>
    %949 = math.exp %948 : vector<8x32xf32>
    %cst_344 = arith.constant 1.000000e+00 : f32
    %950 = vector.broadcast %cst_344 : f32 to vector<8x32xf32>
    %951 = arith.addf %950, %949 : vector<8x32xf32>
    %952 = arith.divf %950, %951 : vector<8x32xf32>
    %953 = vector.extract_strided_slice %946 {offsets = [0, 32], sizes = [8, 32], strides = [1, 1]} : vector<8x128xf32> to vector<8x32xf32>
    %954 = arith.negf %953 : vector<8x32xf32>
    %955 = math.exp %954 : vector<8x32xf32>
    %cst_345 = arith.constant 1.000000e+00 : f32
    %956 = vector.broadcast %cst_345 : f32 to vector<8x32xf32>
    %957 = arith.addf %956, %955 : vector<8x32xf32>
    %958 = arith.divf %956, %957 : vector<8x32xf32>
    %959 = vector.extract_strided_slice %946 {offsets = [0, 64], sizes = [8, 32], strides = [1, 1]} : vector<8x128xf32> to vector<8x32xf32>
    %960 = math.tanh %959 : vector<8x32xf32>
    %961 = vector.extract_strided_slice %946 {offsets = [0, 96], sizes = [8, 32], strides = [1, 1]} : vector<8x128xf32> to vector<8x32xf32>
    %962 = arith.negf %961 : vector<8x32xf32>
    %963 = math.exp %962 : vector<8x32xf32>
    %cst_346 = arith.constant 1.000000e+00 : f32
    %964 = vector.broadcast %cst_346 : f32 to vector<8x32xf32>
    %965 = arith.addf %964, %963 : vector<8x32xf32>
    %966 = arith.divf %964, %965 : vector<8x32xf32>
    %967 = arith.mulf %958, %888 : vector<8x32xf32>
    %968 = arith.mulf %952, %960 : vector<8x32xf32>
    %969 = arith.addf %967, %968 : vector<8x32xf32>
    %970 = math.tanh %969 : vector<8x32xf32>
    %971 = arith.mulf %966, %970 : vector<8x32xf32>
    %c0_347 = arith.constant 0 : index
    %c0_348 = arith.constant 0 : index
    %972 = vector.load %arg12[%c0_347, %c0_348] : memref<32x128xf32, #tpu.memory_space<vmem>>, vector<32x128xf32>
    %cst_349 = arith.constant dense<0.000000e+00> : vector<8x128xf32>
    %973 = tpu.matmul %971, %972, %cst_349 {dimension_numbers = #tpu.dot_dimension_numbers<[1], [0], [0], [1], [0, 0, 1, 1], [], []>} : vector<8x32xf32>, vector<32x128xf32>, vector<8x128xf32> -> vector<8x128xf32>
    %c0_350 = arith.constant 0 : index
    %c0_351 = arith.constant 0 : index
    %974 = vector.load %arg14[%c0_350, %c0_351] : memref<32x128xf32, #tpu.memory_space<vmem>>, vector<32x128xf32>
    %cst_352 = arith.constant dense<0.000000e+00> : vector<8x128xf32>
    %975 = tpu.matmul %923, %974, %cst_352 {dimension_numbers = #tpu.dot_dimension_numbers<[1], [0], [0], [1], [0, 0, 1, 1], [], []>} : vector<8x32xf32>, vector<32x128xf32>, vector<8x128xf32> -> vector<8x128xf32>
    %976 = arith.addf %973, %975 : vector<8x128xf32>
    %c0_353 = arith.constant 0 : index
    %c0_354 = arith.constant 0 : index
    %977 = vector.load %arg16[%c0_353, %c0_354] : memref<1x128xf32, #tpu.memory_space<vmem>>, vector<1x128xf32>
    %978 = vector.broadcast %977 : vector<1x128xf32> to vector<8x128xf32>
    %979 = arith.addf %976, %978 : vector<8x128xf32>
    %980 = vector.extract_strided_slice %979 {offsets = [0, 0], sizes = [8, 32], strides = [1, 1]} : vector<8x128xf32> to vector<8x32xf32>
    %981 = arith.negf %980 : vector<8x32xf32>
    %982 = math.exp %981 : vector<8x32xf32>
    %cst_355 = arith.constant 1.000000e+00 : f32
    %983 = vector.broadcast %cst_355 : f32 to vector<8x32xf32>
    %984 = arith.addf %983, %982 : vector<8x32xf32>
    %985 = arith.divf %983, %984 : vector<8x32xf32>
    %986 = vector.extract_strided_slice %979 {offsets = [0, 32], sizes = [8, 32], strides = [1, 1]} : vector<8x128xf32> to vector<8x32xf32>
    %987 = arith.negf %986 : vector<8x32xf32>
    %988 = math.exp %987 : vector<8x32xf32>
    %cst_356 = arith.constant 1.000000e+00 : f32
    %989 = vector.broadcast %cst_356 : f32 to vector<8x32xf32>
    %990 = arith.addf %989, %988 : vector<8x32xf32>
    %991 = arith.divf %989, %990 : vector<8x32xf32>
    %992 = vector.extract_strided_slice %979 {offsets = [0, 64], sizes = [8, 32], strides = [1, 1]} : vector<8x128xf32> to vector<8x32xf32>
    %993 = math.tanh %992 : vector<8x32xf32>
    %994 = vector.extract_strided_slice %979 {offsets = [0, 96], sizes = [8, 32], strides = [1, 1]} : vector<8x128xf32> to vector<8x32xf32>
    %995 = arith.negf %994 : vector<8x32xf32>
    %996 = math.exp %995 : vector<8x32xf32>
    %cst_357 = arith.constant 1.000000e+00 : f32
    %997 = vector.broadcast %cst_357 : f32 to vector<8x32xf32>
    %998 = arith.addf %997, %996 : vector<8x32xf32>
    %999 = arith.divf %997, %998 : vector<8x32xf32>
    %1000 = arith.mulf %991, %921 : vector<8x32xf32>
    %1001 = arith.mulf %985, %993 : vector<8x32xf32>
    %1002 = arith.addf %1000, %1001 : vector<8x32xf32>
    %1003 = math.tanh %1002 : vector<8x32xf32>
    %1004 = arith.mulf %999, %1003 : vector<8x32xf32>
    %c0_358 = arith.constant 0 : index
    %c0_359 = arith.constant 0 : index
    %1005 = vector.load %arg17[%c0_358, %c0_359] : memref<32x128xf32, #tpu.memory_space<vmem>>, vector<32x128xf32>
    %cst_360 = arith.constant dense<0.000000e+00> : vector<8x128xf32>
    %1006 = tpu.matmul %1004, %1005, %cst_360 {dimension_numbers = #tpu.dot_dimension_numbers<[1], [0], [0], [1], [0, 0, 1, 1], [], []>} : vector<8x32xf32>, vector<32x128xf32>, vector<8x128xf32> -> vector<8x128xf32>
    %c0_361 = arith.constant 0 : index
    %c0_362 = arith.constant 0 : index
    %1007 = vector.load %arg18[%c0_361, %c0_362] : memref<1x128xf32, #tpu.memory_space<vmem>>, vector<1x128xf32>
    %1008 = vector.broadcast %1007 : vector<1x128xf32> to vector<8x128xf32>
    %1009 = arith.addf %1006, %1008 : vector<8x128xf32>
    %c5 = arith.constant 5 : index
    %c0_363 = arith.constant 0 : index
    %c0_364 = arith.constant 0 : index
    %1010 = vector.load %arg19[%c5, %c0_363, %c0_364] : memref<8x8x128xf32, #tpu.memory_space<vmem>>, vector<1x8x128xf32>
    %1011 = vector.shape_cast %1010 : vector<1x8x128xf32> to vector<8x128xf32>
    %1012 = vector.shape_cast %1009 : vector<8x128xf32> to vector<1x8x128xf32>
    tpu.vector_store %arg19[%c5, %c0_363, %c0_364], %1012 {strides = array<i32>} : memref<8x8x128xf32, #tpu.memory_space<vmem>>, vector<1x8x128xf32>,
    %1013 = vector.extract_strided_slice %524 {offsets = [40, 0], sizes = [8, 32], strides = [1, 1]} : vector<64x32xf32> to vector<8x32xf32>
    %c0_365 = arith.constant 0 : index
    %c0_366 = arith.constant 0 : index
    %1014 = vector.load %arg20[%c0_365, %c0_366] : memref<8x32xf32, #tpu.memory_space<vmem>>, vector<8x32xf32>
    tpu.vector_store %arg20[%c0_365, %c0_366], %1013 {strides = array<i32>} : memref<8x32xf32, #tpu.memory_space<vmem>>, vector<8x32xf32>,
    %c5_367 = arith.constant 5 : index
    %1015 = memref.load %arg0[%c5_367] : memref<8xi32, #tpu.memory_space<smem>>
    %c0_i32_368 = arith.constant 0 : i32
    %1016 = arith.cmpi eq, %1015, %c0_i32_368 : i32
    %1017 = arith.extui %1016 : i1 to i32
    %c0_i32_369 = arith.constant 0 : i32
    %1018 = arith.cmpi ne, %1017, %c0_i32_369 : i32
    scf.if %1018 {
      %cst_437 = arith.constant dense<0xFF800000> : vector<8xf32>
      %1175 = vector.multi_reduction <maximumf>, %1009, %cst_437 [1] : vector<8x128xf32> to vector<8xf32>
      %1176 = vector.shape_cast %1175 : vector<8xf32> to vector<8x1xf32>
      %1177 = vector.broadcast %1176 : vector<8x1xf32> to vector<8x128xf32>
      %1178 = arith.cmpf oge, %1009, %1177 : vector<8x128xf32>
      %cst_438 = arith.constant 1.280000e+02 : f32
      %1179 = vector.broadcast %cst_438 : f32 to vector<8x128xf32>
      %1180 = arith.select %1178, %526, %1179 : vector<8x128xi1>, vector<8x128xf32>
      %cst_439 = arith.constant dense<0x7F800000> : vector<8xf32>
      %1181 = vector.multi_reduction <minimumf>, %1180, %cst_439 [1] : vector<8x128xf32> to vector<8xf32>
      %1182 = vector.shape_cast %1181 : vector<8xf32> to vector<8x1xf32>
      %1183 = vector.broadcast %1182 : vector<8x1xf32> to vector<8x128xf32>
      %1184 = arith.cmpf oeq, %526, %1183 : vector<8x128xf32>
      %1185 = arith.extui %1184 : vector<8x128xi1> to vector<8x128xi32>
      %1186 = arith.sitofp %1185 : vector<8x128xi32> to vector<8x128xf32>
      %c0_440 = arith.constant 0 : index
      %c0_441 = arith.constant 0 : index
      %1187 = vector.load %arg4[%c0_440, %c0_441] : memref<128x32xf32, #tpu.memory_space<vmem>>, vector<128x32xf32>
      %cst_442 = arith.constant dense<0.000000e+00> : vector<8x32xf32>
      %1188 = tpu.matmul %1186, %1187, %cst_442 {dimension_numbers = #tpu.dot_dimension_numbers<[1], [0], [0], [1], [0, 0, 1, 1], [], []>} : vector<8x128xf32>, vector<128x32xf32>, vector<8x32xf32> -> vector<8x32xf32>
      %c0_443 = arith.constant 0 : index
      %c0_444 = arith.constant 0 : index
      %1189 = vector.load %arg20[%c0_443, %c0_444] : memref<8x32xf32, #tpu.memory_space<vmem>>, vector<8x32xf32>
      tpu.vector_store %arg20[%c0_443, %c0_444], %1188 {strides = array<i32>} : memref<8x32xf32, #tpu.memory_space<vmem>>, vector<8x32xf32>,
    } else {
    }
    %c0_370 = arith.constant 0 : index
    %c0_371 = arith.constant 0 : index
    %1019 = vector.load %arg20[%c0_370, %c0_371] : memref<8x32xf32, #tpu.memory_space<vmem>>, vector<8x32xf32>
    %c0_372 = arith.constant 0 : index
    %c0_373 = arith.constant 0 : index
    %1020 = vector.load %arg11[%c0_372, %c0_373] : memref<32x128xf32, #tpu.memory_space<vmem>>, vector<32x128xf32>
    %cst_374 = arith.constant dense<0.000000e+00> : vector<8x128xf32>
    %1021 = tpu.matmul %1019, %1020, %cst_374 {dimension_numbers = #tpu.dot_dimension_numbers<[1], [0], [0], [1], [0, 0, 1, 1], [], []>} : vector<8x32xf32>, vector<32x128xf32>, vector<8x128xf32> -> vector<8x128xf32>
    %c0_375 = arith.constant 0 : index
    %c0_376 = arith.constant 0 : index
    %1022 = vector.load %arg13[%c0_375, %c0_376] : memref<32x128xf32, #tpu.memory_space<vmem>>, vector<32x128xf32>
    %cst_377 = arith.constant dense<0.000000e+00> : vector<8x128xf32>
    %1023 = tpu.matmul %971, %1022, %cst_377 {dimension_numbers = #tpu.dot_dimension_numbers<[1], [0], [0], [1], [0, 0, 1, 1], [], []>} : vector<8x32xf32>, vector<32x128xf32>, vector<8x128xf32> -> vector<8x128xf32>
    %1024 = arith.addf %1021, %1023 : vector<8x128xf32>
    %c0_378 = arith.constant 0 : index
    %c0_379 = arith.constant 0 : index
    %1025 = vector.load %arg15[%c0_378, %c0_379] : memref<1x128xf32, #tpu.memory_space<vmem>>, vector<1x128xf32>
    %1026 = vector.broadcast %1025 : vector<1x128xf32> to vector<8x128xf32>
    %1027 = arith.addf %1024, %1026 : vector<8x128xf32>
    %1028 = vector.extract_strided_slice %1027 {offsets = [0, 0], sizes = [8, 32], strides = [1, 1]} : vector<8x128xf32> to vector<8x32xf32>
    %1029 = arith.negf %1028 : vector<8x32xf32>
    %1030 = math.exp %1029 : vector<8x32xf32>
    %cst_380 = arith.constant 1.000000e+00 : f32
    %1031 = vector.broadcast %cst_380 : f32 to vector<8x32xf32>
    %1032 = arith.addf %1031, %1030 : vector<8x32xf32>
    %1033 = arith.divf %1031, %1032 : vector<8x32xf32>
    %1034 = vector.extract_strided_slice %1027 {offsets = [0, 32], sizes = [8, 32], strides = [1, 1]} : vector<8x128xf32> to vector<8x32xf32>
    %1035 = arith.negf %1034 : vector<8x32xf32>
    %1036 = math.exp %1035 : vector<8x32xf32>
    %cst_381 = arith.constant 1.000000e+00 : f32
    %1037 = vector.broadcast %cst_381 : f32 to vector<8x32xf32>
    %1038 = arith.addf %1037, %1036 : vector<8x32xf32>
    %1039 = arith.divf %1037, %1038 : vector<8x32xf32>
    %1040 = vector.extract_strided_slice %1027 {offsets = [0, 64], sizes = [8, 32], strides = [1, 1]} : vector<8x128xf32> to vector<8x32xf32>
    %1041 = math.tanh %1040 : vector<8x32xf32>
    %1042 = vector.extract_strided_slice %1027 {offsets = [0, 96], sizes = [8, 32], strides = [1, 1]} : vector<8x128xf32> to vector<8x32xf32>
    %1043 = arith.negf %1042 : vector<8x32xf32>
    %1044 = math.exp %1043 : vector<8x32xf32>
    %cst_382 = arith.constant 1.000000e+00 : f32
    %1045 = vector.broadcast %cst_382 : f32 to vector<8x32xf32>
    %1046 = arith.addf %1045, %1044 : vector<8x32xf32>
    %1047 = arith.divf %1045, %1046 : vector<8x32xf32>
    %1048 = arith.mulf %1039, %969 : vector<8x32xf32>
    %1049 = arith.mulf %1033, %1041 : vector<8x32xf32>
    %1050 = arith.addf %1048, %1049 : vector<8x32xf32>
    %1051 = math.tanh %1050 : vector<8x32xf32>
    %1052 = arith.mulf %1047, %1051 : vector<8x32xf32>
    %c0_383 = arith.constant 0 : index
    %c0_384 = arith.constant 0 : index
    %1053 = vector.load %arg12[%c0_383, %c0_384] : memref<32x128xf32, #tpu.memory_space<vmem>>, vector<32x128xf32>
    %cst_385 = arith.constant dense<0.000000e+00> : vector<8x128xf32>
    %1054 = tpu.matmul %1052, %1053, %cst_385 {dimension_numbers = #tpu.dot_dimension_numbers<[1], [0], [0], [1], [0, 0, 1, 1], [], []>} : vector<8x32xf32>, vector<32x128xf32>, vector<8x128xf32> -> vector<8x128xf32>
    %c0_386 = arith.constant 0 : index
    %c0_387 = arith.constant 0 : index
    %1055 = vector.load %arg14[%c0_386, %c0_387] : memref<32x128xf32, #tpu.memory_space<vmem>>, vector<32x128xf32>
    %cst_388 = arith.constant dense<0.000000e+00> : vector<8x128xf32>
    %1056 = tpu.matmul %1004, %1055, %cst_388 {dimension_numbers = #tpu.dot_dimension_numbers<[1], [0], [0], [1], [0, 0, 1, 1], [], []>} : vector<8x32xf32>, vector<32x128xf32>, vector<8x128xf32> -> vector<8x128xf32>
    %1057 = arith.addf %1054, %1056 : vector<8x128xf32>
    %c0_389 = arith.constant 0 : index
    %c0_390 = arith.constant 0 : index
    %1058 = vector.load %arg16[%c0_389, %c0_390] : memref<1x128xf32, #tpu.memory_space<vmem>>, vector<1x128xf32>
    %1059 = vector.broadcast %1058 : vector<1x128xf32> to vector<8x128xf32>
    %1060 = arith.addf %1057, %1059 : vector<8x128xf32>
    %1061 = vector.extract_strided_slice %1060 {offsets = [0, 0], sizes = [8, 32], strides = [1, 1]} : vector<8x128xf32> to vector<8x32xf32>
    %1062 = arith.negf %1061 : vector<8x32xf32>
    %1063 = math.exp %1062 : vector<8x32xf32>
    %cst_391 = arith.constant 1.000000e+00 : f32
    %1064 = vector.broadcast %cst_391 : f32 to vector<8x32xf32>
    %1065 = arith.addf %1064, %1063 : vector<8x32xf32>
    %1066 = arith.divf %1064, %1065 : vector<8x32xf32>
    %1067 = vector.extract_strided_slice %1060 {offsets = [0, 32], sizes = [8, 32], strides = [1, 1]} : vector<8x128xf32> to vector<8x32xf32>
    %1068 = arith.negf %1067 : vector<8x32xf32>
    %1069 = math.exp %1068 : vector<8x32xf32>
    %cst_392 = arith.constant 1.000000e+00 : f32
    %1070 = vector.broadcast %cst_392 : f32 to vector<8x32xf32>
    %1071 = arith.addf %1070, %1069 : vector<8x32xf32>
    %1072 = arith.divf %1070, %1071 : vector<8x32xf32>
    %1073 = vector.extract_strided_slice %1060 {offsets = [0, 64], sizes = [8, 32], strides = [1, 1]} : vector<8x128xf32> to vector<8x32xf32>
    %1074 = math.tanh %1073 : vector<8x32xf32>
    %1075 = vector.extract_strided_slice %1060 {offsets = [0, 96], sizes = [8, 32], strides = [1, 1]} : vector<8x128xf32> to vector<8x32xf32>
    %1076 = arith.negf %1075 : vector<8x32xf32>
    %1077 = math.exp %1076 : vector<8x32xf32>
    %cst_393 = arith.constant 1.000000e+00 : f32
    %1078 = vector.broadcast %cst_393 : f32 to vector<8x32xf32>
    %1079 = arith.addf %1078, %1077 : vector<8x32xf32>
    %1080 = arith.divf %1078, %1079 : vector<8x32xf32>
    %1081 = arith.mulf %1072, %1002 : vector<8x32xf32>
    %1082 = arith.mulf %1066, %1074 : vector<8x32xf32>
    %1083 = arith.addf %1081, %1082 : vector<8x32xf32>
    %1084 = math.tanh %1083 : vector<8x32xf32>
    %1085 = arith.mulf %1080, %1084 : vector<8x32xf32>
    %c0_394 = arith.constant 0 : index
    %c0_395 = arith.constant 0 : index
    %1086 = vector.load %arg17[%c0_394, %c0_395] : memref<32x128xf32, #tpu.memory_space<vmem>>, vector<32x128xf32>
    %cst_396 = arith.constant dense<0.000000e+00> : vector<8x128xf32>
    %1087 = tpu.matmul %1085, %1086, %cst_396 {dimension_numbers = #tpu.dot_dimension_numbers<[1], [0], [0], [1], [0, 0, 1, 1], [], []>} : vector<8x32xf32>, vector<32x128xf32>, vector<8x128xf32> -> vector<8x128xf32>
    %c0_397 = arith.constant 0 : index
    %c0_398 = arith.constant 0 : index
    %1088 = vector.load %arg18[%c0_397, %c0_398] : memref<1x128xf32, #tpu.memory_space<vmem>>, vector<1x128xf32>
    %1089 = vector.broadcast %1088 : vector<1x128xf32> to vector<8x128xf32>
    %1090 = arith.addf %1087, %1089 : vector<8x128xf32>
    %c6 = arith.constant 6 : index
    %c0_399 = arith.constant 0 : index
    %c0_400 = arith.constant 0 : index
    %1091 = vector.load %arg19[%c6, %c0_399, %c0_400] : memref<8x8x128xf32, #tpu.memory_space<vmem>>, vector<1x8x128xf32>
    %1092 = vector.shape_cast %1091 : vector<1x8x128xf32> to vector<8x128xf32>
    %1093 = vector.shape_cast %1090 : vector<8x128xf32> to vector<1x8x128xf32>
    tpu.vector_store %arg19[%c6, %c0_399, %c0_400], %1093 {strides = array<i32>} : memref<8x8x128xf32, #tpu.memory_space<vmem>>, vector<1x8x128xf32>,
    %1094 = vector.extract_strided_slice %524 {offsets = [48, 0], sizes = [8, 32], strides = [1, 1]} : vector<64x32xf32> to vector<8x32xf32>
    %c0_401 = arith.constant 0 : index
    %c0_402 = arith.constant 0 : index
    %1095 = vector.load %arg20[%c0_401, %c0_402] : memref<8x32xf32, #tpu.memory_space<vmem>>, vector<8x32xf32>
    tpu.vector_store %arg20[%c0_401, %c0_402], %1094 {strides = array<i32>} : memref<8x32xf32, #tpu.memory_space<vmem>>, vector<8x32xf32>,
    %c6_403 = arith.constant 6 : index
    %1096 = memref.load %arg0[%c6_403] : memref<8xi32, #tpu.memory_space<smem>>
    %c0_i32_404 = arith.constant 0 : i32
    %1097 = arith.cmpi eq, %1096, %c0_i32_404 : i32
    %1098 = arith.extui %1097 : i1 to i32
    %c0_i32_405 = arith.constant 0 : i32
    %1099 = arith.cmpi ne, %1098, %c0_i32_405 : i32
    scf.if %1099 {
      %cst_437 = arith.constant dense<0xFF800000> : vector<8xf32>
      %1175 = vector.multi_reduction <maximumf>, %1090, %cst_437 [1] : vector<8x128xf32> to vector<8xf32>
      %1176 = vector.shape_cast %1175 : vector<8xf32> to vector<8x1xf32>
      %1177 = vector.broadcast %1176 : vector<8x1xf32> to vector<8x128xf32>
      %1178 = arith.cmpf oge, %1090, %1177 : vector<8x128xf32>
      %cst_438 = arith.constant 1.280000e+02 : f32
      %1179 = vector.broadcast %cst_438 : f32 to vector<8x128xf32>
      %1180 = arith.select %1178, %526, %1179 : vector<8x128xi1>, vector<8x128xf32>
      %cst_439 = arith.constant dense<0x7F800000> : vector<8xf32>
      %1181 = vector.multi_reduction <minimumf>, %1180, %cst_439 [1] : vector<8x128xf32> to vector<8xf32>
      %1182 = vector.shape_cast %1181 : vector<8xf32> to vector<8x1xf32>
      %1183 = vector.broadcast %1182 : vector<8x1xf32> to vector<8x128xf32>
      %1184 = arith.cmpf oeq, %526, %1183 : vector<8x128xf32>
      %1185 = arith.extui %1184 : vector<8x128xi1> to vector<8x128xi32>
      %1186 = arith.sitofp %1185 : vector<8x128xi32> to vector<8x128xf32>
      %c0_440 = arith.constant 0 : index
      %c0_441 = arith.constant 0 : index
      %1187 = vector.load %arg4[%c0_440, %c0_441] : memref<128x32xf32, #tpu.memory_space<vmem>>, vector<128x32xf32>
      %cst_442 = arith.constant dense<0.000000e+00> : vector<8x32xf32>
      %1188 = tpu.matmul %1186, %1187, %cst_442 {dimension_numbers = #tpu.dot_dimension_numbers<[1], [0], [0], [1], [0, 0, 1, 1], [], []>} : vector<8x128xf32>, vector<128x32xf32>, vector<8x32xf32> -> vector<8x32xf32>
      %c0_443 = arith.constant 0 : index
      %c0_444 = arith.constant 0 : index
      %1189 = vector.load %arg20[%c0_443, %c0_444] : memref<8x32xf32, #tpu.memory_space<vmem>>, vector<8x32xf32>
      tpu.vector_store %arg20[%c0_443, %c0_444], %1188 {strides = array<i32>} : memref<8x32xf32, #tpu.memory_space<vmem>>, vector<8x32xf32>,
    } else {
    }
    %c0_406 = arith.constant 0 : index
    %c0_407 = arith.constant 0 : index
    %1100 = vector.load %arg20[%c0_406, %c0_407] : memref<8x32xf32, #tpu.memory_space<vmem>>, vector<8x32xf32>
    %c0_408 = arith.constant 0 : index
    %c0_409 = arith.constant 0 : index
    %1101 = vector.load %arg11[%c0_408, %c0_409] : memref<32x128xf32, #tpu.memory_space<vmem>>, vector<32x128xf32>
    %cst_410 = arith.constant dense<0.000000e+00> : vector<8x128xf32>
    %1102 = tpu.matmul %1100, %1101, %cst_410 {dimension_numbers = #tpu.dot_dimension_numbers<[1], [0], [0], [1], [0, 0, 1, 1], [], []>} : vector<8x32xf32>, vector<32x128xf32>, vector<8x128xf32> -> vector<8x128xf32>
    %c0_411 = arith.constant 0 : index
    %c0_412 = arith.constant 0 : index
    %1103 = vector.load %arg13[%c0_411, %c0_412] : memref<32x128xf32, #tpu.memory_space<vmem>>, vector<32x128xf32>
    %cst_413 = arith.constant dense<0.000000e+00> : vector<8x128xf32>
    %1104 = tpu.matmul %1052, %1103, %cst_413 {dimension_numbers = #tpu.dot_dimension_numbers<[1], [0], [0], [1], [0, 0, 1, 1], [], []>} : vector<8x32xf32>, vector<32x128xf32>, vector<8x128xf32> -> vector<8x128xf32>
    %1105 = arith.addf %1102, %1104 : vector<8x128xf32>
    %c0_414 = arith.constant 0 : index
    %c0_415 = arith.constant 0 : index
    %1106 = vector.load %arg15[%c0_414, %c0_415] : memref<1x128xf32, #tpu.memory_space<vmem>>, vector<1x128xf32>
    %1107 = vector.broadcast %1106 : vector<1x128xf32> to vector<8x128xf32>
    %1108 = arith.addf %1105, %1107 : vector<8x128xf32>
    %1109 = vector.extract_strided_slice %1108 {offsets = [0, 0], sizes = [8, 32], strides = [1, 1]} : vector<8x128xf32> to vector<8x32xf32>
    %1110 = arith.negf %1109 : vector<8x32xf32>
    %1111 = math.exp %1110 : vector<8x32xf32>
    %cst_416 = arith.constant 1.000000e+00 : f32
    %1112 = vector.broadcast %cst_416 : f32 to vector<8x32xf32>
    %1113 = arith.addf %1112, %1111 : vector<8x32xf32>
    %1114 = arith.divf %1112, %1113 : vector<8x32xf32>
    %1115 = vector.extract_strided_slice %1108 {offsets = [0, 32], sizes = [8, 32], strides = [1, 1]} : vector<8x128xf32> to vector<8x32xf32>
    %1116 = arith.negf %1115 : vector<8x32xf32>
    %1117 = math.exp %1116 : vector<8x32xf32>
    %cst_417 = arith.constant 1.000000e+00 : f32
    %1118 = vector.broadcast %cst_417 : f32 to vector<8x32xf32>
    %1119 = arith.addf %1118, %1117 : vector<8x32xf32>
    %1120 = arith.divf %1118, %1119 : vector<8x32xf32>
    %1121 = vector.extract_strided_slice %1108 {offsets = [0, 64], sizes = [8, 32], strides = [1, 1]} : vector<8x128xf32> to vector<8x32xf32>
    %1122 = math.tanh %1121 : vector<8x32xf32>
    %1123 = vector.extract_strided_slice %1108 {offsets = [0, 96], sizes = [8, 32], strides = [1, 1]} : vector<8x128xf32> to vector<8x32xf32>
    %1124 = arith.negf %1123 : vector<8x32xf32>
    %1125 = math.exp %1124 : vector<8x32xf32>
    %cst_418 = arith.constant 1.000000e+00 : f32
    %1126 = vector.broadcast %cst_418 : f32 to vector<8x32xf32>
    %1127 = arith.addf %1126, %1125 : vector<8x32xf32>
    %1128 = arith.divf %1126, %1127 : vector<8x32xf32>
    %1129 = arith.mulf %1120, %1050 : vector<8x32xf32>
    %1130 = arith.mulf %1114, %1122 : vector<8x32xf32>
    %1131 = arith.addf %1129, %1130 : vector<8x32xf32>
    %1132 = math.tanh %1131 : vector<8x32xf32>
    %1133 = arith.mulf %1128, %1132 : vector<8x32xf32>
    %c0_419 = arith.constant 0 : index
    %c0_420 = arith.constant 0 : index
    %1134 = vector.load %arg12[%c0_419, %c0_420] : memref<32x128xf32, #tpu.memory_space<vmem>>, vector<32x128xf32>
    %cst_421 = arith.constant dense<0.000000e+00> : vector<8x128xf32>
    %1135 = tpu.matmul %1133, %1134, %cst_421 {dimension_numbers = #tpu.dot_dimension_numbers<[1], [0], [0], [1], [0, 0, 1, 1], [], []>} : vector<8x32xf32>, vector<32x128xf32>, vector<8x128xf32> -> vector<8x128xf32>
    %c0_422 = arith.constant 0 : index
    %c0_423 = arith.constant 0 : index
    %1136 = vector.load %arg14[%c0_422, %c0_423] : memref<32x128xf32, #tpu.memory_space<vmem>>, vector<32x128xf32>
    %cst_424 = arith.constant dense<0.000000e+00> : vector<8x128xf32>
    %1137 = tpu.matmul %1085, %1136, %cst_424 {dimension_numbers = #tpu.dot_dimension_numbers<[1], [0], [0], [1], [0, 0, 1, 1], [], []>} : vector<8x32xf32>, vector<32x128xf32>, vector<8x128xf32> -> vector<8x128xf32>
    %1138 = arith.addf %1135, %1137 : vector<8x128xf32>
    %c0_425 = arith.constant 0 : index
    %c0_426 = arith.constant 0 : index
    %1139 = vector.load %arg16[%c0_425, %c0_426] : memref<1x128xf32, #tpu.memory_space<vmem>>, vector<1x128xf32>
    %1140 = vector.broadcast %1139 : vector<1x128xf32> to vector<8x128xf32>
    %1141 = arith.addf %1138, %1140 : vector<8x128xf32>
    %1142 = vector.extract_strided_slice %1141 {offsets = [0, 0], sizes = [8, 32], strides = [1, 1]} : vector<8x128xf32> to vector<8x32xf32>
    %1143 = arith.negf %1142 : vector<8x32xf32>
    %1144 = math.exp %1143 : vector<8x32xf32>
    %cst_427 = arith.constant 1.000000e+00 : f32
    %1145 = vector.broadcast %cst_427 : f32 to vector<8x32xf32>
    %1146 = arith.addf %1145, %1144 : vector<8x32xf32>
    %1147 = arith.divf %1145, %1146 : vector<8x32xf32>
    %1148 = vector.extract_strided_slice %1141 {offsets = [0, 32], sizes = [8, 32], strides = [1, 1]} : vector<8x128xf32> to vector<8x32xf32>
    %1149 = arith.negf %1148 : vector<8x32xf32>
    %1150 = math.exp %1149 : vector<8x32xf32>
    %cst_428 = arith.constant 1.000000e+00 : f32
    %1151 = vector.broadcast %cst_428 : f32 to vector<8x32xf32>
    %1152 = arith.addf %1151, %1150 : vector<8x32xf32>
    %1153 = arith.divf %1151, %1152 : vector<8x32xf32>
    %1154 = vector.extract_strided_slice %1141 {offsets = [0, 64], sizes = [8, 32], strides = [1, 1]} : vector<8x128xf32> to vector<8x32xf32>
    %1155 = math.tanh %1154 : vector<8x32xf32>
    %1156 = vector.extract_strided_slice %1141 {offsets = [0, 96], sizes = [8, 32], strides = [1, 1]} : vector<8x128xf32> to vector<8x32xf32>
    %1157 = arith.negf %1156 : vector<8x32xf32>
    %1158 = math.exp %1157 : vector<8x32xf32>
    %cst_429 = arith.constant 1.000000e+00 : f32
    %1159 = vector.broadcast %cst_429 : f32 to vector<8x32xf32>
    %1160 = arith.addf %1159, %1158 : vector<8x32xf32>
    %1161 = arith.divf %1159, %1160 : vector<8x32xf32>
    %1162 = arith.mulf %1153, %1083 : vector<8x32xf32>
    %1163 = arith.mulf %1147, %1155 : vector<8x32xf32>
    %1164 = arith.addf %1162, %1163 : vector<8x32xf32>
    %1165 = math.tanh %1164 : vector<8x32xf32>
    %1166 = arith.mulf %1161, %1165 : vector<8x32xf32>
    %c0_430 = arith.constant 0 : index
    %c0_431 = arith.constant 0 : index
    %1167 = vector.load %arg17[%c0_430, %c0_431] : memref<32x128xf32, #tpu.memory_space<vmem>>, vector<32x128xf32>
    %cst_432 = arith.constant dense<0.000000e+00> : vector<8x128xf32>
    %1168 = tpu.matmul %1166, %1167, %cst_432 {dimension_numbers = #tpu.dot_dimension_numbers<[1], [0], [0], [1], [0, 0, 1, 1], [], []>} : vector<8x32xf32>, vector<32x128xf32>, vector<8x128xf32> -> vector<8x128xf32>
    %c0_433 = arith.constant 0 : index
    %c0_434 = arith.constant 0 : index
    %1169 = vector.load %arg18[%c0_433, %c0_434] : memref<1x128xf32, #tpu.memory_space<vmem>>, vector<1x128xf32>
    %1170 = vector.broadcast %1169 : vector<1x128xf32> to vector<8x128xf32>
    %1171 = arith.addf %1168, %1170 : vector<8x128xf32>
    %c7 = arith.constant 7 : index
    %c0_435 = arith.constant 0 : index
    %c0_436 = arith.constant 0 : index
    %1172 = vector.load %arg19[%c7, %c0_435, %c0_436] : memref<8x8x128xf32, #tpu.memory_space<vmem>>, vector<1x8x128xf32>
    %1173 = vector.shape_cast %1172 : vector<1x8x128xf32> to vector<8x128xf32>
    %1174 = vector.shape_cast %1171 : vector<8x128xf32> to vector<1x8x128xf32>
    tpu.vector_store %arg19[%c7, %c0_435, %c0_436], %1174 {strides = array<i32>} : memref<8x8x128xf32, #tpu.memory_space<vmem>>, vector<1x8x128xf32>,
    return
  }
}

</mosaic_0001>

<llo_original>
// kernel: seq2seq_forward.1
$region0: #{seq2seq_forward.1}
  #allocation0 [shape = 'u32[]', space=smem, size = 0x4, offset = 0x4, fixed_abs, tag = 'smem constant byte address 0x4 - core index']
  #allocation1 [shape = 'u32[144,128]{1,0:T(1,128)}', space=vmem, size = 0x12000, scoped, tag = 'internal scratch']
  #allocation2 [shape = 'f32[8,32]{1,0:T(8,128)}', space=vmem, size = 0x1000, scoped, tag = 'scratch operand']
  %s0 = inlined_call_operand.vmem [shape: s32[8], index: 0, kind: input, shape index: {}]
  %s1 = inlined_call_operand.vmem [shape: s32[64,1], index: 1, kind: input, shape index: {}]
  %s2 = inlined_call_operand.vmem [shape: s32[64,1], index: 2, kind: input, shape index: {}]
  %s3 = inlined_call_operand.vmem [shape: f32[128,32], index: 3, kind: input, shape index: {}]
  %s4 = inlined_call_operand.vmem [shape: f32[128,32], index: 4, kind: input, shape index: {}]
  %s5 = inlined_call_operand.vmem [shape: f32[32,128], index: 5, kind: input, shape index: {}]
  %s6 = inlined_call_operand.vmem [shape: f32[32,128], index: 6, kind: input, shape index: {}]
  %s7 = inlined_call_operand.vmem [shape: f32[32,128], index: 7, kind: input, shape index: {}]
  %s8 = inlined_call_operand.vmem [shape: f32[32,128], index: 8, kind: input, shape index: {}]
  %s9 = inlined_call_operand.vmem [shape: f32[1,128], index: 9, kind: input, shape index: {}]
  %s10 = inlined_call_operand.vmem [shape: f32[1,128], index: 10, kind: input, shape index: {}]
  %s11 = inlined_call_operand.vmem [shape: f32[32,128], index: 11, kind: input, shape index: {}]
  %s12 = inlined_call_operand.vmem [shape: f32[32,128], index: 12, kind: input, shape index: {}]
  %s13 = inlined_call_operand.vmem [shape: f32[32,128], index: 13, kind: input, shape index: {}]
  %s14 = inlined_call_operand.vmem [shape: f32[32,128], index: 14, kind: input, shape index: {}]
  %s15 = inlined_call_operand.vmem [shape: f32[1,128], index: 15, kind: input, shape index: {}]
  %s16 = inlined_call_operand.vmem [shape: f32[1,128], index: 16, kind: input, shape index: {}]
  %s17 = inlined_call_operand.vmem [shape: f32[32,128], index: 17, kind: input, shape index: {}]
  %s18 = inlined_call_operand.vmem [shape: f32[1,128], index: 18, kind: input, shape index: {}]
  %s19 = inlined_call_operand.vmem [shape: f32[8,8,128], index: 19, kind: output, shape index: {}]
  %s20 = sld [smem:[#allocation0]]
  $region118: #{seq2seq_forward.1} parent=0
    _
  %s22 = ssub.s32 1, %s20
  %s23 = scalar_select 0, %s22, %s20
  $region1: #{seq2seq_forward.1} parent=0
    #allocation3 [shape = 'u8[512]{0}', space=smem, size = 0x200, scoped, tag = 'input window, operand 0, single buffered']
    #allocation4 [shape = 's32[1]{0}', space=sflag, size = 0x4, scoped, tag = 'scoped memory for seq2seq_forward.1']
    %24 = vsyncpa [#allocation4], 0
    // Predicated region
    $region2: #{seq2seq_forward.1} parent=1 // pred_check
      _
    $region3: #{seq2seq_forward.1} parent=1 // pred_check_branch
      %26 = sbr.rel (0) target = $region5
    $region4: #{seq2seq_forward.1} parent=1 // pred_region
      %s28 = ssub.s32 16, 16
      %29 = vsyncadd [#allocation4], %s28
      %s31 = sshll.u32 %s0, 4
      %s32 = int_to_ptr.vmem [resolvable:$true] %s31
      %34 = dma.vmem_to_smem %s32, 16, [#allocation3], [#allocation4]
    $region5: #{seq2seq_forward.1} parent=1 // pred_fallthru
      _
    // Predicated region
    $region6: #{seq2seq_forward.1} parent=1 // pred_check
      _
    $region7: #{seq2seq_forward.1} parent=1 // pred_check_branch
      %36 = sbr.rel (0) target = $region9
    $region8: #{seq2seq_forward.1} parent=1 // pred_region
      _
    $region9: #{seq2seq_forward.1} parent=1 // pred_fallthru
      _
    // Predicated region
    $region10: #{seq2seq_forward.1} parent=1 // pred_check
      _
    $region11: #{seq2seq_forward.1} parent=1 // pred_check_branch
      %38 = sbr.rel (0) target = $region13
    $region12: #{seq2seq_forward.1} parent=1 // pred_region
      _
    $region13: #{seq2seq_forward.1} parent=1 // pred_fallthru
      _
    // Predicated region
    $region14: #{seq2seq_forward.1} parent=1 // pred_check
      _
    $region15: #{seq2seq_forward.1} parent=1 // pred_check_branch
      %40 = sbr.rel (0) target = $region17
    $region16: #{seq2seq_forward.1} parent=1 // pred_region
      _
    $region17: #{seq2seq_forward.1} parent=1 // pred_fallthru
      _
    // Predicated region
    $region18: #{seq2seq_forward.1} parent=1 // pred_check
      _
    $region19: #{seq2seq_forward.1} parent=1 // pred_check_branch
      %42 = sbr.rel (0) target = $region21
    $region20: #{seq2seq_forward.1} parent=1 // pred_region
      _
    $region21: #{seq2seq_forward.1} parent=1 // pred_fallthru
      _
    // Predicated region
    $region22: #{seq2seq_forward.1} parent=1 // pred_check
      _
    $region23: #{seq2seq_forward.1} parent=1 // pred_check_branch
      %44 = sbr.rel (0) target = $region25
    $region24: #{seq2seq_forward.1} parent=1 // pred_region
      _
    $region25: #{seq2seq_forward.1} parent=1 // pred_fallthru
      _
    // Predicated region
    $region26: #{seq2seq_forward.1} parent=1 // pred_check
      _
    $region27: #{seq2seq_forward.1} parent=1 // pred_check_branch
      %46 = sbr.rel (0) target = $region29
    $region28: #{seq2seq_forward.1} parent=1 // pred_region
      _
    $region29: #{seq2seq_forward.1} parent=1 // pred_fallthru
      _
    // Predicated region
    $region30: #{seq2seq_forward.1} parent=1 // pred_check
      _
    $region31: #{seq2seq_forward.1} parent=1 // pred_check_branch
      %48 = sbr.rel (0) target = $region33
    $region32: #{seq2seq_forward.1} parent=1 // pred_region
      _
    $region33: #{seq2seq_forward.1} parent=1 // pred_fallthru
      _
    // Predicated region
    $region34: #{seq2seq_forward.1} parent=1 // pred_check
      _
    $region35: #{seq2seq_forward.1} parent=1 // pred_check_branch
      %50 = sbr.rel (0) target = $region37
    $region36: #{seq2seq_forward.1} parent=1 // pred_region
      _
    $region37: #{seq2seq_forward.1} parent=1 // pred_fallthru
      _
    // Predicated region
    $region38: #{seq2seq_forward.1} parent=1 // pred_check
      _
    $region39: #{seq2seq_forward.1} parent=1 // pred_check_branch
      %52 = sbr.rel (0) target = $region41
    $region40: #{seq2seq_forward.1} parent=1 // pred_region
      _
    $region41: #{seq2seq_forward.1} parent=1 // pred_fallthru
      _
    // Predicated region
    $region42: #{seq2seq_forward.1} parent=1 // pred_check
      _
    $region43: #{seq2seq_forward.1} parent=1 // pred_check_branch
      %54 = sbr.rel (0) target = $region45
    $region44: #{seq2seq_forward.1} parent=1 // pred_region
      _
    $region45: #{seq2seq_forward.1} parent=1 // pred_fallthru
      _
    // Predicated region
    $region46: #{seq2seq_forward.1} parent=1 // pred_check
      _
    $region47: #{seq2seq_forward.1} parent=1 // pred_check_branch
      %56 = sbr.rel (0) target = $region49
    $region48: #{seq2seq_forward.1} parent=1 // pred_region
      _
    $region49: #{seq2seq_forward.1} parent=1 // pred_fallthru
      _
    // Predicated region
    $region50: #{seq2seq_forward.1} parent=1 // pred_check
      _
    $region51: #{seq2seq_forward.1} parent=1 // pred_check_branch
      %58 = sbr.rel (0) target = $region53
    $region52: #{seq2seq_forward.1} parent=1 // pred_region
      _
    $region53: #{seq2seq_forward.1} parent=1 // pred_fallthru
      _
    // Predicated region
    $region54: #{seq2seq_forward.1} parent=1 // pred_check
      _
    $region55: #{seq2seq_forward.1} parent=1 // pred_check_branch
      %60 = sbr.rel (0) target = $region57
    $region56: #{seq2seq_forward.1} parent=1 // pred_region
      _
    $region57: #{seq2seq_forward.1} parent=1 // pred_fallthru
      _
    // Predicated region
    $region58: #{seq2seq_forward.1} parent=1 // pred_check
      _
    $region59: #{seq2seq_forward.1} parent=1 // pred_check_branch
      %62 = sbr.rel (0) target = $region61
    $region60: #{seq2seq_forward.1} parent=1 // pred_region
      _
    $region61: #{seq2seq_forward.1} parent=1 // pred_fallthru
      _
    // Predicated region
    $region62: #{seq2seq_forward.1} parent=1 // pred_check
      _
    $region63: #{seq2seq_forward.1} parent=1 // pred_check_branch
      %64 = sbr.rel (0) target = $region65
    $region64: #{seq2seq_forward.1} parent=1 // pred_region
      _
    $region65: #{seq2seq_forward.1} parent=1 // pred_fallthru
      _
    // Predicated region
    $region66: #{seq2seq_forward.1} parent=1 // pred_check
      _
    $region67: #{seq2seq_forward.1} parent=1 // pred_check_branch
      %66 = sbr.rel (0) target = $region69
    $region68: #{seq2seq_forward.1} parent=1 // pred_region
      _
    $region69: #{seq2seq_forward.1} parent=1 // pred_fallthru
      _
    // Predicated region
    $region70: #{seq2seq_forward.1} parent=1 // pred_check
      _
    $region71: #{seq2seq_forward.1} parent=1 // pred_check_branch
      %68 = sbr.rel (0) target = $region73
    $region72: #{seq2seq_forward.1} parent=1 // pred_region
      _
    $region73: #{seq2seq_forward.1} parent=1 // pred_fallthru
      _
    // Predicated region
    $region74: #{seq2seq_forward.1} parent=1 // pred_check
      _
    $region75: #{seq2seq_forward.1} parent=1 // pred_check_branch
      %70 = sbr.rel (0) target = $region77
    $region76: #{seq2seq_forward.1} parent=1 // pred_region
      _
    $region77: #{seq2seq_forward.1} parent=1 // pred_fallthru
      _
    // Predicated region
    $region78: #{seq2seq_forward.1} parent=1 // pred_check
      _
    $region79: #{seq2seq_forward.1} parent=1 // pred_check_branch
      %72 = sbr.rel (0) target = $region81
    $region80: #{seq2seq_forward.1} parent=1 // pred_region
      %73 = dma.done [#allocation4], 16
    $region81: #{seq2seq_forward.1} parent=1 // pred_fallthru
      _
    %74 = sfence
    %v75 = vld [vmem:[%s1] sm:$0xff]
    %v76 = vld [vmem:[%s1 + $0x8] sm:$0xff]
    %v77 = vld [vmem:[%s1 + $0x10] sm:$0xff]
    %v78 = vld [vmem:[%s1 + $0x18] sm:$0xff]
    %v79 = vld [vmem:[%s1 + $0x20] sm:$0xff]
    %v80 = vld [vmem:[%s1 + $0x28] sm:$0xff]
    %v81 = vld [vmem:[%s1 + $0x30] sm:$0xff]
    %v82 = vld [vmem:[%s1 + $0x38] sm:$0xff]
    %v83 = vcvt.s32.f32 %v75
    %v84 = vcvt.s32.f32 %v76
    %v85 = vcvt.s32.f32 %v77
    %v86 = vcvt.s32.f32 %v78
    %v87 = vcvt.s32.f32 %v79
    %v88 = vcvt.s32.f32 %v80
    %v89 = vcvt.s32.f32 %v81
    %v90 = vcvt.s32.f32 %v82
    %v91 = vlaneseq
    %v92 = vand.u32 %v91, 127
    %v93 = vcvt.s32.f32 %v92
    %95 = vset.pattern.permute.xlu0 0
    %96 = vperm.xlu0 %95, %v83
    %v97 = vpop.permute.xlu0 %96
    %100 = vset.pattern.permute.xlu0 0
    %101 = vperm.xlu0 %100, %v84
    %v102 = vpop.permute.xlu0 %101
    %105 = vset.pattern.permute.xlu0 0
    %106 = vperm.xlu0 %105, %v85
    %v107 = vpop.permute.xlu0 %106
    %110 = vset.pattern.permute.xlu0 0
    %111 = vperm.xlu0 %110, %v86
    %v112 = vpop.permute.xlu0 %111
    %115 = vset.pattern.permute.xlu0 0
    %116 = vperm.xlu0 %115, %v87
    %v117 = vpop.permute.xlu0 %116
    %120 = vset.pattern.permute.xlu0 0
    %121 = vperm.xlu0 %120, %v88
    %v122 = vpop.permute.xlu0 %121
    %125 = vset.pattern.permute.xlu0 0
    %126 = vperm.xlu0 %125, %v89
    %v127 = vpop.permute.xlu0 %126
    %130 = vset.pattern.permute.xlu0 0
    %131 = vperm.xlu0 %130, %v90
    %v132 = vpop.permute.xlu0 %131
    %vm134 = vcmp.eq.f32.partialorder %v93, %v97
    %vm135 = vcmp.eq.f32.partialorder %v93, %v102
    %vm136 = vcmp.eq.f32.partialorder %v93, %v107
    %vm137 = vcmp.eq.f32.partialorder %v93, %v112
    %vm138 = vcmp.eq.f32.partialorder %v93, %v117
    %vm139 = vcmp.eq.f32.partialorder %v93, %v122
    %vm140 = vcmp.eq.f32.partialorder %v93, %v127
    %vm141 = vcmp.eq.f32.partialorder %v93, %v132
    %v142 = vsel %vm134, 1, 0
    %v143 = vsel %vm135, 1, 0
    %v144 = vsel %vm136, 1, 0
    %v145 = vsel %vm137, 1, 0
    %v146 = vsel %vm138, 1, 0
    %v147 = vsel %vm139, 1, 0
    %v148 = vsel %vm140, 1, 0
    %v149 = vsel %vm141, 1, 0
    %v150 = vcvt.s32.f32 %v142
    %v151 = vcvt.s32.f32 %v143
    %v152 = vcvt.s32.f32 %v144
    %v153 = vcvt.s32.f32 %v145
    %v154 = vcvt.s32.f32 %v146
    %v155 = vcvt.s32.f32 %v147
    %v156 = vcvt.s32.f32 %v148
    %v157 = vcvt.s32.f32 %v149
    %v158 = vld [vmem:[%s3] sm:$0xff]
    %v159 = vld [vmem:[%s3 + $0x8] sm:$0xff]
    %v160 = vld [vmem:[%s3 + $0x10] sm:$0xff]
    %v161 = vld [vmem:[%s3 + $0x18] sm:$0xff]
    %v162 = vld [vmem:[%s3 + $0x20] sm:$0xff]
    %v163 = vld [vmem:[%s3 + $0x28] sm:$0xff]
    %v164 = vld [vmem:[%s3 + $0x30] sm:$0xff]
    %v165 = vld [vmem:[%s3 + $0x38] sm:$0xff]
    %v166 = vld [vmem:[%s3 + $0x40] sm:$0xff]
    %v167 = vld [vmem:[%s3 + $0x48] sm:$0xff]
    %v168 = vld [vmem:[%s3 + $0x50] sm:$0xff]
    %v169 = vld [vmem:[%s3 + $0x58] sm:$0xff]
    %v170 = vld [vmem:[%s3 + $0x60] sm:$0xff]
    %v171 = vld [vmem:[%s3 + $0x68] sm:$0xff]
    %v172 = vld [vmem:[%s3 + $0x70] sm:$0xff]
    %v173 = vld [vmem:[%s3 + $0x78] sm:$0xff]
    %174 = vmatprep.subr.mxu0 0.0
    %175 = vmatpush1.msra.mxu0 %v173
    %176 = vmatprep.subr.mxu0 0.0
    %177 = vmatpush1.msra.mxu0 %v172
    %178 = vmatprep.subr.mxu0 0.0
    %179 = vmatpush1.msra.mxu0 %v171
    %180 = vmatprep.subr.mxu0 0.0
    %181 = vmatpush1.msra.mxu0 %v170
    %182 = vmatprep.subr.mxu0 0.0
    %183 = vmatpush1.msra.mxu0 %v169
    %184 = vmatprep.subr.mxu0 0.0
    %185 = vmatpush1.msra.mxu0 %v168
    %186 = vmatprep.subr.mxu0 0.0
    %187 = vmatpush1.msra.mxu0 %v167
    %188 = vmatprep.subr.mxu0 0.0
    %189 = vmatpush1.msra.mxu0 %v166
    %190 = vmatprep.subr.mxu0 0.0
    %191 = vmatpush1.msra.mxu0 %v165
    %192 = vmatprep.subr.mxu0 0.0
    %193 = vmatpush1.msra.mxu0 %v164
    %194 = vmatprep.subr.mxu0 0.0
    %195 = vmatpush1.msra.mxu0 %v163
    %196 = vmatprep.subr.mxu0 0.0
    %197 = vmatpush1.msra.mxu0 %v162
    %198 = vmatprep.subr.mxu0 0.0
    %199 = vmatpush1.msra.mxu0 %v161
    %200 = vmatprep.subr.mxu0 0.0
    %201 = vmatpush1.msra.mxu0 %v160
    %202 = vmatprep.subr.mxu0 0.0
    %203 = vmatpush1.msra.mxu0 %v159
    %204 = vmatprep.subr.mxu0 0.0
    %205 = vmatpush1.msra.mxu0 %v158
    %206 = vmatprep.subr.mxu0 0.0
    %207 = vmatpush2.msra.mxu0 0.0
    %208 = vmatprep.subr.mxu0 0.0
    %209 = vmatpush2.msra.mxu0 0.0
    %210 = vmatprep.subr.mxu0 0.0
    %211 = vmatpush2.msra.mxu0 0.0
    %212 = vmatprep.subr.mxu0 0.0
    %213 = vmatpush2.msra.mxu0 0.0
    %214 = vmatprep.subr.mxu0 0.0
    %215 = vmatpush2.msra.mxu0 0.0
    %216 = vmatprep.subr.mxu0 0.0
    %217 = vmatpush2.msra.mxu0 0.0
    %218 = vmatprep.subr.mxu0 0.0
    %219 = vmatpush2.msra.mxu0 0.0
    %220 = vmatprep.subr.mxu0 0.0
    %221 = vmatpush2.msra.mxu0 0.0
    %222 = vmatprep.subr.mxu0 0.0
    %223 = vmatpush2.msra.mxu0 0.0
    %224 = vmatprep.subr.mxu0 0.0
    %225 = vmatpush2.msra.mxu0 0.0
    %226 = vmatprep.subr.mxu0 0.0
    %227 = vmatpush2.msra.mxu0 0.0
    %228 = vmatprep.subr.mxu0 0.0
    %229 = vmatpush2.msra.mxu0 0.0
    %230 = vmatprep.subr.mxu0 0.0
    %231 = vmatpush2.msra.mxu0 0.0
    %232 = vmatprep.subr.mxu0 0.0
    %233 = vmatpush2.msra.mxu0 0.0
    %234 = vmatprep.subr.mxu0 0.0
    %235 = vmatpush2.msra.mxu0 0.0
    %236 = vmatprep.subr.mxu0 0.0
    %237 = vmatpush2.msra.mxu0 0.0
    %238 = vmatprep.mubr.f32.mxu0 0.0
    %239 = vmatmul.mubr.f32.gmra.mxu0 %v150
    %v240 = vpop.f32.mrf.mxu0
    %v241 = vadd.f32 0.0, %v240
    %v242 = vpop.f32.mrf.mxu0
    %243 = vmatprep.mubr.f32.mxu0 0.0
    %244 = vmatmul.mubr.f32.gmra.mxu0 %v151
    %v245 = vpop.f32.mrf.mxu0
    %v246 = vadd.f32 0.0, %v245
    %v247 = vpop.f32.mrf.mxu0
    %248 = vmatprep.mubr.f32.mxu0 0.0
    %249 = vmatmul.mubr.f32.gmra.mxu0 %v152
    %v250 = vpop.f32.mrf.mxu0
    %v251 = vadd.f32 0.0, %v250
    %v252 = vpop.f32.mrf.mxu0
    %253 = vmatprep.mubr.f32.mxu0 0.0
    %254 = vmatmul.mubr.f32.gmra.mxu0 %v153
    %v255 = vpop.f32.mrf.mxu0
    %v256 = vadd.f32 0.0, %v255
    %v257 = vpop.f32.mrf.mxu0
    %258 = vmatprep.mubr.f32.mxu0 0.0
    %259 = vmatmul.mubr.f32.gmra.mxu0 %v154
    %v260 = vpop.f32.mrf.mxu0
    %v261 = vadd.f32 0.0, %v260
    %v262 = vpop.f32.mrf.mxu0
    %263 = vmatprep.mubr.f32.mxu0 0.0
    %264 = vmatmul.mubr.f32.gmra.mxu0 %v155
    %v265 = vpop.f32.mrf.mxu0
    %v266 = vadd.f32 0.0, %v265
    %v267 = vpop.f32.mrf.mxu0
    %268 = vmatprep.mubr.f32.mxu0 0.0
    %269 = vmatmul.mubr.f32.gmra.mxu0 %v156
    %v270 = vpop.f32.mrf.mxu0
    %v271 = vadd.f32 0.0, %v270
    %v272 = vpop.f32.mrf.mxu0
    %273 = vmatprep.mubr.f32.mxu0 0.0
    %274 = vmatmul.mubr.f32.gmra.mxu0 %v157
    %v275 = vpop.f32.mrf.mxu0
    %v276 = vadd.f32 0.0, %v275
    %v277 = vpop.f32.mrf.mxu0
    %278 = vdwg.mxu0
    %v279 = vld [vmem:[%s5] sm:$0xff]
    %v280 = vld [vmem:[%s5 + $0x8] sm:$0xff]
    %v281 = vld [vmem:[%s5 + $0x10] sm:$0xff]
    %v282 = vld [vmem:[%s5 + $0x18] sm:$0xff]
    %v283 = vld [vmem:[%s9] sm:$0x1]
    %v285 = vlaneseq
    %v286 = vshrl.u32 %v285, 7
    %v287 = vsub.s32 0, %v286
    %v288 = vrot.slane %v283, %v287
    %vm290 = vcmask 261120
    %v292 = vsel %vm290, %v241, 0
    %v295 = vsel %vm290, %v246, 0
    %v298 = vsel %vm290, %v251, 0
    %v301 = vsel %vm290, %v256, 0
    %v304 = vsel %vm290, %v261, 0
    %v307 = vsel %vm290, %v266, 0
    %v310 = vsel %vm290, %v271, 0
    %v313 = vsel %vm290, %v276, 0
    %315 = vmatprep.subr.mxu0 0.0
    %316 = vmatpush1.msra.mxu0 0.0
    %317 = vmatprep.subr.mxu0 0.0
    %318 = vmatpush1.msra.mxu0 0.0
    %319 = vmatprep.subr.mxu0 0.0
    %320 = vmatpush1.msra.mxu0 0.0
    %321 = vmatprep.subr.mxu0 0.0
    %322 = vmatpush1.msra.mxu0 0.0
    %323 = vmatprep.subr.mxu0 0.0
    %324 = vmatpush1.msra.mxu0 0.0
    %325 = vmatprep.subr.mxu0 0.0
    %326 = vmatpush1.msra.mxu0 0.0
    %327 = vmatprep.subr.mxu0 0.0
    %328 = vmatpush1.msra.mxu0 0.0
    %329 = vmatprep.subr.mxu0 0.0
    %330 = vmatpush1.msra.mxu0 0.0
    %331 = vmatprep.subr.mxu0 0.0
    %332 = vmatpush1.msra.mxu0 0.0
    %333 = vmatprep.subr.mxu0 0.0
    %334 = vmatpush1.msra.mxu0 0.0
    %335 = vmatprep.subr.mxu0 0.0
    %336 = vmatpush1.msra.mxu0 0.0
    %337 = vmatprep.subr.mxu0 0.0
    %338 = vmatpush1.msra.mxu0 0.0
    %339 = vmatprep.subr.mxu0 0.0
    %340 = vmatpush1.msra.mxu0 %v282
    %341 = vmatprep.subr.mxu0 0.0
    %342 = vmatpush1.msra.mxu0 %v281
    %343 = vmatprep.subr.mxu0 0.0
    %344 = vmatpush1.msra.mxu0 %v280
    %345 = vmatprep.subr.mxu0 0.0
    %346 = vmatpush1.msra.mxu0 %v279
    %347 = vmatprep.subr.mxu0 0.0
    %348 = vmatpush2.msra.mxu0 0.0
    %349 = vmatprep.subr.mxu0 0.0
    %350 = vmatpush2.msra.mxu0 0.0
    %351 = vmatprep.subr.mxu0 0.0
    %352 = vmatpush2.msra.mxu0 0.0
    %353 = vmatprep.subr.mxu0 0.0
    %354 = vmatpush2.msra.mxu0 0.0
    %355 = vmatprep.subr.mxu0 0.0
    %356 = vmatpush2.msra.mxu0 0.0
    %357 = vmatprep.subr.mxu0 0.0
    %358 = vmatpush2.msra.mxu0 0.0
    %359 = vmatprep.subr.mxu0 0.0
    %360 = vmatpush2.msra.mxu0 0.0
    %361 = vmatprep.subr.mxu0 0.0
    %362 = vmatpush2.msra.mxu0 0.0
    %363 = vmatprep.subr.mxu0 0.0
    %364 = vmatpush2.msra.mxu0 0.0
    %365 = vmatprep.subr.mxu0 0.0
    %366 = vmatpush2.msra.mxu0 0.0
    %367 = vmatprep.subr.mxu0 0.0
    %368 = vmatpush2.msra.mxu0 0.0
    %369 = vmatprep.subr.mxu0 0.0
    %370 = vmatpush2.msra.mxu0 0.0
    %371 = vmatprep.subr.mxu0 0.0
    %372 = vmatpush2.msra.mxu0 0.0
    %373 = vmatprep.subr.mxu0 0.0
    %374 = vmatpush2.msra.mxu0 0.0
    %375 = vmatprep.subr.mxu0 0.0
    %376 = vmatpush2.msra.mxu0 0.0
    %377 = vmatprep.subr.mxu0 0.0
    %378 = vmatpush2.msra.mxu0 0.0
    %379 = vmatprep.mubr.f32.mxu0 0.0
    %380 = vmatmul.mubr.f32.gmra.mxu0 %v292
    %v381 = vpop.f32.mrf.mxu0
    %v382 = vadd.f32 %v288, %v381
    %v383 = vpop.f32.mrf.mxu0
    %384 = vmatprep.mubr.f32.mxu0 0.0
    %385 = vmatmul.mubr.f32.gmra.mxu0 %v295
    %v386 = vpop.f32.mrf.mxu0
    %v387 = vadd.f32 %v288, %v386
    %v388 = vpop.f32.mrf.mxu0
    %389 = vmatprep.mubr.f32.mxu0 0.0
    %390 = vmatmul.mubr.f32.gmra.mxu0 %v298
    %v391 = vpop.f32.mrf.mxu0
    %v392 = vadd.f32 %v288, %v391
    %v393 = vpop.f32.mrf.mxu0
    %394 = vmatprep.mubr.f32.mxu0 0.0
    %395 = vmatmul.mubr.f32.gmra.mxu0 %v301
    %v396 = vpop.f32.mrf.mxu0
    %v397 = vadd.f32 %v288, %v396
    %v398 = vpop.f32.mrf.mxu0
    %399 = vmatprep.mubr.f32.mxu0 0.0
    %400 = vmatmul.mubr.f32.gmra.mxu0 %v304
    %v401 = vpop.f32.mrf.mxu0
    %v402 = vadd.f32 %v288, %v401
    %v403 = vpop.f32.mrf.mxu0
    %404 = vmatprep.mubr.f32.mxu0 0.0
    %405 = vmatmul.mubr.f32.gmra.mxu0 %v307
    %v406 = vpop.f32.mrf.mxu0
    %v407 = vadd.f32 %v288, %v406
    %v408 = vpop.f32.mrf.mxu0
    %409 = vmatprep.mubr.f32.mxu0 0.0
    %410 = vmatmul.mubr.f32.gmra.mxu0 %v310
    %v411 = vpop.f32.mrf.mxu0
    %v412 = vadd.f32 %v288, %v411
    %v413 = vpop.f32.mrf.mxu0
    %414 = vmatprep.mubr.f32.mxu0 0.0
    %415 = vmatmul.mubr.f32.gmra.mxu0 %v313
    %v416 = vpop.f32.mrf.mxu0
    %v417 = vadd.f32 %v288, %v416
    %v418 = vpop.f32.mrf.mxu0
    %419 = vdwg.mxu0
    %v420 = vld [vmem:[%s7] sm:$0xff]
    %v421 = vld [vmem:[%s7 + $0x8] sm:$0xff]
    %v422 = vld [vmem:[%s7 + $0x10] sm:$0xff]
    %v423 = vld [vmem:[%s7 + $0x18] sm:$0xff]
    %v425 = vsel %vm290, 0.0, 0
    %427 = vmatprep.subr.mxu0 0.0
    %428 = vmatpush1.msra.mxu0 0.0
    %429 = vmatprep.subr.mxu0 0.0
    %430 = vmatpush1.msra.mxu0 0.0
    %431 = vmatprep.subr.mxu0 0.0
    %432 = vmatpush1.msra.mxu0 0.0
    %433 = vmatprep.subr.mxu0 0.0
    %434 = vmatpush1.msra.mxu0 0.0
    %435 = vmatprep.subr.mxu0 0.0
    %436 = vmatpush1.msra.mxu0 0.0
    %437 = vmatprep.subr.mxu0 0.0
    %438 = vmatpush1.msra.mxu0 0.0
    %439 = vmatprep.subr.mxu0 0.0
    %440 = vmatpush1.msra.mxu0 0.0
    %441 = vmatprep.subr.mxu0 0.0
    %442 = vmatpush1.msra.mxu0 0.0
    %443 = vmatprep.subr.mxu0 0.0
    %444 = vmatpush1.msra.mxu0 0.0
    %445 = vmatprep.subr.mxu0 0.0
    %446 = vmatpush1.msra.mxu0 0.0
    %447 = vmatprep.subr.mxu0 0.0
    %448 = vmatpush1.msra.mxu0 0.0
    %449 = vmatprep.subr.mxu0 0.0
    %450 = vmatpush1.msra.mxu0 0.0
    %451 = vmatprep.subr.mxu0 0.0
    %452 = vmatpush1.msra.mxu0 %v423
    %453 = vmatprep.subr.mxu0 0.0
    %454 = vmatpush1.msra.mxu0 %v422
    %455 = vmatprep.subr.mxu0 0.0
    %456 = vmatpush1.msra.mxu0 %v421
    %457 = vmatprep.subr.mxu0 0.0
    %458 = vmatpush1.msra.mxu0 %v420
    %459 = vmatprep.subr.mxu0 0.0
    %460 = vmatpush2.msra.mxu0 0.0
    %461 = vmatprep.subr.mxu0 0.0
    %462 = vmatpush2.msra.mxu0 0.0
    %463 = vmatprep.subr.mxu0 0.0
    %464 = vmatpush2.msra.mxu0 0.0
    %465 = vmatprep.subr.mxu0 0.0
    %466 = vmatpush2.msra.mxu0 0.0
    %467 = vmatprep.subr.mxu0 0.0
    %468 = vmatpush2.msra.mxu0 0.0
    %469 = vmatprep.subr.mxu0 0.0
    %470 = vmatpush2.msra.mxu0 0.0
    %471 = vmatprep.subr.mxu0 0.0
    %472 = vmatpush2.msra.mxu0 0.0
    %473 = vmatprep.subr.mxu0 0.0
    %474 = vmatpush2.msra.mxu0 0.0
    %475 = vmatprep.subr.mxu0 0.0
    %476 = vmatpush2.msra.mxu0 0.0
    %477 = vmatprep.subr.mxu0 0.0
    %478 = vmatpush2.msra.mxu0 0.0
    %479 = vmatprep.subr.mxu0 0.0
    %480 = vmatpush2.msra.mxu0 0.0
    %481 = vmatprep.subr.mxu0 0.0
    %482 = vmatpush2.msra.mxu0 0.0
    %483 = vmatprep.subr.mxu0 0.0
    %484 = vmatpush2.msra.mxu0 0.0
    %485 = vmatprep.subr.mxu0 0.0
    %486 = vmatpush2.msra.mxu0 0.0
    %487 = vmatprep.subr.mxu0 0.0
    %488 = vmatpush2.msra.mxu0 0.0
    %489 = vmatprep.subr.mxu0 0.0
    %490 = vmatpush2.msra.mxu0 0.0
    %491 = vmatprep.mubr.f32.mxu0 0.0
    %492 = vmatmul.mubr.f32.gmra.mxu0 %v425
    %v493 = vpop.f32.mrf.mxu0
    %v494 = vadd.f32 0.0, %v493
    %v495 = vpop.f32.mrf.mxu0
    %496 = vdwg.mxu0
    %v497 = vadd.f32 %v382, %v494
    %v498 = vxor.u32 %v497, 2147483648
    %v499 = vmul.f32 %v498, 1.442695
    %v500 = vpow.pop %v499
    %v501 = vadd.f32 %v500, 1.0
    %v502 = vrcp.pop %v501
    %v503 = vmul.f32 1.0, %v502
    %v504 = vtanh.pop %v497
    %v505 = vmul.f32 %v503, 0.0
    %507 = vrot.lane.b32.xlu0 %v504, 64
    %v508 = vpop.permute.xlu0 %507
    %v510 = vmul.f32 %v503, %v508
    %512 = vrot.lane.b32.xlu0 %v510, 32
    %v513 = vpop.permute.xlu0 %512
    %v515 = vadd.f32 %v505, %v513
    %v516 = vtanh.pop %v515
    %518 = vrot.lane.b32.xlu0 %v516, 64
    %v519 = vpop.permute.xlu0 %518
    %v521 = vmul.f32 %v503, %v519
    %v522 = vld [vmem:[%s6] sm:$0xff]
    %v523 = vld [vmem:[%s6 + $0x8] sm:$0xff]
    %v524 = vld [vmem:[%s6 + $0x10] sm:$0xff]
    %v525 = vld [vmem:[%s6 + $0x18] sm:$0xff]
    %v526 = vld [vmem:[%s8] sm:$0xff]
    %v527 = vld [vmem:[%s8 + $0x8] sm:$0xff]
    %v528 = vld [vmem:[%s8 + $0x10] sm:$0xff]
    %v529 = vld [vmem:[%s8 + $0x18] sm:$0xff]
    %530 = vmatprep.subr.mxu0 0.0
    %531 = vmatpush1.msra.mxu0 0.0
    %532 = vmatprep.subr.mxu0 0.0
    %533 = vmatpush1.msra.mxu0 0.0
    %534 = vmatprep.subr.mxu0 0.0
    %535 = vmatpush1.msra.mxu0 0.0
    %536 = vmatprep.subr.mxu0 0.0
    %537 = vmatpush1.msra.mxu0 0.0
    %538 = vmatprep.subr.mxu0 0.0
    %539 = vmatpush1.msra.mxu0 0.0
    %540 = vmatprep.subr.mxu0 0.0
    %541 = vmatpush1.msra.mxu0 0.0
    %542 = vmatprep.subr.mxu0 0.0
    %543 = vmatpush1.msra.mxu0 0.0
    %544 = vmatprep.subr.mxu0 0.0
    %545 = vmatpush1.msra.mxu0 0.0
    %546 = vmatprep.subr.mxu0 0.0
    %547 = vmatpush1.msra.mxu0 0.0
    %548 = vmatprep.subr.mxu0 0.0
    %549 = vmatpush1.msra.mxu0 0.0
    %550 = vmatprep.subr.mxu0 0.0
    %551 = vmatpush1.msra.mxu0 0.0
    %552 = vmatprep.subr.mxu0 0.0
    %553 = vmatpush1.msra.mxu0 0.0
    %554 = vmatprep.subr.mxu0 0.0
    %555 = vmatpush1.msra.mxu0 %v529
    %556 = vmatprep.subr.mxu0 0.0
    %557 = vmatpush1.msra.mxu0 %v528
    %558 = vmatprep.subr.mxu0 0.0
    %559 = vmatpush1.msra.mxu0 %v527
    %560 = vmatprep.subr.mxu0 0.0
    %561 = vmatpush1.msra.mxu0 %v526
    %562 = vmatprep.subr.mxu0 0.0
    %563 = vmatpush2.msra.mxu0 0.0
    %564 = vmatprep.subr.mxu0 0.0
    %565 = vmatpush2.msra.mxu0 0.0
    %566 = vmatprep.subr.mxu0 0.0
    %567 = vmatpush2.msra.mxu0 0.0
    %568 = vmatprep.subr.mxu0 0.0
    %569 = vmatpush2.msra.mxu0 0.0
    %570 = vmatprep.subr.mxu0 0.0
    %571 = vmatpush2.msra.mxu0 0.0
    %572 = vmatprep.subr.mxu0 0.0
    %573 = vmatpush2.msra.mxu0 0.0
    %574 = vmatprep.subr.mxu0 0.0
    %575 = vmatpush2.msra.mxu0 0.0
    %576 = vmatprep.subr.mxu0 0.0
    %577 = vmatpush2.msra.mxu0 0.0
    %578 = vmatprep.subr.mxu0 0.0
    %579 = vmatpush2.msra.mxu0 0.0
    %580 = vmatprep.subr.mxu0 0.0
    %581 = vmatpush2.msra.mxu0 0.0
    %582 = vmatprep.subr.mxu0 0.0
    %583 = vmatpush2.msra.mxu0 0.0
    %584 = vmatprep.subr.mxu0 0.0
    %585 = vmatpush2.msra.mxu0 0.0
    %586 = vmatprep.subr.mxu0 0.0
    %587 = vmatpush2.msra.mxu0 0.0
    %588 = vmatprep.subr.mxu0 0.0
    %589 = vmatpush2.msra.mxu0 0.0
    %590 = vmatprep.subr.mxu0 0.0
    %591 = vmatpush2.msra.mxu0 0.0
    %592 = vmatprep.subr.mxu0 0.0
    %593 = vmatpush2.msra.mxu0 0.0
    %594 = vmatprep.mubr.f32.mxu0 0.0
    %595 = vmatmul.mubr.f32.gmra.mxu0 %v425
    %v596 = vpop.f32.mrf.mxu0
    %v597 = vadd.f32 0.0, %v596
    %v598 = vpop.f32.mrf.mxu0
    %599 = vdwg.mxu0
    %601 = vrot.lane.b32.xlu0 %v521, 32
    %v602 = vpop.permute.xlu0 %601
    %v603 = vsel %vm290, %v602, 0
    %605 = vmatprep.subr.mxu0 0.0
    %606 = vmatpush1.msra.mxu0 0.0
    %607 = vmatprep.subr.mxu0 0.0
    %608 = vmatpush1.msra.mxu0 0.0
    %609 = vmatprep.subr.mxu0 0.0
    %610 = vmatpush1.msra.mxu0 0.0
    %611 = vmatprep.subr.mxu0 0.0
    %612 = vmatpush1.msra.mxu0 0.0
    %613 = vmatprep.subr.mxu0 0.0
    %614 = vmatpush1.msra.mxu0 0.0
    %615 = vmatprep.subr.mxu0 0.0
    %616 = vmatpush1.msra.mxu0 0.0
    %617 = vmatprep.subr.mxu0 0.0
    %618 = vmatpush1.msra.mxu0 0.0
    %619 = vmatprep.subr.mxu0 0.0
    %620 = vmatpush1.msra.mxu0 0.0
    %621 = vmatprep.subr.mxu0 0.0
    %622 = vmatpush1.msra.mxu0 0.0
    %623 = vmatprep.subr.mxu0 0.0
    %624 = vmatpush1.msra.mxu0 0.0
    %625 = vmatprep.subr.mxu0 0.0
    %626 = vmatpush1.msra.mxu0 0.0
    %627 = vmatprep.subr.mxu0 0.0
    %628 = vmatpush1.msra.mxu0 0.0
    %629 = vmatprep.subr.mxu0 0.0
    %630 = vmatpush1.msra.mxu0 %v525
    %631 = vmatprep.subr.mxu0 0.0
    %632 = vmatpush1.msra.mxu0 %v524
    %633 = vmatprep.subr.mxu0 0.0
    %634 = vmatpush1.msra.mxu0 %v523
    %635 = vmatprep.subr.mxu0 0.0
    %636 = vmatpush1.msra.mxu0 %v522
    %637 = vmatprep.subr.mxu0 0.0
    %638 = vmatpush2.msra.mxu0 0.0
    %639 = vmatprep.subr.mxu0 0.0
    %640 = vmatpush2.msra.mxu0 0.0
    %641 = vmatprep.subr.mxu0 0.0
    %642 = vmatpush2.msra.mxu0 0.0
    %643 = vmatprep.subr.mxu0 0.0
    %644 = vmatpush2.msra.mxu0 0.0
    %645 = vmatprep.subr.mxu0 0.0
    %646 = vmatpush2.msra.mxu0 0.0
    %647 = vmatprep.subr.mxu0 0.0
    %648 = vmatpush2.msra.mxu0 0.0
    %649 = vmatprep.subr.mxu0 0.0
    %650 = vmatpush2.msra.mxu0 0.0
    %651 = vmatprep.subr.mxu0 0.0
    %652 = vmatpush2.msra.mxu0 0.0
    %653 = vmatprep.subr.mxu0 0.0
    %654 = vmatpush2.msra.mxu0 0.0
    %655 = vmatprep.subr.mxu0 0.0
    %656 = vmatpush2.msra.mxu0 0.0
    %657 = vmatprep.subr.mxu0 0.0
    %658 = vmatpush2.msra.mxu0 0.0
    %659 = vmatprep.subr.mxu0 0.0
    %660 = vmatpush2.msra.mxu0 0.0
    %661 = vmatprep.subr.mxu0 0.0
    %662 = vmatpush2.msra.mxu0 0.0
    %663 = vmatprep.subr.mxu0 0.0
    %664 = vmatpush2.msra.mxu0 0.0
    %665 = vmatprep.subr.mxu0 0.0
    %666 = vmatpush2.msra.mxu0 0.0
    %667 = vmatprep.subr.mxu0 0.0
    %668 = vmatpush2.msra.mxu0 0.0
    %669 = vmatprep.mubr.f32.mxu0 0.0
    %670 = vmatmul.mubr.f32.gmra.mxu0 %v603
    %v671 = vpop.f32.mrf.mxu0
    %v672 = vadd.f32 %v597, %v671
    %v673 = vpop.f32.mrf.mxu0
    %674 = vdwg.mxu0
    %v675 = vld [vmem:[%s10] sm:$0x1]
    %v677 = vlaneseq
    %v678 = vshrl.u32 %v677, 7
    %v679 = vsub.s32 0, %v678
    %v680 = vrot.slane %v675, %v679
    %v682 = vadd.f32 %v672, %v680
    %v683 = vxor.u32 %v682, 2147483648
    %v684 = vmul.f32 %v683, 1.442695
    %v685 = vpow.pop %v684
    %v686 = vadd.f32 %v685, 1.0
    %v687 = vrcp.pop %v686
    %v688 = vmul.f32 1.0, %v687
    %v689 = vtanh.pop %v682
    %v690 = vmul.f32 %v688, 0.0
    %692 = vrot.lane.b32.xlu0 %v689, 64
    %v693 = vpop.permute.xlu0 %692
    %v695 = vmul.f32 %v688, %v693
    %697 = vrot.lane.b32.xlu0 %v695, 32
    %v698 = vpop.permute.xlu0 %697
    %v700 = vadd.f32 %v690, %v698
    %v701 = vtanh.pop %v700
    %703 = vrot.lane.b32.xlu0 %v701, 64
    %v704 = vpop.permute.xlu0 %703
    %v706 = vmul.f32 %v688, %v704
    %707 = vmatprep.subr.mxu0 0.0
    %708 = vmatpush1.msra.mxu0 0.0
    %709 = vmatprep.subr.mxu0 0.0
    %710 = vmatpush1.msra.mxu0 0.0
    %711 = vmatprep.subr.mxu0 0.0
    %712 = vmatpush1.msra.mxu0 0.0
    %713 = vmatprep.subr.mxu0 0.0
    %714 = vmatpush1.msra.mxu0 0.0
    %715 = vmatprep.subr.mxu0 0.0
    %716 = vmatpush1.msra.mxu0 0.0
    %717 = vmatprep.subr.mxu0 0.0
    %718 = vmatpush1.msra.mxu0 0.0
    %719 = vmatprep.subr.mxu0 0.0
    %720 = vmatpush1.msra.mxu0 0.0
    %721 = vmatprep.subr.mxu0 0.0
    %722 = vmatpush1.msra.mxu0 0.0
    %723 = vmatprep.subr.mxu0 0.0
    %724 = vmatpush1.msra.mxu0 0.0
    %725 = vmatprep.subr.mxu0 0.0
    %726 = vmatpush1.msra.mxu0 0.0
    %727 = vmatprep.subr.mxu0 0.0
    %728 = vmatpush1.msra.mxu0 0.0
    %729 = vmatprep.subr.mxu0 0.0
    %730 = vmatpush1.msra.mxu0 0.0
    %731 = vmatprep.subr.mxu0 0.0
    %732 = vmatpush1.msra.mxu0 %v423
    %733 = vmatprep.subr.mxu0 0.0
    %734 = vmatpush1.msra.mxu0 %v422
    %735 = vmatprep.subr.mxu0 0.0
    %736 = vmatpush1.msra.mxu0 %v421
    %737 = vmatprep.subr.mxu0 0.0
    %738 = vmatpush1.msra.mxu0 %v420
    %739 = vmatprep.subr.mxu0 0.0
    %740 = vmatpush2.msra.mxu0 0.0
    %741 = vmatprep.subr.mxu0 0.0
    %742 = vmatpush2.msra.mxu0 0.0
    %743 = vmatprep.subr.mxu0 0.0
    %744 = vmatpush2.msra.mxu0 0.0
    %745 = vmatprep.subr.mxu0 0.0
    %746 = vmatpush2.msra.mxu0 0.0
    %747 = vmatprep.subr.mxu0 0.0
    %748 = vmatpush2.msra.mxu0 0.0
    %749 = vmatprep.subr.mxu0 0.0
    %750 = vmatpush2.msra.mxu0 0.0
    %751 = vmatprep.subr.mxu0 0.0
    %752 = vmatpush2.msra.mxu0 0.0
    %753 = vmatprep.subr.mxu0 0.0
    %754 = vmatpush2.msra.mxu0 0.0
    %755 = vmatprep.subr.mxu0 0.0
    %756 = vmatpush2.msra.mxu0 0.0
    %757 = vmatprep.subr.mxu0 0.0
    %758 = vmatpush2.msra.mxu0 0.0
    %759 = vmatprep.subr.mxu0 0.0
    %760 = vmatpush2.msra.mxu0 0.0
    %761 = vmatprep.subr.mxu0 0.0
    %762 = vmatpush2.msra.mxu0 0.0
    %763 = vmatprep.subr.mxu0 0.0
    %764 = vmatpush2.msra.mxu0 0.0
    %765 = vmatprep.subr.mxu0 0.0
    %766 = vmatpush2.msra.mxu0 0.0
    %767 = vmatprep.subr.mxu0 0.0
    %768 = vmatpush2.msra.mxu0 0.0
    %769 = vmatprep.subr.mxu0 0.0
    %770 = vmatpush2.msra.mxu0 0.0
    %771 = vmatprep.mubr.f32.mxu0 0.0
    %772 = vmatmul.mubr.f32.gmra.mxu0 %v603
    %v773 = vpop.f32.mrf.mxu0
    %v774 = vadd.f32 0.0, %v773
    %v775 = vpop.f32.mrf.mxu0
    %776 = vdwg.mxu0
    %v777 = vadd.f32 %v387, %v774
    %v778 = vxor.u32 %v777, 2147483648
    %v779 = vmul.f32 %v778, 1.442695
    %v780 = vpow.pop %v779
    %v781 = vadd.f32 %v780, 1.0
    %v782 = vrcp.pop %v781
    %v783 = vmul.f32 1.0, %v782
    %v784 = vtanh.pop %v777
    %v785 = vmul.f32 %v783, %v515
    %787 = vrot.lane.b32.xlu0 %v784, 64
    %v788 = vpop.permute.xlu0 %787
    %v790 = vmul.f32 %v783, %v788
    %792 = vrot.lane.b32.xlu0 %v790, 32
    %v793 = vpop.permute.xlu0 %792
    %v795 = vadd.f32 %v785, %v793
    %v796 = vtanh.pop %v795
    %798 = vrot.lane.b32.xlu0 %v796, 64
    %v799 = vpop.permute.xlu0 %798
    %v801 = vmul.f32 %v783, %v799
    %803 = vrot.lane.b32.xlu0 %v706, 32
    %v804 = vpop.permute.xlu0 %803
    %v805 = vsel %vm290, %v804, 0
    %807 = vmatprep.subr.mxu0 0.0
    %808 = vmatpush1.msra.mxu0 0.0
    %809 = vmatprep.subr.mxu0 0.0
    %810 = vmatpush1.msra.mxu0 0.0
    %811 = vmatprep.subr.mxu0 0.0
    %812 = vmatpush1.msra.mxu0 0.0
    %813 = vmatprep.subr.mxu0 0.0
    %814 = vmatpush1.msra.mxu0 0.0
    %815 = vmatprep.subr.mxu0 0.0
    %816 = vmatpush1.msra.mxu0 0.0
    %817 = vmatprep.subr.mxu0 0.0
    %818 = vmatpush1.msra.mxu0 0.0
    %819 = vmatprep.subr.mxu0 0.0
    %820 = vmatpush1.msra.mxu0 0.0
    %821 = vmatprep.subr.mxu0 0.0
    %822 = vmatpush1.msra.mxu0 0.0
    %823 = vmatprep.subr.mxu0 0.0
    %824 = vmatpush1.msra.mxu0 0.0
    %825 = vmatprep.subr.mxu0 0.0
    %826 = vmatpush1.msra.mxu0 0.0
    %827 = vmatprep.subr.mxu0 0.0
    %828 = vmatpush1.msra.mxu0 0.0
    %829 = vmatprep.subr.mxu0 0.0
    %830 = vmatpush1.msra.mxu0 0.0
    %831 = vmatprep.subr.mxu0 0.0
    %832 = vmatpush1.msra.mxu0 %v529
    %833 = vmatprep.subr.mxu0 0.0
    %834 = vmatpush1.msra.mxu0 %v528
    %835 = vmatprep.subr.mxu0 0.0
    %836 = vmatpush1.msra.mxu0 %v527
    %837 = vmatprep.subr.mxu0 0.0
    %838 = vmatpush1.msra.mxu0 %v526
    %839 = vmatprep.subr.mxu0 0.0
    %840 = vmatpush2.msra.mxu0 0.0
    %841 = vmatprep.subr.mxu0 0.0
    %842 = vmatpush2.msra.mxu0 0.0
    %843 = vmatprep.subr.mxu0 0.0
    %844 = vmatpush2.msra.mxu0 0.0
    %845 = vmatprep.subr.mxu0 0.0
    %846 = vmatpush2.msra.mxu0 0.0
    %847 = vmatprep.subr.mxu0 0.0
    %848 = vmatpush2.msra.mxu0 0.0
    %849 = vmatprep.subr.mxu0 0.0
    %850 = vmatpush2.msra.mxu0 0.0
    %851 = vmatprep.subr.mxu0 0.0
    %852 = vmatpush2.msra.mxu0 0.0
    %853 = vmatprep.subr.mxu0 0.0
    %854 = vmatpush2.msra.mxu0 0.0
    %855 = vmatprep.subr.mxu0 0.0
    %856 = vmatpush2.msra.mxu0 0.0
    %857 = vmatprep.subr.mxu0 0.0
    %858 = vmatpush2.msra.mxu0 0.0
    %859 = vmatprep.subr.mxu0 0.0
    %860 = vmatpush2.msra.mxu0 0.0
    %861 = vmatprep.subr.mxu0 0.0
    %862 = vmatpush2.msra.mxu0 0.0
    %863 = vmatprep.subr.mxu0 0.0
    %864 = vmatpush2.msra.mxu0 0.0
    %865 = vmatprep.subr.mxu0 0.0
    %866 = vmatpush2.msra.mxu0 0.0
    %867 = vmatprep.subr.mxu0 0.0
    %868 = vmatpush2.msra.mxu0 0.0
    %869 = vmatprep.subr.mxu0 0.0
    %870 = vmatpush2.msra.mxu0 0.0
    %871 = vmatprep.mubr.f32.mxu0 0.0
    %872 = vmatmul.mubr.f32.gmra.mxu0 %v805
    %v873 = vpop.f32.mrf.mxu0
    %v874 = vadd.f32 0.0, %v873
    %v875 = vpop.f32.mrf.mxu0
    %876 = vdwg.mxu0
    %878 = vrot.lane.b32.xlu0 %v801, 32
    %v879 = vpop.permute.xlu0 %878
    %v880 = vsel %vm290, %v879, 0
    %882 = vmatprep.subr.mxu0 0.0
    %883 = vmatpush1.msra.mxu0 0.0
    %884 = vmatprep.subr.mxu0 0.0
    %885 = vmatpush1.msra.mxu0 0.0
    %886 = vmatprep.subr.mxu0 0.0
    %887 = vmatpush1.msra.mxu0 0.0
    %888 = vmatprep.subr.mxu0 0.0
    %889 = vmatpush1.msra.mxu0 0.0
    %890 = vmatprep.subr.mxu0 0.0
    %891 = vmatpush1.msra.mxu0 0.0
    %892 = vmatprep.subr.mxu0 0.0
    %893 = vmatpush1.msra.mxu0 0.0
    %894 = vmatprep.subr.mxu0 0.0
    %895 = vmatpush1.msra.mxu0 0.0
    %896 = vmatprep.subr.mxu0 0.0
    %897 = vmatpush1.msra.mxu0 0.0
    %898 = vmatprep.subr.mxu0 0.0
    %899 = vmatpush1.msra.mxu0 0.0
    %900 = vmatprep.subr.mxu0 0.0
    %901 = vmatpush1.msra.mxu0 0.0
    %902 = vmatprep.subr.mxu0 0.0
    %903 = vmatpush1.msra.mxu0 0.0
    %904 = vmatprep.subr.mxu0 0.0
    %905 = vmatpush1.msra.mxu0 0.0
    %906 = vmatprep.subr.mxu0 0.0
    %907 = vmatpush1.msra.mxu0 %v525
    %908 = vmatprep.subr.mxu0 0.0
    %909 = vmatpush1.msra.mxu0 %v524
    %910 = vmatprep.subr.mxu0 0.0
    %911 = vmatpush1.msra.mxu0 %v523
    %912 = vmatprep.subr.mxu0 0.0
    %913 = vmatpush1.msra.mxu0 %v522
    %914 = vmatprep.subr.mxu0 0.0
    %915 = vmatpush2.msra.mxu0 0.0
    %916 = vmatprep.subr.mxu0 0.0
    %917 = vmatpush2.msra.mxu0 0.0
    %918 = vmatprep.subr.mxu0 0.0
    %919 = vmatpush2.msra.mxu0 0.0
    %920 = vmatprep.subr.mxu0 0.0
    %921 = vmatpush2.msra.mxu0 0.0
    %922 = vmatprep.subr.mxu0 0.0
    %923 = vmatpush2.msra.mxu0 0.0
    %924 = vmatprep.subr.mxu0 0.0
    %925 = vmatpush2.msra.mxu0 0.0
    %926 = vmatprep.subr.mxu0 0.0
    %927 = vmatpush2.msra.mxu0 0.0
    %928 = vmatprep.subr.mxu0 0.0
    %929 = vmatpush2.msra.mxu0 0.0
    %930 = vmatprep.subr.mxu0 0.0
    %931 = vmatpush2.msra.mxu0 0.0
    %932 = vmatprep.subr.mxu0 0.0
    %933 = vmatpush2.msra.mxu0 0.0
    %934 = vmatprep.subr.mxu0 0.0
    %935 = vmatpush2.msra.mxu0 0.0
    %936 = vmatprep.subr.mxu0 0.0
    %937 = vmatpush2.msra.mxu0 0.0
    %938 = vmatprep.subr.mxu0 0.0
    %939 = vmatpush2.msra.mxu0 0.0
    %940 = vmatprep.subr.mxu0 0.0
    %941 = vmatpush2.msra.mxu0 0.0
    %942 = vmatprep.subr.mxu0 0.0
    %943 = vmatpush2.msra.mxu0 0.0
    %944 = vmatprep.subr.mxu0 0.0
    %945 = vmatpush2.msra.mxu0 0.0
    %946 = vmatprep.mubr.f32.mxu0 0.0
    %947 = vmatmul.mubr.f32.gmra.mxu0 %v880
    %v948 = vpop.f32.mrf.mxu0
    %v949 = vadd.f32 %v874, %v948
    %v950 = vpop.f32.mrf.mxu0
    %951 = vdwg.mxu0
    %v952 = vadd.f32 %v949, %v680
    %v953 = vxor.u32 %v952, 2147483648
    %v954 = vmul.f32 %v953, 1.442695
    %v955 = vpow.pop %v954
    %v956 = vadd.f32 %v955, 1.0
    %v957 = vrcp.pop %v956
    %v958 = vmul.f32 1.0, %v957
    %v959 = vtanh.pop %v952
    %v960 = vmul.f32 %v958, %v700
    %962 = vrot.lane.b32.xlu0 %v959, 64
    %v963 = vpop.permute.xlu0 %962
    %v965 = vmul.f32 %v958, %v963
    %967 = vrot.lane.b32.xlu0 %v965, 32
    %v968 = vpop.permute.xlu0 %967
    %v970 = vadd.f32 %v960, %v968
    %v971 = vtanh.pop %v970
    %973 = vrot.lane.b32.xlu0 %v971, 64
    %v974 = vpop.permute.xlu0 %973
    %v976 = vmul.f32 %v958, %v974
    %977 = vmatprep.subr.mxu0 0.0
    %978 = vmatpush1.msra.mxu0 0.0
    %979 = vmatprep.subr.mxu0 0.0
    %980 = vmatpush1.msra.mxu0 0.0
    %981 = vmatprep.subr.mxu0 0.0
    %982 = vmatpush1.msra.mxu0 0.0
    %983 = vmatprep.subr.mxu0 0.0
    %984 = vmatpush1.msra.mxu0 0.0
    %985 = vmatprep.subr.mxu0 0.0
    %986 = vmatpush1.msra.mxu0 0.0
    %987 = vmatprep.subr.mxu0 0.0
    %988 = vmatpush1.msra.mxu0 0.0
    %989 = vmatprep.subr.mxu0 0.0
    %990 = vmatpush1.msra.mxu0 0.0
    %991 = vmatprep.subr.mxu0 0.0
    %992 = vmatpush1.msra.mxu0 0.0
    %993 = vmatprep.subr.mxu0 0.0
    %994 = vmatpush1.msra.mxu0 0.0
    %995 = vmatprep.subr.mxu0 0.0
    %996 = vmatpush1.msra.mxu0 0.0
    %997 = vmatprep.subr.mxu0 0.0
    %998 = vmatpush1.msra.mxu0 0.0
    %999 = vmatprep.subr.mxu0 0.0
    %1000 = vmatpush1.msra.mxu0 0.0
    %1001 = vmatprep.subr.mxu0 0.0
    %1002 = vmatpush1.msra.mxu0 %v423
    %1003 = vmatprep.subr.mxu0 0.0
    %1004 = vmatpush1.msra.mxu0 %v422
    %1005 = vmatprep.subr.mxu0 0.0
    %1006 = vmatpush1.msra.mxu0 %v421
    %1007 = vmatprep.subr.mxu0 0.0
    %1008 = vmatpush1.msra.mxu0 %v420
    %1009 = vmatprep.subr.mxu0 0.0
    %1010 = vmatpush2.msra.mxu0 0.0
    %1011 = vmatprep.subr.mxu0 0.0
    %1012 = vmatpush2.msra.mxu0 0.0
    %1013 = vmatprep.subr.mxu0 0.0
    %1014 = vmatpush2.msra.mxu0 0.0
    %1015 = vmatprep.subr.mxu0 0.0
    %1016 = vmatpush2.msra.mxu0 0.0
    %1017 = vmatprep.subr.mxu0 0.0
    %1018 = vmatpush2.msra.mxu0 0.0
    %1019 = vmatprep.subr.mxu0 0.0
    %1020 = vmatpush2.msra.mxu0 0.0
    %1021 = vmatprep.subr.mxu0 0.0
    %1022 = vmatpush2.msra.mxu0 0.0
    %1023 = vmatprep.subr.mxu0 0.0
    %1024 = vmatpush2.msra.mxu0 0.0
    %1025 = vmatprep.subr.mxu0 0.0
    %1026 = vmatpush2.msra.mxu0 0.0
    %1027 = vmatprep.subr.mxu0 0.0
    %1028 = vmatpush2.msra.mxu0 0.0
    %1029 = vmatprep.subr.mxu0 0.0
    %1030 = vmatpush2.msra.mxu0 0.0
    %1031 = vmatprep.subr.mxu0 0.0
    %1032 = vmatpush2.msra.mxu0 0.0
    %1033 = vmatprep.subr.mxu0 0.0
    %1034 = vmatpush2.msra.mxu0 0.0
    %1035 = vmatprep.subr.mxu0 0.0
    %1036 = vmatpush2.msra.mxu0 0.0
    %1037 = vmatprep.subr.mxu0 0.0
    %1038 = vmatpush2.msra.mxu0 0.0
    %1039 = vmatprep.subr.mxu0 0.0
    %1040 = vmatpush2.msra.mxu0 0.0
    %1041 = vmatprep.mubr.f32.mxu0 0.0
    %1042 = vmatmul.mubr.f32.gmra.mxu0 %v880
    %v1043 = vpop.f32.mrf.mxu0
    %v1044 = vadd.f32 0.0, %v1043
    %v1045 = vpop.f32.mrf.mxu0
    %1046 = vdwg.mxu0
    %v1047 = vadd.f32 %v392, %v1044
    %v1048 = vxor.u32 %v1047, 2147483648
    %v1049 = vmul.f32 %v1048, 1.442695
    %v1050 = vpow.pop %v1049
    %v1051 = vadd.f32 %v1050, 1.0
    %v1052 = vrcp.pop %v1051
    %v1053 = vmul.f32 1.0, %v1052
    %v1054 = vtanh.pop %v1047
    %v1055 = vmul.f32 %v1053, %v795
    %1057 = vrot.lane.b32.xlu0 %v1054, 64
    %v1058 = vpop.permute.xlu0 %1057
    %v1060 = vmul.f32 %v1053, %v1058
    %1062 = vrot.lane.b32.xlu0 %v1060, 32
    %v1063 = vpop.permute.xlu0 %1062
    %v1065 = vadd.f32 %v1055, %v1063
    %v1066 = vtanh.pop %v1065
    %1068 = vrot.lane.b32.xlu0 %v1066, 64
    %v1069 = vpop.permute.xlu0 %1068
    %v1071 = vmul.f32 %v1053, %v1069
    %1073 = vrot.lane.b32.xlu0 %v976, 32
    %v1074 = vpop.permute.xlu0 %1073
    %v1075 = vsel %vm290, %v1074, 0
    %1077 = vmatprep.subr.mxu0 0.0
    %1078 = vmatpush1.msra.mxu0 0.0
    %1079 = vmatprep.subr.mxu0 0.0
    %1080 = vmatpush1.msra.mxu0 0.0
    %1081 = vmatprep.subr.mxu0 0.0
    %1082 = vmatpush1.msra.mxu0 0.0
    %1083 = vmatprep.subr.mxu0 0.0
    %1084 = vmatpush1.msra.mxu0 0.0
    %1085 = vmatprep.subr.mxu0 0.0
    %1086 = vmatpush1.msra.mxu0 0.0
    %1087 = vmatprep.subr.mxu0 0.0
    %1088 = vmatpush1.msra.mxu0 0.0
    %1089 = vmatprep.subr.mxu0 0.0
    %1090 = vmatpush1.msra.mxu0 0.0
    %1091 = vmatprep.subr.mxu0 0.0
    %1092 = vmatpush1.msra.mxu0 0.0
    %1093 = vmatprep.subr.mxu0 0.0
    %1094 = vmatpush1.msra.mxu0 0.0
    %1095 = vmatprep.subr.mxu0 0.0
    %1096 = vmatpush1.msra.mxu0 0.0
    %1097 = vmatprep.subr.mxu0 0.0
    %1098 = vmatpush1.msra.mxu0 0.0
    %1099 = vmatprep.subr.mxu0 0.0
    %1100 = vmatpush1.msra.mxu0 0.0
    %1101 = vmatprep.subr.mxu0 0.0
    %1102 = vmatpush1.msra.mxu0 %v529
    %1103 = vmatprep.subr.mxu0 0.0
    %1104 = vmatpush1.msra.mxu0 %v528
    %1105 = vmatprep.subr.mxu0 0.0
    %1106 = vmatpush1.msra.mxu0 %v527
    %1107 = vmatprep.subr.mxu0 0.0
    %1108 = vmatpush1.msra.mxu0 %v526
    %1109 = vmatprep.subr.mxu0 0.0
    %1110 = vmatpush2.msra.mxu0 0.0
    %1111 = vmatprep.subr.mxu0 0.0
    %1112 = vmatpush2.msra.mxu0 0.0
    %1113 = vmatprep.subr.mxu0 0.0
    %1114 = vmatpush2.msra.mxu0 0.0
    %1115 = vmatprep.subr.mxu0 0.0
    %1116 = vmatpush2.msra.mxu0 0.0
    %1117 = vmatprep.subr.mxu0 0.0
    %1118 = vmatpush2.msra.mxu0 0.0
    %1119 = vmatprep.subr.mxu0 0.0
    %1120 = vmatpush2.msra.mxu0 0.0
    %1121 = vmatprep.subr.mxu0 0.0
    %1122 = vmatpush2.msra.mxu0 0.0
    %1123 = vmatprep.subr.mxu0 0.0
    %1124 = vmatpush2.msra.mxu0 0.0
    %1125 = vmatprep.subr.mxu0 0.0
    %1126 = vmatpush2.msra.mxu0 0.0
    %1127 = vmatprep.subr.mxu0 0.0
    %1128 = vmatpush2.msra.mxu0 0.0
    %1129 = vmatprep.subr.mxu0 0.0
    %1130 = vmatpush2.msra.mxu0 0.0
    %1131 = vmatprep.subr.mxu0 0.0
    %1132 = vmatpush2.msra.mxu0 0.0
    %1133 = vmatprep.subr.mxu0 0.0
    %1134 = vmatpush2.msra.mxu0 0.0
    %1135 = vmatprep.subr.mxu0 0.0
    %1136 = vmatpush2.msra.mxu0 0.0
    %1137 = vmatprep.subr.mxu0 0.0
    %1138 = vmatpush2.msra.mxu0 0.0
    %1139 = vmatprep.subr.mxu0 0.0
    %1140 = vmatpush2.msra.mxu0 0.0
    %1141 = vmatprep.mubr.f32.mxu0 0.0
    %1142 = vmatmul.mubr.f32.gmra.mxu0 %v1075
    %v1143 = vpop.f32.mrf.mxu0
    %v1144 = vadd.f32 0.0, %v1143
    %v1145 = vpop.f32.mrf.mxu0
    %1146 = vdwg.mxu0
    %1148 = vrot.lane.b32.xlu0 %v1071, 32
    %v1149 = vpop.permute.xlu0 %1148
    %v1150 = vsel %vm290, %v1149, 0
    %1152 = vmatprep.subr.mxu0 0.0
    %1153 = vmatpush1.msra.mxu0 0.0
    %1154 = vmatprep.subr.mxu0 0.0
    %1155 = vmatpush1.msra.mxu0 0.0
    %1156 = vmatprep.subr.mxu0 0.0
    %1157 = vmatpush1.msra.mxu0 0.0
    %1158 = vmatprep.subr.mxu0 0.0
    %1159 = vmatpush1.msra.mxu0 0.0
    %1160 = vmatprep.subr.mxu0 0.0
    %1161 = vmatpush1.msra.mxu0 0.0
    %1162 = vmatprep.subr.mxu0 0.0
    %1163 = vmatpush1.msra.mxu0 0.0
    %1164 = vmatprep.subr.mxu0 0.0
    %1165 = vmatpush1.msra.mxu0 0.0
    %1166 = vmatprep.subr.mxu0 0.0
    %1167 = vmatpush1.msra.mxu0 0.0
    %1168 = vmatprep.subr.mxu0 0.0
    %1169 = vmatpush1.msra.mxu0 0.0
    %1170 = vmatprep.subr.mxu0 0.0
    %1171 = vmatpush1.msra.mxu0 0.0
    %1172 = vmatprep.subr.mxu0 0.0
    %1173 = vmatpush1.msra.mxu0 0.0
    %1174 = vmatprep.subr.mxu0 0.0
    %1175 = vmatpush1.msra.mxu0 0.0
    %1176 = vmatprep.subr.mxu0 0.0
    %1177 = vmatpush1.msra.mxu0 %v525
    %1178 = vmatprep.subr.mxu0 0.0
    %1179 = vmatpush1.msra.mxu0 %v524
    %1180 = vmatprep.subr.mxu0 0.0
    %1181 = vmatpush1.msra.mxu0 %v523
    %1182 = vmatprep.subr.mxu0 0.0
    %1183 = vmatpush1.msra.mxu0 %v522
    %1184 = vmatprep.subr.mxu0 0.0
    %1185 = vmatpush2.msra.mxu0 0.0
    %1186 = vmatprep.subr.mxu0 0.0
    %1187 = vmatpush2.msra.mxu0 0.0
    %1188 = vmatprep.subr.mxu0 0.0
    %1189 = vmatpush2.msra.mxu0 0.0
    %1190 = vmatprep.subr.mxu0 0.0
    %1191 = vmatpush2.msra.mxu0 0.0
    %1192 = vmatprep.subr.mxu0 0.0
    %1193 = vmatpush2.msra.mxu0 0.0
    %1194 = vmatprep.subr.mxu0 0.0
    %1195 = vmatpush2.msra.mxu0 0.0
    %1196 = vmatprep.subr.mxu0 0.0
    %1197 = vmatpush2.msra.mxu0 0.0
    %1198 = vmatprep.subr.mxu0 0.0
    %1199 = vmatpush2.msra.mxu0 0.0
    %1200 = vmatprep.subr.mxu0 0.0
    %1201 = vmatpush2.msra.mxu0 0.0
    %1202 = vmatprep.subr.mxu0 0.0
    %1203 = vmatpush2.msra.mxu0 0.0
    %1204 = vmatprep.subr.mxu0 0.0
    %1205 = vmatpush2.msra.mxu0 0.0
    %1206 = vmatprep.subr.mxu0 0.0
    %1207 = vmatpush2.msra.mxu0 0.0
    %1208 = vmatprep.subr.mxu0 0.0
    %1209 = vmatpush2.msra.mxu0 0.0
    %1210 = vmatprep.subr.mxu0 0.0
    %1211 = vmatpush2.msra.mxu0 0.0
    %1212 = vmatprep.subr.mxu0 0.0
    %1213 = vmatpush2.msra.mxu0 0.0
    %1214 = vmatprep.subr.mxu0 0.0
    %1215 = vmatpush2.msra.mxu0 0.0
    %1216 = vmatprep.mubr.f32.mxu0 0.0
    %1217 = vmatmul.mubr.f32.gmra.mxu0 %v1150
    %v1218 = vpop.f32.mrf.mxu0
    %v1219 = vadd.f32 %v1144, %v1218
    %v1220 = vpop.f32.mrf.mxu0
    %1221 = vdwg.mxu0
    %v1222 = vadd.f32 %v1219, %v680
    %v1223 = vxor.u32 %v1222, 2147483648
    %v1224 = vmul.f32 %v1223, 1.442695
    %v1225 = vpow.pop %v1224
    %v1226 = vadd.f32 %v1225, 1.0
    %v1227 = vrcp.pop %v1226
    %v1228 = vmul.f32 1.0, %v1227
    %v1229 = vtanh.pop %v1222
    %v1230 = vmul.f32 %v1228, %v970
    %1232 = vrot.lane.b32.xlu0 %v1229, 64
    %v1233 = vpop.permute.xlu0 %1232
    %v1235 = vmul.f32 %v1228, %v1233
    %1237 = vrot.lane.b32.xlu0 %v1235, 32
    %v1238 = vpop.permute.xlu0 %1237
    %v1240 = vadd.f32 %v1230, %v1238
    %v1241 = vtanh.pop %v1240
    %1243 = vrot.lane.b32.xlu0 %v1241, 64
    %v1244 = vpop.permute.xlu0 %1243
    %v1246 = vmul.f32 %v1228, %v1244
    %1247 = vmatprep.subr.mxu0 0.0
    %1248 = vmatpush1.msra.mxu0 0.0
    %1249 = vmatprep.subr.mxu0 0.0
    %1250 = vmatpush1.msra.mxu0 0.0
    %1251 = vmatprep.subr.mxu0 0.0
    %1252 = vmatpush1.msra.mxu0 0.0
    %1253 = vmatprep.subr.mxu0 0.0
    %1254 = vmatpush1.msra.mxu0 0.0
    %1255 = vmatprep.subr.mxu0 0.0
    %1256 = vmatpush1.msra.mxu0 0.0
    %1257 = vmatprep.subr.mxu0 0.0
    %1258 = vmatpush1.msra.mxu0 0.0
    %1259 = vmatprep.subr.mxu0 0.0
    %1260 = vmatpush1.msra.mxu0 0.0
    %1261 = vmatprep.subr.mxu0 0.0
    %1262 = vmatpush1.msra.mxu0 0.0
    %1263 = vmatprep.subr.mxu0 0.0
    %1264 = vmatpush1.msra.mxu0 0.0
    %1265 = vmatprep.subr.mxu0 0.0
    %1266 = vmatpush1.msra.mxu0 0.0
    %1267 = vmatprep.subr.mxu0 0.0
    %1268 = vmatpush1.msra.mxu0 0.0
    %1269 = vmatprep.subr.mxu0 0.0
    %1270 = vmatpush1.msra.mxu0 0.0
    %1271 = vmatprep.subr.mxu0 0.0
    %1272 = vmatpush1.msra.mxu0 %v423
    %1273 = vmatprep.subr.mxu0 0.0
    %1274 = vmatpush1.msra.mxu0 %v422
    %1275 = vmatprep.subr.mxu0 0.0
    %1276 = vmatpush1.msra.mxu0 %v421
    %1277 = vmatprep.subr.mxu0 0.0
    %1278 = vmatpush1.msra.mxu0 %v420
    %1279 = vmatprep.subr.mxu0 0.0
    %1280 = vmatpush2.msra.mxu0 0.0
    %1281 = vmatprep.subr.mxu0 0.0
    %1282 = vmatpush2.msra.mxu0 0.0
    %1283 = vmatprep.subr.mxu0 0.0
    %1284 = vmatpush2.msra.mxu0 0.0
    %1285 = vmatprep.subr.mxu0 0.0
    %1286 = vmatpush2.msra.mxu0 0.0
    %1287 = vmatprep.subr.mxu0 0.0
    %1288 = vmatpush2.msra.mxu0 0.0
    %1289 = vmatprep.subr.mxu0 0.0
    %1290 = vmatpush2.msra.mxu0 0.0
    %1291 = vmatprep.subr.mxu0 0.0
    %1292 = vmatpush2.msra.mxu0 0.0
    %1293 = vmatprep.subr.mxu0 0.0
    %1294 = vmatpush2.msra.mxu0 0.0
    %1295 = vmatprep.subr.mxu0 0.0
    %1296 = vmatpush2.msra.mxu0 0.0
    %1297 = vmatprep.subr.mxu0 0.0
    %1298 = vmatpush2.msra.mxu0 0.0
    %1299 = vmatprep.subr.mxu0 0.0
    %1300 = vmatpush2.msra.mxu0 0.0
    %1301 = vmatprep.subr.mxu0 0.0
    %1302 = vmatpush2.msra.mxu0 0.0
    %1303 = vmatprep.subr.mxu0 0.0
    %1304 = vmatpush2.msra.mxu0 0.0
    %1305 = vmatprep.subr.mxu0 0.0
    %1306 = vmatpush2.msra.mxu0 0.0
    %1307 = vmatprep.subr.mxu0 0.0
    %1308 = vmatpush2.msra.mxu0 0.0
    %1309 = vmatprep.subr.mxu0 0.0
    %1310 = vmatpush2.msra.mxu0 0.0
    %1311 = vmatprep.mubr.f32.mxu0 0.0
    %1312 = vmatmul.mubr.f32.gmra.mxu0 %v1150
    %v1313 = vpop.f32.mrf.mxu0
    %v1314 = vadd.f32 0.0, %v1313
    %v1315 = vpop.f32.mrf.mxu0
    %1316 = vdwg.mxu0
    %v1317 = vadd.f32 %v397, %v1314
    %v1318 = vxor.u32 %v1317, 2147483648
    %v1319 = vmul.f32 %v1318, 1.442695
    %v1320 = vpow.pop %v1319
    %v1321 = vadd.f32 %v1320, 1.0
    %v1322 = vrcp.pop %v1321
    %v1323 = vmul.f32 1.0, %v1322
    %v1324 = vtanh.pop %v1317
    %v1325 = vmul.f32 %v1323, %v1065
    %1327 = vrot.lane.b32.xlu0 %v1324, 64
    %v1328 = vpop.permute.xlu0 %1327
    %v1330 = vmul.f32 %v1323, %v1328
    %1332 = vrot.lane.b32.xlu0 %v1330, 32
    %v1333 = vpop.permute.xlu0 %1332
    %v1335 = vadd.f32 %v1325, %v1333
    %v1336 = vtanh.pop %v1335
    %1338 = vrot.lane.b32.xlu0 %v1336, 64
    %v1339 = vpop.permute.xlu0 %1338
    %v1341 = vmul.f32 %v1323, %v1339
    %1343 = vrot.lane.b32.xlu0 %v1246, 32
    %v1344 = vpop.permute.xlu0 %1343
    %v1345 = vsel %vm290, %v1344, 0
    %1347 = vmatprep.subr.mxu0 0.0
    %1348 = vmatpush1.msra.mxu0 0.0
    %1349 = vmatprep.subr.mxu0 0.0
    %1350 = vmatpush1.msra.mxu0 0.0
    %1351 = vmatprep.subr.mxu0 0.0
    %1352 = vmatpush1.msra.mxu0 0.0
    %1353 = vmatprep.subr.mxu0 0.0
    %1354 = vmatpush1.msra.mxu0 0.0
    %1355 = vmatprep.subr.mxu0 0.0
    %1356 = vmatpush1.msra.mxu0 0.0
    %1357 = vmatprep.subr.mxu0 0.0
    %1358 = vmatpush1.msra.mxu0 0.0
    %1359 = vmatprep.subr.mxu0 0.0
    %1360 = vmatpush1.msra.mxu0 0.0
    %1361 = vmatprep.subr.mxu0 0.0
    %1362 = vmatpush1.msra.mxu0 0.0
    %1363 = vmatprep.subr.mxu0 0.0
    %1364 = vmatpush1.msra.mxu0 0.0
    %1365 = vmatprep.subr.mxu0 0.0
    %1366 = vmatpush1.msra.mxu0 0.0
    %1367 = vmatprep.subr.mxu0 0.0
    %1368 = vmatpush1.msra.mxu0 0.0
    %1369 = vmatprep.subr.mxu0 0.0
    %1370 = vmatpush1.msra.mxu0 0.0
    %1371 = vmatprep.subr.mxu0 0.0
    %1372 = vmatpush1.msra.mxu0 %v529
    %1373 = vmatprep.subr.mxu0 0.0
    %1374 = vmatpush1.msra.mxu0 %v528
    %1375 = vmatprep.subr.mxu0 0.0
    %1376 = vmatpush1.msra.mxu0 %v527
    %1377 = vmatprep.subr.mxu0 0.0
    %1378 = vmatpush1.msra.mxu0 %v526
    %1379 = vmatprep.subr.mxu0 0.0
    %1380 = vmatpush2.msra.mxu0 0.0
    %1381 = vmatprep.subr.mxu0 0.0
    %1382 = vmatpush2.msra.mxu0 0.0
    %1383 = vmatprep.subr.mxu0 0.0
    %1384 = vmatpush2.msra.mxu0 0.0
    %1385 = vmatprep.subr.mxu0 0.0
    %1386 = vmatpush2.msra.mxu0 0.0
    %1387 = vmatprep.subr.mxu0 0.0
    %1388 = vmatpush2.msra.mxu0 0.0
    %1389 = vmatprep.subr.mxu0 0.0
    %1390 = vmatpush2.msra.mxu0 0.0
    %1391 = vmatprep.subr.mxu0 0.0
    %1392 = vmatpush2.msra.mxu0 0.0
    %1393 = vmatprep.subr.mxu0 0.0
    %1394 = vmatpush2.msra.mxu0 0.0
    %1395 = vmatprep.subr.mxu0 0.0
    %1396 = vmatpush2.msra.mxu0 0.0
    %1397 = vmatprep.subr.mxu0 0.0
    %1398 = vmatpush2.msra.mxu0 0.0
    %1399 = vmatprep.subr.mxu0 0.0
    %1400 = vmatpush2.msra.mxu0 0.0
    %1401 = vmatprep.subr.mxu0 0.0
    %1402 = vmatpush2.msra.mxu0 0.0
    %1403 = vmatprep.subr.mxu0 0.0
    %1404 = vmatpush2.msra.mxu0 0.0
    %1405 = vmatprep.subr.mxu0 0.0
    %1406 = vmatpush2.msra.mxu0 0.0
    %1407 = vmatprep.subr.mxu0 0.0
    %1408 = vmatpush2.msra.mxu0 0.0
    %1409 = vmatprep.subr.mxu0 0.0
    %1410 = vmatpush2.msra.mxu0 0.0
    %1411 = vmatprep.mubr.f32.mxu0 0.0
    %1412 = vmatmul.mubr.f32.gmra.mxu0 %v1345
    %v1413 = vpop.f32.mrf.mxu0
    %v1414 = vadd.f32 0.0, %v1413
    %v1415 = vpop.f32.mrf.mxu0
    %1416 = vdwg.mxu0
    %1418 = vrot.lane.b32.xlu0 %v1341, 32
    %v1419 = vpop.permute.xlu0 %1418
    %v1420 = vsel %vm290, %v1419, 0
    %1422 = vmatprep.subr.mxu0 0.0
    %1423 = vmatpush1.msra.mxu0 0.0
    %1424 = vmatprep.subr.mxu0 0.0
    %1425 = vmatpush1.msra.mxu0 0.0
    %1426 = vmatprep.subr.mxu0 0.0
    %1427 = vmatpush1.msra.mxu0 0.0
    %1428 = vmatprep.subr.mxu0 0.0
    %1429 = vmatpush1.msra.mxu0 0.0
    %1430 = vmatprep.subr.mxu0 0.0
    %1431 = vmatpush1.msra.mxu0 0.0
    %1432 = vmatprep.subr.mxu0 0.0
    %1433 = vmatpush1.msra.mxu0 0.0
    %1434 = vmatprep.subr.mxu0 0.0
    %1435 = vmatpush1.msra.mxu0 0.0
    %1436 = vmatprep.subr.mxu0 0.0
    %1437 = vmatpush1.msra.mxu0 0.0
    %1438 = vmatprep.subr.mxu0 0.0
    %1439 = vmatpush1.msra.mxu0 0.0
    %1440 = vmatprep.subr.mxu0 0.0
    %1441 = vmatpush1.msra.mxu0 0.0
    %1442 = vmatprep.subr.mxu0 0.0
    %1443 = vmatpush1.msra.mxu0 0.0
    %1444 = vmatprep.subr.mxu0 0.0
    %1445 = vmatpush1.msra.mxu0 0.0
    %1446 = vmatprep.subr.mxu0 0.0
    %1447 = vmatpush1.msra.mxu0 %v525
    %1448 = vmatprep.subr.mxu0 0.0
    %1449 = vmatpush1.msra.mxu0 %v524
    %1450 = vmatprep.subr.mxu0 0.0
    %1451 = vmatpush1.msra.mxu0 %v523
    %1452 = vmatprep.subr.mxu0 0.0
    %1453 = vmatpush1.msra.mxu0 %v522
    %1454 = vmatprep.subr.mxu0 0.0
    %1455 = vmatpush2.msra.mxu0 0.0
    %1456 = vmatprep.subr.mxu0 0.0
    %1457 = vmatpush2.msra.mxu0 0.0
    %1458 = vmatprep.subr.mxu0 0.0
    %1459 = vmatpush2.msra.mxu0 0.0
    %1460 = vmatprep.subr.mxu0 0.0
    %1461 = vmatpush2.msra.mxu0 0.0
    %1462 = vmatprep.subr.mxu0 0.0
    %1463 = vmatpush2.msra.mxu0 0.0
    %1464 = vmatprep.subr.mxu0 0.0
    %1465 = vmatpush2.msra.mxu0 0.0
    %1466 = vmatprep.subr.mxu0 0.0
    %1467 = vmatpush2.msra.mxu0 0.0
    %1468 = vmatprep.subr.mxu0 0.0
    %1469 = vmatpush2.msra.mxu0 0.0
    %1470 = vmatprep.subr.mxu0 0.0
    %1471 = vmatpush2.msra.mxu0 0.0
    %1472 = vmatprep.subr.mxu0 0.0
    %1473 = vmatpush2.msra.mxu0 0.0
    %1474 = vmatprep.subr.mxu0 0.0
    %1475 = vmatpush2.msra.mxu0 0.0
    %1476 = vmatprep.subr.mxu0 0.0
    %1477 = vmatpush2.msra.mxu0 0.0
    %1478 = vmatprep.subr.mxu0 0.0
    %1479 = vmatpush2.msra.mxu0 0.0
    %1480 = vmatprep.subr.mxu0 0.0
    %1481 = vmatpush2.msra.mxu0 0.0
    %1482 = vmatprep.subr.mxu0 0.0
    %1483 = vmatpush2.msra.mxu0 0.0
    %1484 = vmatprep.subr.mxu0 0.0
    %1485 = vmatpush2.msra.mxu0 0.0
    %1486 = vmatprep.mubr.f32.mxu0 0.0
    %1487 = vmatmul.mubr.f32.gmra.mxu0 %v1420
    %v1488 = vpop.f32.mrf.mxu0
    %v1489 = vadd.f32 %v1414, %v1488
    %v1490 = vpop.f32.mrf.mxu0
    %1491 = vdwg.mxu0
    %v1492 = vadd.f32 %v1489, %v680
    %v1493 = vxor.u32 %v1492, 2147483648
    %v1494 = vmul.f32 %v1493, 1.442695
    %v1495 = vpow.pop %v1494
    %v1496 = vadd.f32 %v1495, 1.0
    %v1497 = vrcp.pop %v1496
    %v1498 = vmul.f32 1.0, %v1497
    %v1499 = vtanh.pop %v1492
    %v1500 = vmul.f32 %v1498, %v1240
    %1502 = vrot.lane.b32.xlu0 %v1499, 64
    %v1503 = vpop.permute.xlu0 %1502
    %v1505 = vmul.f32 %v1498, %v1503
    %1507 = vrot.lane.b32.xlu0 %v1505, 32
    %v1508 = vpop.permute.xlu0 %1507
    %v1510 = vadd.f32 %v1500, %v1508
    %v1511 = vtanh.pop %v1510
    %1513 = vrot.lane.b32.xlu0 %v1511, 64
    %v1514 = vpop.permute.xlu0 %1513
    %v1516 = vmul.f32 %v1498, %v1514
    %1517 = vmatprep.subr.mxu0 0.0
    %1518 = vmatpush1.msra.mxu0 0.0
    %1519 = vmatprep.subr.mxu0 0.0
    %1520 = vmatpush1.msra.mxu0 0.0
    %1521 = vmatprep.subr.mxu0 0.0
    %1522 = vmatpush1.msra.mxu0 0.0
    %1523 = vmatprep.subr.mxu0 0.0
    %1524 = vmatpush1.msra.mxu0 0.0
    %1525 = vmatprep.subr.mxu0 0.0
    %1526 = vmatpush1.msra.mxu0 0.0
    %1527 = vmatprep.subr.mxu0 0.0
    %1528 = vmatpush1.msra.mxu0 0.0
    %1529 = vmatprep.subr.mxu0 0.0
    %1530 = vmatpush1.msra.mxu0 0.0
    %1531 = vmatprep.subr.mxu0 0.0
    %1532 = vmatpush1.msra.mxu0 0.0
    %1533 = vmatprep.subr.mxu0 0.0
    %1534 = vmatpush1.msra.mxu0 0.0
    %1535 = vmatprep.subr.mxu0 0.0
    %1536 = vmatpush1.msra.mxu0 0.0
    %1537 = vmatprep.subr.mxu0 0.0
    %1538 = vmatpush1.msra.mxu0 0.0
    %1539 = vmatprep.subr.mxu0 0.0
    %1540 = vmatpush1.msra.mxu0 0.0
    %1541 = vmatprep.subr.mxu0 0.0
    %1542 = vmatpush1.msra.mxu0 %v423
    %1543 = vmatprep.subr.mxu0 0.0
    %1544 = vmatpush1.msra.mxu0 %v422
    %1545 = vmatprep.subr.mxu0 0.0
    %1546 = vmatpush1.msra.mxu0 %v421
    %1547 = vmatprep.subr.mxu0 0.0
    %1548 = vmatpush1.msra.mxu0 %v420
    %1549 = vmatprep.subr.mxu0 0.0
    %1550 = vmatpush2.msra.mxu0 0.0
    %1551 = vmatprep.subr.mxu0 0.0
    %1552 = vmatpush2.msra.mxu0 0.0
    %1553 = vmatprep.subr.mxu0 0.0
    %1554 = vmatpush2.msra.mxu0 0.0
    %1555 = vmatprep.subr.mxu0 0.0
    %1556 = vmatpush2.msra.mxu0 0.0
    %1557 = vmatprep.subr.mxu0 0.0
    %1558 = vmatpush2.msra.mxu0 0.0
    %1559 = vmatprep.subr.mxu0 0.0
    %1560 = vmatpush2.msra.mxu0 0.0
    %1561 = vmatprep.subr.mxu0 0.0
    %1562 = vmatpush2.msra.mxu0 0.0
    %1563 = vmatprep.subr.mxu0 0.0
    %1564 = vmatpush2.msra.mxu0 0.0
    %1565 = vmatprep.subr.mxu0 0.0
    %1566 = vmatpush2.msra.mxu0 0.0
    %1567 = vmatprep.subr.mxu0 0.0
    %1568 = vmatpush2.msra.mxu0 0.0
    %1569 = vmatprep.subr.mxu0 0.0
    %1570 = vmatpush2.msra.mxu0 0.0
    %1571 = vmatprep.subr.mxu0 0.0
    %1572 = vmatpush2.msra.mxu0 0.0
    %1573 = vmatprep.subr.mxu0 0.0
    %1574 = vmatpush2.msra.mxu0 0.0
    %1575 = vmatprep.subr.mxu0 0.0
    %1576 = vmatpush2.msra.mxu0 0.0
    %1577 = vmatprep.subr.mxu0 0.0
    %1578 = vmatpush2.msra.mxu0 0.0
    %1579 = vmatprep.subr.mxu0 0.0
    %1580 = vmatpush2.msra.mxu0 0.0
    %1581 = vmatprep.mubr.f32.mxu0 0.0
    %1582 = vmatmul.mubr.f32.gmra.mxu0 %v1420
    %v1583 = vpop.f32.mrf.mxu0
    %v1584 = vadd.f32 0.0, %v1583
    %v1585 = vpop.f32.mrf.mxu0
    %1586 = vdwg.mxu0
    %v1587 = vadd.f32 %v402, %v1584
    %v1588 = vxor.u32 %v1587, 2147483648
    %v1589 = vmul.f32 %v1588, 1.442695
    %v1590 = vpow.pop %v1589
    %v1591 = vadd.f32 %v1590, 1.0
    %v1592 = vrcp.pop %v1591
    %v1593 = vmul.f32 1.0, %v1592
    %v1594 = vtanh.pop %v1587
    %v1595 = vmul.f32 %v1593, %v1335
    %1597 = vrot.lane.b32.xlu0 %v1594, 64
    %v1598 = vpop.permute.xlu0 %1597
    %v1600 = vmul.f32 %v1593, %v1598
    %1602 = vrot.lane.b32.xlu0 %v1600, 32
    %v1603 = vpop.permute.xlu0 %1602
    %v1605 = vadd.f32 %v1595, %v1603
    %v1606 = vtanh.pop %v1605
    %1608 = vrot.lane.b32.xlu0 %v1606, 64
    %v1609 = vpop.permute.xlu0 %1608
    %v1611 = vmul.f32 %v1593, %v1609
    %1613 = vrot.lane.b32.xlu0 %v1516, 32
    %v1614 = vpop.permute.xlu0 %1613
    %v1615 = vsel %vm290, %v1614, 0
    %1617 = vmatprep.subr.mxu0 0.0
    %1618 = vmatpush1.msra.mxu0 0.0
    %1619 = vmatprep.subr.mxu0 0.0
    %1620 = vmatpush1.msra.mxu0 0.0
    %1621 = vmatprep.subr.mxu0 0.0
    %1622 = vmatpush1.msra.mxu0 0.0
    %1623 = vmatprep.subr.mxu0 0.0
    %1624 = vmatpush1.msra.mxu0 0.0
    %1625 = vmatprep.subr.mxu0 0.0
    %1626 = vmatpush1.msra.mxu0 0.0
    %1627 = vmatprep.subr.mxu0 0.0
    %1628 = vmatpush1.msra.mxu0 0.0
    %1629 = vmatprep.subr.mxu0 0.0
    %1630 = vmatpush1.msra.mxu0 0.0
    %1631 = vmatprep.subr.mxu0 0.0
    %1632 = vmatpush1.msra.mxu0 0.0
    %1633 = vmatprep.subr.mxu0 0.0
    %1634 = vmatpush1.msra.mxu0 0.0
    %1635 = vmatprep.subr.mxu0 0.0
    %1636 = vmatpush1.msra.mxu0 0.0
    %1637 = vmatprep.subr.mxu0 0.0
    %1638 = vmatpush1.msra.mxu0 0.0
    %1639 = vmatprep.subr.mxu0 0.0
    %1640 = vmatpush1.msra.mxu0 0.0
    %1641 = vmatprep.subr.mxu0 0.0
    %1642 = vmatpush1.msra.mxu0 %v529
    %1643 = vmatprep.subr.mxu0 0.0
    %1644 = vmatpush1.msra.mxu0 %v528
    %1645 = vmatprep.subr.mxu0 0.0
    %1646 = vmatpush1.msra.mxu0 %v527
    %1647 = vmatprep.subr.mxu0 0.0
    %1648 = vmatpush1.msra.mxu0 %v526
    %1649 = vmatprep.subr.mxu0 0.0
    %1650 = vmatpush2.msra.mxu0 0.0
    %1651 = vmatprep.subr.mxu0 0.0
    %1652 = vmatpush2.msra.mxu0 0.0
    %1653 = vmatprep.subr.mxu0 0.0
    %1654 = vmatpush2.msra.mxu0 0.0
    %1655 = vmatprep.subr.mxu0 0.0
    %1656 = vmatpush2.msra.mxu0 0.0
    %1657 = vmatprep.subr.mxu0 0.0
    %1658 = vmatpush2.msra.mxu0 0.0
    %1659 = vmatprep.subr.mxu0 0.0
    %1660 = vmatpush2.msra.mxu0 0.0
    %1661 = vmatprep.subr.mxu0 0.0
    %1662 = vmatpush2.msra.mxu0 0.0
    %1663 = vmatprep.subr.mxu0 0.0
    %1664 = vmatpush2.msra.mxu0 0.0
    %1665 = vmatprep.subr.mxu0 0.0
    %1666 = vmatpush2.msra.mxu0 0.0
    %1667 = vmatprep.subr.mxu0 0.0
    %1668 = vmatpush2.msra.mxu0 0.0
    %1669 = vmatprep.subr.mxu0 0.0
    %1670 = vmatpush2.msra.mxu0 0.0
    %1671 = vmatprep.subr.mxu0 0.0
    %1672 = vmatpush2.msra.mxu0 0.0
    %1673 = vmatprep.subr.mxu0 0.0
    %1674 = vmatpush2.msra.mxu0 0.0
    %1675 = vmatprep.subr.mxu0 0.0
    %1676 = vmatpush2.msra.mxu0 0.0
    %1677 = vmatprep.subr.mxu0 0.0
    %1678 = vmatpush2.msra.mxu0 0.0
    %1679 = vmatprep.subr.mxu0 0.0
    %1680 = vmatpush2.msra.mxu0 0.0
    %1681 = vmatprep.mubr.f32.mxu0 0.0
    %1682 = vmatmul.mubr.f32.gmra.mxu0 %v1615
    %v1683 = vpop.f32.mrf.mxu0
    %v1684 = vadd.f32 0.0, %v1683
    %v1685 = vpop.f32.mrf.mxu0
    %1686 = vdwg.mxu0
    %1688 = vrot.lane.b32.xlu0 %v1611, 32
    %v1689 = vpop.permute.xlu0 %1688
    %v1690 = vsel %vm290, %v1689, 0
    %1692 = vmatprep.subr.mxu0 0.0
    %1693 = vmatpush1.msra.mxu0 0.0
    %1694 = vmatprep.subr.mxu0 0.0
    %1695 = vmatpush1.msra.mxu0 0.0
    %1696 = vmatprep.subr.mxu0 0.0
    %1697 = vmatpush1.msra.mxu0 0.0
    %1698 = vmatprep.subr.mxu0 0.0
    %1699 = vmatpush1.msra.mxu0 0.0
    %1700 = vmatprep.subr.mxu0 0.0
    %1701 = vmatpush1.msra.mxu0 0.0
    %1702 = vmatprep.subr.mxu0 0.0
    %1703 = vmatpush1.msra.mxu0 0.0
    %1704 = vmatprep.subr.mxu0 0.0
    %1705 = vmatpush1.msra.mxu0 0.0
    %1706 = vmatprep.subr.mxu0 0.0
    %1707 = vmatpush1.msra.mxu0 0.0
    %1708 = vmatprep.subr.mxu0 0.0
    %1709 = vmatpush1.msra.mxu0 0.0
    %1710 = vmatprep.subr.mxu0 0.0
    %1711 = vmatpush1.msra.mxu0 0.0
    %1712 = vmatprep.subr.mxu0 0.0
    %1713 = vmatpush1.msra.mxu0 0.0
    %1714 = vmatprep.subr.mxu0 0.0
    %1715 = vmatpush1.msra.mxu0 0.0
    %1716 = vmatprep.subr.mxu0 0.0
    %1717 = vmatpush1.msra.mxu0 %v525
    %1718 = vmatprep.subr.mxu0 0.0
    %1719 = vmatpush1.msra.mxu0 %v524
    %1720 = vmatprep.subr.mxu0 0.0
    %1721 = vmatpush1.msra.mxu0 %v523
    %1722 = vmatprep.subr.mxu0 0.0
    %1723 = vmatpush1.msra.mxu0 %v522
    %1724 = vmatprep.subr.mxu0 0.0
    %1725 = vmatpush2.msra.mxu0 0.0
    %1726 = vmatprep.subr.mxu0 0.0
    %1727 = vmatpush2.msra.mxu0 0.0
    %1728 = vmatprep.subr.mxu0 0.0
    %1729 = vmatpush2.msra.mxu0 0.0
    %1730 = vmatprep.subr.mxu0 0.0
    %1731 = vmatpush2.msra.mxu0 0.0
    %1732 = vmatprep.subr.mxu0 0.0
    %1733 = vmatpush2.msra.mxu0 0.0
    %1734 = vmatprep.subr.mxu0 0.0
    %1735 = vmatpush2.msra.mxu0 0.0
    %1736 = vmatprep.subr.mxu0 0.0
    %1737 = vmatpush2.msra.mxu0 0.0
    %1738 = vmatprep.subr.mxu0 0.0
    %1739 = vmatpush2.msra.mxu0 0.0
    %1740 = vmatprep.subr.mxu0 0.0
    %1741 = vmatpush2.msra.mxu0 0.0
    %1742 = vmatprep.subr.mxu0 0.0
    %1743 = vmatpush2.msra.mxu0 0.0
    %1744 = vmatprep.subr.mxu0 0.0
    %1745 = vmatpush2.msra.mxu0 0.0
    %1746 = vmatprep.subr.mxu0 0.0
    %1747 = vmatpush2.msra.mxu0 0.0
    %1748 = vmatprep.subr.mxu0 0.0
    %1749 = vmatpush2.msra.mxu0 0.0
    %1750 = vmatprep.subr.mxu0 0.0
    %1751 = vmatpush2.msra.mxu0 0.0
    %1752 = vmatprep.subr.mxu0 0.0
    %1753 = vmatpush2.msra.mxu0 0.0
    %1754 = vmatprep.subr.mxu0 0.0
    %1755 = vmatpush2.msra.mxu0 0.0
    %1756 = vmatprep.mubr.f32.mxu0 0.0
    %1757 = vmatmul.mubr.f32.gmra.mxu0 %v1690
    %v1758 = vpop.f32.mrf.mxu0
    %v1759 = vadd.f32 %v1684, %v1758
    %v1760 = vpop.f32.mrf.mxu0
    %1761 = vdwg.mxu0
    %v1762 = vadd.f32 %v1759, %v680
    %v1763 = vxor.u32 %v1762, 2147483648
    %v1764 = vmul.f32 %v1763, 1.442695
    %v1765 = vpow.pop %v1764
    %v1766 = vadd.f32 %v1765, 1.0
    %v1767 = vrcp.pop %v1766
    %v1768 = vmul.f32 1.0, %v1767
    %v1769 = vtanh.pop %v1762
    %v1770 = vmul.f32 %v1768, %v1510
    %1772 = vrot.lane.b32.xlu0 %v1769, 64
    %v1773 = vpop.permute.xlu0 %1772
    %v1775 = vmul.f32 %v1768, %v1773
    %1777 = vrot.lane.b32.xlu0 %v1775, 32
    %v1778 = vpop.permute.xlu0 %1777
    %v1780 = vadd.f32 %v1770, %v1778
    %v1781 = vtanh.pop %v1780
    %1783 = vrot.lane.b32.xlu0 %v1781, 64
    %v1784 = vpop.permute.xlu0 %1783
    %v1786 = vmul.f32 %v1768, %v1784
    %1787 = vmatprep.subr.mxu0 0.0
    %1788 = vmatpush1.msra.mxu0 0.0
    %1789 = vmatprep.subr.mxu0 0.0
    %1790 = vmatpush1.msra.mxu0 0.0
    %1791 = vmatprep.subr.mxu0 0.0
    %1792 = vmatpush1.msra.mxu0 0.0
    %1793 = vmatprep.subr.mxu0 0.0
    %1794 = vmatpush1.msra.mxu0 0.0
    %1795 = vmatprep.subr.mxu0 0.0
    %1796 = vmatpush1.msra.mxu0 0.0
    %1797 = vmatprep.subr.mxu0 0.0
    %1798 = vmatpush1.msra.mxu0 0.0
    %1799 = vmatprep.subr.mxu0 0.0
    %1800 = vmatpush1.msra.mxu0 0.0
    %1801 = vmatprep.subr.mxu0 0.0
    %1802 = vmatpush1.msra.mxu0 0.0
    %1803 = vmatprep.subr.mxu0 0.0
    %1804 = vmatpush1.msra.mxu0 0.0
    %1805 = vmatprep.subr.mxu0 0.0
    %1806 = vmatpush1.msra.mxu0 0.0
    %1807 = vmatprep.subr.mxu0 0.0
    %1808 = vmatpush1.msra.mxu0 0.0
    %1809 = vmatprep.subr.mxu0 0.0
    %1810 = vmatpush1.msra.mxu0 0.0
    %1811 = vmatprep.subr.mxu0 0.0
    %1812 = vmatpush1.msra.mxu0 %v423
    %1813 = vmatprep.subr.mxu0 0.0
    %1814 = vmatpush1.msra.mxu0 %v422
    %1815 = vmatprep.subr.mxu0 0.0
    %1816 = vmatpush1.msra.mxu0 %v421
    %1817 = vmatprep.subr.mxu0 0.0
    %1818 = vmatpush1.msra.mxu0 %v420
    %1819 = vmatprep.subr.mxu0 0.0
    %1820 = vmatpush2.msra.mxu0 0.0
    %1821 = vmatprep.subr.mxu0 0.0
    %1822 = vmatpush2.msra.mxu0 0.0
    %1823 = vmatprep.subr.mxu0 0.0
    %1824 = vmatpush2.msra.mxu0 0.0
    %1825 = vmatprep.subr.mxu0 0.0
    %1826 = vmatpush2.msra.mxu0 0.0
    %1827 = vmatprep.subr.mxu0 0.0
    %1828 = vmatpush2.msra.mxu0 0.0
    %1829 = vmatprep.subr.mxu0 0.0
    %1830 = vmatpush2.msra.mxu0 0.0
    %1831 = vmatprep.subr.mxu0 0.0
    %1832 = vmatpush2.msra.mxu0 0.0
    %1833 = vmatprep.subr.mxu0 0.0
    %1834 = vmatpush2.msra.mxu0 0.0
    %1835 = vmatprep.subr.mxu0 0.0
    %1836 = vmatpush2.msra.mxu0 0.0
    %1837 = vmatprep.subr.mxu0 0.0
    %1838 = vmatpush2.msra.mxu0 0.0
    %1839 = vmatprep.subr.mxu0 0.0
    %1840 = vmatpush2.msra.mxu0 0.0
    %1841 = vmatprep.subr.mxu0 0.0
    %1842 = vmatpush2.msra.mxu0 0.0
    %1843 = vmatprep.subr.mxu0 0.0
    %1844 = vmatpush2.msra.mxu0 0.0
    %1845 = vmatprep.subr.mxu0 0.0
    %1846 = vmatpush2.msra.mxu0 0.0
    %1847 = vmatprep.subr.mxu0 0.0
    %1848 = vmatpush2.msra.mxu0 0.0
    %1849 = vmatprep.subr.mxu0 0.0
    %1850 = vmatpush2.msra.mxu0 0.0
    %1851 = vmatprep.mubr.f32.mxu0 0.0
    %1852 = vmatmul.mubr.f32.gmra.mxu0 %v1690
    %v1853 = vpop.f32.mrf.mxu0
    %v1854 = vadd.f32 0.0, %v1853
    %v1855 = vpop.f32.mrf.mxu0
    %1856 = vdwg.mxu0
    %v1857 = vadd.f32 %v407, %v1854
    %v1858 = vxor.u32 %v1857, 2147483648
    %v1859 = vmul.f32 %v1858, 1.442695
    %v1860 = vpow.pop %v1859
    %v1861 = vadd.f32 %v1860, 1.0
    %v1862 = vrcp.pop %v1861
    %v1863 = vmul.f32 1.0, %v1862
    %v1864 = vtanh.pop %v1857
    %v1865 = vmul.f32 %v1863, %v1605
    %1867 = vrot.lane.b32.xlu0 %v1864, 64
    %v1868 = vpop.permute.xlu0 %1867
    %v1870 = vmul.f32 %v1863, %v1868
    %1872 = vrot.lane.b32.xlu0 %v1870, 32
    %v1873 = vpop.permute.xlu0 %1872
    %v1875 = vadd.f32 %v1865, %v1873
    %v1876 = vtanh.pop %v1875
    %1878 = vrot.lane.b32.xlu0 %v1876, 64
    %v1879 = vpop.permute.xlu0 %1878
    %v1881 = vmul.f32 %v1863, %v1879
    %1883 = vrot.lane.b32.xlu0 %v1786, 32
    %v1884 = vpop.permute.xlu0 %1883
    %v1885 = vsel %vm290, %v1884, 0
    %1887 = vmatprep.subr.mxu0 0.0
    %1888 = vmatpush1.msra.mxu0 0.0
    %1889 = vmatprep.subr.mxu0 0.0
    %1890 = vmatpush1.msra.mxu0 0.0
    %1891 = vmatprep.subr.mxu0 0.0
    %1892 = vmatpush1.msra.mxu0 0.0
    %1893 = vmatprep.subr.mxu0 0.0
    %1894 = vmatpush1.msra.mxu0 0.0
    %1895 = vmatprep.subr.mxu0 0.0
    %1896 = vmatpush1.msra.mxu0 0.0
    %1897 = vmatprep.subr.mxu0 0.0
    %1898 = vmatpush1.msra.mxu0 0.0
    %1899 = vmatprep.subr.mxu0 0.0
    %1900 = vmatpush1.msra.mxu0 0.0
    %1901 = vmatprep.subr.mxu0 0.0
    %1902 = vmatpush1.msra.mxu0 0.0
    %1903 = vmatprep.subr.mxu0 0.0
    %1904 = vmatpush1.msra.mxu0 0.0
    %1905 = vmatprep.subr.mxu0 0.0
    %1906 = vmatpush1.msra.mxu0 0.0
    %1907 = vmatprep.subr.mxu0 0.0
    %1908 = vmatpush1.msra.mxu0 0.0
    %1909 = vmatprep.subr.mxu0 0.0
    %1910 = vmatpush1.msra.mxu0 0.0
    %1911 = vmatprep.subr.mxu0 0.0
    %1912 = vmatpush1.msra.mxu0 %v529
    %1913 = vmatprep.subr.mxu0 0.0
    %1914 = vmatpush1.msra.mxu0 %v528
    %1915 = vmatprep.subr.mxu0 0.0
    %1916 = vmatpush1.msra.mxu0 %v527
    %1917 = vmatprep.subr.mxu0 0.0
    %1918 = vmatpush1.msra.mxu0 %v526
    %1919 = vmatprep.subr.mxu0 0.0
    %1920 = vmatpush2.msra.mxu0 0.0
    %1921 = vmatprep.subr.mxu0 0.0
    %1922 = vmatpush2.msra.mxu0 0.0
    %1923 = vmatprep.subr.mxu0 0.0
    %1924 = vmatpush2.msra.mxu0 0.0
    %1925 = vmatprep.subr.mxu0 0.0
    %1926 = vmatpush2.msra.mxu0 0.0
    %1927 = vmatprep.subr.mxu0 0.0
    %1928 = vmatpush2.msra.mxu0 0.0
    %1929 = vmatprep.subr.mxu0 0.0
    %1930 = vmatpush2.msra.mxu0 0.0
    %1931 = vmatprep.subr.mxu0 0.0
    %1932 = vmatpush2.msra.mxu0 0.0
    %1933 = vmatprep.subr.mxu0 0.0
    %1934 = vmatpush2.msra.mxu0 0.0
    %1935 = vmatprep.subr.mxu0 0.0
    %1936 = vmatpush2.msra.mxu0 0.0
    %1937 = vmatprep.subr.mxu0 0.0
    %1938 = vmatpush2.msra.mxu0 0.0
    %1939 = vmatprep.subr.mxu0 0.0
    %1940 = vmatpush2.msra.mxu0 0.0
    %1941 = vmatprep.subr.mxu0 0.0
    %1942 = vmatpush2.msra.mxu0 0.0
    %1943 = vmatprep.subr.mxu0 0.0
    %1944 = vmatpush2.msra.mxu0 0.0
    %1945 = vmatprep.subr.mxu0 0.0
    %1946 = vmatpush2.msra.mxu0 0.0
    %1947 = vmatprep.subr.mxu0 0.0
    %1948 = vmatpush2.msra.mxu0 0.0
    %1949 = vmatprep.subr.mxu0 0.0
    %1950 = vmatpush2.msra.mxu0 0.0
    %1951 = vmatprep.mubr.f32.mxu0 0.0
    %1952 = vmatmul.mubr.f32.gmra.mxu0 %v1885
    %v1953 = vpop.f32.mrf.mxu0
    %v1954 = vadd.f32 0.0, %v1953
    %v1955 = vpop.f32.mrf.mxu0
    %1956 = vdwg.mxu0
    %1958 = vrot.lane.b32.xlu0 %v1881, 32
    %v1959 = vpop.permute.xlu0 %1958
    %v1960 = vsel %vm290, %v1959, 0
    %1962 = vmatprep.subr.mxu0 0.0
    %1963 = vmatpush1.msra.mxu0 0.0
    %1964 = vmatprep.subr.mxu0 0.0
    %1965 = vmatpush1.msra.mxu0 0.0
    %1966 = vmatprep.subr.mxu0 0.0
    %1967 = vmatpush1.msra.mxu0 0.0
    %1968 = vmatprep.subr.mxu0 0.0
    %1969 = vmatpush1.msra.mxu0 0.0
    %1970 = vmatprep.subr.mxu0 0.0
    %1971 = vmatpush1.msra.mxu0 0.0
    %1972 = vmatprep.subr.mxu0 0.0
    %1973 = vmatpush1.msra.mxu0 0.0
    %1974 = vmatprep.subr.mxu0 0.0
    %1975 = vmatpush1.msra.mxu0 0.0
    %1976 = vmatprep.subr.mxu0 0.0
    %1977 = vmatpush1.msra.mxu0 0.0
    %1978 = vmatprep.subr.mxu0 0.0
    %1979 = vmatpush1.msra.mxu0 0.0
    %1980 = vmatprep.subr.mxu0 0.0
    %1981 = vmatpush1.msra.mxu0 0.0
    %1982 = vmatprep.subr.mxu0 0.0
    %1983 = vmatpush1.msra.mxu0 0.0
    %1984 = vmatprep.subr.mxu0 0.0
    %1985 = vmatpush1.msra.mxu0 0.0
    %1986 = vmatprep.subr.mxu0 0.0
    %1987 = vmatpush1.msra.mxu0 %v525
    %1988 = vmatprep.subr.mxu0 0.0
    %1989 = vmatpush1.msra.mxu0 %v524
    %1990 = vmatprep.subr.mxu0 0.0
    %1991 = vmatpush1.msra.mxu0 %v523
    %1992 = vmatprep.subr.mxu0 0.0
    %1993 = vmatpush1.msra.mxu0 %v522
    %1994 = vmatprep.subr.mxu0 0.0
    %1995 = vmatpush2.msra.mxu0 0.0
    %1996 = vmatprep.subr.mxu0 0.0
    %1997 = vmatpush2.msra.mxu0 0.0
    %1998 = vmatprep.subr.mxu0 0.0
    %1999 = vmatpush2.msra.mxu0 0.0
    %2000 = vmatprep.subr.mxu0 0.0
    %2001 = vmatpush2.msra.mxu0 0.0
    %2002 = vmatprep.subr.mxu0 0.0
    %2003 = vmatpush2.msra.mxu0 0.0
    %2004 = vmatprep.subr.mxu0 0.0
    %2005 = vmatpush2.msra.mxu0 0.0
    %2006 = vmatprep.subr.mxu0 0.0
    %2007 = vmatpush2.msra.mxu0 0.0
    %2008 = vmatprep.subr.mxu0 0.0
    %2009 = vmatpush2.msra.mxu0 0.0
    %2010 = vmatprep.subr.mxu0 0.0
    %2011 = vmatpush2.msra.mxu0 0.0
    %2012 = vmatprep.subr.mxu0 0.0
    %2013 = vmatpush2.msra.mxu0 0.0
    %2014 = vmatprep.subr.mxu0 0.0
    %2015 = vmatpush2.msra.mxu0 0.0
    %2016 = vmatprep.subr.mxu0 0.0
    %2017 = vmatpush2.msra.mxu0 0.0
    %2018 = vmatprep.subr.mxu0 0.0
    %2019 = vmatpush2.msra.mxu0 0.0
    %2020 = vmatprep.subr.mxu0 0.0
    %2021 = vmatpush2.msra.mxu0 0.0
    %2022 = vmatprep.subr.mxu0 0.0
    %2023 = vmatpush2.msra.mxu0 0.0
    %2024 = vmatprep.subr.mxu0 0.0
    %2025 = vmatpush2.msra.mxu0 0.0
    %2026 = vmatprep.mubr.f32.mxu0 0.0
    %2027 = vmatmul.mubr.f32.gmra.mxu0 %v1960
    %v2028 = vpop.f32.mrf.mxu0
    %v2029 = vadd.f32 %v1954, %v2028
    %v2030 = vpop.f32.mrf.mxu0
    %2031 = vdwg.mxu0
    %v2032 = vadd.f32 %v2029, %v680
    %v2033 = vxor.u32 %v2032, 2147483648
    %v2034 = vmul.f32 %v2033, 1.442695
    %v2035 = vpow.pop %v2034
    %v2036 = vadd.f32 %v2035, 1.0
    %v2037 = vrcp.pop %v2036
    %v2038 = vmul.f32 1.0, %v2037
    %v2039 = vtanh.pop %v2032
    %v2040 = vmul.f32 %v2038, %v1780
    %2042 = vrot.lane.b32.xlu0 %v2039, 64
    %v2043 = vpop.permute.xlu0 %2042
    %v2045 = vmul.f32 %v2038, %v2043
    %2047 = vrot.lane.b32.xlu0 %v2045, 32
    %v2048 = vpop.permute.xlu0 %2047
    %v2050 = vadd.f32 %v2040, %v2048
    %v2051 = vtanh.pop %v2050
    %2053 = vrot.lane.b32.xlu0 %v2051, 64
    %v2054 = vpop.permute.xlu0 %2053
    %v2056 = vmul.f32 %v2038, %v2054
    %2057 = vmatprep.subr.mxu0 0.0
    %2058 = vmatpush1.msra.mxu0 0.0
    %2059 = vmatprep.subr.mxu0 0.0
    %2060 = vmatpush1.msra.mxu0 0.0
    %2061 = vmatprep.subr.mxu0 0.0
    %2062 = vmatpush1.msra.mxu0 0.0
    %2063 = vmatprep.subr.mxu0 0.0
    %2064 = vmatpush1.msra.mxu0 0.0
    %2065 = vmatprep.subr.mxu0 0.0
    %2066 = vmatpush1.msra.mxu0 0.0
    %2067 = vmatprep.subr.mxu0 0.0
    %2068 = vmatpush1.msra.mxu0 0.0
    %2069 = vmatprep.subr.mxu0 0.0
    %2070 = vmatpush1.msra.mxu0 0.0
    %2071 = vmatprep.subr.mxu0 0.0
    %2072 = vmatpush1.msra.mxu0 0.0
    %2073 = vmatprep.subr.mxu0 0.0
    %2074 = vmatpush1.msra.mxu0 0.0
    %2075 = vmatprep.subr.mxu0 0.0
    %2076 = vmatpush1.msra.mxu0 0.0
    %2077 = vmatprep.subr.mxu0 0.0
    %2078 = vmatpush1.msra.mxu0 0.0
    %2079 = vmatprep.subr.mxu0 0.0
    %2080 = vmatpush1.msra.mxu0 0.0
    %2081 = vmatprep.subr.mxu0 0.0
    %2082 = vmatpush1.msra.mxu0 %v423
    %2083 = vmatprep.subr.mxu0 0.0
    %2084 = vmatpush1.msra.mxu0 %v422
    %2085 = vmatprep.subr.mxu0 0.0
    %2086 = vmatpush1.msra.mxu0 %v421
    %2087 = vmatprep.subr.mxu0 0.0
    %2088 = vmatpush1.msra.mxu0 %v420
    %2089 = vmatprep.subr.mxu0 0.0
    %2090 = vmatpush2.msra.mxu0 0.0
    %2091 = vmatprep.subr.mxu0 0.0
    %2092 = vmatpush2.msra.mxu0 0.0
    %2093 = vmatprep.subr.mxu0 0.0
    %2094 = vmatpush2.msra.mxu0 0.0
    %2095 = vmatprep.subr.mxu0 0.0
    %2096 = vmatpush2.msra.mxu0 0.0
    %2097 = vmatprep.subr.mxu0 0.0
    %2098 = vmatpush2.msra.mxu0 0.0
    %2099 = vmatprep.subr.mxu0 0.0
    %2100 = vmatpush2.msra.mxu0 0.0
    %2101 = vmatprep.subr.mxu0 0.0
    %2102 = vmatpush2.msra.mxu0 0.0
    %2103 = vmatprep.subr.mxu0 0.0
    %2104 = vmatpush2.msra.mxu0 0.0
    %2105 = vmatprep.subr.mxu0 0.0
    %2106 = vmatpush2.msra.mxu0 0.0
    %2107 = vmatprep.subr.mxu0 0.0
    %2108 = vmatpush2.msra.mxu0 0.0
    %2109 = vmatprep.subr.mxu0 0.0
    %2110 = vmatpush2.msra.mxu0 0.0
    %2111 = vmatprep.subr.mxu0 0.0
    %2112 = vmatpush2.msra.mxu0 0.0
    %2113 = vmatprep.subr.mxu0 0.0
    %2114 = vmatpush2.msra.mxu0 0.0
    %2115 = vmatprep.subr.mxu0 0.0
    %2116 = vmatpush2.msra.mxu0 0.0
    %2117 = vmatprep.subr.mxu0 0.0
    %2118 = vmatpush2.msra.mxu0 0.0
    %2119 = vmatprep.subr.mxu0 0.0
    %2120 = vmatpush2.msra.mxu0 0.0
    %2121 = vmatprep.mubr.f32.mxu0 0.0
    %2122 = vmatmul.mubr.f32.gmra.mxu0 %v1960
    %v2123 = vpop.f32.mrf.mxu0
    %v2124 = vadd.f32 0.0, %v2123
    %v2125 = vpop.f32.mrf.mxu0
    %2126 = vdwg.mxu0
    %v2127 = vadd.f32 %v412, %v2124
    %v2128 = vxor.u32 %v2127, 2147483648
    %v2129 = vmul.f32 %v2128, 1.442695
    %v2130 = vpow.pop %v2129
    %v2131 = vadd.f32 %v2130, 1.0
    %v2132 = vrcp.pop %v2131
    %v2133 = vmul.f32 1.0, %v2132
    %v2134 = vtanh.pop %v2127
    %v2135 = vmul.f32 %v2133, %v1875
    %2137 = vrot.lane.b32.xlu0 %v2134, 64
    %v2138 = vpop.permute.xlu0 %2137
    %v2140 = vmul.f32 %v2133, %v2138
    %2142 = vrot.lane.b32.xlu0 %v2140, 32
    %v2143 = vpop.permute.xlu0 %2142
    %v2145 = vadd.f32 %v2135, %v2143
    %v2146 = vtanh.pop %v2145
    %2148 = vrot.lane.b32.xlu0 %v2146, 64
    %v2149 = vpop.permute.xlu0 %2148
    %v2151 = vmul.f32 %v2133, %v2149
    %2153 = vrot.lane.b32.xlu0 %v2056, 32
    %v2154 = vpop.permute.xlu0 %2153
    %v2155 = vsel %vm290, %v2154, 0
    %2157 = vmatprep.subr.mxu0 0.0
    %2158 = vmatpush1.msra.mxu0 0.0
    %2159 = vmatprep.subr.mxu0 0.0
    %2160 = vmatpush1.msra.mxu0 0.0
    %2161 = vmatprep.subr.mxu0 0.0
    %2162 = vmatpush1.msra.mxu0 0.0
    %2163 = vmatprep.subr.mxu0 0.0
    %2164 = vmatpush1.msra.mxu0 0.0
    %2165 = vmatprep.subr.mxu0 0.0
    %2166 = vmatpush1.msra.mxu0 0.0
    %2167 = vmatprep.subr.mxu0 0.0
    %2168 = vmatpush1.msra.mxu0 0.0
    %2169 = vmatprep.subr.mxu0 0.0
    %2170 = vmatpush1.msra.mxu0 0.0
    %2171 = vmatprep.subr.mxu0 0.0
    %2172 = vmatpush1.msra.mxu0 0.0
    %2173 = vmatprep.subr.mxu0 0.0
    %2174 = vmatpush1.msra.mxu0 0.0
    %2175 = vmatprep.subr.mxu0 0.0
    %2176 = vmatpush1.msra.mxu0 0.0
    %2177 = vmatprep.subr.mxu0 0.0
    %2178 = vmatpush1.msra.mxu0 0.0
    %2179 = vmatprep.subr.mxu0 0.0
    %2180 = vmatpush1.msra.mxu0 0.0
    %2181 = vmatprep.subr.mxu0 0.0
    %2182 = vmatpush1.msra.mxu0 %v529
    %2183 = vmatprep.subr.mxu0 0.0
    %2184 = vmatpush1.msra.mxu0 %v528
    %2185 = vmatprep.subr.mxu0 0.0
    %2186 = vmatpush1.msra.mxu0 %v527
    %2187 = vmatprep.subr.mxu0 0.0
    %2188 = vmatpush1.msra.mxu0 %v526
    %2189 = vmatprep.subr.mxu0 0.0
    %2190 = vmatpush2.msra.mxu0 0.0
    %2191 = vmatprep.subr.mxu0 0.0
    %2192 = vmatpush2.msra.mxu0 0.0
    %2193 = vmatprep.subr.mxu0 0.0
    %2194 = vmatpush2.msra.mxu0 0.0
    %2195 = vmatprep.subr.mxu0 0.0
    %2196 = vmatpush2.msra.mxu0 0.0
    %2197 = vmatprep.subr.mxu0 0.0
    %2198 = vmatpush2.msra.mxu0 0.0
    %2199 = vmatprep.subr.mxu0 0.0
    %2200 = vmatpush2.msra.mxu0 0.0
    %2201 = vmatprep.subr.mxu0 0.0
    %2202 = vmatpush2.msra.mxu0 0.0
    %2203 = vmatprep.subr.mxu0 0.0
    %2204 = vmatpush2.msra.mxu0 0.0
    %2205 = vmatprep.subr.mxu0 0.0
    %2206 = vmatpush2.msra.mxu0 0.0
    %2207 = vmatprep.subr.mxu0 0.0
    %2208 = vmatpush2.msra.mxu0 0.0
    %2209 = vmatprep.subr.mxu0 0.0
    %2210 = vmatpush2.msra.mxu0 0.0
    %2211 = vmatprep.subr.mxu0 0.0
    %2212 = vmatpush2.msra.mxu0 0.0
    %2213 = vmatprep.subr.mxu0 0.0
    %2214 = vmatpush2.msra.mxu0 0.0
    %2215 = vmatprep.subr.mxu0 0.0
    %2216 = vmatpush2.msra.mxu0 0.0
    %2217 = vmatprep.subr.mxu0 0.0
    %2218 = vmatpush2.msra.mxu0 0.0
    %2219 = vmatprep.subr.mxu0 0.0
    %2220 = vmatpush2.msra.mxu0 0.0
    %2221 = vmatprep.mubr.f32.mxu0 0.0
    %2222 = vmatmul.mubr.f32.gmra.mxu0 %v2155
    %v2223 = vpop.f32.mrf.mxu0
    %v2224 = vadd.f32 0.0, %v2223
    %v2225 = vpop.f32.mrf.mxu0
    %2226 = vdwg.mxu0
    %2228 = vrot.lane.b32.xlu0 %v2151, 32
    %v2229 = vpop.permute.xlu0 %2228
    %v2230 = vsel %vm290, %v2229, 0
    %2232 = vmatprep.subr.mxu0 0.0
    %2233 = vmatpush1.msra.mxu0 0.0
    %2234 = vmatprep.subr.mxu0 0.0
    %2235 = vmatpush1.msra.mxu0 0.0
    %2236 = vmatprep.subr.mxu0 0.0
    %2237 = vmatpush1.msra.mxu0 0.0
    %2238 = vmatprep.subr.mxu0 0.0
    %2239 = vmatpush1.msra.mxu0 0.0
    %2240 = vmatprep.subr.mxu0 0.0
    %2241 = vmatpush1.msra.mxu0 0.0
    %2242 = vmatprep.subr.mxu0 0.0
    %2243 = vmatpush1.msra.mxu0 0.0
    %2244 = vmatprep.subr.mxu0 0.0
    %2245 = vmatpush1.msra.mxu0 0.0
    %2246 = vmatprep.subr.mxu0 0.0
    %2247 = vmatpush1.msra.mxu0 0.0
    %2248 = vmatprep.subr.mxu0 0.0
    %2249 = vmatpush1.msra.mxu0 0.0
    %2250 = vmatprep.subr.mxu0 0.0
    %2251 = vmatpush1.msra.mxu0 0.0
    %2252 = vmatprep.subr.mxu0 0.0
    %2253 = vmatpush1.msra.mxu0 0.0
    %2254 = vmatprep.subr.mxu0 0.0
    %2255 = vmatpush1.msra.mxu0 0.0
    %2256 = vmatprep.subr.mxu0 0.0
    %2257 = vmatpush1.msra.mxu0 %v525
    %2258 = vmatprep.subr.mxu0 0.0
    %2259 = vmatpush1.msra.mxu0 %v524
    %2260 = vmatprep.subr.mxu0 0.0
    %2261 = vmatpush1.msra.mxu0 %v523
    %2262 = vmatprep.subr.mxu0 0.0
    %2263 = vmatpush1.msra.mxu0 %v522
    %2264 = vmatprep.subr.mxu0 0.0
    %2265 = vmatpush2.msra.mxu0 0.0
    %2266 = vmatprep.subr.mxu0 0.0
    %2267 = vmatpush2.msra.mxu0 0.0
    %2268 = vmatprep.subr.mxu0 0.0
    %2269 = vmatpush2.msra.mxu0 0.0
    %2270 = vmatprep.subr.mxu0 0.0
    %2271 = vmatpush2.msra.mxu0 0.0
    %2272 = vmatprep.subr.mxu0 0.0
    %2273 = vmatpush2.msra.mxu0 0.0
    %2274 = vmatprep.subr.mxu0 0.0
    %2275 = vmatpush2.msra.mxu0 0.0
    %2276 = vmatprep.subr.mxu0 0.0
    %2277 = vmatpush2.msra.mxu0 0.0
    %2278 = vmatprep.subr.mxu0 0.0
    %2279 = vmatpush2.msra.mxu0 0.0
    %2280 = vmatprep.subr.mxu0 0.0
    %2281 = vmatpush2.msra.mxu0 0.0
    %2282 = vmatprep.subr.mxu0 0.0
    %2283 = vmatpush2.msra.mxu0 0.0
    %2284 = vmatprep.subr.mxu0 0.0
    %2285 = vmatpush2.msra.mxu0 0.0
    %2286 = vmatprep.subr.mxu0 0.0
    %2287 = vmatpush2.msra.mxu0 0.0
    %2288 = vmatprep.subr.mxu0 0.0
    %2289 = vmatpush2.msra.mxu0 0.0
    %2290 = vmatprep.subr.mxu0 0.0
    %2291 = vmatpush2.msra.mxu0 0.0
    %2292 = vmatprep.subr.mxu0 0.0
    %2293 = vmatpush2.msra.mxu0 0.0
    %2294 = vmatprep.subr.mxu0 0.0
    %2295 = vmatpush2.msra.mxu0 0.0
    %2296 = vmatprep.mubr.f32.mxu0 0.0
    %2297 = vmatmul.mubr.f32.gmra.mxu0 %v2230
    %v2298 = vpop.f32.mrf.mxu0
    %v2299 = vadd.f32 %v2224, %v2298
    %v2300 = vpop.f32.mrf.mxu0
    %2301 = vdwg.mxu0
    %v2302 = vadd.f32 %v2299, %v680
    %v2303 = vxor.u32 %v2302, 2147483648
    %v2304 = vmul.f32 %v2303, 1.442695
    %v2305 = vpow.pop %v2304
    %v2306 = vadd.f32 %v2305, 1.0
    %v2307 = vrcp.pop %v2306
    %v2308 = vmul.f32 1.0, %v2307
    %v2309 = vtanh.pop %v2302
    %v2310 = vmul.f32 %v2308, %v2050
    %2312 = vrot.lane.b32.xlu0 %v2309, 64
    %v2313 = vpop.permute.xlu0 %2312
    %v2315 = vmul.f32 %v2308, %v2313
    %2317 = vrot.lane.b32.xlu0 %v2315, 32
    %v2318 = vpop.permute.xlu0 %2317
    %v2320 = vadd.f32 %v2310, %v2318
    %v2321 = vtanh.pop %v2320
    %2323 = vrot.lane.b32.xlu0 %v2321, 64
    %v2324 = vpop.permute.xlu0 %2323
    %v2326 = vmul.f32 %v2308, %v2324
    %2327 = vmatprep.subr.mxu0 0.0
    %2328 = vmatpush1.msra.mxu0 0.0
    %2329 = vmatprep.subr.mxu0 0.0
    %2330 = vmatpush1.msra.mxu0 0.0
    %2331 = vmatprep.subr.mxu0 0.0
    %2332 = vmatpush1.msra.mxu0 0.0
    %2333 = vmatprep.subr.mxu0 0.0
    %2334 = vmatpush1.msra.mxu0 0.0
    %2335 = vmatprep.subr.mxu0 0.0
    %2336 = vmatpush1.msra.mxu0 0.0
    %2337 = vmatprep.subr.mxu0 0.0
    %2338 = vmatpush1.msra.mxu0 0.0
    %2339 = vmatprep.subr.mxu0 0.0
    %2340 = vmatpush1.msra.mxu0 0.0
    %2341 = vmatprep.subr.mxu0 0.0
    %2342 = vmatpush1.msra.mxu0 0.0
    %2343 = vmatprep.subr.mxu0 0.0
    %2344 = vmatpush1.msra.mxu0 0.0
    %2345 = vmatprep.subr.mxu0 0.0
    %2346 = vmatpush1.msra.mxu0 0.0
    %2347 = vmatprep.subr.mxu0 0.0
    %2348 = vmatpush1.msra.mxu0 0.0
    %2349 = vmatprep.subr.mxu0 0.0
    %2350 = vmatpush1.msra.mxu0 0.0
    %2351 = vmatprep.subr.mxu0 0.0
    %2352 = vmatpush1.msra.mxu0 %v423
    %2353 = vmatprep.subr.mxu0 0.0
    %2354 = vmatpush1.msra.mxu0 %v422
    %2355 = vmatprep.subr.mxu0 0.0
    %2356 = vmatpush1.msra.mxu0 %v421
    %2357 = vmatprep.subr.mxu0 0.0
    %2358 = vmatpush1.msra.mxu0 %v420
    %2359 = vmatprep.subr.mxu0 0.0
    %2360 = vmatpush2.msra.mxu0 0.0
    %2361 = vmatprep.subr.mxu0 0.0
    %2362 = vmatpush2.msra.mxu0 0.0
    %2363 = vmatprep.subr.mxu0 0.0
    %2364 = vmatpush2.msra.mxu0 0.0
    %2365 = vmatprep.subr.mxu0 0.0
    %2366 = vmatpush2.msra.mxu0 0.0
    %2367 = vmatprep.subr.mxu0 0.0
    %2368 = vmatpush2.msra.mxu0 0.0
    %2369 = vmatprep.subr.mxu0 0.0
    %2370 = vmatpush2.msra.mxu0 0.0
    %2371 = vmatprep.subr.mxu0 0.0
    %2372 = vmatpush2.msra.mxu0 0.0
    %2373 = vmatprep.subr.mxu0 0.0
    %2374 = vmatpush2.msra.mxu0 0.0
    %2375 = vmatprep.subr.mxu0 0.0
    %2376 = vmatpush2.msra.mxu0 0.0
    %2377 = vmatprep.subr.mxu0 0.0
    %2378 = vmatpush2.msra.mxu0 0.0
    %2379 = vmatprep.subr.mxu0 0.0
    %2380 = vmatpush2.msra.mxu0 0.0
    %2381 = vmatprep.subr.mxu0 0.0
    %2382 = vmatpush2.msra.mxu0 0.0
    %2383 = vmatprep.subr.mxu0 0.0
    %2384 = vmatpush2.msra.mxu0 0.0
    %2385 = vmatprep.subr.mxu0 0.0
    %2386 = vmatpush2.msra.mxu0 0.0
    %2387 = vmatprep.subr.mxu0 0.0
    %2388 = vmatpush2.msra.mxu0 0.0
    %2389 = vmatprep.subr.mxu0 0.0
    %2390 = vmatpush2.msra.mxu0 0.0
    %2391 = vmatprep.mubr.f32.mxu0 0.0
    %2392 = vmatmul.mubr.f32.gmra.mxu0 %v2230
    %v2393 = vpop.f32.mrf.mxu0
    %v2394 = vadd.f32 0.0, %v2393
    %v2395 = vpop.f32.mrf.mxu0
    %2396 = vdwg.mxu0
    %v2397 = vadd.f32 %v417, %v2394
    %v2398 = vxor.u32 %v2397, 2147483648
    %v2399 = vmul.f32 %v2398, 1.442695
    %v2400 = vpow.pop %v2399
    %v2401 = vadd.f32 %v2400, 1.0
    %v2402 = vrcp.pop %v2401
    %v2403 = vmul.f32 1.0, %v2402
    %v2404 = vtanh.pop %v2397
    %v2405 = vmul.f32 %v2403, %v2145
    %2407 = vrot.lane.b32.xlu0 %v2404, 64
    %v2408 = vpop.permute.xlu0 %2407
    %v2410 = vmul.f32 %v2403, %v2408
    %2412 = vrot.lane.b32.xlu0 %v2410, 32
    %v2413 = vpop.permute.xlu0 %2412
    %v2415 = vadd.f32 %v2405, %v2413
    %v2416 = vtanh.pop %v2415
    %2418 = vrot.lane.b32.xlu0 %v2416, 64
    %v2419 = vpop.permute.xlu0 %2418
    %v2421 = vmul.f32 %v2403, %v2419
    %2423 = vrot.lane.b32.xlu0 %v2326, 32
    %v2424 = vpop.permute.xlu0 %2423
    %v2425 = vsel %vm290, %v2424, 0
    %2427 = vmatprep.subr.mxu0 0.0
    %2428 = vmatpush1.msra.mxu0 0.0
    %2429 = vmatprep.subr.mxu0 0.0
    %2430 = vmatpush1.msra.mxu0 0.0
    %2431 = vmatprep.subr.mxu0 0.0
    %2432 = vmatpush1.msra.mxu0 0.0
    %2433 = vmatprep.subr.mxu0 0.0
    %2434 = vmatpush1.msra.mxu0 0.0
    %2435 = vmatprep.subr.mxu0 0.0
    %2436 = vmatpush1.msra.mxu0 0.0
    %2437 = vmatprep.subr.mxu0 0.0
    %2438 = vmatpush1.msra.mxu0 0.0
    %2439 = vmatprep.subr.mxu0 0.0
    %2440 = vmatpush1.msra.mxu0 0.0
    %2441 = vmatprep.subr.mxu0 0.0
    %2442 = vmatpush1.msra.mxu0 0.0
    %2443 = vmatprep.subr.mxu0 0.0
    %2444 = vmatpush1.msra.mxu0 0.0
    %2445 = vmatprep.subr.mxu0 0.0
    %2446 = vmatpush1.msra.mxu0 0.0
    %2447 = vmatprep.subr.mxu0 0.0
    %2448 = vmatpush1.msra.mxu0 0.0
    %2449 = vmatprep.subr.mxu0 0.0
    %2450 = vmatpush1.msra.mxu0 0.0
    %2451 = vmatprep.subr.mxu0 0.0
    %2452 = vmatpush1.msra.mxu0 %v529
    %2453 = vmatprep.subr.mxu0 0.0
    %2454 = vmatpush1.msra.mxu0 %v528
    %2455 = vmatprep.subr.mxu0 0.0
    %2456 = vmatpush1.msra.mxu0 %v527
    %2457 = vmatprep.subr.mxu0 0.0
    %2458 = vmatpush1.msra.mxu0 %v526
    %2459 = vmatprep.subr.mxu0 0.0
    %2460 = vmatpush2.msra.mxu0 0.0
    %2461 = vmatprep.subr.mxu0 0.0
    %2462 = vmatpush2.msra.mxu0 0.0
    %2463 = vmatprep.subr.mxu0 0.0
    %2464 = vmatpush2.msra.mxu0 0.0
    %2465 = vmatprep.subr.mxu0 0.0
    %2466 = vmatpush2.msra.mxu0 0.0
    %2467 = vmatprep.subr.mxu0 0.0
    %2468 = vmatpush2.msra.mxu0 0.0
    %2469 = vmatprep.subr.mxu0 0.0
    %2470 = vmatpush2.msra.mxu0 0.0
    %2471 = vmatprep.subr.mxu0 0.0
    %2472 = vmatpush2.msra.mxu0 0.0
    %2473 = vmatprep.subr.mxu0 0.0
    %2474 = vmatpush2.msra.mxu0 0.0
    %2475 = vmatprep.subr.mxu0 0.0
    %2476 = vmatpush2.msra.mxu0 0.0
    %2477 = vmatprep.subr.mxu0 0.0
    %2478 = vmatpush2.msra.mxu0 0.0
    %2479 = vmatprep.subr.mxu0 0.0
    %2480 = vmatpush2.msra.mxu0 0.0
    %2481 = vmatprep.subr.mxu0 0.0
    %2482 = vmatpush2.msra.mxu0 0.0
    %2483 = vmatprep.subr.mxu0 0.0
    %2484 = vmatpush2.msra.mxu0 0.0
    %2485 = vmatprep.subr.mxu0 0.0
    %2486 = vmatpush2.msra.mxu0 0.0
    %2487 = vmatprep.subr.mxu0 0.0
    %2488 = vmatpush2.msra.mxu0 0.0
    %2489 = vmatprep.subr.mxu0 0.0
    %2490 = vmatpush2.msra.mxu0 0.0
    %2491 = vmatprep.mubr.f32.mxu0 0.0
    %2492 = vmatmul.mubr.f32.gmra.mxu0 %v2425
    %v2493 = vpop.f32.mrf.mxu0
    %v2494 = vadd.f32 0.0, %v2493
    %v2495 = vpop.f32.mrf.mxu0
    %2496 = vdwg.mxu0
    %2498 = vrot.lane.b32.xlu0 %v2421, 32
    %v2499 = vpop.permute.xlu0 %2498
    %v2500 = vsel %vm290, %v2499, 0
    %2502 = vmatprep.subr.mxu0 0.0
    %2503 = vmatpush1.msra.mxu0 0.0
    %2504 = vmatprep.subr.mxu0 0.0
    %2505 = vmatpush1.msra.mxu0 0.0
    %2506 = vmatprep.subr.mxu0 0.0
    %2507 = vmatpush1.msra.mxu0 0.0
    %2508 = vmatprep.subr.mxu0 0.0
    %2509 = vmatpush1.msra.mxu0 0.0
    %2510 = vmatprep.subr.mxu0 0.0
    %2511 = vmatpush1.msra.mxu0 0.0
    %2512 = vmatprep.subr.mxu0 0.0
    %2513 = vmatpush1.msra.mxu0 0.0
    %2514 = vmatprep.subr.mxu0 0.0
    %2515 = vmatpush1.msra.mxu0 0.0
    %2516 = vmatprep.subr.mxu0 0.0
    %2517 = vmatpush1.msra.mxu0 0.0
    %2518 = vmatprep.subr.mxu0 0.0
    %2519 = vmatpush1.msra.mxu0 0.0
    %2520 = vmatprep.subr.mxu0 0.0
    %2521 = vmatpush1.msra.mxu0 0.0
    %2522 = vmatprep.subr.mxu0 0.0
    %2523 = vmatpush1.msra.mxu0 0.0
    %2524 = vmatprep.subr.mxu0 0.0
    %2525 = vmatpush1.msra.mxu0 0.0
    %2526 = vmatprep.subr.mxu0 0.0
    %2527 = vmatpush1.msra.mxu0 %v525
    %2528 = vmatprep.subr.mxu0 0.0
    %2529 = vmatpush1.msra.mxu0 %v524
    %2530 = vmatprep.subr.mxu0 0.0
    %2531 = vmatpush1.msra.mxu0 %v523
    %2532 = vmatprep.subr.mxu0 0.0
    %2533 = vmatpush1.msra.mxu0 %v522
    %2534 = vmatprep.subr.mxu0 0.0
    %2535 = vmatpush2.msra.mxu0 0.0
    %2536 = vmatprep.subr.mxu0 0.0
    %2537 = vmatpush2.msra.mxu0 0.0
    %2538 = vmatprep.subr.mxu0 0.0
    %2539 = vmatpush2.msra.mxu0 0.0
    %2540 = vmatprep.subr.mxu0 0.0
    %2541 = vmatpush2.msra.mxu0 0.0
    %2542 = vmatprep.subr.mxu0 0.0
    %2543 = vmatpush2.msra.mxu0 0.0
    %2544 = vmatprep.subr.mxu0 0.0
    %2545 = vmatpush2.msra.mxu0 0.0
    %2546 = vmatprep.subr.mxu0 0.0
    %2547 = vmatpush2.msra.mxu0 0.0
    %2548 = vmatprep.subr.mxu0 0.0
    %2549 = vmatpush2.msra.mxu0 0.0
    %2550 = vmatprep.subr.mxu0 0.0
    %2551 = vmatpush2.msra.mxu0 0.0
    %2552 = vmatprep.subr.mxu0 0.0
    %2553 = vmatpush2.msra.mxu0 0.0
    %2554 = vmatprep.subr.mxu0 0.0
    %2555 = vmatpush2.msra.mxu0 0.0
    %2556 = vmatprep.subr.mxu0 0.0
    %2557 = vmatpush2.msra.mxu0 0.0
    %2558 = vmatprep.subr.mxu0 0.0
    %2559 = vmatpush2.msra.mxu0 0.0
    %2560 = vmatprep.subr.mxu0 0.0
    %2561 = vmatpush2.msra.mxu0 0.0
    %2562 = vmatprep.subr.mxu0 0.0
    %2563 = vmatpush2.msra.mxu0 0.0
    %2564 = vmatprep.subr.mxu0 0.0
    %2565 = vmatpush2.msra.mxu0 0.0
    %2566 = vmatprep.mubr.f32.mxu0 0.0
    %2567 = vmatmul.mubr.f32.gmra.mxu0 %v2500
    %v2568 = vpop.f32.mrf.mxu0
    %v2569 = vadd.f32 %v2494, %v2568
    %v2570 = vpop.f32.mrf.mxu0
    %2571 = vdwg.mxu0
    %v2572 = vadd.f32 %v2569, %v680
    %v2573 = vxor.u32 %v2572, 2147483648
    %v2574 = vmul.f32 %v2573, 1.442695
    %v2575 = vpow.pop %v2574
    %v2576 = vadd.f32 %v2575, 1.0
    %v2577 = vrcp.pop %v2576
    %v2578 = vmul.f32 1.0, %v2577
    %v2579 = vtanh.pop %v2572
    %v2580 = vmul.f32 %v2578, %v2320
    %2582 = vrot.lane.b32.xlu0 %v2579, 64
    %v2583 = vpop.permute.xlu0 %2582
    %v2585 = vmul.f32 %v2578, %v2583
    %2587 = vrot.lane.b32.xlu0 %v2585, 32
    %v2588 = vpop.permute.xlu0 %2587
    %v2590 = vadd.f32 %v2580, %v2588
    %v2591 = vtanh.pop %v2590
    %2593 = vrot.lane.b32.xlu0 %v2591, 64
    %v2594 = vpop.permute.xlu0 %2593
    %v2596 = vmul.f32 %v2578, %v2594
    %v2597 = vld [vmem:[%s2] sm:$0xff]
    %v2598 = vld [vmem:[%s2 + $0x8] sm:$0xff]
    %v2599 = vld [vmem:[%s2 + $0x10] sm:$0xff]
    %v2600 = vld [vmem:[%s2 + $0x18] sm:$0xff]
    %v2601 = vld [vmem:[%s2 + $0x20] sm:$0xff]
    %v2602 = vld [vmem:[%s2 + $0x28] sm:$0xff]
    %v2603 = vld [vmem:[%s2 + $0x30] sm:$0xff]
    %v2604 = vld [vmem:[%s2 + $0x38] sm:$0xff]
    %v2605 = vcvt.s32.f32 %v2597
    %v2606 = vcvt.s32.f32 %v2598
    %v2607 = vcvt.s32.f32 %v2599
    %v2608 = vcvt.s32.f32 %v2600
    %v2609 = vcvt.s32.f32 %v2601
    %v2610 = vcvt.s32.f32 %v2602
    %v2611 = vcvt.s32.f32 %v2603
    %v2612 = vcvt.s32.f32 %v2604
    %2614 = vset.pattern.permute.xlu0 0
    %2615 = vperm.xlu0 %2614, %v2605
    %v2616 = vpop.permute.xlu0 %2615
    %2619 = vset.pattern.permute.xlu0 0
    %2620 = vperm.xlu0 %2619, %v2606
    %v2621 = vpop.permute.xlu0 %2620
    %2624 = vset.pattern.permute.xlu0 0
    %2625 = vperm.xlu0 %2624, %v2607
    %v2626 = vpop.permute.xlu0 %2625
    %2629 = vset.pattern.permute.xlu0 0
    %2630 = vperm.xlu0 %2629, %v2608
    %v2631 = vpop.permute.xlu0 %2630
    %2634 = vset.pattern.permute.xlu0 0
    %2635 = vperm.xlu0 %2634, %v2609
    %v2636 = vpop.permute.xlu0 %2635
    %2639 = vset.pattern.permute.xlu0 0
    %2640 = vperm.xlu0 %2639, %v2610
    %v2641 = vpop.permute.xlu0 %2640
    %2644 = vset.pattern.permute.xlu0 0
    %2645 = vperm.xlu0 %2644, %v2611
    %v2646 = vpop.permute.xlu0 %2645
    %2649 = vset.pattern.permute.xlu0 0
    %2650 = vperm.xlu0 %2649, %v2612
    %v2651 = vpop.permute.xlu0 %2650
    %vm2653 = vcmp.eq.f32.partialorder %v93, %v2616
    %vm2654 = vcmp.eq.f32.partialorder %v93, %v2621
    %vm2655 = vcmp.eq.f32.partialorder %v93, %v2626
    %vm2656 = vcmp.eq.f32.partialorder %v93, %v2631
    %vm2657 = vcmp.eq.f32.partialorder %v93, %v2636
    %vm2658 = vcmp.eq.f32.partialorder %v93, %v2641
    %vm2659 = vcmp.eq.f32.partialorder %v93, %v2646
    %vm2660 = vcmp.eq.f32.partialorder %v93, %v2651
    %v2661 = vsel %vm2653, 1, 0
    %v2662 = vsel %vm2654, 1, 0
    %v2663 = vsel %vm2655, 1, 0
    %v2664 = vsel %vm2656, 1, 0
    %v2665 = vsel %vm2657, 1, 0
    %v2666 = vsel %vm2658, 1, 0
    %v2667 = vsel %vm2659, 1, 0
    %v2668 = vsel %vm2660, 1, 0
    %v2669 = vcvt.s32.f32 %v2661
    %v2670 = vcvt.s32.f32 %v2662
    %v2671 = vcvt.s32.f32 %v2663
    %v2672 = vcvt.s32.f32 %v2664
    %v2673 = vcvt.s32.f32 %v2665
    %v2674 = vcvt.s32.f32 %v2666
    %v2675 = vcvt.s32.f32 %v2667
    %v2676 = vcvt.s32.f32 %v2668
    %v2677 = vld [vmem:[%s4] sm:$0xff]
    %v2678 = vld [vmem:[%s4 + $0x8] sm:$0xff]
    %v2679 = vld [vmem:[%s4 + $0x10] sm:$0xff]
    %v2680 = vld [vmem:[%s4 + $0x18] sm:$0xff]
    %v2681 = vld [vmem:[%s4 + $0x20] sm:$0xff]
    %v2682 = vld [vmem:[%s4 + $0x28] sm:$0xff]
    %v2683 = vld [vmem:[%s4 + $0x30] sm:$0xff]
    %v2684 = vld [vmem:[%s4 + $0x38] sm:$0xff]
    %v2685 = vld [vmem:[%s4 + $0x40] sm:$0xff]
    %v2686 = vld [vmem:[%s4 + $0x48] sm:$0xff]
    %v2687 = vld [vmem:[%s4 + $0x50] sm:$0xff]
    %v2688 = vld [vmem:[%s4 + $0x58] sm:$0xff]
    %v2689 = vld [vmem:[%s4 + $0x60] sm:$0xff]
    %v2690 = vld [vmem:[%s4 + $0x68] sm:$0xff]
    %v2691 = vld [vmem:[%s4 + $0x70] sm:$0xff]
    %v2692 = vld [vmem:[%s4 + $0x78] sm:$0xff]
    %2693 = vmatprep.subr.mxu0 0.0
    %2694 = vmatpush1.msra.mxu0 %v2692
    %2695 = vmatprep.subr.mxu0 0.0
    %2696 = vmatpush1.msra.mxu0 %v2691
    %2697 = vmatprep.subr.mxu0 0.0
    %2698 = vmatpush1.msra.mxu0 %v2690
    %2699 = vmatprep.subr.mxu0 0.0
    %2700 = vmatpush1.msra.mxu0 %v2689
    %2701 = vmatprep.subr.mxu0 0.0
    %2702 = vmatpush1.msra.mxu0 %v2688
    %2703 = vmatprep.subr.mxu0 0.0
    %2704 = vmatpush1.msra.mxu0 %v2687
    %2705 = vmatprep.subr.mxu0 0.0
    %2706 = vmatpush1.msra.mxu0 %v2686
    %2707 = vmatprep.subr.mxu0 0.0
    %2708 = vmatpush1.msra.mxu0 %v2685
    %2709 = vmatprep.subr.mxu0 0.0
    %2710 = vmatpush1.msra.mxu0 %v2684
    %2711 = vmatprep.subr.mxu0 0.0
    %2712 = vmatpush1.msra.mxu0 %v2683
    %2713 = vmatprep.subr.mxu0 0.0
    %2714 = vmatpush1.msra.mxu0 %v2682
    %2715 = vmatprep.subr.mxu0 0.0
    %2716 = vmatpush1.msra.mxu0 %v2681
    %2717 = vmatprep.subr.mxu0 0.0
    %2718 = vmatpush1.msra.mxu0 %v2680
    %2719 = vmatprep.subr.mxu0 0.0
    %2720 = vmatpush1.msra.mxu0 %v2679
    %2721 = vmatprep.subr.mxu0 0.0
    %2722 = vmatpush1.msra.mxu0 %v2678
    %2723 = vmatprep.subr.mxu0 0.0
    %2724 = vmatpush1.msra.mxu0 %v2677
    %2725 = vmatprep.subr.mxu0 0.0
    %2726 = vmatpush2.msra.mxu0 0.0
    %2727 = vmatprep.subr.mxu0 0.0
    %2728 = vmatpush2.msra.mxu0 0.0
    %2729 = vmatprep.subr.mxu0 0.0
    %2730 = vmatpush2.msra.mxu0 0.0
    %2731 = vmatprep.subr.mxu0 0.0
    %2732 = vmatpush2.msra.mxu0 0.0
    %2733 = vmatprep.subr.mxu0 0.0
    %2734 = vmatpush2.msra.mxu0 0.0
    %2735 = vmatprep.subr.mxu0 0.0
    %2736 = vmatpush2.msra.mxu0 0.0
    %2737 = vmatprep.subr.mxu0 0.0
    %2738 = vmatpush2.msra.mxu0 0.0
    %2739 = vmatprep.subr.mxu0 0.0
    %2740 = vmatpush2.msra.mxu0 0.0
    %2741 = vmatprep.subr.mxu0 0.0
    %2742 = vmatpush2.msra.mxu0 0.0
    %2743 = vmatprep.subr.mxu0 0.0
    %2744 = vmatpush2.msra.mxu0 0.0
    %2745 = vmatprep.subr.mxu0 0.0
    %2746 = vmatpush2.msra.mxu0 0.0
    %2747 = vmatprep.subr.mxu0 0.0
    %2748 = vmatpush2.msra.mxu0 0.0
    %2749 = vmatprep.subr.mxu0 0.0
    %2750 = vmatpush2.msra.mxu0 0.0
    %2751 = vmatprep.subr.mxu0 0.0
    %2752 = vmatpush2.msra.mxu0 0.0
    %2753 = vmatprep.subr.mxu0 0.0
    %2754 = vmatpush2.msra.mxu0 0.0
    %2755 = vmatprep.subr.mxu0 0.0
    %2756 = vmatpush2.msra.mxu0 0.0
    %2757 = vmatprep.mubr.f32.mxu0 0.0
    %2758 = vmatmul.mubr.f32.gmra.mxu0 %v2669
    %v2759 = vpop.f32.mrf.mxu0
    %v2760 = vadd.f32 0.0, %v2759
    %v2761 = vpop.f32.mrf.mxu0
    %2762 = vmatprep.mubr.f32.mxu0 0.0
    %2763 = vmatmul.mubr.f32.gmra.mxu0 %v2670
    %v2764 = vpop.f32.mrf.mxu0
    %v2765 = vadd.f32 0.0, %v2764
    %v2766 = vpop.f32.mrf.mxu0
    %2767 = vmatprep.mubr.f32.mxu0 0.0
    %2768 = vmatmul.mubr.f32.gmra.mxu0 %v2671
    %v2769 = vpop.f32.mrf.mxu0
    %v2770 = vadd.f32 0.0, %v2769
    %v2771 = vpop.f32.mrf.mxu0
    %2772 = vmatprep.mubr.f32.mxu0 0.0
    %2773 = vmatmul.mubr.f32.gmra.mxu0 %v2672
    %v2774 = vpop.f32.mrf.mxu0
    %v2775 = vadd.f32 0.0, %v2774
    %v2776 = vpop.f32.mrf.mxu0
    %2777 = vmatprep.mubr.f32.mxu0 0.0
    %2778 = vmatmul.mubr.f32.gmra.mxu0 %v2673
    %v2779 = vpop.f32.mrf.mxu0
    %v2780 = vadd.f32 0.0, %v2779
    %v2781 = vpop.f32.mrf.mxu0
    %2782 = vmatprep.mubr.f32.mxu0 0.0
    %2783 = vmatmul.mubr.f32.gmra.mxu0 %v2674
    %v2784 = vpop.f32.mrf.mxu0
    %v2785 = vadd.f32 0.0, %v2784
    %v2786 = vpop.f32.mrf.mxu0
    %2787 = vmatprep.mubr.f32.mxu0 0.0
    %2788 = vmatmul.mubr.f32.gmra.mxu0 %v2675
    %v2789 = vpop.f32.mrf.mxu0
    %v2790 = vadd.f32 0.0, %v2789
    %v2791 = vpop.f32.mrf.mxu0
    %2792 = vmatprep.mubr.f32.mxu0 0.0
    %2793 = vmatmul.mubr.f32.gmra.mxu0 %v2676
    %v2794 = vpop.f32.mrf.mxu0
    %v2795 = vpop.f32.mrf.mxu0
    %2796 = vdwg.mxu0
    %2797 = vmatprep.subr.mxu0 0.0
    %2798 = vmatpush1.msra.mxu0 %v2692
    %2799 = vmatprep.subr.mxu0 0.0
    %2800 = vmatpush1.msra.mxu0 %v2691
    %2801 = vmatprep.subr.mxu0 0.0
    %2802 = vmatpush1.msra.mxu0 %v2690
    %2803 = vmatprep.subr.mxu0 0.0
    %2804 = vmatpush1.msra.mxu0 %v2689
    %2805 = vmatprep.subr.mxu0 0.0
    %2806 = vmatpush1.msra.mxu0 %v2688
    %2807 = vmatprep.subr.mxu0 0.0
    %2808 = vmatpush1.msra.mxu0 %v2687
    %2809 = vmatprep.subr.mxu0 0.0
    %2810 = vmatpush1.msra.mxu0 %v2686
    %2811 = vmatprep.subr.mxu0 0.0
    %2812 = vmatpush1.msra.mxu0 %v2685
    %2813 = vmatprep.subr.mxu0 0.0
    %2814 = vmatpush1.msra.mxu0 %v2684
    %2815 = vmatprep.subr.mxu0 0.0
    %2816 = vmatpush1.msra.mxu0 %v2683
    %2817 = vmatprep.subr.mxu0 0.0
    %2818 = vmatpush1.msra.mxu0 %v2682
    %2819 = vmatprep.subr.mxu0 0.0
    %2820 = vmatpush1.msra.mxu0 %v2681
    %2821 = vmatprep.subr.mxu0 0.0
    %2822 = vmatpush1.msra.mxu0 %v2680
    %2823 = vmatprep.subr.mxu0 0.0
    %2824 = vmatpush1.msra.mxu0 %v2679
    %2825 = vmatprep.subr.mxu0 0.0
    %2826 = vmatpush1.msra.mxu0 %v2678
    %2827 = vmatprep.subr.mxu0 0.0
    %2828 = vmatpush1.msra.mxu0 %v2677
    %2829 = vmatprep.subr.mxu0 0.0
    %2830 = vmatpush2.msra.mxu0 0.0
    %2831 = vmatprep.subr.mxu0 0.0
    %2832 = vmatpush2.msra.mxu0 0.0
    %2833 = vmatprep.subr.mxu0 0.0
    %2834 = vmatpush2.msra.mxu0 0.0
    %2835 = vmatprep.subr.mxu0 0.0
    %2836 = vmatpush2.msra.mxu0 0.0
    %2837 = vmatprep.subr.mxu0 0.0
    %2838 = vmatpush2.msra.mxu0 0.0
    %2839 = vmatprep.subr.mxu0 0.0
    %2840 = vmatpush2.msra.mxu0 0.0
    %2841 = vmatprep.subr.mxu0 0.0
    %2842 = vmatpush2.msra.mxu0 0.0
    %2843 = vmatprep.subr.mxu0 0.0
    %2844 = vmatpush2.msra.mxu0 0.0
    %2845 = vmatprep.subr.mxu0 0.0
    %2846 = vmatpush2.msra.mxu0 0.0
    %2847 = vmatprep.subr.mxu0 0.0
    %2848 = vmatpush2.msra.mxu0 0.0
    %2849 = vmatprep.subr.mxu0 0.0
    %2850 = vmatpush2.msra.mxu0 0.0
    %2851 = vmatprep.subr.mxu0 0.0
    %2852 = vmatpush2.msra.mxu0 0.0
    %2853 = vmatprep.subr.mxu0 0.0
    %2854 = vmatpush2.msra.mxu0 0.0
    %2855 = vmatprep.subr.mxu0 0.0
    %2856 = vmatpush2.msra.mxu0 0.0
    %2857 = vmatprep.subr.mxu0 0.0
    %2858 = vmatpush2.msra.mxu0 0.0
    %2859 = vmatprep.subr.mxu0 0.0
    %2860 = vmatpush2.msra.mxu0 0.0
    %2861 = vmatprep.mubr.f32.mxu0 0.0
    %2862 = vmatmul.mubr.f32.gmra.mxu0 %v157
    %v2863 = vpop.f32.mrf.mxu0
    %v2864 = vadd.f32 0.0, %v2863
    %v2865 = vpop.f32.mrf.mxu0
    %2866 = vdwg.mxu0
    %v2867 = vld [vmem:[%s11] sm:$0xff]
    %v2868 = vld [vmem:[%s11 + $0x8] sm:$0xff]
    %v2869 = vld [vmem:[%s11 + $0x10] sm:$0xff]
    %v2870 = vld [vmem:[%s11 + $0x18] sm:$0xff]
    %v2871 = vld [vmem:[%s13] sm:$0xff]
    %v2872 = vld [vmem:[%s13 + $0x8] sm:$0xff]
    %v2873 = vld [vmem:[%s13 + $0x10] sm:$0xff]
    %v2874 = vld [vmem:[%s13 + $0x18] sm:$0xff]
    %2875 = vmatprep.subr.mxu0 0.0
    %2876 = vmatpush1.msra.mxu0 0.0
    %2877 = vmatprep.subr.mxu0 0.0
    %2878 = vmatpush1.msra.mxu0 0.0
    %2879 = vmatprep.subr.mxu0 0.0
    %2880 = vmatpush1.msra.mxu0 0.0
    %2881 = vmatprep.subr.mxu0 0.0
    %2882 = vmatpush1.msra.mxu0 0.0
    %2883 = vmatprep.subr.mxu0 0.0
    %2884 = vmatpush1.msra.mxu0 0.0
    %2885 = vmatprep.subr.mxu0 0.0
    %2886 = vmatpush1.msra.mxu0 0.0
    %2887 = vmatprep.subr.mxu0 0.0
    %2888 = vmatpush1.msra.mxu0 0.0
    %2889 = vmatprep.subr.mxu0 0.0
    %2890 = vmatpush1.msra.mxu0 0.0
    %2891 = vmatprep.subr.mxu0 0.0
    %2892 = vmatpush1.msra.mxu0 0.0
    %2893 = vmatprep.subr.mxu0 0.0
    %2894 = vmatpush1.msra.mxu0 0.0
    %2895 = vmatprep.subr.mxu0 0.0
    %2896 = vmatpush1.msra.mxu0 0.0
    %2897 = vmatprep.subr.mxu0 0.0
    %2898 = vmatpush1.msra.mxu0 0.0
    %2899 = vmatprep.subr.mxu0 0.0
    %2900 = vmatpush1.msra.mxu0 %v2874
    %2901 = vmatprep.subr.mxu0 0.0
    %2902 = vmatpush1.msra.mxu0 %v2873
    %2903 = vmatprep.subr.mxu0 0.0
    %2904 = vmatpush1.msra.mxu0 %v2872
    %2905 = vmatprep.subr.mxu0 0.0
    %2906 = vmatpush1.msra.mxu0 %v2871
    %2907 = vmatprep.subr.mxu0 0.0
    %2908 = vmatpush2.msra.mxu0 0.0
    %2909 = vmatprep.subr.mxu0 0.0
    %2910 = vmatpush2.msra.mxu0 0.0
    %2911 = vmatprep.subr.mxu0 0.0
    %2912 = vmatpush2.msra.mxu0 0.0
    %2913 = vmatprep.subr.mxu0 0.0
    %2914 = vmatpush2.msra.mxu0 0.0
    %2915 = vmatprep.subr.mxu0 0.0
    %2916 = vmatpush2.msra.mxu0 0.0
    %2917 = vmatprep.subr.mxu0 0.0
    %2918 = vmatpush2.msra.mxu0 0.0
    %2919 = vmatprep.subr.mxu0 0.0
    %2920 = vmatpush2.msra.mxu0 0.0
    %2921 = vmatprep.subr.mxu0 0.0
    %2922 = vmatpush2.msra.mxu0 0.0
    %2923 = vmatprep.subr.mxu0 0.0
    %2924 = vmatpush2.msra.mxu0 0.0
    %2925 = vmatprep.subr.mxu0 0.0
    %2926 = vmatpush2.msra.mxu0 0.0
    %2927 = vmatprep.subr.mxu0 0.0
    %2928 = vmatpush2.msra.mxu0 0.0
    %2929 = vmatprep.subr.mxu0 0.0
    %2930 = vmatpush2.msra.mxu0 0.0
    %2931 = vmatprep.subr.mxu0 0.0
    %2932 = vmatpush2.msra.mxu0 0.0
    %2933 = vmatprep.subr.mxu0 0.0
    %2934 = vmatpush2.msra.mxu0 0.0
    %2935 = vmatprep.subr.mxu0 0.0
    %2936 = vmatpush2.msra.mxu0 0.0
    %2937 = vmatprep.subr.mxu0 0.0
    %2938 = vmatpush2.msra.mxu0 0.0
    %2939 = vmatprep.mubr.f32.mxu0 0.0
    %2940 = vmatmul.mubr.f32.gmra.mxu0 %v2500
    %v2941 = vpop.f32.mrf.mxu0
    %v2942 = vadd.f32 0.0, %v2941
    %v2943 = vpop.f32.mrf.mxu0
    %2944 = vdwg.mxu0
    %v2946 = vsel %vm290, %v2864, 0
    %2948 = vmatprep.subr.mxu0 0.0
    %2949 = vmatpush1.msra.mxu0 0.0
    %2950 = vmatprep.subr.mxu0 0.0
    %2951 = vmatpush1.msra.mxu0 0.0
    %2952 = vmatprep.subr.mxu0 0.0
    %2953 = vmatpush1.msra.mxu0 0.0
    %2954 = vmatprep.subr.mxu0 0.0
    %2955 = vmatpush1.msra.mxu0 0.0
    %2956 = vmatprep.subr.mxu0 0.0
    %2957 = vmatpush1.msra.mxu0 0.0
    %2958 = vmatprep.subr.mxu0 0.0
    %2959 = vmatpush1.msra.mxu0 0.0
    %2960 = vmatprep.subr.mxu0 0.0
    %2961 = vmatpush1.msra.mxu0 0.0
    %2962 = vmatprep.subr.mxu0 0.0
    %2963 = vmatpush1.msra.mxu0 0.0
    %2964 = vmatprep.subr.mxu0 0.0
    %2965 = vmatpush1.msra.mxu0 0.0
    %2966 = vmatprep.subr.mxu0 0.0
    %2967 = vmatpush1.msra.mxu0 0.0
    %2968 = vmatprep.subr.mxu0 0.0
    %2969 = vmatpush1.msra.mxu0 0.0
    %2970 = vmatprep.subr.mxu0 0.0
    %2971 = vmatpush1.msra.mxu0 0.0
    %2972 = vmatprep.subr.mxu0 0.0
    %2973 = vmatpush1.msra.mxu0 %v2870
    %2974 = vmatprep.subr.mxu0 0.0
    %2975 = vmatpush1.msra.mxu0 %v2869
    %2976 = vmatprep.subr.mxu0 0.0
    %2977 = vmatpush1.msra.mxu0 %v2868
    %2978 = vmatprep.subr.mxu0 0.0
    %2979 = vmatpush1.msra.mxu0 %v2867
    %2980 = vmatprep.subr.mxu0 0.0
    %2981 = vmatpush2.msra.mxu0 0.0
    %2982 = vmatprep.subr.mxu0 0.0
    %2983 = vmatpush2.msra.mxu0 0.0
    %2984 = vmatprep.subr.mxu0 0.0
    %2985 = vmatpush2.msra.mxu0 0.0
    %2986 = vmatprep.subr.mxu0 0.0
    %2987 = vmatpush2.msra.mxu0 0.0
    %2988 = vmatprep.subr.mxu0 0.0
    %2989 = vmatpush2.msra.mxu0 0.0
    %2990 = vmatprep.subr.mxu0 0.0
    %2991 = vmatpush2.msra.mxu0 0.0
    %2992 = vmatprep.subr.mxu0 0.0
    %2993 = vmatpush2.msra.mxu0 0.0
    %2994 = vmatprep.subr.mxu0 0.0
    %2995 = vmatpush2.msra.mxu0 0.0
    %2996 = vmatprep.subr.mxu0 0.0
    %2997 = vmatpush2.msra.mxu0 0.0
    %2998 = vmatprep.subr.mxu0 0.0
    %2999 = vmatpush2.msra.mxu0 0.0
    %3000 = vmatprep.subr.mxu0 0.0
    %3001 = vmatpush2.msra.mxu0 0.0
    %3002 = vmatprep.subr.mxu0 0.0
    %3003 = vmatpush2.msra.mxu0 0.0
    %3004 = vmatprep.subr.mxu0 0.0
    %3005 = vmatpush2.msra.mxu0 0.0
    %3006 = vmatprep.subr.mxu0 0.0
    %3007 = vmatpush2.msra.mxu0 0.0
    %3008 = vmatprep.subr.mxu0 0.0
    %3009 = vmatpush2.msra.mxu0 0.0
    %3010 = vmatprep.subr.mxu0 0.0
    %3011 = vmatpush2.msra.mxu0 0.0
    %3012 = vmatprep.mubr.f32.mxu0 0.0
    %3013 = vmatmul.mubr.f32.gmra.mxu0 %v2946
    %v3014 = vpop.f32.mrf.mxu0
    %v3015 = vadd.f32 %v2942, %v3014
    %v3016 = vpop.f32.mrf.mxu0
    %3017 = vdwg.mxu0
    %v3018 = vld [vmem:[%s15] sm:$0x1]
    %v3020 = vlaneseq
    %v3021 = vshrl.u32 %v3020, 7
    %v3022 = vsub.s32 0, %v3021
    %v3023 = vrot.slane %v3018, %v3022
    %v3025 = vadd.f32 %v3015, %v3023
    %v3026 = vxor.u32 %v3025, 2147483648
    %v3027 = vmul.f32 %v3026, 1.442695
    %v3028 = vpow.pop %v3027
    %v3029 = vadd.f32 %v3028, 1.0
    %v3030 = vrcp.pop %v3029
    %v3031 = vmul.f32 1.0, %v3030
    %v3032 = vtanh.pop %v3025
    %v3033 = vmul.f32 %v3031, %v2415
    %3035 = vrot.lane.b32.xlu0 %v3032, 64
    %v3036 = vpop.permute.xlu0 %3035
    %v3038 = vmul.f32 %v3031, %v3036
    %3040 = vrot.lane.b32.xlu0 %v3038, 32
    %v3041 = vpop.permute.xlu0 %3040
    %v3043 = vadd.f32 %v3033, %v3041
    %v3044 = vtanh.pop %v3043
    %3046 = vrot.lane.b32.xlu0 %v3044, 64
    %v3047 = vpop.permute.xlu0 %3046
    %v3049 = vmul.f32 %v3031, %v3047
    %v3050 = vld [vmem:[%s12] sm:$0xff]
    %v3051 = vld [vmem:[%s12 + $0x8] sm:$0xff]
    %v3052 = vld [vmem:[%s12 + $0x10] sm:$0xff]
    %v3053 = vld [vmem:[%s12 + $0x18] sm:$0xff]
    %v3054 = vld [vmem:[%s14] sm:$0xff]
    %v3055 = vld [vmem:[%s14 + $0x8] sm:$0xff]
    %v3056 = vld [vmem:[%s14 + $0x10] sm:$0xff]
    %v3057 = vld [vmem:[%s14 + $0x18] sm:$0xff]
    %3059 = vrot.lane.b32.xlu0 %v2596, 32
    %v3060 = vpop.permute.xlu0 %3059
    %v3061 = vsel %vm290, %v3060, 0
    %3063 = vmatprep.subr.mxu0 0.0
    %3064 = vmatpush1.msra.mxu0 0.0
    %3065 = vmatprep.subr.mxu0 0.0
    %3066 = vmatpush1.msra.mxu0 0.0
    %3067 = vmatprep.subr.mxu0 0.0
    %3068 = vmatpush1.msra.mxu0 0.0
    %3069 = vmatprep.subr.mxu0 0.0
    %3070 = vmatpush1.msra.mxu0 0.0
    %3071 = vmatprep.subr.mxu0 0.0
    %3072 = vmatpush1.msra.mxu0 0.0
    %3073 = vmatprep.subr.mxu0 0.0
    %3074 = vmatpush1.msra.mxu0 0.0
    %3075 = vmatprep.subr.mxu0 0.0
    %3076 = vmatpush1.msra.mxu0 0.0
    %3077 = vmatprep.subr.mxu0 0.0
    %3078 = vmatpush1.msra.mxu0 0.0
    %3079 = vmatprep.subr.mxu0 0.0
    %3080 = vmatpush1.msra.mxu0 0.0
    %3081 = vmatprep.subr.mxu0 0.0
    %3082 = vmatpush1.msra.mxu0 0.0
    %3083 = vmatprep.subr.mxu0 0.0
    %3084 = vmatpush1.msra.mxu0 0.0
    %3085 = vmatprep.subr.mxu0 0.0
    %3086 = vmatpush1.msra.mxu0 0.0
    %3087 = vmatprep.subr.mxu0 0.0
    %3088 = vmatpush1.msra.mxu0 %v3057
    %3089 = vmatprep.subr.mxu0 0.0
    %3090 = vmatpush1.msra.mxu0 %v3056
    %3091 = vmatprep.subr.mxu0 0.0
    %3092 = vmatpush1.msra.mxu0 %v3055
    %3093 = vmatprep.subr.mxu0 0.0
    %3094 = vmatpush1.msra.mxu0 %v3054
    %3095 = vmatprep.subr.mxu0 0.0
    %3096 = vmatpush2.msra.mxu0 0.0
    %3097 = vmatprep.subr.mxu0 0.0
    %3098 = vmatpush2.msra.mxu0 0.0
    %3099 = vmatprep.subr.mxu0 0.0
    %3100 = vmatpush2.msra.mxu0 0.0
    %3101 = vmatprep.subr.mxu0 0.0
    %3102 = vmatpush2.msra.mxu0 0.0
    %3103 = vmatprep.subr.mxu0 0.0
    %3104 = vmatpush2.msra.mxu0 0.0
    %3105 = vmatprep.subr.mxu0 0.0
    %3106 = vmatpush2.msra.mxu0 0.0
    %3107 = vmatprep.subr.mxu0 0.0
    %3108 = vmatpush2.msra.mxu0 0.0
    %3109 = vmatprep.subr.mxu0 0.0
    %3110 = vmatpush2.msra.mxu0 0.0
    %3111 = vmatprep.subr.mxu0 0.0
    %3112 = vmatpush2.msra.mxu0 0.0
    %3113 = vmatprep.subr.mxu0 0.0
    %3114 = vmatpush2.msra.mxu0 0.0
    %3115 = vmatprep.subr.mxu0 0.0
    %3116 = vmatpush2.msra.mxu0 0.0
    %3117 = vmatprep.subr.mxu0 0.0
    %3118 = vmatpush2.msra.mxu0 0.0
    %3119 = vmatprep.subr.mxu0 0.0
    %3120 = vmatpush2.msra.mxu0 0.0
    %3121 = vmatprep.subr.mxu0 0.0
    %3122 = vmatpush2.msra.mxu0 0.0
    %3123 = vmatprep.subr.mxu0 0.0
    %3124 = vmatpush2.msra.mxu0 0.0
    %3125 = vmatprep.subr.mxu0 0.0
    %3126 = vmatpush2.msra.mxu0 0.0
    %3127 = vmatprep.mubr.f32.mxu0 0.0
    %3128 = vmatmul.mubr.f32.gmra.mxu0 %v3061
    %v3129 = vpop.f32.mrf.mxu0
    %v3130 = vadd.f32 0.0, %v3129
    %v3131 = vpop.f32.mrf.mxu0
    %3132 = vdwg.mxu0
    %3134 = vrot.lane.b32.xlu0 %v3049, 32
    %v3135 = vpop.permute.xlu0 %3134
    %v3136 = vsel %vm290, %v3135, 0
    %3138 = vmatprep.subr.mxu0 0.0
    %3139 = vmatpush1.msra.mxu0 0.0
    %3140 = vmatprep.subr.mxu0 0.0
    %3141 = vmatpush1.msra.mxu0 0.0
    %3142 = vmatprep.subr.mxu0 0.0
    %3143 = vmatpush1.msra.mxu0 0.0
    %3144 = vmatprep.subr.mxu0 0.0
    %3145 = vmatpush1.msra.mxu0 0.0
    %3146 = vmatprep.subr.mxu0 0.0
    %3147 = vmatpush1.msra.mxu0 0.0
    %3148 = vmatprep.subr.mxu0 0.0
    %3149 = vmatpush1.msra.mxu0 0.0
    %3150 = vmatprep.subr.mxu0 0.0
    %3151 = vmatpush1.msra.mxu0 0.0
    %3152 = vmatprep.subr.mxu0 0.0
    %3153 = vmatpush1.msra.mxu0 0.0
    %3154 = vmatprep.subr.mxu0 0.0
    %3155 = vmatpush1.msra.mxu0 0.0
    %3156 = vmatprep.subr.mxu0 0.0
    %3157 = vmatpush1.msra.mxu0 0.0
    %3158 = vmatprep.subr.mxu0 0.0
    %3159 = vmatpush1.msra.mxu0 0.0
    %3160 = vmatprep.subr.mxu0 0.0
    %3161 = vmatpush1.msra.mxu0 0.0
    %3162 = vmatprep.subr.mxu0 0.0
    %3163 = vmatpush1.msra.mxu0 %v3053
    %3164 = vmatprep.subr.mxu0 0.0
    %3165 = vmatpush1.msra.mxu0 %v3052
    %3166 = vmatprep.subr.mxu0 0.0
    %3167 = vmatpush1.msra.mxu0 %v3051
    %3168 = vmatprep.subr.mxu0 0.0
    %3169 = vmatpush1.msra.mxu0 %v3050
    %3170 = vmatprep.subr.mxu0 0.0
    %3171 = vmatpush2.msra.mxu0 0.0
    %3172 = vmatprep.subr.mxu0 0.0
    %3173 = vmatpush2.msra.mxu0 0.0
    %3174 = vmatprep.subr.mxu0 0.0
    %3175 = vmatpush2.msra.mxu0 0.0
    %3176 = vmatprep.subr.mxu0 0.0
    %3177 = vmatpush2.msra.mxu0 0.0
    %3178 = vmatprep.subr.mxu0 0.0
    %3179 = vmatpush2.msra.mxu0 0.0
    %3180 = vmatprep.subr.mxu0 0.0
    %3181 = vmatpush2.msra.mxu0 0.0
    %3182 = vmatprep.subr.mxu0 0.0
    %3183 = vmatpush2.msra.mxu0 0.0
    %3184 = vmatprep.subr.mxu0 0.0
    %3185 = vmatpush2.msra.mxu0 0.0
    %3186 = vmatprep.subr.mxu0 0.0
    %3187 = vmatpush2.msra.mxu0 0.0
    %3188 = vmatprep.subr.mxu0 0.0
    %3189 = vmatpush2.msra.mxu0 0.0
    %3190 = vmatprep.subr.mxu0 0.0
    %3191 = vmatpush2.msra.mxu0 0.0
    %3192 = vmatprep.subr.mxu0 0.0
    %3193 = vmatpush2.msra.mxu0 0.0
    %3194 = vmatprep.subr.mxu0 0.0
    %3195 = vmatpush2.msra.mxu0 0.0
    %3196 = vmatprep.subr.mxu0 0.0
    %3197 = vmatpush2.msra.mxu0 0.0
    %3198 = vmatprep.subr.mxu0 0.0
    %3199 = vmatpush2.msra.mxu0 0.0
    %3200 = vmatprep.subr.mxu0 0.0
    %3201 = vmatpush2.msra.mxu0 0.0
    %3202 = vmatprep.mubr.f32.mxu0 0.0
    %3203 = vmatmul.mubr.f32.gmra.mxu0 %v3136
    %v3204 = vpop.f32.mrf.mxu0
    %v3205 = vadd.f32 %v3130, %v3204
    %v3206 = vpop.f32.mrf.mxu0
    %3207 = vdwg.mxu0
    %v3208 = vld [vmem:[%s16] sm:$0x1]
    %v3210 = vlaneseq
    %v3211 = vshrl.u32 %v3210, 7
    %v3212 = vsub.s32 0, %v3211
    %v3213 = vrot.slane %v3208, %v3212
    %v3215 = vadd.f32 %v3205, %v3213
    %v3216 = vxor.u32 %v3215, 2147483648
    %v3217 = vmul.f32 %v3216, 1.442695
    %v3218 = vpow.pop %v3217
    %v3219 = vadd.f32 %v3218, 1.0
    %v3220 = vrcp.pop %v3219
    %v3221 = vmul.f32 1.0, %v3220
    %v3222 = vtanh.pop %v3215
    %v3223 = vmul.f32 %v3221, %v2590
    %3225 = vrot.lane.b32.xlu0 %v3222, 64
    %v3226 = vpop.permute.xlu0 %3225
    %v3228 = vmul.f32 %v3221, %v3226
    %3230 = vrot.lane.b32.xlu0 %v3228, 32
    %v3231 = vpop.permute.xlu0 %3230
    %v3233 = vadd.f32 %v3223, %v3231
    %v3234 = vtanh.pop %v3233
    %3236 = vrot.lane.b32.xlu0 %v3234, 64
    %v3237 = vpop.permute.xlu0 %3236
    %v3239 = vmul.f32 %v3221, %v3237
    %v3240 = vld [vmem:[%s17] sm:$0xff]
    %v3241 = vld [vmem:[%s17 + $0x8] sm:$0xff]
    %v3242 = vld [vmem:[%s17 + $0x10] sm:$0xff]
    %v3243 = vld [vmem:[%s17 + $0x18] sm:$0xff]
    %v3244 = vld [vmem:[%s18] sm:$0x1]
    %v3246 = vlaneseq
    %v3247 = vshrl.u32 %v3246, 7
    %v3248 = vsub.s32 0, %v3247
    %v3249 = vrot.slane %v3244, %v3248
    %3252 = vrot.lane.b32.xlu0 %v3239, 32
    %v3253 = vpop.permute.xlu0 %3252
    %v3254 = vsel %vm290, %v3253, 0
    %3256 = vmatprep.subr.mxu0 0.0
    %3257 = vmatpush1.msra.mxu0 0.0
    %3258 = vmatprep.subr.mxu0 0.0
    %3259 = vmatpush1.msra.mxu0 0.0
    %3260 = vmatprep.subr.mxu0 0.0
    %3261 = vmatpush1.msra.mxu0 0.0
    %3262 = vmatprep.subr.mxu0 0.0
    %3263 = vmatpush1.msra.mxu0 0.0
    %3264 = vmatprep.subr.mxu0 0.0
    %3265 = vmatpush1.msra.mxu0 0.0
    %3266 = vmatprep.subr.mxu0 0.0
    %3267 = vmatpush1.msra.mxu0 0.0
    %3268 = vmatprep.subr.mxu0 0.0
    %3269 = vmatpush1.msra.mxu0 0.0
    %3270 = vmatprep.subr.mxu0 0.0
    %3271 = vmatpush1.msra.mxu0 0.0
    %3272 = vmatprep.subr.mxu0 0.0
    %3273 = vmatpush1.msra.mxu0 0.0
    %3274 = vmatprep.subr.mxu0 0.0
    %3275 = vmatpush1.msra.mxu0 0.0
    %3276 = vmatprep.subr.mxu0 0.0
    %3277 = vmatpush1.msra.mxu0 0.0
    %3278 = vmatprep.subr.mxu0 0.0
    %3279 = vmatpush1.msra.mxu0 0.0
    %3280 = vmatprep.subr.mxu0 0.0
    %3281 = vmatpush1.msra.mxu0 %v3243
    %3282 = vmatprep.subr.mxu0 0.0
    %3283 = vmatpush1.msra.mxu0 %v3242
    %3284 = vmatprep.subr.mxu0 0.0
    %3285 = vmatpush1.msra.mxu0 %v3241
    %3286 = vmatprep.subr.mxu0 0.0
    %3287 = vmatpush1.msra.mxu0 %v3240
    %3288 = vmatprep.subr.mxu0 0.0
    %3289 = vmatpush2.msra.mxu0 0.0
    %3290 = vmatprep.subr.mxu0 0.0
    %3291 = vmatpush2.msra.mxu0 0.0
    %3292 = vmatprep.subr.mxu0 0.0
    %3293 = vmatpush2.msra.mxu0 0.0
    %3294 = vmatprep.subr.mxu0 0.0
    %3295 = vmatpush2.msra.mxu0 0.0
    %3296 = vmatprep.subr.mxu0 0.0
    %3297 = vmatpush2.msra.mxu0 0.0
    %3298 = vmatprep.subr.mxu0 0.0
    %3299 = vmatpush2.msra.mxu0 0.0
    %3300 = vmatprep.subr.mxu0 0.0
    %3301 = vmatpush2.msra.mxu0 0.0
    %3302 = vmatprep.subr.mxu0 0.0
    %3303 = vmatpush2.msra.mxu0 0.0
    %3304 = vmatprep.subr.mxu0 0.0
    %3305 = vmatpush2.msra.mxu0 0.0
    %3306 = vmatprep.subr.mxu0 0.0
    %3307 = vmatpush2.msra.mxu0 0.0
    %3308 = vmatprep.subr.mxu0 0.0
    %3309 = vmatpush2.msra.mxu0 0.0
    %3310 = vmatprep.subr.mxu0 0.0
    %3311 = vmatpush2.msra.mxu0 0.0
    %3312 = vmatprep.subr.mxu0 0.0
    %3313 = vmatpush2.msra.mxu0 0.0
    %3314 = vmatprep.subr.mxu0 0.0
    %3315 = vmatpush2.msra.mxu0 0.0
    %3316 = vmatprep.subr.mxu0 0.0
    %3317 = vmatpush2.msra.mxu0 0.0
    %3318 = vmatprep.subr.mxu0 0.0
    %3319 = vmatpush2.msra.mxu0 0.0
    %3320 = vmatprep.mubr.f32.mxu0 0.0
    %3321 = vmatmul.mubr.f32.gmra.mxu0 %v3254
    %v3322 = vpop.f32.mrf.mxu0
    %v3323 = vadd.f32 %v3249, %v3322
    %v3324 = vpop.f32.mrf.mxu0
    %3325 = vdwg.mxu0
    %3326 = vst [vmem:[%s19] sm:$0xff] %v3323
    %3327 = vst.msk [vmem:[#allocation2] sm:$0xff] %vm290, %v2760
    %s3328 = sld [smem:[#allocation3]]
    %p3329 = scmp.eq.s32.totalorder %s3328, 0
    // Predicated region
    $region82: #{seq2seq_forward.1} parent=1 // pred_check
      %p3330 = pneg %p3329
    $region83: #{seq2seq_forward.1} parent=1 // pred_check_branch
      %3332 = sbr.rel (%p3330) target = $region85
    $region84: #{seq2seq_forward.1} parent=1 // pred_region
      %3333 = vmax.xlane.f32.xlu0 %v3323
      %v3334 = vpop.xlane.xlu0 %3333
      %vm3335 = vcmp.ge.f32.partialorder %v3323, %v3334
      %v3336 = vsel %vm3335, %v93, 128.0
      %3337 = vmin.xlane.f32.xlu0 %v3336
      %v3338 = vpop.xlane.xlu0 %3337
      %vm3339 = vcmp.eq.f32.partialorder %v93, %v3338
      %v3340 = vsel %vm3339, 1, 0
      %v3341 = vcvt.s32.f32 %v3340
      %v3342 = vld [vmem:[%s4] sm:$0xff]
      %v3343 = vld [vmem:[%s4 + $0x8] sm:$0xff]
      %v3344 = vld [vmem:[%s4 + $0x10] sm:$0xff]
      %v3345 = vld [vmem:[%s4 + $0x18] sm:$0xff]
      %v3346 = vld [vmem:[%s4 + $0x20] sm:$0xff]
      %v3347 = vld [vmem:[%s4 + $0x28] sm:$0xff]
      %v3348 = vld [vmem:[%s4 + $0x30] sm:$0xff]
      %v3349 = vld [vmem:[%s4 + $0x38] sm:$0xff]
      %v3350 = vld [vmem:[%s4 + $0x40] sm:$0xff]
      %v3351 = vld [vmem:[%s4 + $0x48] sm:$0xff]
      %v3352 = vld [vmem:[%s4 + $0x50] sm:$0xff]
      %v3353 = vld [vmem:[%s4 + $0x58] sm:$0xff]
      %v3354 = vld [vmem:[%s4 + $0x60] sm:$0xff]
      %v3355 = vld [vmem:[%s4 + $0x68] sm:$0xff]
      %v3356 = vld [vmem:[%s4 + $0x70] sm:$0xff]
      %v3357 = vld [vmem:[%s4 + $0x78] sm:$0xff]
      %3358 = vmatprep.subr.mxu0 0.0
      %3359 = vmatpush1.msra.mxu0 %v3357
      %3360 = vmatprep.subr.mxu0 0.0
      %3361 = vmatpush1.msra.mxu0 %v3356
      %3362 = vmatprep.subr.mxu0 0.0
      %3363 = vmatpush1.msra.mxu0 %v3355
      %3364 = vmatprep.subr.mxu0 0.0
      %3365 = vmatpush1.msra.mxu0 %v3354
      %3366 = vmatprep.subr.mxu0 0.0
      %3367 = vmatpush1.msra.mxu0 %v3353
      %3368 = vmatprep.subr.mxu0 0.0
      %3369 = vmatpush1.msra.mxu0 %v3352
      %3370 = vmatprep.subr.mxu0 0.0
      %3371 = vmatpush1.msra.mxu0 %v3351
      %3372 = vmatprep.subr.mxu0 0.0
      %3373 = vmatpush1.msra.mxu0 %v3350
      %3374 = vmatprep.subr.mxu0 0.0
      %3375 = vmatpush1.msra.mxu0 %v3349
      %3376 = vmatprep.subr.mxu0 0.0
      %3377 = vmatpush1.msra.mxu0 %v3348
      %3378 = vmatprep.subr.mxu0 0.0
      %3379 = vmatpush1.msra.mxu0 %v3347
      %3380 = vmatprep.subr.mxu0 0.0
      %3381 = vmatpush1.msra.mxu0 %v3346
      %3382 = vmatprep.subr.mxu0 0.0
      %3383 = vmatpush1.msra.mxu0 %v3345
      %3384 = vmatprep.subr.mxu0 0.0
      %3385 = vmatpush1.msra.mxu0 %v3344
      %3386 = vmatprep.subr.mxu0 0.0
      %3387 = vmatpush1.msra.mxu0 %v3343
      %3388 = vmatprep.subr.mxu0 0.0
      %3389 = vmatpush1.msra.mxu0 %v3342
      %3390 = vmatprep.subr.mxu0 0.0
      %3391 = vmatpush2.msra.mxu0 0.0
      %3392 = vmatprep.subr.mxu0 0.0
      %3393 = vmatpush2.msra.mxu0 0.0
      %3394 = vmatprep.subr.mxu0 0.0
      %3395 = vmatpush2.msra.mxu0 0.0
      %3396 = vmatprep.subr.mxu0 0.0
      %3397 = vmatpush2.msra.mxu0 0.0
      %3398 = vmatprep.subr.mxu0 0.0
      %3399 = vmatpush2.msra.mxu0 0.0
      %3400 = vmatprep.subr.mxu0 0.0
      %3401 = vmatpush2.msra.mxu0 0.0
      %3402 = vmatprep.subr.mxu0 0.0
      %3403 = vmatpush2.msra.mxu0 0.0
      %3404 = vmatprep.subr.mxu0 0.0
      %3405 = vmatpush2.msra.mxu0 0.0
      %3406 = vmatprep.subr.mxu0 0.0
      %3407 = vmatpush2.msra.mxu0 0.0
      %3408 = vmatprep.subr.mxu0 0.0
      %3409 = vmatpush2.msra.mxu0 0.0
      %3410 = vmatprep.subr.mxu0 0.0
      %3411 = vmatpush2.msra.mxu0 0.0
      %3412 = vmatprep.subr.mxu0 0.0
      %3413 = vmatpush2.msra.mxu0 0.0
      %3414 = vmatprep.subr.mxu0 0.0
      %3415 = vmatpush2.msra.mxu0 0.0
      %3416 = vmatprep.subr.mxu0 0.0
      %3417 = vmatpush2.msra.mxu0 0.0
      %3418 = vmatprep.subr.mxu0 0.0
      %3419 = vmatpush2.msra.mxu0 0.0
      %3420 = vmatprep.subr.mxu0 0.0
      %3421 = vmatpush2.msra.mxu0 0.0
      %3422 = vmatprep.mubr.f32.mxu0 0.0
      %3423 = vmatmul.mubr.f32.gmra.mxu0 %v3341
      %v3424 = vpop.f32.mrf.mxu0
      %v3425 = vadd.f32 0.0, %v3424
      %v3426 = vpop.f32.mrf.mxu0
      %3427 = vdwg.mxu0
      %3428 = vst.msk [vmem:[#allocation2] sm:$0xff] %vm290, %v3425
    $region85: #{seq2seq_forward.1} parent=1 // pred_fallthru
      _
    %v3429 = vld [vmem:[#allocation2] sm:$0xff]
    %v3430 = vld [vmem:[%s11] sm:$0xff]
    %v3431 = vld [vmem:[%s11 + $0x8] sm:$0xff]
    %v3432 = vld [vmem:[%s11 + $0x10] sm:$0xff]
    %v3433 = vld [vmem:[%s11 + $0x18] sm:$0xff]
    %v3434 = vld [vmem:[%s13] sm:$0xff]
    %v3435 = vld [vmem:[%s13 + $0x8] sm:$0xff]
    %v3436 = vld [vmem:[%s13 + $0x10] sm:$0xff]
    %v3437 = vld [vmem:[%s13 + $0x18] sm:$0xff]
    %3438 = vmatprep.subr.mxu0 0.0
    %3439 = vmatpush1.msra.mxu0 0.0
    %3440 = vmatprep.subr.mxu0 0.0
    %3441 = vmatpush1.msra.mxu0 0.0
    %3442 = vmatprep.subr.mxu0 0.0
    %3443 = vmatpush1.msra.mxu0 0.0
    %3444 = vmatprep.subr.mxu0 0.0
    %3445 = vmatpush1.msra.mxu0 0.0
    %3446 = vmatprep.subr.mxu0 0.0
    %3447 = vmatpush1.msra.mxu0 0.0
    %3448 = vmatprep.subr.mxu0 0.0
    %3449 = vmatpush1.msra.mxu0 0.0
    %3450 = vmatprep.subr.mxu0 0.0
    %3451 = vmatpush1.msra.mxu0 0.0
    %3452 = vmatprep.subr.mxu0 0.0
    %3453 = vmatpush1.msra.mxu0 0.0
    %3454 = vmatprep.subr.mxu0 0.0
    %3455 = vmatpush1.msra.mxu0 0.0
    %3456 = vmatprep.subr.mxu0 0.0
    %3457 = vmatpush1.msra.mxu0 0.0
    %3458 = vmatprep.subr.mxu0 0.0
    %3459 = vmatpush1.msra.mxu0 0.0
    %3460 = vmatprep.subr.mxu0 0.0
    %3461 = vmatpush1.msra.mxu0 0.0
    %3462 = vmatprep.subr.mxu0 0.0
    %3463 = vmatpush1.msra.mxu0 %v3437
    %3464 = vmatprep.subr.mxu0 0.0
    %3465 = vmatpush1.msra.mxu0 %v3436
    %3466 = vmatprep.subr.mxu0 0.0
    %3467 = vmatpush1.msra.mxu0 %v3435
    %3468 = vmatprep.subr.mxu0 0.0
    %3469 = vmatpush1.msra.mxu0 %v3434
    %3470 = vmatprep.subr.mxu0 0.0
    %3471 = vmatpush2.msra.mxu0 0.0
    %3472 = vmatprep.subr.mxu0 0.0
    %3473 = vmatpush2.msra.mxu0 0.0
    %3474 = vmatprep.subr.mxu0 0.0
    %3475 = vmatpush2.msra.mxu0 0.0
    %3476 = vmatprep.subr.mxu0 0.0
    %3477 = vmatpush2.msra.mxu0 0.0
    %3478 = vmatprep.subr.mxu0 0.0
    %3479 = vmatpush2.msra.mxu0 0.0
    %3480 = vmatprep.subr.mxu0 0.0
    %3481 = vmatpush2.msra.mxu0 0.0
    %3482 = vmatprep.subr.mxu0 0.0
    %3483 = vmatpush2.msra.mxu0 0.0
    %3484 = vmatprep.subr.mxu0 0.0
    %3485 = vmatpush2.msra.mxu0 0.0
    %3486 = vmatprep.subr.mxu0 0.0
    %3487 = vmatpush2.msra.mxu0 0.0
    %3488 = vmatprep.subr.mxu0 0.0
    %3489 = vmatpush2.msra.mxu0 0.0
    %3490 = vmatprep.subr.mxu0 0.0
    %3491 = vmatpush2.msra.mxu0 0.0
    %3492 = vmatprep.subr.mxu0 0.0
    %3493 = vmatpush2.msra.mxu0 0.0
    %3494 = vmatprep.subr.mxu0 0.0
    %3495 = vmatpush2.msra.mxu0 0.0
    %3496 = vmatprep.subr.mxu0 0.0
    %3497 = vmatpush2.msra.mxu0 0.0
    %3498 = vmatprep.subr.mxu0 0.0
    %3499 = vmatpush2.msra.mxu0 0.0
    %3500 = vmatprep.subr.mxu0 0.0
    %3501 = vmatpush2.msra.mxu0 0.0
    %3502 = vmatprep.mubr.f32.mxu0 0.0
    %3503 = vmatmul.mubr.f32.gmra.mxu0 %v3136
    %v3504 = vpop.f32.mrf.mxu0
    %v3505 = vadd.f32 0.0, %v3504
    %v3506 = vpop.f32.mrf.mxu0
    %3507 = vdwg.mxu0
    %v3509 = vsel %vm290, %v3429, 0
    %3511 = vmatprep.subr.mxu0 0.0
    %3512 = vmatpush1.msra.mxu0 0.0
    %3513 = vmatprep.subr.mxu0 0.0
    %3514 = vmatpush1.msra.mxu0 0.0
    %3515 = vmatprep.subr.mxu0 0.0
    %3516 = vmatpush1.msra.mxu0 0.0
    %3517 = vmatprep.subr.mxu0 0.0
    %3518 = vmatpush1.msra.mxu0 0.0
    %3519 = vmatprep.subr.mxu0 0.0
    %3520 = vmatpush1.msra.mxu0 0.0
    %3521 = vmatprep.subr.mxu0 0.0
    %3522 = vmatpush1.msra.mxu0 0.0
    %3523 = vmatprep.subr.mxu0 0.0
    %3524 = vmatpush1.msra.mxu0 0.0
    %3525 = vmatprep.subr.mxu0 0.0
    %3526 = vmatpush1.msra.mxu0 0.0
    %3527 = vmatprep.subr.mxu0 0.0
    %3528 = vmatpush1.msra.mxu0 0.0
    %3529 = vmatprep.subr.mxu0 0.0
    %3530 = vmatpush1.msra.mxu0 0.0
    %3531 = vmatprep.subr.mxu0 0.0
    %3532 = vmatpush1.msra.mxu0 0.0
    %3533 = vmatprep.subr.mxu0 0.0
    %3534 = vmatpush1.msra.mxu0 0.0
    %3535 = vmatprep.subr.mxu0 0.0
    %3536 = vmatpush1.msra.mxu0 %v3433
    %3537 = vmatprep.subr.mxu0 0.0
    %3538 = vmatpush1.msra.mxu0 %v3432
    %3539 = vmatprep.subr.mxu0 0.0
    %3540 = vmatpush1.msra.mxu0 %v3431
    %3541 = vmatprep.subr.mxu0 0.0
    %3542 = vmatpush1.msra.mxu0 %v3430
    %3543 = vmatprep.subr.mxu0 0.0
    %3544 = vmatpush2.msra.mxu0 0.0
    %3545 = vmatprep.subr.mxu0 0.0
    %3546 = vmatpush2.msra.mxu0 0.0
    %3547 = vmatprep.subr.mxu0 0.0
    %3548 = vmatpush2.msra.mxu0 0.0
    %3549 = vmatprep.subr.mxu0 0.0
    %3550 = vmatpush2.msra.mxu0 0.0
    %3551 = vmatprep.subr.mxu0 0.0
    %3552 = vmatpush2.msra.mxu0 0.0
    %3553 = vmatprep.subr.mxu0 0.0
    %3554 = vmatpush2.msra.mxu0 0.0
    %3555 = vmatprep.subr.mxu0 0.0
    %3556 = vmatpush2.msra.mxu0 0.0
    %3557 = vmatprep.subr.mxu0 0.0
    %3558 = vmatpush2.msra.mxu0 0.0
    %3559 = vmatprep.subr.mxu0 0.0
    %3560 = vmatpush2.msra.mxu0 0.0
    %3561 = vmatprep.subr.mxu0 0.0
    %3562 = vmatpush2.msra.mxu0 0.0
    %3563 = vmatprep.subr.mxu0 0.0
    %3564 = vmatpush2.msra.mxu0 0.0
    %3565 = vmatprep.subr.mxu0 0.0
    %3566 = vmatpush2.msra.mxu0 0.0
    %3567 = vmatprep.subr.mxu0 0.0
    %3568 = vmatpush2.msra.mxu0 0.0
    %3569 = vmatprep.subr.mxu0 0.0
    %3570 = vmatpush2.msra.mxu0 0.0
    %3571 = vmatprep.subr.mxu0 0.0
    %3572 = vmatpush2.msra.mxu0 0.0
    %3573 = vmatprep.subr.mxu0 0.0
    %3574 = vmatpush2.msra.mxu0 0.0
    %3575 = vmatprep.mubr.f32.mxu0 0.0
    %3576 = vmatmul.mubr.f32.gmra.mxu0 %v3509
    %v3577 = vpop.f32.mrf.mxu0
    %v3578 = vadd.f32 %v3505, %v3577
    %v3579 = vpop.f32.mrf.mxu0
    %3580 = vdwg.mxu0
    %v3581 = vld [vmem:[%s15] sm:$0x1]
    %v3583 = vlaneseq
    %v3584 = vshrl.u32 %v3583, 7
    %v3585 = vsub.s32 0, %v3584
    %v3586 = vrot.slane %v3581, %v3585
    %v3588 = vadd.f32 %v3578, %v3586
    %v3589 = vxor.u32 %v3588, 2147483648
    %v3590 = vmul.f32 %v3589, 1.442695
    %v3591 = vpow.pop %v3590
    %v3592 = vadd.f32 %v3591, 1.0
    %v3593 = vrcp.pop %v3592
    %v3594 = vmul.f32 1.0, %v3593
    %v3595 = vtanh.pop %v3588
    %v3596 = vmul.f32 %v3594, %v3043
    %3598 = vrot.lane.b32.xlu0 %v3595, 64
    %v3599 = vpop.permute.xlu0 %3598
    %v3601 = vmul.f32 %v3594, %v3599
    %3603 = vrot.lane.b32.xlu0 %v3601, 32
    %v3604 = vpop.permute.xlu0 %3603
    %v3606 = vadd.f32 %v3596, %v3604
    %v3607 = vtanh.pop %v3606
    %3609 = vrot.lane.b32.xlu0 %v3607, 64
    %v3610 = vpop.permute.xlu0 %3609
    %v3612 = vmul.f32 %v3594, %v3610
    %v3613 = vld [vmem:[%s12] sm:$0xff]
    %v3614 = vld [vmem:[%s12 + $0x8] sm:$0xff]
    %v3615 = vld [vmem:[%s12 + $0x10] sm:$0xff]
    %v3616 = vld [vmem:[%s12 + $0x18] sm:$0xff]
    %v3617 = vld [vmem:[%s14] sm:$0xff]
    %v3618 = vld [vmem:[%s14 + $0x8] sm:$0xff]
    %v3619 = vld [vmem:[%s14 + $0x10] sm:$0xff]
    %v3620 = vld [vmem:[%s14 + $0x18] sm:$0xff]
    %3621 = vmatprep.subr.mxu0 0.0
    %3622 = vmatpush1.msra.mxu0 0.0
    %3623 = vmatprep.subr.mxu0 0.0
    %3624 = vmatpush1.msra.mxu0 0.0
    %3625 = vmatprep.subr.mxu0 0.0
    %3626 = vmatpush1.msra.mxu0 0.0
    %3627 = vmatprep.subr.mxu0 0.0
    %3628 = vmatpush1.msra.mxu0 0.0
    %3629 = vmatprep.subr.mxu0 0.0
    %3630 = vmatpush1.msra.mxu0 0.0
    %3631 = vmatprep.subr.mxu0 0.0
    %3632 = vmatpush1.msra.mxu0 0.0
    %3633 = vmatprep.subr.mxu0 0.0
    %3634 = vmatpush1.msra.mxu0 0.0
    %3635 = vmatprep.subr.mxu0 0.0
    %3636 = vmatpush1.msra.mxu0 0.0
    %3637 = vmatprep.subr.mxu0 0.0
    %3638 = vmatpush1.msra.mxu0 0.0
    %3639 = vmatprep.subr.mxu0 0.0
    %3640 = vmatpush1.msra.mxu0 0.0
    %3641 = vmatprep.subr.mxu0 0.0
    %3642 = vmatpush1.msra.mxu0 0.0
    %3643 = vmatprep.subr.mxu0 0.0
    %3644 = vmatpush1.msra.mxu0 0.0
    %3645 = vmatprep.subr.mxu0 0.0
    %3646 = vmatpush1.msra.mxu0 %v3620
    %3647 = vmatprep.subr.mxu0 0.0
    %3648 = vmatpush1.msra.mxu0 %v3619
    %3649 = vmatprep.subr.mxu0 0.0
    %3650 = vmatpush1.msra.mxu0 %v3618
    %3651 = vmatprep.subr.mxu0 0.0
    %3652 = vmatpush1.msra.mxu0 %v3617
    %3653 = vmatprep.subr.mxu0 0.0
    %3654 = vmatpush2.msra.mxu0 0.0
    %3655 = vmatprep.subr.mxu0 0.0
    %3656 = vmatpush2.msra.mxu0 0.0
    %3657 = vmatprep.subr.mxu0 0.0
    %3658 = vmatpush2.msra.mxu0 0.0
    %3659 = vmatprep.subr.mxu0 0.0
    %3660 = vmatpush2.msra.mxu0 0.0
    %3661 = vmatprep.subr.mxu0 0.0
    %3662 = vmatpush2.msra.mxu0 0.0
    %3663 = vmatprep.subr.mxu0 0.0
    %3664 = vmatpush2.msra.mxu0 0.0
    %3665 = vmatprep.subr.mxu0 0.0
    %3666 = vmatpush2.msra.mxu0 0.0
    %3667 = vmatprep.subr.mxu0 0.0
    %3668 = vmatpush2.msra.mxu0 0.0
    %3669 = vmatprep.subr.mxu0 0.0
    %3670 = vmatpush2.msra.mxu0 0.0
    %3671 = vmatprep.subr.mxu0 0.0
    %3672 = vmatpush2.msra.mxu0 0.0
    %3673 = vmatprep.subr.mxu0 0.0
    %3674 = vmatpush2.msra.mxu0 0.0
    %3675 = vmatprep.subr.mxu0 0.0
    %3676 = vmatpush2.msra.mxu0 0.0
    %3677 = vmatprep.subr.mxu0 0.0
    %3678 = vmatpush2.msra.mxu0 0.0
    %3679 = vmatprep.subr.mxu0 0.0
    %3680 = vmatpush2.msra.mxu0 0.0
    %3681 = vmatprep.subr.mxu0 0.0
    %3682 = vmatpush2.msra.mxu0 0.0
    %3683 = vmatprep.subr.mxu0 0.0
    %3684 = vmatpush2.msra.mxu0 0.0
    %3685 = vmatprep.mubr.f32.mxu0 0.0
    %3686 = vmatmul.mubr.f32.gmra.mxu0 %v3254
    %v3687 = vpop.f32.mrf.mxu0
    %v3688 = vadd.f32 0.0, %v3687
    %v3689 = vpop.f32.mrf.mxu0
    %3690 = vdwg.mxu0
    %3692 = vrot.lane.b32.xlu0 %v3612, 32
    %v3693 = vpop.permute.xlu0 %3692
    %v3694 = vsel %vm290, %v3693, 0
    %3696 = vmatprep.subr.mxu0 0.0
    %3697 = vmatpush1.msra.mxu0 0.0
    %3698 = vmatprep.subr.mxu0 0.0
    %3699 = vmatpush1.msra.mxu0 0.0
    %3700 = vmatprep.subr.mxu0 0.0
    %3701 = vmatpush1.msra.mxu0 0.0
    %3702 = vmatprep.subr.mxu0 0.0
    %3703 = vmatpush1.msra.mxu0 0.0
    %3704 = vmatprep.subr.mxu0 0.0
    %3705 = vmatpush1.msra.mxu0 0.0
    %3706 = vmatprep.subr.mxu0 0.0
    %3707 = vmatpush1.msra.mxu0 0.0
    %3708 = vmatprep.subr.mxu0 0.0
    %3709 = vmatpush1.msra.mxu0 0.0
    %3710 = vmatprep.subr.mxu0 0.0
    %3711 = vmatpush1.msra.mxu0 0.0
    %3712 = vmatprep.subr.mxu0 0.0
    %3713 = vmatpush1.msra.mxu0 0.0
    %3714 = vmatprep.subr.mxu0 0.0
    %3715 = vmatpush1.msra.mxu0 0.0
    %3716 = vmatprep.subr.mxu0 0.0
    %3717 = vmatpush1.msra.mxu0 0.0
    %3718 = vmatprep.subr.mxu0 0.0
    %3719 = vmatpush1.msra.mxu0 0.0
    %3720 = vmatprep.subr.mxu0 0.0
    %3721 = vmatpush1.msra.mxu0 %v3616
    %3722 = vmatprep.subr.mxu0 0.0
    %3723 = vmatpush1.msra.mxu0 %v3615
    %3724 = vmatprep.subr.mxu0 0.0
    %3725 = vmatpush1.msra.mxu0 %v3614
    %3726 = vmatprep.subr.mxu0 0.0
    %3727 = vmatpush1.msra.mxu0 %v3613
    %3728 = vmatprep.subr.mxu0 0.0
    %3729 = vmatpush2.msra.mxu0 0.0
    %3730 = vmatprep.subr.mxu0 0.0
    %3731 = vmatpush2.msra.mxu0 0.0
    %3732 = vmatprep.subr.mxu0 0.0
    %3733 = vmatpush2.msra.mxu0 0.0
    %3734 = vmatprep.subr.mxu0 0.0
    %3735 = vmatpush2.msra.mxu0 0.0
    %3736 = vmatprep.subr.mxu0 0.0
    %3737 = vmatpush2.msra.mxu0 0.0
    %3738 = vmatprep.subr.mxu0 0.0
    %3739 = vmatpush2.msra.mxu0 0.0
    %3740 = vmatprep.subr.mxu0 0.0
    %3741 = vmatpush2.msra.mxu0 0.0
    %3742 = vmatprep.subr.mxu0 0.0
    %3743 = vmatpush2.msra.mxu0 0.0
    %3744 = vmatprep.subr.mxu0 0.0
    %3745 = vmatpush2.msra.mxu0 0.0
    %3746 = vmatprep.subr.mxu0 0.0
    %3747 = vmatpush2.msra.mxu0 0.0
    %3748 = vmatprep.subr.mxu0 0.0
    %3749 = vmatpush2.msra.mxu0 0.0
    %3750 = vmatprep.subr.mxu0 0.0
    %3751 = vmatpush2.msra.mxu0 0.0
    %3752 = vmatprep.subr.mxu0 0.0
    %3753 = vmatpush2.msra.mxu0 0.0
    %3754 = vmatprep.subr.mxu0 0.0
    %3755 = vmatpush2.msra.mxu0 0.0
    %3756 = vmatprep.subr.mxu0 0.0
    %3757 = vmatpush2.msra.mxu0 0.0
    %3758 = vmatprep.subr.mxu0 0.0
    %3759 = vmatpush2.msra.mxu0 0.0
    %3760 = vmatprep.mubr.f32.mxu0 0.0
    %3761 = vmatmul.mubr.f32.gmra.mxu0 %v3694
    %v3762 = vpop.f32.mrf.mxu0
    %v3763 = vadd.f32 %v3688, %v3762
    %v3764 = vpop.f32.mrf.mxu0
    %3765 = vdwg.mxu0
    %v3766 = vld [vmem:[%s16] sm:$0x1]
    %v3768 = vlaneseq
    %v3769 = vshrl.u32 %v3768, 7
    %v3770 = vsub.s32 0, %v3769
    %v3771 = vrot.slane %v3766, %v3770
    %v3773 = vadd.f32 %v3763, %v3771
    %v3774 = vxor.u32 %v3773, 2147483648
    %v3775 = vmul.f32 %v3774, 1.442695
    %v3776 = vpow.pop %v3775
    %v3777 = vadd.f32 %v3776, 1.0
    %v3778 = vrcp.pop %v3777
    %v3779 = vmul.f32 1.0, %v3778
    %v3780 = vtanh.pop %v3773
    %v3781 = vmul.f32 %v3779, %v3233
    %3783 = vrot.lane.b32.xlu0 %v3780, 64
    %v3784 = vpop.permute.xlu0 %3783
    %v3786 = vmul.f32 %v3779, %v3784
    %3788 = vrot.lane.b32.xlu0 %v3786, 32
    %v3789 = vpop.permute.xlu0 %3788
    %v3791 = vadd.f32 %v3781, %v3789
    %v3792 = vtanh.pop %v3791
    %3794 = vrot.lane.b32.xlu0 %v3792, 64
    %v3795 = vpop.permute.xlu0 %3794
    %v3797 = vmul.f32 %v3779, %v3795
    %v3798 = vld [vmem:[%s17] sm:$0xff]
    %v3799 = vld [vmem:[%s17 + $0x8] sm:$0xff]
    %v3800 = vld [vmem:[%s17 + $0x10] sm:$0xff]
    %v3801 = vld [vmem:[%s17 + $0x18] sm:$0xff]
    %v3802 = vld [vmem:[%s18] sm:$0x1]
    %v3804 = vlaneseq
    %v3805 = vshrl.u32 %v3804, 7
    %v3806 = vsub.s32 0, %v3805
    %v3807 = vrot.slane %v3802, %v3806
    %3810 = vrot.lane.b32.xlu0 %v3797, 32
    %v3811 = vpop.permute.xlu0 %3810
    %v3812 = vsel %vm290, %v3811, 0
    %3814 = vmatprep.subr.mxu0 0.0
    %3815 = vmatpush1.msra.mxu0 0.0
    %3816 = vmatprep.subr.mxu0 0.0
    %3817 = vmatpush1.msra.mxu0 0.0
    %3818 = vmatprep.subr.mxu0 0.0
    %3819 = vmatpush1.msra.mxu0 0.0
    %3820 = vmatprep.subr.mxu0 0.0
    %3821 = vmatpush1.msra.mxu0 0.0
    %3822 = vmatprep.subr.mxu0 0.0
    %3823 = vmatpush1.msra.mxu0 0.0
    %3824 = vmatprep.subr.mxu0 0.0
    %3825 = vmatpush1.msra.mxu0 0.0
    %3826 = vmatprep.subr.mxu0 0.0
    %3827 = vmatpush1.msra.mxu0 0.0
    %3828 = vmatprep.subr.mxu0 0.0
    %3829 = vmatpush1.msra.mxu0 0.0
    %3830 = vmatprep.subr.mxu0 0.0
    %3831 = vmatpush1.msra.mxu0 0.0
    %3832 = vmatprep.subr.mxu0 0.0
    %3833 = vmatpush1.msra.mxu0 0.0
    %3834 = vmatprep.subr.mxu0 0.0
    %3835 = vmatpush1.msra.mxu0 0.0
    %3836 = vmatprep.subr.mxu0 0.0
    %3837 = vmatpush1.msra.mxu0 0.0
    %3838 = vmatprep.subr.mxu0 0.0
    %3839 = vmatpush1.msra.mxu0 %v3801
    %3840 = vmatprep.subr.mxu0 0.0
    %3841 = vmatpush1.msra.mxu0 %v3800
    %3842 = vmatprep.subr.mxu0 0.0
    %3843 = vmatpush1.msra.mxu0 %v3799
    %3844 = vmatprep.subr.mxu0 0.0
    %3845 = vmatpush1.msra.mxu0 %v3798
    %3846 = vmatprep.subr.mxu0 0.0
    %3847 = vmatpush2.msra.mxu0 0.0
    %3848 = vmatprep.subr.mxu0 0.0
    %3849 = vmatpush2.msra.mxu0 0.0
    %3850 = vmatprep.subr.mxu0 0.0
    %3851 = vmatpush2.msra.mxu0 0.0
    %3852 = vmatprep.subr.mxu0 0.0
    %3853 = vmatpush2.msra.mxu0 0.0
    %3854 = vmatprep.subr.mxu0 0.0
    %3855 = vmatpush2.msra.mxu0 0.0
    %3856 = vmatprep.subr.mxu0 0.0
    %3857 = vmatpush2.msra.mxu0 0.0
    %3858 = vmatprep.subr.mxu0 0.0
    %3859 = vmatpush2.msra.mxu0 0.0
    %3860 = vmatprep.subr.mxu0 0.0
    %3861 = vmatpush2.msra.mxu0 0.0
    %3862 = vmatprep.subr.mxu0 0.0
    %3863 = vmatpush2.msra.mxu0 0.0
    %3864 = vmatprep.subr.mxu0 0.0
    %3865 = vmatpush2.msra.mxu0 0.0
    %3866 = vmatprep.subr.mxu0 0.0
    %3867 = vmatpush2.msra.mxu0 0.0
    %3868 = vmatprep.subr.mxu0 0.0
    %3869 = vmatpush2.msra.mxu0 0.0
    %3870 = vmatprep.subr.mxu0 0.0
    %3871 = vmatpush2.msra.mxu0 0.0
    %3872 = vmatprep.subr.mxu0 0.0
    %3873 = vmatpush2.msra.mxu0 0.0
    %3874 = vmatprep.subr.mxu0 0.0
    %3875 = vmatpush2.msra.mxu0 0.0
    %3876 = vmatprep.subr.mxu0 0.0
    %3877 = vmatpush2.msra.mxu0 0.0
    %3878 = vmatprep.mubr.f32.mxu0 0.0
    %3879 = vmatmul.mubr.f32.gmra.mxu0 %v3812
    %v3880 = vpop.f32.mrf.mxu0
    %v3881 = vadd.f32 %v3807, %v3880
    %v3882 = vpop.f32.mrf.mxu0
    %3883 = vdwg.mxu0
    %s3884 = scalar_lea.vmem %s19, 8
    %3885 = vst [vmem:[%s3884] sm:$0xff] %v3881
    %3886 = vst.msk [vmem:[#allocation2] sm:$0xff] %vm290, %v2765
    %s3887 = sld [smem:[#allocation3 + $0x1]]
    %p3888 = scmp.eq.s32.totalorder %s3887, 0
    // Predicated region
    $region86: #{seq2seq_forward.1} parent=1 // pred_check
      %p3889 = pneg %p3888
    $region87: #{seq2seq_forward.1} parent=1 // pred_check_branch
      %3891 = sbr.rel (%p3889) target = $region89
    $region88: #{seq2seq_forward.1} parent=1 // pred_region
      %3892 = vmax.xlane.f32.xlu0 %v3881
      %v3893 = vpop.xlane.xlu0 %3892
      %vm3894 = vcmp.ge.f32.partialorder %v3881, %v3893
      %v3895 = vsel %vm3894, %v93, 128.0
      %3896 = vmin.xlane.f32.xlu0 %v3895
      %v3897 = vpop.xlane.xlu0 %3896
      %vm3898 = vcmp.eq.f32.partialorder %v93, %v3897
      %v3899 = vsel %vm3898, 1, 0
      %v3900 = vcvt.s32.f32 %v3899
      %v3901 = vld [vmem:[%s4] sm:$0xff]
      %v3902 = vld [vmem:[%s4 + $0x8] sm:$0xff]
      %v3903 = vld [vmem:[%s4 + $0x10] sm:$0xff]
      %v3904 = vld [vmem:[%s4 + $0x18] sm:$0xff]
      %v3905 = vld [vmem:[%s4 + $0x20] sm:$0xff]
      %v3906 = vld [vmem:[%s4 + $0x28] sm:$0xff]
      %v3907 = vld [vmem:[%s4 + $0x30] sm:$0xff]
      %v3908 = vld [vmem:[%s4 + $0x38] sm:$0xff]
      %v3909 = vld [vmem:[%s4 + $0x40] sm:$0xff]
      %v3910 = vld [vmem:[%s4 + $0x48] sm:$0xff]
      %v3911 = vld [vmem:[%s4 + $0x50] sm:$0xff]
      %v3912 = vld [vmem:[%s4 + $0x58] sm:$0xff]
      %v3913 = vld [vmem:[%s4 + $0x60] sm:$0xff]
      %v3914 = vld [vmem:[%s4 + $0x68] sm:$0xff]
      %v3915 = vld [vmem:[%s4 + $0x70] sm:$0xff]
      %v3916 = vld [vmem:[%s4 + $0x78] sm:$0xff]
      %3917 = vmatprep.subr.mxu0 0.0
      %3918 = vmatpush1.msra.mxu0 %v3916
      %3919 = vmatprep.subr.mxu0 0.0
      %3920 = vmatpush1.msra.mxu0 %v3915
      %3921 = vmatprep.subr.mxu0 0.0
      %3922 = vmatpush1.msra.mxu0 %v3914
      %3923 = vmatprep.subr.mxu0 0.0
      %3924 = vmatpush1.msra.mxu0 %v3913
      %3925 = vmatprep.subr.mxu0 0.0
      %3926 = vmatpush1.msra.mxu0 %v3912
      %3927 = vmatprep.subr.mxu0 0.0
      %3928 = vmatpush1.msra.mxu0 %v3911
      %3929 = vmatprep.subr.mxu0 0.0
      %3930 = vmatpush1.msra.mxu0 %v3910
      %3931 = vmatprep.subr.mxu0 0.0
      %3932 = vmatpush1.msra.mxu0 %v3909
      %3933 = vmatprep.subr.mxu0 0.0
      %3934 = vmatpush1.msra.mxu0 %v3908
      %3935 = vmatprep.subr.mxu0 0.0
      %3936 = vmatpush1.msra.mxu0 %v3907
      %3937 = vmatprep.subr.mxu0 0.0
      %3938 = vmatpush1.msra.mxu0 %v3906
      %3939 = vmatprep.subr.mxu0 0.0
      %3940 = vmatpush1.msra.mxu0 %v3905
      %3941 = vmatprep.subr.mxu0 0.0
      %3942 = vmatpush1.msra.mxu0 %v3904
      %3943 = vmatprep.subr.mxu0 0.0
      %3944 = vmatpush1.msra.mxu0 %v3903
      %3945 = vmatprep.subr.mxu0 0.0
      %3946 = vmatpush1.msra.mxu0 %v3902
      %3947 = vmatprep.subr.mxu0 0.0
      %3948 = vmatpush1.msra.mxu0 %v3901
      %3949 = vmatprep.subr.mxu0 0.0
      %3950 = vmatpush2.msra.mxu0 0.0
      %3951 = vmatprep.subr.mxu0 0.0
      %3952 = vmatpush2.msra.mxu0 0.0
      %3953 = vmatprep.subr.mxu0 0.0
      %3954 = vmatpush2.msra.mxu0 0.0
      %3955 = vmatprep.subr.mxu0 0.0
      %3956 = vmatpush2.msra.mxu0 0.0
      %3957 = vmatprep.subr.mxu0 0.0
      %3958 = vmatpush2.msra.mxu0 0.0
      %3959 = vmatprep.subr.mxu0 0.0
      %3960 = vmatpush2.msra.mxu0 0.0
      %3961 = vmatprep.subr.mxu0 0.0
      %3962 = vmatpush2.msra.mxu0 0.0
      %3963 = vmatprep.subr.mxu0 0.0
      %3964 = vmatpush2.msra.mxu0 0.0
      %3965 = vmatprep.subr.mxu0 0.0
      %3966 = vmatpush2.msra.mxu0 0.0
      %3967 = vmatprep.subr.mxu0 0.0
      %3968 = vmatpush2.msra.mxu0 0.0
      %3969 = vmatprep.subr.mxu0 0.0
      %3970 = vmatpush2.msra.mxu0 0.0
      %3971 = vmatprep.subr.mxu0 0.0
      %3972 = vmatpush2.msra.mxu0 0.0
      %3973 = vmatprep.subr.mxu0 0.0
      %3974 = vmatpush2.msra.mxu0 0.0
      %3975 = vmatprep.subr.mxu0 0.0
      %3976 = vmatpush2.msra.mxu0 0.0
      %3977 = vmatprep.subr.mxu0 0.0
      %3978 = vmatpush2.msra.mxu0 0.0
      %3979 = vmatprep.subr.mxu0 0.0
      %3980 = vmatpush2.msra.mxu0 0.0
      %3981 = vmatprep.mubr.f32.mxu0 0.0
      %3982 = vmatmul.mubr.f32.gmra.mxu0 %v3900
      %v3983 = vpop.f32.mrf.mxu0
      %v3984 = vadd.f32 0.0, %v3983
      %v3985 = vpop.f32.mrf.mxu0
      %3986 = vdwg.mxu0
      %3987 = vst.msk [vmem:[#allocation2] sm:$0xff] %vm290, %v3984
    $region89: #{seq2seq_forward.1} parent=1 // pred_fallthru
      _
    %v3988 = vld [vmem:[#allocation2] sm:$0xff]
    %v3989 = vld [vmem:[%s11] sm:$0xff]
    %v3990 = vld [vmem:[%s11 + $0x8] sm:$0xff]
    %v3991 = vld [vmem:[%s11 + $0x10] sm:$0xff]
    %v3992 = vld [vmem:[%s11 + $0x18] sm:$0xff]
    %v3993 = vld [vmem:[%s13] sm:$0xff]
    %v3994 = vld [vmem:[%s13 + $0x8] sm:$0xff]
    %v3995 = vld [vmem:[%s13 + $0x10] sm:$0xff]
    %v3996 = vld [vmem:[%s13 + $0x18] sm:$0xff]
    %3997 = vmatprep.subr.mxu0 0.0
    %3998 = vmatpush1.msra.mxu0 0.0
    %3999 = vmatprep.subr.mxu0 0.0
    %4000 = vmatpush1.msra.mxu0 0.0
    %4001 = vmatprep.subr.mxu0 0.0
    %4002 = vmatpush1.msra.mxu0 0.0
    %4003 = vmatprep.subr.mxu0 0.0
    %4004 = vmatpush1.msra.mxu0 0.0
    %4005 = vmatprep.subr.mxu0 0.0
    %4006 = vmatpush1.msra.mxu0 0.0
    %4007 = vmatprep.subr.mxu0 0.0
    %4008 = vmatpush1.msra.mxu0 0.0
    %4009 = vmatprep.subr.mxu0 0.0
    %4010 = vmatpush1.msra.mxu0 0.0
    %4011 = vmatprep.subr.mxu0 0.0
    %4012 = vmatpush1.msra.mxu0 0.0
    %4013 = vmatprep.subr.mxu0 0.0
    %4014 = vmatpush1.msra.mxu0 0.0
    %4015 = vmatprep.subr.mxu0 0.0
    %4016 = vmatpush1.msra.mxu0 0.0
    %4017 = vmatprep.subr.mxu0 0.0
    %4018 = vmatpush1.msra.mxu0 0.0
    %4019 = vmatprep.subr.mxu0 0.0
    %4020 = vmatpush1.msra.mxu0 0.0
    %4021 = vmatprep.subr.mxu0 0.0
    %4022 = vmatpush1.msra.mxu0 %v3996
    %4023 = vmatprep.subr.mxu0 0.0
    %4024 = vmatpush1.msra.mxu0 %v3995
    %4025 = vmatprep.subr.mxu0 0.0
    %4026 = vmatpush1.msra.mxu0 %v3994
    %4027 = vmatprep.subr.mxu0 0.0
    %4028 = vmatpush1.msra.mxu0 %v3993
    %4029 = vmatprep.subr.mxu0 0.0
    %4030 = vmatpush2.msra.mxu0 0.0
    %4031 = vmatprep.subr.mxu0 0.0
    %4032 = vmatpush2.msra.mxu0 0.0
    %4033 = vmatprep.subr.mxu0 0.0
    %4034 = vmatpush2.msra.mxu0 0.0
    %4035 = vmatprep.subr.mxu0 0.0
    %4036 = vmatpush2.msra.mxu0 0.0
    %4037 = vmatprep.subr.mxu0 0.0
    %4038 = vmatpush2.msra.mxu0 0.0
    %4039 = vmatprep.subr.mxu0 0.0
    %4040 = vmatpush2.msra.mxu0 0.0
    %4041 = vmatprep.subr.mxu0 0.0
    %4042 = vmatpush2.msra.mxu0 0.0
    %4043 = vmatprep.subr.mxu0 0.0
    %4044 = vmatpush2.msra.mxu0 0.0
    %4045 = vmatprep.subr.mxu0 0.0
    %4046 = vmatpush2.msra.mxu0 0.0
    %4047 = vmatprep.subr.mxu0 0.0
    %4048 = vmatpush2.msra.mxu0 0.0
    %4049 = vmatprep.subr.mxu0 0.0
    %4050 = vmatpush2.msra.mxu0 0.0
    %4051 = vmatprep.subr.mxu0 0.0
    %4052 = vmatpush2.msra.mxu0 0.0
    %4053 = vmatprep.subr.mxu0 0.0
    %4054 = vmatpush2.msra.mxu0 0.0
    %4055 = vmatprep.subr.mxu0 0.0
    %4056 = vmatpush2.msra.mxu0 0.0
    %4057 = vmatprep.subr.mxu0 0.0
    %4058 = vmatpush2.msra.mxu0 0.0
    %4059 = vmatprep.subr.mxu0 0.0
    %4060 = vmatpush2.msra.mxu0 0.0
    %4061 = vmatprep.mubr.f32.mxu0 0.0
    %4062 = vmatmul.mubr.f32.gmra.mxu0 %v3694
    %v4063 = vpop.f32.mrf.mxu0
    %v4064 = vadd.f32 0.0, %v4063
    %v4065 = vpop.f32.mrf.mxu0
    %4066 = vdwg.mxu0
    %v4068 = vsel %vm290, %v3988, 0
    %4070 = vmatprep.subr.mxu0 0.0
    %4071 = vmatpush1.msra.mxu0 0.0
    %4072 = vmatprep.subr.mxu0 0.0
    %4073 = vmatpush1.msra.mxu0 0.0
    %4074 = vmatprep.subr.mxu0 0.0
    %4075 = vmatpush1.msra.mxu0 0.0
    %4076 = vmatprep.subr.mxu0 0.0
    %4077 = vmatpush1.msra.mxu0 0.0
    %4078 = vmatprep.subr.mxu0 0.0
    %4079 = vmatpush1.msra.mxu0 0.0
    %4080 = vmatprep.subr.mxu0 0.0
    %4081 = vmatpush1.msra.mxu0 0.0
    %4082 = vmatprep.subr.mxu0 0.0
    %4083 = vmatpush1.msra.mxu0 0.0
    %4084 = vmatprep.subr.mxu0 0.0
    %4085 = vmatpush1.msra.mxu0 0.0
    %4086 = vmatprep.subr.mxu0 0.0
    %4087 = vmatpush1.msra.mxu0 0.0
    %4088 = vmatprep.subr.mxu0 0.0
    %4089 = vmatpush1.msra.mxu0 0.0
    %4090 = vmatprep.subr.mxu0 0.0
    %4091 = vmatpush1.msra.mxu0 0.0
    %4092 = vmatprep.subr.mxu0 0.0
    %4093 = vmatpush1.msra.mxu0 0.0
    %4094 = vmatprep.subr.mxu0 0.0
    %4095 = vmatpush1.msra.mxu0 %v3992
    %4096 = vmatprep.subr.mxu0 0.0
    %4097 = vmatpush1.msra.mxu0 %v3991
    %4098 = vmatprep.subr.mxu0 0.0
    %4099 = vmatpush1.msra.mxu0 %v3990
    %4100 = vmatprep.subr.mxu0 0.0
    %4101 = vmatpush1.msra.mxu0 %v3989
    %4102 = vmatprep.subr.mxu0 0.0
    %4103 = vmatpush2.msra.mxu0 0.0
    %4104 = vmatprep.subr.mxu0 0.0
    %4105 = vmatpush2.msra.mxu0 0.0
    %4106 = vmatprep.subr.mxu0 0.0
    %4107 = vmatpush2.msra.mxu0 0.0
    %4108 = vmatprep.subr.mxu0 0.0
    %4109 = vmatpush2.msra.mxu0 0.0
    %4110 = vmatprep.subr.mxu0 0.0
    %4111 = vmatpush2.msra.mxu0 0.0
    %4112 = vmatprep.subr.mxu0 0.0
    %4113 = vmatpush2.msra.mxu0 0.0
    %4114 = vmatprep.subr.mxu0 0.0
    %4115 = vmatpush2.msra.mxu0 0.0
    %4116 = vmatprep.subr.mxu0 0.0
    %4117 = vmatpush2.msra.mxu0 0.0
    %4118 = vmatprep.subr.mxu0 0.0
    %4119 = vmatpush2.msra.mxu0 0.0
    %4120 = vmatprep.subr.mxu0 0.0
    %4121 = vmatpush2.msra.mxu0 0.0
    %4122 = vmatprep.subr.mxu0 0.0
    %4123 = vmatpush2.msra.mxu0 0.0
    %4124 = vmatprep.subr.mxu0 0.0
    %4125 = vmatpush2.msra.mxu0 0.0
    %4126 = vmatprep.subr.mxu0 0.0
    %4127 = vmatpush2.msra.mxu0 0.0
    %4128 = vmatprep.subr.mxu0 0.0
    %4129 = vmatpush2.msra.mxu0 0.0
    %4130 = vmatprep.subr.mxu0 0.0
    %4131 = vmatpush2.msra.mxu0 0.0
    %4132 = vmatprep.subr.mxu0 0.0
    %4133 = vmatpush2.msra.mxu0 0.0
    %4134 = vmatprep.mubr.f32.mxu0 0.0
    %4135 = vmatmul.mubr.f32.gmra.mxu0 %v4068
    %v4136 = vpop.f32.mrf.mxu0
    %v4137 = vadd.f32 %v4064, %v4136
    %v4138 = vpop.f32.mrf.mxu0
    %4139 = vdwg.mxu0
    %v4140 = vld [vmem:[%s15] sm:$0x1]
    %v4142 = vlaneseq
    %v4143 = vshrl.u32 %v4142, 7
    %v4144 = vsub.s32 0, %v4143
    %v4145 = vrot.slane %v4140, %v4144
    %v4147 = vadd.f32 %v4137, %v4145
    %v4148 = vxor.u32 %v4147, 2147483648
    %v4149 = vmul.f32 %v4148, 1.442695
    %v4150 = vpow.pop %v4149
    %v4151 = vadd.f32 %v4150, 1.0
    %v4152 = vrcp.pop %v4151
    %v4153 = vmul.f32 1.0, %v4152
    %v4154 = vtanh.pop %v4147
    %v4155 = vmul.f32 %v4153, %v3606
    %4157 = vrot.lane.b32.xlu0 %v4154, 64
    %v4158 = vpop.permute.xlu0 %4157
    %v4160 = vmul.f32 %v4153, %v4158
    %4162 = vrot.lane.b32.xlu0 %v4160, 32
    %v4163 = vpop.permute.xlu0 %4162
    %v4165 = vadd.f32 %v4155, %v4163
    %v4166 = vtanh.pop %v4165
    %4168 = vrot.lane.b32.xlu0 %v4166, 64
    %v4169 = vpop.permute.xlu0 %4168
    %v4171 = vmul.f32 %v4153, %v4169
    %v4172 = vld [vmem:[%s12] sm:$0xff]
    %v4173 = vld [vmem:[%s12 + $0x8] sm:$0xff]
    %v4174 = vld [vmem:[%s12 + $0x10] sm:$0xff]
    %v4175 = vld [vmem:[%s12 + $0x18] sm:$0xff]
    %v4176 = vld [vmem:[%s14] sm:$0xff]
    %v4177 = vld [vmem:[%s14 + $0x8] sm:$0xff]
    %v4178 = vld [vmem:[%s14 + $0x10] sm:$0xff]
    %v4179 = vld [vmem:[%s14 + $0x18] sm:$0xff]
    %4180 = vmatprep.subr.mxu0 0.0
    %4181 = vmatpush1.msra.mxu0 0.0
    %4182 = vmatprep.subr.mxu0 0.0
    %4183 = vmatpush1.msra.mxu0 0.0
    %4184 = vmatprep.subr.mxu0 0.0
    %4185 = vmatpush1.msra.mxu0 0.0
    %4186 = vmatprep.subr.mxu0 0.0
    %4187 = vmatpush1.msra.mxu0 0.0
    %4188 = vmatprep.subr.mxu0 0.0
    %4189 = vmatpush1.msra.mxu0 0.0
    %4190 = vmatprep.subr.mxu0 0.0
    %4191 = vmatpush1.msra.mxu0 0.0
    %4192 = vmatprep.subr.mxu0 0.0
    %4193 = vmatpush1.msra.mxu0 0.0
    %4194 = vmatprep.subr.mxu0 0.0
    %4195 = vmatpush1.msra.mxu0 0.0
    %4196 = vmatprep.subr.mxu0 0.0
    %4197 = vmatpush1.msra.mxu0 0.0
    %4198 = vmatprep.subr.mxu0 0.0
    %4199 = vmatpush1.msra.mxu0 0.0
    %4200 = vmatprep.subr.mxu0 0.0
    %4201 = vmatpush1.msra.mxu0 0.0
    %4202 = vmatprep.subr.mxu0 0.0
    %4203 = vmatpush1.msra.mxu0 0.0
    %4204 = vmatprep.subr.mxu0 0.0
    %4205 = vmatpush1.msra.mxu0 %v4179
    %4206 = vmatprep.subr.mxu0 0.0
    %4207 = vmatpush1.msra.mxu0 %v4178
    %4208 = vmatprep.subr.mxu0 0.0
    %4209 = vmatpush1.msra.mxu0 %v4177
    %4210 = vmatprep.subr.mxu0 0.0
    %4211 = vmatpush1.msra.mxu0 %v4176
    %4212 = vmatprep.subr.mxu0 0.0
    %4213 = vmatpush2.msra.mxu0 0.0
    %4214 = vmatprep.subr.mxu0 0.0
    %4215 = vmatpush2.msra.mxu0 0.0
    %4216 = vmatprep.subr.mxu0 0.0
    %4217 = vmatpush2.msra.mxu0 0.0
    %4218 = vmatprep.subr.mxu0 0.0
    %4219 = vmatpush2.msra.mxu0 0.0
    %4220 = vmatprep.subr.mxu0 0.0
    %4221 = vmatpush2.msra.mxu0 0.0
    %4222 = vmatprep.subr.mxu0 0.0
    %4223 = vmatpush2.msra.mxu0 0.0
    %4224 = vmatprep.subr.mxu0 0.0
    %4225 = vmatpush2.msra.mxu0 0.0
    %4226 = vmatprep.subr.mxu0 0.0
    %4227 = vmatpush2.msra.mxu0 0.0
    %4228 = vmatprep.subr.mxu0 0.0
    %4229 = vmatpush2.msra.mxu0 0.0
    %4230 = vmatprep.subr.mxu0 0.0
    %4231 = vmatpush2.msra.mxu0 0.0
    %4232 = vmatprep.subr.mxu0 0.0
    %4233 = vmatpush2.msra.mxu0 0.0
    %4234 = vmatprep.subr.mxu0 0.0
    %4235 = vmatpush2.msra.mxu0 0.0
    %4236 = vmatprep.subr.mxu0 0.0
    %4237 = vmatpush2.msra.mxu0 0.0
    %4238 = vmatprep.subr.mxu0 0.0
    %4239 = vmatpush2.msra.mxu0 0.0
    %4240 = vmatprep.subr.mxu0 0.0
    %4241 = vmatpush2.msra.mxu0 0.0
    %4242 = vmatprep.subr.mxu0 0.0
    %4243 = vmatpush2.msra.mxu0 0.0
    %4244 = vmatprep.mubr.f32.mxu0 0.0
    %4245 = vmatmul.mubr.f32.gmra.mxu0 %v3812
    %v4246 = vpop.f32.mrf.mxu0
    %v4247 = vadd.f32 0.0, %v4246
    %v4248 = vpop.f32.mrf.mxu0
    %4249 = vdwg.mxu0
    %4251 = vrot.lane.b32.xlu0 %v4171, 32
    %v4252 = vpop.permute.xlu0 %4251
    %v4253 = vsel %vm290, %v4252, 0
    %4255 = vmatprep.subr.mxu0 0.0
    %4256 = vmatpush1.msra.mxu0 0.0
    %4257 = vmatprep.subr.mxu0 0.0
    %4258 = vmatpush1.msra.mxu0 0.0
    %4259 = vmatprep.subr.mxu0 0.0
    %4260 = vmatpush1.msra.mxu0 0.0
    %4261 = vmatprep.subr.mxu0 0.0
    %4262 = vmatpush1.msra.mxu0 0.0
    %4263 = vmatprep.subr.mxu0 0.0
    %4264 = vmatpush1.msra.mxu0 0.0
    %4265 = vmatprep.subr.mxu0 0.0
    %4266 = vmatpush1.msra.mxu0 0.0
    %4267 = vmatprep.subr.mxu0 0.0
    %4268 = vmatpush1.msra.mxu0 0.0
    %4269 = vmatprep.subr.mxu0 0.0
    %4270 = vmatpush1.msra.mxu0 0.0
    %4271 = vmatprep.subr.mxu0 0.0
    %4272 = vmatpush1.msra.mxu0 0.0
    %4273 = vmatprep.subr.mxu0 0.0
    %4274 = vmatpush1.msra.mxu0 0.0
    %4275 = vmatprep.subr.mxu0 0.0
    %4276 = vmatpush1.msra.mxu0 0.0
    %4277 = vmatprep.subr.mxu0 0.0
    %4278 = vmatpush1.msra.mxu0 0.0
    %4279 = vmatprep.subr.mxu0 0.0
    %4280 = vmatpush1.msra.mxu0 %v4175
    %4281 = vmatprep.subr.mxu0 0.0
    %4282 = vmatpush1.msra.mxu0 %v4174
    %4283 = vmatprep.subr.mxu0 0.0
    %4284 = vmatpush1.msra.mxu0 %v4173
    %4285 = vmatprep.subr.mxu0 0.0
    %4286 = vmatpush1.msra.mxu0 %v4172
    %4287 = vmatprep.subr.mxu0 0.0
    %4288 = vmatpush2.msra.mxu0 0.0
    %4289 = vmatprep.subr.mxu0 0.0
    %4290 = vmatpush2.msra.mxu0 0.0
    %4291 = vmatprep.subr.mxu0 0.0
    %4292 = vmatpush2.msra.mxu0 0.0
    %4293 = vmatprep.subr.mxu0 0.0
    %4294 = vmatpush2.msra.mxu0 0.0
    %4295 = vmatprep.subr.mxu0 0.0
    %4296 = vmatpush2.msra.mxu0 0.0
    %4297 = vmatprep.subr.mxu0 0.0
    %4298 = vmatpush2.msra.mxu0 0.0
    %4299 = vmatprep.subr.mxu0 0.0
    %4300 = vmatpush2.msra.mxu0 0.0
    %4301 = vmatprep.subr.mxu0 0.0
    %4302 = vmatpush2.msra.mxu0 0.0
    %4303 = vmatprep.subr.mxu0 0.0
    %4304 = vmatpush2.msra.mxu0 0.0
    %4305 = vmatprep.subr.mxu0 0.0
    %4306 = vmatpush2.msra.mxu0 0.0
    %4307 = vmatprep.subr.mxu0 0.0
    %4308 = vmatpush2.msra.mxu0 0.0
    %4309 = vmatprep.subr.mxu0 0.0
    %4310 = vmatpush2.msra.mxu0 0.0
    %4311 = vmatprep.subr.mxu0 0.0
    %4312 = vmatpush2.msra.mxu0 0.0
    %4313 = vmatprep.subr.mxu0 0.0
    %4314 = vmatpush2.msra.mxu0 0.0
    %4315 = vmatprep.subr.mxu0 0.0
    %4316 = vmatpush2.msra.mxu0 0.0
    %4317 = vmatprep.subr.mxu0 0.0
    %4318 = vmatpush2.msra.mxu0 0.0
    %4319 = vmatprep.mubr.f32.mxu0 0.0
    %4320 = vmatmul.mubr.f32.gmra.mxu0 %v4253
    %v4321 = vpop.f32.mrf.mxu0
    %v4322 = vadd.f32 %v4247, %v4321
    %v4323 = vpop.f32.mrf.mxu0
    %4324 = vdwg.mxu0
    %v4325 = vld [vmem:[%s16] sm:$0x1]
    %v4327 = vlaneseq
    %v4328 = vshrl.u32 %v4327, 7
    %v4329 = vsub.s32 0, %v4328
    %v4330 = vrot.slane %v4325, %v4329
    %v4332 = vadd.f32 %v4322, %v4330
    %v4333 = vxor.u32 %v4332, 2147483648
    %v4334 = vmul.f32 %v4333, 1.442695
    %v4335 = vpow.pop %v4334
    %v4336 = vadd.f32 %v4335, 1.0
    %v4337 = vrcp.pop %v4336
    %v4338 = vmul.f32 1.0, %v4337
    %v4339 = vtanh.pop %v4332
    %v4340 = vmul.f32 %v4338, %v3791
    %4342 = vrot.lane.b32.xlu0 %v4339, 64
    %v4343 = vpop.permute.xlu0 %4342
    %v4345 = vmul.f32 %v4338, %v4343
    %4347 = vrot.lane.b32.xlu0 %v4345, 32
    %v4348 = vpop.permute.xlu0 %4347
    %v4350 = vadd.f32 %v4340, %v4348
    %v4351 = vtanh.pop %v4350
    %4353 = vrot.lane.b32.xlu0 %v4351, 64
    %v4354 = vpop.permute.xlu0 %4353
    %v4356 = vmul.f32 %v4338, %v4354
    %v4357 = vld [vmem:[%s17] sm:$0xff]
    %v4358 = vld [vmem:[%s17 + $0x8] sm:$0xff]
    %v4359 = vld [vmem:[%s17 + $0x10] sm:$0xff]
    %v4360 = vld [vmem:[%s17 + $0x18] sm:$0xff]
    %v4361 = vld [vmem:[%s18] sm:$0x1]
    %v4363 = vlaneseq
    %v4364 = vshrl.u32 %v4363, 7
    %v4365 = vsub.s32 0, %v4364
    %v4366 = vrot.slane %v4361, %v4365
    %4369 = vrot.lane.b32.xlu0 %v4356, 32
    %v4370 = vpop.permute.xlu0 %4369
    %v4371 = vsel %vm290, %v4370, 0
    %4373 = vmatprep.subr.mxu0 0.0
    %4374 = vmatpush1.msra.mxu0 0.0
    %4375 = vmatprep.subr.mxu0 0.0
    %4376 = vmatpush1.msra.mxu0 0.0
    %4377 = vmatprep.subr.mxu0 0.0
    %4378 = vmatpush1.msra.mxu0 0.0
    %4379 = vmatprep.subr.mxu0 0.0
    %4380 = vmatpush1.msra.mxu0 0.0
    %4381 = vmatprep.subr.mxu0 0.0
    %4382 = vmatpush1.msra.mxu0 0.0
    %4383 = vmatprep.subr.mxu0 0.0
    %4384 = vmatpush1.msra.mxu0 0.0
    %4385 = vmatprep.subr.mxu0 0.0
    %4386 = vmatpush1.msra.mxu0 0.0
    %4387 = vmatprep.subr.mxu0 0.0
    %4388 = vmatpush1.msra.mxu0 0.0
    %4389 = vmatprep.subr.mxu0 0.0
    %4390 = vmatpush1.msra.mxu0 0.0
    %4391 = vmatprep.subr.mxu0 0.0
    %4392 = vmatpush1.msra.mxu0 0.0
    %4393 = vmatprep.subr.mxu0 0.0
    %4394 = vmatpush1.msra.mxu0 0.0
    %4395 = vmatprep.subr.mxu0 0.0
    %4396 = vmatpush1.msra.mxu0 0.0
    %4397 = vmatprep.subr.mxu0 0.0
    %4398 = vmatpush1.msra.mxu0 %v4360
    %4399 = vmatprep.subr.mxu0 0.0
    %4400 = vmatpush1.msra.mxu0 %v4359
    %4401 = vmatprep.subr.mxu0 0.0
    %4402 = vmatpush1.msra.mxu0 %v4358
    %4403 = vmatprep.subr.mxu0 0.0
    %4404 = vmatpush1.msra.mxu0 %v4357
    %4405 = vmatprep.subr.mxu0 0.0
    %4406 = vmatpush2.msra.mxu0 0.0
    %4407 = vmatprep.subr.mxu0 0.0
    %4408 = vmatpush2.msra.mxu0 0.0
    %4409 = vmatprep.subr.mxu0 0.0
    %4410 = vmatpush2.msra.mxu0 0.0
    %4411 = vmatprep.subr.mxu0 0.0
    %4412 = vmatpush2.msra.mxu0 0.0
    %4413 = vmatprep.subr.mxu0 0.0
    %4414 = vmatpush2.msra.mxu0 0.0
    %4415 = vmatprep.subr.mxu0 0.0
    %4416 = vmatpush2.msra.mxu0 0.0
    %4417 = vmatprep.subr.mxu0 0.0
    %4418 = vmatpush2.msra.mxu0 0.0
    %4419 = vmatprep.subr.mxu0 0.0
    %4420 = vmatpush2.msra.mxu0 0.0
    %4421 = vmatprep.subr.mxu0 0.0
    %4422 = vmatpush2.msra.mxu0 0.0
    %4423 = vmatprep.subr.mxu0 0.0
    %4424 = vmatpush2.msra.mxu0 0.0
    %4425 = vmatprep.subr.mxu0 0.0
    %4426 = vmatpush2.msra.mxu0 0.0
    %4427 = vmatprep.subr.mxu0 0.0
    %4428 = vmatpush2.msra.mxu0 0.0
    %4429 = vmatprep.subr.mxu0 0.0
    %4430 = vmatpush2.msra.mxu0 0.0
    %4431 = vmatprep.subr.mxu0 0.0
    %4432 = vmatpush2.msra.mxu0 0.0
    %4433 = vmatprep.subr.mxu0 0.0
    %4434 = vmatpush2.msra.mxu0 0.0
    %4435 = vmatprep.subr.mxu0 0.0
    %4436 = vmatpush2.msra.mxu0 0.0
    %4437 = vmatprep.mubr.f32.mxu0 0.0
    %4438 = vmatmul.mubr.f32.gmra.mxu0 %v4371
    %v4439 = vpop.f32.mrf.mxu0
    %v4440 = vadd.f32 %v4366, %v4439
    %v4441 = vpop.f32.mrf.mxu0
    %4442 = vdwg.mxu0
    %s4443 = scalar_lea.vmem %s19, 16
    %4444 = vst [vmem:[%s4443] sm:$0xff] %v4440
    %4445 = vst.msk [vmem:[#allocation2] sm:$0xff] %vm290, %v2770
    %s4446 = sld [smem:[#allocation3 + $0x2]]
    %p4447 = scmp.eq.s32.totalorder %s4446, 0
    // Predicated region
    $region90: #{seq2seq_forward.1} parent=1 // pred_check
      %p4448 = pneg %p4447
    $region91: #{seq2seq_forward.1} parent=1 // pred_check_branch
      %4450 = sbr.rel (%p4448) target = $region93
    $region92: #{seq2seq_forward.1} parent=1 // pred_region
      %4451 = vmax.xlane.f32.xlu0 %v4440
      %v4452 = vpop.xlane.xlu0 %4451
      %vm4453 = vcmp.ge.f32.partialorder %v4440, %v4452
      %v4454 = vsel %vm4453, %v93, 128.0
      %4455 = vmin.xlane.f32.xlu0 %v4454
      %v4456 = vpop.xlane.xlu0 %4455
      %vm4457 = vcmp.eq.f32.partialorder %v93, %v4456
      %v4458 = vsel %vm4457, 1, 0
      %v4459 = vcvt.s32.f32 %v4458
      %v4460 = vld [vmem:[%s4] sm:$0xff]
      %v4461 = vld [vmem:[%s4 + $0x8] sm:$0xff]
      %v4462 = vld [vmem:[%s4 + $0x10] sm:$0xff]
      %v4463 = vld [vmem:[%s4 + $0x18] sm:$0xff]
      %v4464 = vld [vmem:[%s4 + $0x20] sm:$0xff]
      %v4465 = vld [vmem:[%s4 + $0x28] sm:$0xff]
      %v4466 = vld [vmem:[%s4 + $0x30] sm:$0xff]
      %v4467 = vld [vmem:[%s4 + $0x38] sm:$0xff]
      %v4468 = vld [vmem:[%s4 + $0x40] sm:$0xff]
      %v4469 = vld [vmem:[%s4 + $0x48] sm:$0xff]
      %v4470 = vld [vmem:[%s4 + $0x50] sm:$0xff]
      %v4471 = vld [vmem:[%s4 + $0x58] sm:$0xff]
      %v4472 = vld [vmem:[%s4 + $0x60] sm:$0xff]
      %v4473 = vld [vmem:[%s4 + $0x68] sm:$0xff]
      %v4474 = vld [vmem:[%s4 + $0x70] sm:$0xff]
      %v4475 = vld [vmem:[%s4 + $0x78] sm:$0xff]
      %4476 = vmatprep.subr.mxu0 0.0
      %4477 = vmatpush1.msra.mxu0 %v4475
      %4478 = vmatprep.subr.mxu0 0.0
      %4479 = vmatpush1.msra.mxu0 %v4474
      %4480 = vmatprep.subr.mxu0 0.0
      %4481 = vmatpush1.msra.mxu0 %v4473
      %4482 = vmatprep.subr.mxu0 0.0
      %4483 = vmatpush1.msra.mxu0 %v4472
      %4484 = vmatprep.subr.mxu0 0.0
      %4485 = vmatpush1.msra.mxu0 %v4471
      %4486 = vmatprep.subr.mxu0 0.0
      %4487 = vmatpush1.msra.mxu0 %v4470
      %4488 = vmatprep.subr.mxu0 0.0
      %4489 = vmatpush1.msra.mxu0 %v4469
      %4490 = vmatprep.subr.mxu0 0.0
      %4491 = vmatpush1.msra.mxu0 %v4468
      %4492 = vmatprep.subr.mxu0 0.0
      %4493 = vmatpush1.msra.mxu0 %v4467
      %4494 = vmatprep.subr.mxu0 0.0
      %4495 = vmatpush1.msra.mxu0 %v4466
      %4496 = vmatprep.subr.mxu0 0.0
      %4497 = vmatpush1.msra.mxu0 %v4465
      %4498 = vmatprep.subr.mxu0 0.0
      %4499 = vmatpush1.msra.mxu0 %v4464
      %4500 = vmatprep.subr.mxu0 0.0
      %4501 = vmatpush1.msra.mxu0 %v4463
      %4502 = vmatprep.subr.mxu0 0.0
      %4503 = vmatpush1.msra.mxu0 %v4462
      %4504 = vmatprep.subr.mxu0 0.0
      %4505 = vmatpush1.msra.mxu0 %v4461
      %4506 = vmatprep.subr.mxu0 0.0
      %4507 = vmatpush1.msra.mxu0 %v4460
      %4508 = vmatprep.subr.mxu0 0.0
      %4509 = vmatpush2.msra.mxu0 0.0
      %4510 = vmatprep.subr.mxu0 0.0
      %4511 = vmatpush2.msra.mxu0 0.0
      %4512 = vmatprep.subr.mxu0 0.0
      %4513 = vmatpush2.msra.mxu0 0.0
      %4514 = vmatprep.subr.mxu0 0.0
      %4515 = vmatpush2.msra.mxu0 0.0
      %4516 = vmatprep.subr.mxu0 0.0
      %4517 = vmatpush2.msra.mxu0 0.0
      %4518 = vmatprep.subr.mxu0 0.0
      %4519 = vmatpush2.msra.mxu0 0.0
      %4520 = vmatprep.subr.mxu0 0.0
      %4521 = vmatpush2.msra.mxu0 0.0
      %4522 = vmatprep.subr.mxu0 0.0
      %4523 = vmatpush2.msra.mxu0 0.0
      %4524 = vmatprep.subr.mxu0 0.0
      %4525 = vmatpush2.msra.mxu0 0.0
      %4526 = vmatprep.subr.mxu0 0.0
      %4527 = vmatpush2.msra.mxu0 0.0
      %4528 = vmatprep.subr.mxu0 0.0
      %4529 = vmatpush2.msra.mxu0 0.0
      %4530 = vmatprep.subr.mxu0 0.0
      %4531 = vmatpush2.msra.mxu0 0.0
      %4532 = vmatprep.subr.mxu0 0.0
      %4533 = vmatpush2.msra.mxu0 0.0
      %4534 = vmatprep.subr.mxu0 0.0
      %4535 = vmatpush2.msra.mxu0 0.0
      %4536 = vmatprep.subr.mxu0 0.0
      %4537 = vmatpush2.msra.mxu0 0.0
      %4538 = vmatprep.subr.mxu0 0.0
      %4539 = vmatpush2.msra.mxu0 0.0
      %4540 = vmatprep.mubr.f32.mxu0 0.0
      %4541 = vmatmul.mubr.f32.gmra.mxu0 %v4459
      %v4542 = vpop.f32.mrf.mxu0
      %v4543 = vadd.f32 0.0, %v4542
      %v4544 = vpop.f32.mrf.mxu0
      %4545 = vdwg.mxu0
      %4546 = vst.msk [vmem:[#allocation2] sm:$0xff] %vm290, %v4543
    $region93: #{seq2seq_forward.1} parent=1 // pred_fallthru
      _
    %v4547 = vld [vmem:[#allocation2] sm:$0xff]
    %v4548 = vld [vmem:[%s11] sm:$0xff]
    %v4549 = vld [vmem:[%s11 + $0x8] sm:$0xff]
    %v4550 = vld [vmem:[%s11 + $0x10] sm:$0xff]
    %v4551 = vld [vmem:[%s11 + $0x18] sm:$0xff]
    %v4552 = vld [vmem:[%s13] sm:$0xff]
    %v4553 = vld [vmem:[%s13 + $0x8] sm:$0xff]
    %v4554 = vld [vmem:[%s13 + $0x10] sm:$0xff]
    %v4555 = vld [vmem:[%s13 + $0x18] sm:$0xff]
    %4556 = vmatprep.subr.mxu0 0.0
    %4557 = vmatpush1.msra.mxu0 0.0
    %4558 = vmatprep.subr.mxu0 0.0
    %4559 = vmatpush1.msra.mxu0 0.0
    %4560 = vmatprep.subr.mxu0 0.0
    %4561 = vmatpush1.msra.mxu0 0.0
    %4562 = vmatprep.subr.mxu0 0.0
    %4563 = vmatpush1.msra.mxu0 0.0
    %4564 = vmatprep.subr.mxu0 0.0
    %4565 = vmatpush1.msra.mxu0 0.0
    %4566 = vmatprep.subr.mxu0 0.0
    %4567 = vmatpush1.msra.mxu0 0.0
    %4568 = vmatprep.subr.mxu0 0.0
    %4569 = vmatpush1.msra.mxu0 0.0
    %4570 = vmatprep.subr.mxu0 0.0
    %4571 = vmatpush1.msra.mxu0 0.0
    %4572 = vmatprep.subr.mxu0 0.0
    %4573 = vmatpush1.msra.mxu0 0.0
    %4574 = vmatprep.subr.mxu0 0.0
    %4575 = vmatpush1.msra.mxu0 0.0
    %4576 = vmatprep.subr.mxu0 0.0
    %4577 = vmatpush1.msra.mxu0 0.0
    %4578 = vmatprep.subr.mxu0 0.0
    %4579 = vmatpush1.msra.mxu0 0.0
    %4580 = vmatprep.subr.mxu0 0.0
    %4581 = vmatpush1.msra.mxu0 %v4555
    %4582 = vmatprep.subr.mxu0 0.0
    %4583 = vmatpush1.msra.mxu0 %v4554
    %4584 = vmatprep.subr.mxu0 0.0
    %4585 = vmatpush1.msra.mxu0 %v4553
    %4586 = vmatprep.subr.mxu0 0.0
    %4587 = vmatpush1.msra.mxu0 %v4552
    %4588 = vmatprep.subr.mxu0 0.0
    %4589 = vmatpush2.msra.mxu0 0.0
    %4590 = vmatprep.subr.mxu0 0.0
    %4591 = vmatpush2.msra.mxu0 0.0
    %4592 = vmatprep.subr.mxu0 0.0
    %4593 = vmatpush2.msra.mxu0 0.0
    %4594 = vmatprep.subr.mxu0 0.0
    %4595 = vmatpush2.msra.mxu0 0.0
    %4596 = vmatprep.subr.mxu0 0.0
    %4597 = vmatpush2.msra.mxu0 0.0
    %4598 = vmatprep.subr.mxu0 0.0
    %4599 = vmatpush2.msra.mxu0 0.0
    %4600 = vmatprep.subr.mxu0 0.0
    %4601 = vmatpush2.msra.mxu0 0.0
    %4602 = vmatprep.subr.mxu0 0.0
    %4603 = vmatpush2.msra.mxu0 0.0
    %4604 = vmatprep.subr.mxu0 0.0
    %4605 = vmatpush2.msra.mxu0 0.0
    %4606 = vmatprep.subr.mxu0 0.0
    %4607 = vmatpush2.msra.mxu0 0.0
    %4608 = vmatprep.subr.mxu0 0.0
    %4609 = vmatpush2.msra.mxu0 0.0
    %4610 = vmatprep.subr.mxu0 0.0
    %4611 = vmatpush2.msra.mxu0 0.0
    %4612 = vmatprep.subr.mxu0 0.0
    %4613 = vmatpush2.msra.mxu0 0.0
    %4614 = vmatprep.subr.mxu0 0.0
    %4615 = vmatpush2.msra.mxu0 0.0
    %4616 = vmatprep.subr.mxu0 0.0
    %4617 = vmatpush2.msra.mxu0 0.0
    %4618 = vmatprep.subr.mxu0 0.0
    %4619 = vmatpush2.msra.mxu0 0.0
    %4620 = vmatprep.mubr.f32.mxu0 0.0
    %4621 = vmatmul.mubr.f32.gmra.mxu0 %v4253
    %v4622 = vpop.f32.mrf.mxu0
    %v4623 = vadd.f32 0.0, %v4622
    %v4624 = vpop.f32.mrf.mxu0
    %4625 = vdwg.mxu0
    %v4627 = vsel %vm290, %v4547, 0
    %4629 = vmatprep.subr.mxu0 0.0
    %4630 = vmatpush1.msra.mxu0 0.0
    %4631 = vmatprep.subr.mxu0 0.0
    %4632 = vmatpush1.msra.mxu0 0.0
    %4633 = vmatprep.subr.mxu0 0.0
    %4634 = vmatpush1.msra.mxu0 0.0
    %4635 = vmatprep.subr.mxu0 0.0
    %4636 = vmatpush1.msra.mxu0 0.0
    %4637 = vmatprep.subr.mxu0 0.0
    %4638 = vmatpush1.msra.mxu0 0.0
    %4639 = vmatprep.subr.mxu0 0.0
    %4640 = vmatpush1.msra.mxu0 0.0
    %4641 = vmatprep.subr.mxu0 0.0
    %4642 = vmatpush1.msra.mxu0 0.0
    %4643 = vmatprep.subr.mxu0 0.0
    %4644 = vmatpush1.msra.mxu0 0.0
    %4645 = vmatprep.subr.mxu0 0.0
    %4646 = vmatpush1.msra.mxu0 0.0
    %4647 = vmatprep.subr.mxu0 0.0
    %4648 = vmatpush1.msra.mxu0 0.0
    %4649 = vmatprep.subr.mxu0 0.0
    %4650 = vmatpush1.msra.mxu0 0.0
    %4651 = vmatprep.subr.mxu0 0.0
    %4652 = vmatpush1.msra.mxu0 0.0
    %4653 = vmatprep.subr.mxu0 0.0
    %4654 = vmatpush1.msra.mxu0 %v4551
    %4655 = vmatprep.subr.mxu0 0.0
    %4656 = vmatpush1.msra.mxu0 %v4550
    %4657 = vmatprep.subr.mxu0 0.0
    %4658 = vmatpush1.msra.mxu0 %v4549
    %4659 = vmatprep.subr.mxu0 0.0
    %4660 = vmatpush1.msra.mxu0 %v4548
    %4661 = vmatprep.subr.mxu0 0.0
    %4662 = vmatpush2.msra.mxu0 0.0
    %4663 = vmatprep.subr.mxu0 0.0
    %4664 = vmatpush2.msra.mxu0 0.0
    %4665 = vmatprep.subr.mxu0 0.0
    %4666 = vmatpush2.msra.mxu0 0.0
    %4667 = vmatprep.subr.mxu0 0.0
    %4668 = vmatpush2.msra.mxu0 0.0
    %4669 = vmatprep.subr.mxu0 0.0
    %4670 = vmatpush2.msra.mxu0 0.0
    %4671 = vmatprep.subr.mxu0 0.0
    %4672 = vmatpush2.msra.mxu0 0.0
    %4673 = vmatprep.subr.mxu0 0.0
    %4674 = vmatpush2.msra.mxu0 0.0
    %4675 = vmatprep.subr.mxu0 0.0
    %4676 = vmatpush2.msra.mxu0 0.0
    %4677 = vmatprep.subr.mxu0 0.0
    %4678 = vmatpush2.msra.mxu0 0.0
    %4679 = vmatprep.subr.mxu0 0.0
    %4680 = vmatpush2.msra.mxu0 0.0
    %4681 = vmatprep.subr.mxu0 0.0
    %4682 = vmatpush2.msra.mxu0 0.0
    %4683 = vmatprep.subr.mxu0 0.0
    %4684 = vmatpush2.msra.mxu0 0.0
    %4685 = vmatprep.subr.mxu0 0.0
    %4686 = vmatpush2.msra.mxu0 0.0
    %4687 = vmatprep.subr.mxu0 0.0
    %4688 = vmatpush2.msra.mxu0 0.0
    %4689 = vmatprep.subr.mxu0 0.0
    %4690 = vmatpush2.msra.mxu0 0.0
    %4691 = vmatprep.subr.mxu0 0.0
    %4692 = vmatpush2.msra.mxu0 0.0
    %4693 = vmatprep.mubr.f32.mxu0 0.0
    %4694 = vmatmul.mubr.f32.gmra.mxu0 %v4627
    %v4695 = vpop.f32.mrf.mxu0
    %v4696 = vadd.f32 %v4623, %v4695
    %v4697 = vpop.f32.mrf.mxu0
    %4698 = vdwg.mxu0
    %v4699 = vld [vmem:[%s15] sm:$0x1]
    %v4701 = vlaneseq
    %v4702 = vshrl.u32 %v4701, 7
    %v4703 = vsub.s32 0, %v4702
    %v4704 = vrot.slane %v4699, %v4703
    %v4706 = vadd.f32 %v4696, %v4704
    %v4707 = vxor.u32 %v4706, 2147483648
    %v4708 = vmul.f32 %v4707, 1.442695
    %v4709 = vpow.pop %v4708
    %v4710 = vadd.f32 %v4709, 1.0
    %v4711 = vrcp.pop %v4710
    %v4712 = vmul.f32 1.0, %v4711
    %v4713 = vtanh.pop %v4706
    %v4714 = vmul.f32 %v4712, %v4165
    %4716 = vrot.lane.b32.xlu0 %v4713, 64
    %v4717 = vpop.permute.xlu0 %4716
    %v4719 = vmul.f32 %v4712, %v4717
    %4721 = vrot.lane.b32.xlu0 %v4719, 32
    %v4722 = vpop.permute.xlu0 %4721
    %v4724 = vadd.f32 %v4714, %v4722
    %v4725 = vtanh.pop %v4724
    %4727 = vrot.lane.b32.xlu0 %v4725, 64
    %v4728 = vpop.permute.xlu0 %4727
    %v4730 = vmul.f32 %v4712, %v4728
    %v4731 = vld [vmem:[%s12] sm:$0xff]
    %v4732 = vld [vmem:[%s12 + $0x8] sm:$0xff]
    %v4733 = vld [vmem:[%s12 + $0x10] sm:$0xff]
    %v4734 = vld [vmem:[%s12 + $0x18] sm:$0xff]
    %v4735 = vld [vmem:[%s14] sm:$0xff]
    %v4736 = vld [vmem:[%s14 + $0x8] sm:$0xff]
    %v4737 = vld [vmem:[%s14 + $0x10] sm:$0xff]
    %v4738 = vld [vmem:[%s14 + $0x18] sm:$0xff]
    %4739 = vmatprep.subr.mxu0 0.0
    %4740 = vmatpush1.msra.mxu0 0.0
    %4741 = vmatprep.subr.mxu0 0.0
    %4742 = vmatpush1.msra.mxu0 0.0
    %4743 = vmatprep.subr.mxu0 0.0
    %4744 = vmatpush1.msra.mxu0 0.0
    %4745 = vmatprep.subr.mxu0 0.0
    %4746 = vmatpush1.msra.mxu0 0.0
    %4747 = vmatprep.subr.mxu0 0.0
    %4748 = vmatpush1.msra.mxu0 0.0
    %4749 = vmatprep.subr.mxu0 0.0
    %4750 = vmatpush1.msra.mxu0 0.0
    %4751 = vmatprep.subr.mxu0 0.0
    %4752 = vmatpush1.msra.mxu0 0.0
    %4753 = vmatprep.subr.mxu0 0.0
    %4754 = vmatpush1.msra.mxu0 0.0
    %4755 = vmatprep.subr.mxu0 0.0
    %4756 = vmatpush1.msra.mxu0 0.0
    %4757 = vmatprep.subr.mxu0 0.0
    %4758 = vmatpush1.msra.mxu0 0.0
    %4759 = vmatprep.subr.mxu0 0.0
    %4760 = vmatpush1.msra.mxu0 0.0
    %4761 = vmatprep.subr.mxu0 0.0
    %4762 = vmatpush1.msra.mxu0 0.0
    %4763 = vmatprep.subr.mxu0 0.0
    %4764 = vmatpush1.msra.mxu0 %v4738
    %4765 = vmatprep.subr.mxu0 0.0
    %4766 = vmatpush1.msra.mxu0 %v4737
    %4767 = vmatprep.subr.mxu0 0.0
    %4768 = vmatpush1.msra.mxu0 %v4736
    %4769 = vmatprep.subr.mxu0 0.0
    %4770 = vmatpush1.msra.mxu0 %v4735
    %4771 = vmatprep.subr.mxu0 0.0
    %4772 = vmatpush2.msra.mxu0 0.0
    %4773 = vmatprep.subr.mxu0 0.0
    %4774 = vmatpush2.msra.mxu0 0.0
    %4775 = vmatprep.subr.mxu0 0.0
    %4776 = vmatpush2.msra.mxu0 0.0
    %4777 = vmatprep.subr.mxu0 0.0
    %4778 = vmatpush2.msra.mxu0 0.0
    %4779 = vmatprep.subr.mxu0 0.0
    %4780 = vmatpush2.msra.mxu0 0.0
    %4781 = vmatprep.subr.mxu0 0.0
    %4782 = vmatpush2.msra.mxu0 0.0
    %4783 = vmatprep.subr.mxu0 0.0
    %4784 = vmatpush2.msra.mxu0 0.0
    %4785 = vmatprep.subr.mxu0 0.0
    %4786 = vmatpush2.msra.mxu0 0.0
    %4787 = vmatprep.subr.mxu0 0.0
    %4788 = vmatpush2.msra.mxu0 0.0
    %4789 = vmatprep.subr.mxu0 0.0
    %4790 = vmatpush2.msra.mxu0 0.0
    %4791 = vmatprep.subr.mxu0 0.0
    %4792 = vmatpush2.msra.mxu0 0.0
    %4793 = vmatprep.subr.mxu0 0.0
    %4794 = vmatpush2.msra.mxu0 0.0
    %4795 = vmatprep.subr.mxu0 0.0
    %4796 = vmatpush2.msra.mxu0 0.0
    %4797 = vmatprep.subr.mxu0 0.0
    %4798 = vmatpush2.msra.mxu0 0.0
    %4799 = vmatprep.subr.mxu0 0.0
    %4800 = vmatpush2.msra.mxu0 0.0
    %4801 = vmatprep.subr.mxu0 0.0
    %4802 = vmatpush2.msra.mxu0 0.0
    %4803 = vmatprep.mubr.f32.mxu0 0.0
    %4804 = vmatmul.mubr.f32.gmra.mxu0 %v4371
    %v4805 = vpop.f32.mrf.mxu0
    %v4806 = vadd.f32 0.0, %v4805
    %v4807 = vpop.f32.mrf.mxu0
    %4808 = vdwg.mxu0
    %4810 = vrot.lane.b32.xlu0 %v4730, 32
    %v4811 = vpop.permute.xlu0 %4810
    %v4812 = vsel %vm290, %v4811, 0
    %4814 = vmatprep.subr.mxu0 0.0
    %4815 = vmatpush1.msra.mxu0 0.0
    %4816 = vmatprep.subr.mxu0 0.0
    %4817 = vmatpush1.msra.mxu0 0.0
    %4818 = vmatprep.subr.mxu0 0.0
    %4819 = vmatpush1.msra.mxu0 0.0
    %4820 = vmatprep.subr.mxu0 0.0
    %4821 = vmatpush1.msra.mxu0 0.0
    %4822 = vmatprep.subr.mxu0 0.0
    %4823 = vmatpush1.msra.mxu0 0.0
    %4824 = vmatprep.subr.mxu0 0.0
    %4825 = vmatpush1.msra.mxu0 0.0
    %4826 = vmatprep.subr.mxu0 0.0
    %4827 = vmatpush1.msra.mxu0 0.0
    %4828 = vmatprep.subr.mxu0 0.0
    %4829 = vmatpush1.msra.mxu0 0.0
    %4830 = vmatprep.subr.mxu0 0.0
    %4831 = vmatpush1.msra.mxu0 0.0
    %4832 = vmatprep.subr.mxu0 0.0
    %4833 = vmatpush1.msra.mxu0 0.0
    %4834 = vmatprep.subr.mxu0 0.0
    %4835 = vmatpush1.msra.mxu0 0.0
    %4836 = vmatprep.subr.mxu0 0.0
    %4837 = vmatpush1.msra.mxu0 0.0
    %4838 = vmatprep.subr.mxu0 0.0
    %4839 = vmatpush1.msra.mxu0 %v4734
    %4840 = vmatprep.subr.mxu0 0.0
    %4841 = vmatpush1.msra.mxu0 %v4733
    %4842 = vmatprep.subr.mxu0 0.0
    %4843 = vmatpush1.msra.mxu0 %v4732
    %4844 = vmatprep.subr.mxu0 0.0
    %4845 = vmatpush1.msra.mxu0 %v4731
    %4846 = vmatprep.subr.mxu0 0.0
    %4847 = vmatpush2.msra.mxu0 0.0
    %4848 = vmatprep.subr.mxu0 0.0
    %4849 = vmatpush2.msra.mxu0 0.0
    %4850 = vmatprep.subr.mxu0 0.0
    %4851 = vmatpush2.msra.mxu0 0.0
    %4852 = vmatprep.subr.mxu0 0.0
    %4853 = vmatpush2.msra.mxu0 0.0
    %4854 = vmatprep.subr.mxu0 0.0
    %4855 = vmatpush2.msra.mxu0 0.0
    %4856 = vmatprep.subr.mxu0 0.0
    %4857 = vmatpush2.msra.mxu0 0.0
    %4858 = vmatprep.subr.mxu0 0.0
    %4859 = vmatpush2.msra.mxu0 0.0
    %4860 = vmatprep.subr.mxu0 0.0
    %4861 = vmatpush2.msra.mxu0 0.0
    %4862 = vmatprep.subr.mxu0 0.0
    %4863 = vmatpush2.msra.mxu0 0.0
    %4864 = vmatprep.subr.mxu0 0.0
    %4865 = vmatpush2.msra.mxu0 0.0
    %4866 = vmatprep.subr.mxu0 0.0
    %4867 = vmatpush2.msra.mxu0 0.0
    %4868 = vmatprep.subr.mxu0 0.0
    %4869 = vmatpush2.msra.mxu0 0.0
    %4870 = vmatprep.subr.mxu0 0.0
    %4871 = vmatpush2.msra.mxu0 0.0
    %4872 = vmatprep.subr.mxu0 0.0
    %4873 = vmatpush2.msra.mxu0 0.0
    %4874 = vmatprep.subr.mxu0 0.0
    %4875 = vmatpush2.msra.mxu0 0.0
    %4876 = vmatprep.subr.mxu0 0.0
    %4877 = vmatpush2.msra.mxu0 0.0
    %4878 = vmatprep.mubr.f32.mxu0 0.0
    %4879 = vmatmul.mubr.f32.gmra.mxu0 %v4812
    %v4880 = vpop.f32.mrf.mxu0
    %v4881 = vadd.f32 %v4806, %v4880
    %v4882 = vpop.f32.mrf.mxu0
    %4883 = vdwg.mxu0
    %v4884 = vld [vmem:[%s16] sm:$0x1]
    %v4886 = vlaneseq
    %v4887 = vshrl.u32 %v4886, 7
    %v4888 = vsub.s32 0, %v4887
    %v4889 = vrot.slane %v4884, %v4888
    %v4891 = vadd.f32 %v4881, %v4889
    %v4892 = vxor.u32 %v4891, 2147483648
    %v4893 = vmul.f32 %v4892, 1.442695
    %v4894 = vpow.pop %v4893
    %v4895 = vadd.f32 %v4894, 1.0
    %v4896 = vrcp.pop %v4895
    %v4897 = vmul.f32 1.0, %v4896
    %v4898 = vtanh.pop %v4891
    %v4899 = vmul.f32 %v4897, %v4350
    %4901 = vrot.lane.b32.xlu0 %v4898, 64
    %v4902 = vpop.permute.xlu0 %4901
    %v4904 = vmul.f32 %v4897, %v4902
    %4906 = vrot.lane.b32.xlu0 %v4904, 32
    %v4907 = vpop.permute.xlu0 %4906
    %v4909 = vadd.f32 %v4899, %v4907
    %v4910 = vtanh.pop %v4909
    %4912 = vrot.lane.b32.xlu0 %v4910, 64
    %v4913 = vpop.permute.xlu0 %4912
    %v4915 = vmul.f32 %v4897, %v4913
    %v4916 = vld [vmem:[%s17] sm:$0xff]
    %v4917 = vld [vmem:[%s17 + $0x8] sm:$0xff]
    %v4918 = vld [vmem:[%s17 + $0x10] sm:$0xff]
    %v4919 = vld [vmem:[%s17 + $0x18] sm:$0xff]
    %v4920 = vld [vmem:[%s18] sm:$0x1]
    %v4922 = vlaneseq
    %v4923 = vshrl.u32 %v4922, 7
    %v4924 = vsub.s32 0, %v4923
    %v4925 = vrot.slane %v4920, %v4924
    %4928 = vrot.lane.b32.xlu0 %v4915, 32
    %v4929 = vpop.permute.xlu0 %4928
    %v4930 = vsel %vm290, %v4929, 0
    %4932 = vmatprep.subr.mxu0 0.0
    %4933 = vmatpush1.msra.mxu0 0.0
    %4934 = vmatprep.subr.mxu0 0.0
    %4935 = vmatpush1.msra.mxu0 0.0
    %4936 = vmatprep.subr.mxu0 0.0
    %4937 = vmatpush1.msra.mxu0 0.0
    %4938 = vmatprep.subr.mxu0 0.0
    %4939 = vmatpush1.msra.mxu0 0.0
    %4940 = vmatprep.subr.mxu0 0.0
    %4941 = vmatpush1.msra.mxu0 0.0
    %4942 = vmatprep.subr.mxu0 0.0
    %4943 = vmatpush1.msra.mxu0 0.0
    %4944 = vmatprep.subr.mxu0 0.0
    %4945 = vmatpush1.msra.mxu0 0.0
    %4946 = vmatprep.subr.mxu0 0.0
    %4947 = vmatpush1.msra.mxu0 0.0
    %4948 = vmatprep.subr.mxu0 0.0
    %4949 = vmatpush1.msra.mxu0 0.0
    %4950 = vmatprep.subr.mxu0 0.0
    %4951 = vmatpush1.msra.mxu0 0.0
    %4952 = vmatprep.subr.mxu0 0.0
    %4953 = vmatpush1.msra.mxu0 0.0
    %4954 = vmatprep.subr.mxu0 0.0
    %4955 = vmatpush1.msra.mxu0 0.0
    %4956 = vmatprep.subr.mxu0 0.0
    %4957 = vmatpush1.msra.mxu0 %v4919
    %4958 = vmatprep.subr.mxu0 0.0
    %4959 = vmatpush1.msra.mxu0 %v4918
    %4960 = vmatprep.subr.mxu0 0.0
    %4961 = vmatpush1.msra.mxu0 %v4917
    %4962 = vmatprep.subr.mxu0 0.0
    %4963 = vmatpush1.msra.mxu0 %v4916
    %4964 = vmatprep.subr.mxu0 0.0
    %4965 = vmatpush2.msra.mxu0 0.0
    %4966 = vmatprep.subr.mxu0 0.0
    %4967 = vmatpush2.msra.mxu0 0.0
    %4968 = vmatprep.subr.mxu0 0.0
    %4969 = vmatpush2.msra.mxu0 0.0
    %4970 = vmatprep.subr.mxu0 0.0
    %4971 = vmatpush2.msra.mxu0 0.0
    %4972 = vmatprep.subr.mxu0 0.0
    %4973 = vmatpush2.msra.mxu0 0.0
    %4974 = vmatprep.subr.mxu0 0.0
    %4975 = vmatpush2.msra.mxu0 0.0
    %4976 = vmatprep.subr.mxu0 0.0
    %4977 = vmatpush2.msra.mxu0 0.0
    %4978 = vmatprep.subr.mxu0 0.0
    %4979 = vmatpush2.msra.mxu0 0.0
    %4980 = vmatprep.subr.mxu0 0.0
    %4981 = vmatpush2.msra.mxu0 0.0
    %4982 = vmatprep.subr.mxu0 0.0
    %4983 = vmatpush2.msra.mxu0 0.0
    %4984 = vmatprep.subr.mxu0 0.0
    %4985 = vmatpush2.msra.mxu0 0.0
    %4986 = vmatprep.subr.mxu0 0.0
    %4987 = vmatpush2.msra.mxu0 0.0
    %4988 = vmatprep.subr.mxu0 0.0
    %4989 = vmatpush2.msra.mxu0 0.0
    %4990 = vmatprep.subr.mxu0 0.0
    %4991 = vmatpush2.msra.mxu0 0.0
    %4992 = vmatprep.subr.mxu0 0.0
    %4993 = vmatpush2.msra.mxu0 0.0
    %4994 = vmatprep.subr.mxu0 0.0
    %4995 = vmatpush2.msra.mxu0 0.0
    %4996 = vmatprep.mubr.f32.mxu0 0.0
    %4997 = vmatmul.mubr.f32.gmra.mxu0 %v4930
    %v4998 = vpop.f32.mrf.mxu0
    %v4999 = vadd.f32 %v4925, %v4998
    %v5000 = vpop.f32.mrf.mxu0
    %5001 = vdwg.mxu0
    %s5002 = scalar_lea.vmem %s19, 24
    %5003 = vst [vmem:[%s5002] sm:$0xff] %v4999
    %5004 = vst.msk [vmem:[#allocation2] sm:$0xff] %vm290, %v2775
    %s5005 = sld [smem:[#allocation3 + $0x3]]
    %p5006 = scmp.eq.s32.totalorder %s5005, 0
    // Predicated region
    $region94: #{seq2seq_forward.1} parent=1 // pred_check
      %p5007 = pneg %p5006
    $region95: #{seq2seq_forward.1} parent=1 // pred_check_branch
      %5009 = sbr.rel (%p5007) target = $region97
    $region96: #{seq2seq_forward.1} parent=1 // pred_region
      %5010 = vmax.xlane.f32.xlu0 %v4999
      %v5011 = vpop.xlane.xlu0 %5010
      %vm5012 = vcmp.ge.f32.partialorder %v4999, %v5011
      %v5013 = vsel %vm5012, %v93, 128.0
      %5014 = vmin.xlane.f32.xlu0 %v5013
      %v5015 = vpop.xlane.xlu0 %5014
      %vm5016 = vcmp.eq.f32.partialorder %v93, %v5015
      %v5017 = vsel %vm5016, 1, 0
      %v5018 = vcvt.s32.f32 %v5017
      %v5019 = vld [vmem:[%s4] sm:$0xff]
      %v5020 = vld [vmem:[%s4 + $0x8] sm:$0xff]
      %v5021 = vld [vmem:[%s4 + $0x10] sm:$0xff]
      %v5022 = vld [vmem:[%s4 + $0x18] sm:$0xff]
      %v5023 = vld [vmem:[%s4 + $0x20] sm:$0xff]
      %v5024 = vld [vmem:[%s4 + $0x28] sm:$0xff]
      %v5025 = vld [vmem:[%s4 + $0x30] sm:$0xff]
      %v5026 = vld [vmem:[%s4 + $0x38] sm:$0xff]
      %v5027 = vld [vmem:[%s4 + $0x40] sm:$0xff]
      %v5028 = vld [vmem:[%s4 + $0x48] sm:$0xff]
      %v5029 = vld [vmem:[%s4 + $0x50] sm:$0xff]
      %v5030 = vld [vmem:[%s4 + $0x58] sm:$0xff]
      %v5031 = vld [vmem:[%s4 + $0x60] sm:$0xff]
      %v5032 = vld [vmem:[%s4 + $0x68] sm:$0xff]
      %v5033 = vld [vmem:[%s4 + $0x70] sm:$0xff]
      %v5034 = vld [vmem:[%s4 + $0x78] sm:$0xff]
      %5035 = vmatprep.subr.mxu0 0.0
      %5036 = vmatpush1.msra.mxu0 %v5034
      %5037 = vmatprep.subr.mxu0 0.0
      %5038 = vmatpush1.msra.mxu0 %v5033
      %5039 = vmatprep.subr.mxu0 0.0
      %5040 = vmatpush1.msra.mxu0 %v5032
      %5041 = vmatprep.subr.mxu0 0.0
      %5042 = vmatpush1.msra.mxu0 %v5031
      %5043 = vmatprep.subr.mxu0 0.0
      %5044 = vmatpush1.msra.mxu0 %v5030
      %5045 = vmatprep.subr.mxu0 0.0
      %5046 = vmatpush1.msra.mxu0 %v5029
      %5047 = vmatprep.subr.mxu0 0.0
      %5048 = vmatpush1.msra.mxu0 %v5028
      %5049 = vmatprep.subr.mxu0 0.0
      %5050 = vmatpush1.msra.mxu0 %v5027
      %5051 = vmatprep.subr.mxu0 0.0
      %5052 = vmatpush1.msra.mxu0 %v5026
      %5053 = vmatprep.subr.mxu0 0.0
      %5054 = vmatpush1.msra.mxu0 %v5025
      %5055 = vmatprep.subr.mxu0 0.0
      %5056 = vmatpush1.msra.mxu0 %v5024
      %5057 = vmatprep.subr.mxu0 0.0
      %5058 = vmatpush1.msra.mxu0 %v5023
      %5059 = vmatprep.subr.mxu0 0.0
      %5060 = vmatpush1.msra.mxu0 %v5022
      %5061 = vmatprep.subr.mxu0 0.0
      %5062 = vmatpush1.msra.mxu0 %v5021
      %5063 = vmatprep.subr.mxu0 0.0
      %5064 = vmatpush1.msra.mxu0 %v5020
      %5065 = vmatprep.subr.mxu0 0.0
      %5066 = vmatpush1.msra.mxu0 %v5019
      %5067 = vmatprep.subr.mxu0 0.0
      %5068 = vmatpush2.msra.mxu0 0.0
      %5069 = vmatprep.subr.mxu0 0.0
      %5070 = vmatpush2.msra.mxu0 0.0
      %5071 = vmatprep.subr.mxu0 0.0
      %5072 = vmatpush2.msra.mxu0 0.0
      %5073 = vmatprep.subr.mxu0 0.0
      %5074 = vmatpush2.msra.mxu0 0.0
      %5075 = vmatprep.subr.mxu0 0.0
      %5076 = vmatpush2.msra.mxu0 0.0
      %5077 = vmatprep.subr.mxu0 0.0
      %5078 = vmatpush2.msra.mxu0 0.0
      %5079 = vmatprep.subr.mxu0 0.0
      %5080 = vmatpush2.msra.mxu0 0.0
      %5081 = vmatprep.subr.mxu0 0.0
      %5082 = vmatpush2.msra.mxu0 0.0
      %5083 = vmatprep.subr.mxu0 0.0
      %5084 = vmatpush2.msra.mxu0 0.0
      %5085 = vmatprep.subr.mxu0 0.0
      %5086 = vmatpush2.msra.mxu0 0.0
      %5087 = vmatprep.subr.mxu0 0.0
      %5088 = vmatpush2.msra.mxu0 0.0
      %5089 = vmatprep.subr.mxu0 0.0
      %5090 = vmatpush2.msra.mxu0 0.0
      %5091 = vmatprep.subr.mxu0 0.0
      %5092 = vmatpush2.msra.mxu0 0.0
      %5093 = vmatprep.subr.mxu0 0.0
      %5094 = vmatpush2.msra.mxu0 0.0
      %5095 = vmatprep.subr.mxu0 0.0
      %5096 = vmatpush2.msra.mxu0 0.0
      %5097 = vmatprep.subr.mxu0 0.0
      %5098 = vmatpush2.msra.mxu0 0.0
      %5099 = vmatprep.mubr.f32.mxu0 0.0
      %5100 = vmatmul.mubr.f32.gmra.mxu0 %v5018
      %v5101 = vpop.f32.mrf.mxu0
      %v5102 = vadd.f32 0.0, %v5101
      %v5103 = vpop.f32.mrf.mxu0
      %5104 = vdwg.mxu0
      %5105 = vst.msk [vmem:[#allocation2] sm:$0xff] %vm290, %v5102
    $region97: #{seq2seq_forward.1} parent=1 // pred_fallthru
      _
    %v5106 = vld [vmem:[#allocation2] sm:$0xff]
    %v5107 = vld [vmem:[%s11] sm:$0xff]
    %v5108 = vld [vmem:[%s11 + $0x8] sm:$0xff]
    %v5109 = vld [vmem:[%s11 + $0x10] sm:$0xff]
    %v5110 = vld [vmem:[%s11 + $0x18] sm:$0xff]
    %v5111 = vld [vmem:[%s13] sm:$0xff]
    %v5112 = vld [vmem:[%s13 + $0x8] sm:$0xff]
    %v5113 = vld [vmem:[%s13 + $0x10] sm:$0xff]
    %v5114 = vld [vmem:[%s13 + $0x18] sm:$0xff]
    %5115 = vmatprep.subr.mxu0 0.0
    %5116 = vmatpush1.msra.mxu0 0.0
    %5117 = vmatprep.subr.mxu0 0.0
    %5118 = vmatpush1.msra.mxu0 0.0
    %5119 = vmatprep.subr.mxu0 0.0
    %5120 = vmatpush1.msra.mxu0 0.0
    %5121 = vmatprep.subr.mxu0 0.0
    %5122 = vmatpush1.msra.mxu0 0.0
    %5123 = vmatprep.subr.mxu0 0.0
    %5124 = vmatpush1.msra.mxu0 0.0
    %5125 = vmatprep.subr.mxu0 0.0
    %5126 = vmatpush1.msra.mxu0 0.0
    %5127 = vmatprep.subr.mxu0 0.0
    %5128 = vmatpush1.msra.mxu0 0.0
    %5129 = vmatprep.subr.mxu0 0.0
    %5130 = vmatpush1.msra.mxu0 0.0
    %5131 = vmatprep.subr.mxu0 0.0
    %5132 = vmatpush1.msra.mxu0 0.0
    %5133 = vmatprep.subr.mxu0 0.0
    %5134 = vmatpush1.msra.mxu0 0.0
    %5135 = vmatprep.subr.mxu0 0.0
    %5136 = vmatpush1.msra.mxu0 0.0
    %5137 = vmatprep.subr.mxu0 0.0
    %5138 = vmatpush1.msra.mxu0 0.0
    %5139 = vmatprep.subr.mxu0 0.0
    %5140 = vmatpush1.msra.mxu0 %v5114
    %5141 = vmatprep.subr.mxu0 0.0
    %5142 = vmatpush1.msra.mxu0 %v5113
    %5143 = vmatprep.subr.mxu0 0.0
    %5144 = vmatpush1.msra.mxu0 %v5112
    %5145 = vmatprep.subr.mxu0 0.0
    %5146 = vmatpush1.msra.mxu0 %v5111
    %5147 = vmatprep.subr.mxu0 0.0
    %5148 = vmatpush2.msra.mxu0 0.0
    %5149 = vmatprep.subr.mxu0 0.0
    %5150 = vmatpush2.msra.mxu0 0.0
    %5151 = vmatprep.subr.mxu0 0.0
    %5152 = vmatpush2.msra.mxu0 0.0
    %5153 = vmatprep.subr.mxu0 0.0
    %5154 = vmatpush2.msra.mxu0 0.0
    %5155 = vmatprep.subr.mxu0 0.0
    %5156 = vmatpush2.msra.mxu0 0.0
    %5157 = vmatprep.subr.mxu0 0.0
    %5158 = vmatpush2.msra.mxu0 0.0
    %5159 = vmatprep.subr.mxu0 0.0
    %5160 = vmatpush2.msra.mxu0 0.0
    %5161 = vmatprep.subr.mxu0 0.0
    %5162 = vmatpush2.msra.mxu0 0.0
    %5163 = vmatprep.subr.mxu0 0.0
    %5164 = vmatpush2.msra.mxu0 0.0
    %5165 = vmatprep.subr.mxu0 0.0
    %5166 = vmatpush2.msra.mxu0 0.0
    %5167 = vmatprep.subr.mxu0 0.0
    %5168 = vmatpush2.msra.mxu0 0.0
    %5169 = vmatprep.subr.mxu0 0.0
    %5170 = vmatpush2.msra.mxu0 0.0
    %5171 = vmatprep.subr.mxu0 0.0
    %5172 = vmatpush2.msra.mxu0 0.0
    %5173 = vmatprep.subr.mxu0 0.0
    %5174 = vmatpush2.msra.mxu0 0.0
    %5175 = vmatprep.subr.mxu0 0.0
    %5176 = vmatpush2.msra.mxu0 0.0
    %5177 = vmatprep.subr.mxu0 0.0
    %5178 = vmatpush2.msra.mxu0 0.0
    %5179 = vmatprep.mubr.f32.mxu0 0.0
    %5180 = vmatmul.mubr.f32.gmra.mxu0 %v4812
    %v5181 = vpop.f32.mrf.mxu0
    %v5182 = vadd.f32 0.0, %v5181
    %v5183 = vpop.f32.mrf.mxu0
    %5184 = vdwg.mxu0
    %v5186 = vsel %vm290, %v5106, 0
    %5188 = vmatprep.subr.mxu0 0.0
    %5189 = vmatpush1.msra.mxu0 0.0
    %5190 = vmatprep.subr.mxu0 0.0
    %5191 = vmatpush1.msra.mxu0 0.0
    %5192 = vmatprep.subr.mxu0 0.0
    %5193 = vmatpush1.msra.mxu0 0.0
    %5194 = vmatprep.subr.mxu0 0.0
    %5195 = vmatpush1.msra.mxu0 0.0
    %5196 = vmatprep.subr.mxu0 0.0
    %5197 = vmatpush1.msra.mxu0 0.0
    %5198 = vmatprep.subr.mxu0 0.0
    %5199 = vmatpush1.msra.mxu0 0.0
    %5200 = vmatprep.subr.mxu0 0.0
    %5201 = vmatpush1.msra.mxu0 0.0
    %5202 = vmatprep.subr.mxu0 0.0
    %5203 = vmatpush1.msra.mxu0 0.0
    %5204 = vmatprep.subr.mxu0 0.0
    %5205 = vmatpush1.msra.mxu0 0.0
    %5206 = vmatprep.subr.mxu0 0.0
    %5207 = vmatpush1.msra.mxu0 0.0
    %5208 = vmatprep.subr.mxu0 0.0
    %5209 = vmatpush1.msra.mxu0 0.0
    %5210 = vmatprep.subr.mxu0 0.0
    %5211 = vmatpush1.msra.mxu0 0.0
    %5212 = vmatprep.subr.mxu0 0.0
    %5213 = vmatpush1.msra.mxu0 %v5110
    %5214 = vmatprep.subr.mxu0 0.0
    %5215 = vmatpush1.msra.mxu0 %v5109
    %5216 = vmatprep.subr.mxu0 0.0
    %5217 = vmatpush1.msra.mxu0 %v5108
    %5218 = vmatprep.subr.mxu0 0.0
    %5219 = vmatpush1.msra.mxu0 %v5107
    %5220 = vmatprep.subr.mxu0 0.0
    %5221 = vmatpush2.msra.mxu0 0.0
    %5222 = vmatprep.subr.mxu0 0.0
    %5223 = vmatpush2.msra.mxu0 0.0
    %5224 = vmatprep.subr.mxu0 0.0
    %5225 = vmatpush2.msra.mxu0 0.0
    %5226 = vmatprep.subr.mxu0 0.0
    %5227 = vmatpush2.msra.mxu0 0.0
    %5228 = vmatprep.subr.mxu0 0.0
    %5229 = vmatpush2.msra.mxu0 0.0
    %5230 = vmatprep.subr.mxu0 0.0
    %5231 = vmatpush2.msra.mxu0 0.0
    %5232 = vmatprep.subr.mxu0 0.0
    %5233 = vmatpush2.msra.mxu0 0.0
    %5234 = vmatprep.subr.mxu0 0.0
    %5235 = vmatpush2.msra.mxu0 0.0
    %5236 = vmatprep.subr.mxu0 0.0
    %5237 = vmatpush2.msra.mxu0 0.0
    %5238 = vmatprep.subr.mxu0 0.0
    %5239 = vmatpush2.msra.mxu0 0.0
    %5240 = vmatprep.subr.mxu0 0.0
    %5241 = vmatpush2.msra.mxu0 0.0
    %5242 = vmatprep.subr.mxu0 0.0
    %5243 = vmatpush2.msra.mxu0 0.0
    %5244 = vmatprep.subr.mxu0 0.0
    %5245 = vmatpush2.msra.mxu0 0.0
    %5246 = vmatprep.subr.mxu0 0.0
    %5247 = vmatpush2.msra.mxu0 0.0
    %5248 = vmatprep.subr.mxu0 0.0
    %5249 = vmatpush2.msra.mxu0 0.0
    %5250 = vmatprep.subr.mxu0 0.0
    %5251 = vmatpush2.msra.mxu0 0.0
    %5252 = vmatprep.mubr.f32.mxu0 0.0
    %5253 = vmatmul.mubr.f32.gmra.mxu0 %v5186
    %v5254 = vpop.f32.mrf.mxu0
    %v5255 = vadd.f32 %v5182, %v5254
    %v5256 = vpop.f32.mrf.mxu0
    %5257 = vdwg.mxu0
    %v5258 = vld [vmem:[%s15] sm:$0x1]
    %v5260 = vlaneseq
    %v5261 = vshrl.u32 %v5260, 7
    %v5262 = vsub.s32 0, %v5261
    %v5263 = vrot.slane %v5258, %v5262
    %v5265 = vadd.f32 %v5255, %v5263
    %v5266 = vxor.u32 %v5265, 2147483648
    %v5267 = vmul.f32 %v5266, 1.442695
    %v5268 = vpow.pop %v5267
    %v5269 = vadd.f32 %v5268, 1.0
    %v5270 = vrcp.pop %v5269
    %v5271 = vmul.f32 1.0, %v5270
    %v5272 = vtanh.pop %v5265
    %v5273 = vmul.f32 %v5271, %v4724
    %5275 = vrot.lane.b32.xlu0 %v5272, 64
    %v5276 = vpop.permute.xlu0 %5275
    %v5278 = vmul.f32 %v5271, %v5276
    %5280 = vrot.lane.b32.xlu0 %v5278, 32
    %v5281 = vpop.permute.xlu0 %5280
    %v5283 = vadd.f32 %v5273, %v5281
    %v5284 = vtanh.pop %v5283
    %5286 = vrot.lane.b32.xlu0 %v5284, 64
    %v5287 = vpop.permute.xlu0 %5286
    %v5289 = vmul.f32 %v5271, %v5287
    %v5290 = vld [vmem:[%s12] sm:$0xff]
    %v5291 = vld [vmem:[%s12 + $0x8] sm:$0xff]
    %v5292 = vld [vmem:[%s12 + $0x10] sm:$0xff]
    %v5293 = vld [vmem:[%s12 + $0x18] sm:$0xff]
    %v5294 = vld [vmem:[%s14] sm:$0xff]
    %v5295 = vld [vmem:[%s14 + $0x8] sm:$0xff]
    %v5296 = vld [vmem:[%s14 + $0x10] sm:$0xff]
    %v5297 = vld [vmem:[%s14 + $0x18] sm:$0xff]
    %5298 = vmatprep.subr.mxu0 0.0
    %5299 = vmatpush1.msra.mxu0 0.0
    %5300 = vmatprep.subr.mxu0 0.0
    %5301 = vmatpush1.msra.mxu0 0.0
    %5302 = vmatprep.subr.mxu0 0.0
    %5303 = vmatpush1.msra.mxu0 0.0
    %5304 = vmatprep.subr.mxu0 0.0
    %5305 = vmatpush1.msra.mxu0 0.0
    %5306 = vmatprep.subr.mxu0 0.0
    %5307 = vmatpush1.msra.mxu0 0.0
    %5308 = vmatprep.subr.mxu0 0.0
    %5309 = vmatpush1.msra.mxu0 0.0
    %5310 = vmatprep.subr.mxu0 0.0
    %5311 = vmatpush1.msra.mxu0 0.0
    %5312 = vmatprep.subr.mxu0 0.0
    %5313 = vmatpush1.msra.mxu0 0.0
    %5314 = vmatprep.subr.mxu0 0.0
    %5315 = vmatpush1.msra.mxu0 0.0
    %5316 = vmatprep.subr.mxu0 0.0
    %5317 = vmatpush1.msra.mxu0 0.0
    %5318 = vmatprep.subr.mxu0 0.0
    %5319 = vmatpush1.msra.mxu0 0.0
    %5320 = vmatprep.subr.mxu0 0.0
    %5321 = vmatpush1.msra.mxu0 0.0
    %5322 = vmatprep.subr.mxu0 0.0
    %5323 = vmatpush1.msra.mxu0 %v5297
    %5324 = vmatprep.subr.mxu0 0.0
    %5325 = vmatpush1.msra.mxu0 %v5296
    %5326 = vmatprep.subr.mxu0 0.0
    %5327 = vmatpush1.msra.mxu0 %v5295
    %5328 = vmatprep.subr.mxu0 0.0
    %5329 = vmatpush1.msra.mxu0 %v5294
    %5330 = vmatprep.subr.mxu0 0.0
    %5331 = vmatpush2.msra.mxu0 0.0
    %5332 = vmatprep.subr.mxu0 0.0
    %5333 = vmatpush2.msra.mxu0 0.0
    %5334 = vmatprep.subr.mxu0 0.0
    %5335 = vmatpush2.msra.mxu0 0.0
    %5336 = vmatprep.subr.mxu0 0.0
    %5337 = vmatpush2.msra.mxu0 0.0
    %5338 = vmatprep.subr.mxu0 0.0
    %5339 = vmatpush2.msra.mxu0 0.0
    %5340 = vmatprep.subr.mxu0 0.0
    %5341 = vmatpush2.msra.mxu0 0.0
    %5342 = vmatprep.subr.mxu0 0.0
    %5343 = vmatpush2.msra.mxu0 0.0
    %5344 = vmatprep.subr.mxu0 0.0
    %5345 = vmatpush2.msra.mxu0 0.0
    %5346 = vmatprep.subr.mxu0 0.0
    %5347 = vmatpush2.msra.mxu0 0.0
    %5348 = vmatprep.subr.mxu0 0.0
    %5349 = vmatpush2.msra.mxu0 0.0
    %5350 = vmatprep.subr.mxu0 0.0
    %5351 = vmatpush2.msra.mxu0 0.0
    %5352 = vmatprep.subr.mxu0 0.0
    %5353 = vmatpush2.msra.mxu0 0.0
    %5354 = vmatprep.subr.mxu0 0.0
    %5355 = vmatpush2.msra.mxu0 0.0
    %5356 = vmatprep.subr.mxu0 0.0
    %5357 = vmatpush2.msra.mxu0 0.0
    %5358 = vmatprep.subr.mxu0 0.0
    %5359 = vmatpush2.msra.mxu0 0.0
    %5360 = vmatprep.subr.mxu0 0.0
    %5361 = vmatpush2.msra.mxu0 0.0
    %5362 = vmatprep.mubr.f32.mxu0 0.0
    %5363 = vmatmul.mubr.f32.gmra.mxu0 %v4930
    %v5364 = vpop.f32.mrf.mxu0
    %v5365 = vadd.f32 0.0, %v5364
    %v5366 = vpop.f32.mrf.mxu0
    %5367 = vdwg.mxu0
    %5369 = vrot.lane.b32.xlu0 %v5289, 32
    %v5370 = vpop.permute.xlu0 %5369
    %v5371 = vsel %vm290, %v5370, 0
    %5373 = vmatprep.subr.mxu0 0.0
    %5374 = vmatpush1.msra.mxu0 0.0
    %5375 = vmatprep.subr.mxu0 0.0
    %5376 = vmatpush1.msra.mxu0 0.0
    %5377 = vmatprep.subr.mxu0 0.0
    %5378 = vmatpush1.msra.mxu0 0.0
    %5379 = vmatprep.subr.mxu0 0.0
    %5380 = vmatpush1.msra.mxu0 0.0
    %5381 = vmatprep.subr.mxu0 0.0
    %5382 = vmatpush1.msra.mxu0 0.0
    %5383 = vmatprep.subr.mxu0 0.0
    %5384 = vmatpush1.msra.mxu0 0.0
    %5385 = vmatprep.subr.mxu0 0.0
    %5386 = vmatpush1.msra.mxu0 0.0
    %5387 = vmatprep.subr.mxu0 0.0
    %5388 = vmatpush1.msra.mxu0 0.0
    %5389 = vmatprep.subr.mxu0 0.0
    %5390 = vmatpush1.msra.mxu0 0.0
    %5391 = vmatprep.subr.mxu0 0.0
    %5392 = vmatpush1.msra.mxu0 0.0
    %5393 = vmatprep.subr.mxu0 0.0
    %5394 = vmatpush1.msra.mxu0 0.0
    %5395 = vmatprep.subr.mxu0 0.0
    %5396 = vmatpush1.msra.mxu0 0.0
    %5397 = vmatprep.subr.mxu0 0.0
    %5398 = vmatpush1.msra.mxu0 %v5293
    %5399 = vmatprep.subr.mxu0 0.0
    %5400 = vmatpush1.msra.mxu0 %v5292
    %5401 = vmatprep.subr.mxu0 0.0
    %5402 = vmatpush1.msra.mxu0 %v5291
    %5403 = vmatprep.subr.mxu0 0.0
    %5404 = vmatpush1.msra.mxu0 %v5290
    %5405 = vmatprep.subr.mxu0 0.0
    %5406 = vmatpush2.msra.mxu0 0.0
    %5407 = vmatprep.subr.mxu0 0.0
    %5408 = vmatpush2.msra.mxu0 0.0
    %5409 = vmatprep.subr.mxu0 0.0
    %5410 = vmatpush2.msra.mxu0 0.0
    %5411 = vmatprep.subr.mxu0 0.0
    %5412 = vmatpush2.msra.mxu0 0.0
    %5413 = vmatprep.subr.mxu0 0.0
    %5414 = vmatpush2.msra.mxu0 0.0
    %5415 = vmatprep.subr.mxu0 0.0
    %5416 = vmatpush2.msra.mxu0 0.0
    %5417 = vmatprep.subr.mxu0 0.0
    %5418 = vmatpush2.msra.mxu0 0.0
    %5419 = vmatprep.subr.mxu0 0.0
    %5420 = vmatpush2.msra.mxu0 0.0
    %5421 = vmatprep.subr.mxu0 0.0
    %5422 = vmatpush2.msra.mxu0 0.0
    %5423 = vmatprep.subr.mxu0 0.0
    %5424 = vmatpush2.msra.mxu0 0.0
    %5425 = vmatprep.subr.mxu0 0.0
    %5426 = vmatpush2.msra.mxu0 0.0
    %5427 = vmatprep.subr.mxu0 0.0
    %5428 = vmatpush2.msra.mxu0 0.0
    %5429 = vmatprep.subr.mxu0 0.0
    %5430 = vmatpush2.msra.mxu0 0.0
    %5431 = vmatprep.subr.mxu0 0.0
    %5432 = vmatpush2.msra.mxu0 0.0
    %5433 = vmatprep.subr.mxu0 0.0
    %5434 = vmatpush2.msra.mxu0 0.0
    %5435 = vmatprep.subr.mxu0 0.0
    %5436 = vmatpush2.msra.mxu0 0.0
    %5437 = vmatprep.mubr.f32.mxu0 0.0
    %5438 = vmatmul.mubr.f32.gmra.mxu0 %v5371
    %v5439 = vpop.f32.mrf.mxu0
    %v5440 = vadd.f32 %v5365, %v5439
    %v5441 = vpop.f32.mrf.mxu0
    %5442 = vdwg.mxu0
    %v5443 = vld [vmem:[%s16] sm:$0x1]
    %v5445 = vlaneseq
    %v5446 = vshrl.u32 %v5445, 7
    %v5447 = vsub.s32 0, %v5446
    %v5448 = vrot.slane %v5443, %v5447
    %v5450 = vadd.f32 %v5440, %v5448
    %v5451 = vxor.u32 %v5450, 2147483648
    %v5452 = vmul.f32 %v5451, 1.442695
    %v5453 = vpow.pop %v5452
    %v5454 = vadd.f32 %v5453, 1.0
    %v5455 = vrcp.pop %v5454
    %v5456 = vmul.f32 1.0, %v5455
    %v5457 = vtanh.pop %v5450
    %v5458 = vmul.f32 %v5456, %v4909
    %5460 = vrot.lane.b32.xlu0 %v5457, 64
    %v5461 = vpop.permute.xlu0 %5460
    %v5463 = vmul.f32 %v5456, %v5461
    %5465 = vrot.lane.b32.xlu0 %v5463, 32
    %v5466 = vpop.permute.xlu0 %5465
    %v5468 = vadd.f32 %v5458, %v5466
    %v5469 = vtanh.pop %v5468
    %5471 = vrot.lane.b32.xlu0 %v5469, 64
    %v5472 = vpop.permute.xlu0 %5471
    %v5474 = vmul.f32 %v5456, %v5472
    %v5475 = vld [vmem:[%s17] sm:$0xff]
    %v5476 = vld [vmem:[%s17 + $0x8] sm:$0xff]
    %v5477 = vld [vmem:[%s17 + $0x10] sm:$0xff]
    %v5478 = vld [vmem:[%s17 + $0x18] sm:$0xff]
    %v5479 = vld [vmem:[%s18] sm:$0x1]
    %v5481 = vlaneseq
    %v5482 = vshrl.u32 %v5481, 7
    %v5483 = vsub.s32 0, %v5482
    %v5484 = vrot.slane %v5479, %v5483
    %5487 = vrot.lane.b32.xlu0 %v5474, 32
    %v5488 = vpop.permute.xlu0 %5487
    %v5489 = vsel %vm290, %v5488, 0
    %5491 = vmatprep.subr.mxu0 0.0
    %5492 = vmatpush1.msra.mxu0 0.0
    %5493 = vmatprep.subr.mxu0 0.0
    %5494 = vmatpush1.msra.mxu0 0.0
    %5495 = vmatprep.subr.mxu0 0.0
    %5496 = vmatpush1.msra.mxu0 0.0
    %5497 = vmatprep.subr.mxu0 0.0
    %5498 = vmatpush1.msra.mxu0 0.0
    %5499 = vmatprep.subr.mxu0 0.0
    %5500 = vmatpush1.msra.mxu0 0.0
    %5501 = vmatprep.subr.mxu0 0.0
    %5502 = vmatpush1.msra.mxu0 0.0
    %5503 = vmatprep.subr.mxu0 0.0
    %5504 = vmatpush1.msra.mxu0 0.0
    %5505 = vmatprep.subr.mxu0 0.0
    %5506 = vmatpush1.msra.mxu0 0.0
    %5507 = vmatprep.subr.mxu0 0.0
    %5508 = vmatpush1.msra.mxu0 0.0
    %5509 = vmatprep.subr.mxu0 0.0
    %5510 = vmatpush1.msra.mxu0 0.0
    %5511 = vmatprep.subr.mxu0 0.0
    %5512 = vmatpush1.msra.mxu0 0.0
    %5513 = vmatprep.subr.mxu0 0.0
    %5514 = vmatpush1.msra.mxu0 0.0
    %5515 = vmatprep.subr.mxu0 0.0
    %5516 = vmatpush1.msra.mxu0 %v5478
    %5517 = vmatprep.subr.mxu0 0.0
    %5518 = vmatpush1.msra.mxu0 %v5477
    %5519 = vmatprep.subr.mxu0 0.0
    %5520 = vmatpush1.msra.mxu0 %v5476
    %5521 = vmatprep.subr.mxu0 0.0
    %5522 = vmatpush1.msra.mxu0 %v5475
    %5523 = vmatprep.subr.mxu0 0.0
    %5524 = vmatpush2.msra.mxu0 0.0
    %5525 = vmatprep.subr.mxu0 0.0
    %5526 = vmatpush2.msra.mxu0 0.0
    %5527 = vmatprep.subr.mxu0 0.0
    %5528 = vmatpush2.msra.mxu0 0.0
    %5529 = vmatprep.subr.mxu0 0.0
    %5530 = vmatpush2.msra.mxu0 0.0
    %5531 = vmatprep.subr.mxu0 0.0
    %5532 = vmatpush2.msra.mxu0 0.0
    %5533 = vmatprep.subr.mxu0 0.0
    %5534 = vmatpush2.msra.mxu0 0.0
    %5535 = vmatprep.subr.mxu0 0.0
    %5536 = vmatpush2.msra.mxu0 0.0
    %5537 = vmatprep.subr.mxu0 0.0
    %5538 = vmatpush2.msra.mxu0 0.0
    %5539 = vmatprep.subr.mxu0 0.0
    %5540 = vmatpush2.msra.mxu0 0.0
    %5541 = vmatprep.subr.mxu0 0.0
    %5542 = vmatpush2.msra.mxu0 0.0
    %5543 = vmatprep.subr.mxu0 0.0
    %5544 = vmatpush2.msra.mxu0 0.0
    %5545 = vmatprep.subr.mxu0 0.0
    %5546 = vmatpush2.msra.mxu0 0.0
    %5547 = vmatprep.subr.mxu0 0.0
    %5548 = vmatpush2.msra.mxu0 0.0
    %5549 = vmatprep.subr.mxu0 0.0
    %5550 = vmatpush2.msra.mxu0 0.0
    %5551 = vmatprep.subr.mxu0 0.0
    %5552 = vmatpush2.msra.mxu0 0.0
    %5553 = vmatprep.subr.mxu0 0.0
    %5554 = vmatpush2.msra.mxu0 0.0
    %5555 = vmatprep.mubr.f32.mxu0 0.0
    %5556 = vmatmul.mubr.f32.gmra.mxu0 %v5489
    %v5557 = vpop.f32.mrf.mxu0
    %v5558 = vadd.f32 %v5484, %v5557
    %v5559 = vpop.f32.mrf.mxu0
    %5560 = vdwg.mxu0
    %s5561 = scalar_lea.vmem %s19, 32
    %5562 = vst [vmem:[%s5561] sm:$0xff] %v5558
    %5563 = vst.msk [vmem:[#allocation2] sm:$0xff] %vm290, %v2780
    %s5564 = sld [smem:[#allocation3 + $0x4]]
    %p5565 = scmp.eq.s32.totalorder %s5564, 0
    // Predicated region
    $region98: #{seq2seq_forward.1} parent=1 // pred_check
      %p5566 = pneg %p5565
    $region99: #{seq2seq_forward.1} parent=1 // pred_check_branch
      %5568 = sbr.rel (%p5566) target = $region101
    $region100: #{seq2seq_forward.1} parent=1 // pred_region
      %5569 = vmax.xlane.f32.xlu0 %v5558
      %v5570 = vpop.xlane.xlu0 %5569
      %vm5571 = vcmp.ge.f32.partialorder %v5558, %v5570
      %v5572 = vsel %vm5571, %v93, 128.0
      %5573 = vmin.xlane.f32.xlu0 %v5572
      %v5574 = vpop.xlane.xlu0 %5573
      %vm5575 = vcmp.eq.f32.partialorder %v93, %v5574
      %v5576 = vsel %vm5575, 1, 0
      %v5577 = vcvt.s32.f32 %v5576
      %v5578 = vld [vmem:[%s4] sm:$0xff]
      %v5579 = vld [vmem:[%s4 + $0x8] sm:$0xff]
      %v5580 = vld [vmem:[%s4 + $0x10] sm:$0xff]
      %v5581 = vld [vmem:[%s4 + $0x18] sm:$0xff]
      %v5582 = vld [vmem:[%s4 + $0x20] sm:$0xff]
      %v5583 = vld [vmem:[%s4 + $0x28] sm:$0xff]
      %v5584 = vld [vmem:[%s4 + $0x30] sm:$0xff]
      %v5585 = vld [vmem:[%s4 + $0x38] sm:$0xff]
      %v5586 = vld [vmem:[%s4 + $0x40] sm:$0xff]
      %v5587 = vld [vmem:[%s4 + $0x48] sm:$0xff]
      %v5588 = vld [vmem:[%s4 + $0x50] sm:$0xff]
      %v5589 = vld [vmem:[%s4 + $0x58] sm:$0xff]
      %v5590 = vld [vmem:[%s4 + $0x60] sm:$0xff]
      %v5591 = vld [vmem:[%s4 + $0x68] sm:$0xff]
      %v5592 = vld [vmem:[%s4 + $0x70] sm:$0xff]
      %v5593 = vld [vmem:[%s4 + $0x78] sm:$0xff]
      %5594 = vmatprep.subr.mxu0 0.0
      %5595 = vmatpush1.msra.mxu0 %v5593
      %5596 = vmatprep.subr.mxu0 0.0
      %5597 = vmatpush1.msra.mxu0 %v5592
      %5598 = vmatprep.subr.mxu0 0.0
      %5599 = vmatpush1.msra.mxu0 %v5591
      %5600 = vmatprep.subr.mxu0 0.0
      %5601 = vmatpush1.msra.mxu0 %v5590
      %5602 = vmatprep.subr.mxu0 0.0
      %5603 = vmatpush1.msra.mxu0 %v5589
      %5604 = vmatprep.subr.mxu0 0.0
      %5605 = vmatpush1.msra.mxu0 %v5588
      %5606 = vmatprep.subr.mxu0 0.0
      %5607 = vmatpush1.msra.mxu0 %v5587
      %5608 = vmatprep.subr.mxu0 0.0
      %5609 = vmatpush1.msra.mxu0 %v5586
      %5610 = vmatprep.subr.mxu0 0.0
      %5611 = vmatpush1.msra.mxu0 %v5585
      %5612 = vmatprep.subr.mxu0 0.0
      %5613 = vmatpush1.msra.mxu0 %v5584
      %5614 = vmatprep.subr.mxu0 0.0
      %5615 = vmatpush1.msra.mxu0 %v5583
      %5616 = vmatprep.subr.mxu0 0.0
      %5617 = vmatpush1.msra.mxu0 %v5582
      %5618 = vmatprep.subr.mxu0 0.0
      %5619 = vmatpush1.msra.mxu0 %v5581
      %5620 = vmatprep.subr.mxu0 0.0
      %5621 = vmatpush1.msra.mxu0 %v5580
      %5622 = vmatprep.subr.mxu0 0.0
      %5623 = vmatpush1.msra.mxu0 %v5579
      %5624 = vmatprep.subr.mxu0 0.0
      %5625 = vmatpush1.msra.mxu0 %v5578
      %5626 = vmatprep.subr.mxu0 0.0
      %5627 = vmatpush2.msra.mxu0 0.0
      %5628 = vmatprep.subr.mxu0 0.0
      %5629 = vmatpush2.msra.mxu0 0.0
      %5630 = vmatprep.subr.mxu0 0.0
      %5631 = vmatpush2.msra.mxu0 0.0
      %5632 = vmatprep.subr.mxu0 0.0
      %5633 = vmatpush2.msra.mxu0 0.0
      %5634 = vmatprep.subr.mxu0 0.0
      %5635 = vmatpush2.msra.mxu0 0.0
      %5636 = vmatprep.subr.mxu0 0.0
      %5637 = vmatpush2.msra.mxu0 0.0
      %5638 = vmatprep.subr.mxu0 0.0
      %5639 = vmatpush2.msra.mxu0 0.0
      %5640 = vmatprep.subr.mxu0 0.0
      %5641 = vmatpush2.msra.mxu0 0.0
      %5642 = vmatprep.subr.mxu0 0.0
      %5643 = vmatpush2.msra.mxu0 0.0
      %5644 = vmatprep.subr.mxu0 0.0
      %5645 = vmatpush2.msra.mxu0 0.0
      %5646 = vmatprep.subr.mxu0 0.0
      %5647 = vmatpush2.msra.mxu0 0.0
      %5648 = vmatprep.subr.mxu0 0.0
      %5649 = vmatpush2.msra.mxu0 0.0
      %5650 = vmatprep.subr.mxu0 0.0
      %5651 = vmatpush2.msra.mxu0 0.0
      %5652 = vmatprep.subr.mxu0 0.0
      %5653 = vmatpush2.msra.mxu0 0.0
      %5654 = vmatprep.subr.mxu0 0.0
      %5655 = vmatpush2.msra.mxu0 0.0
      %5656 = vmatprep.subr.mxu0 0.0
      %5657 = vmatpush2.msra.mxu0 0.0
      %5658 = vmatprep.mubr.f32.mxu0 0.0
      %5659 = vmatmul.mubr.f32.gmra.mxu0 %v5577
      %v5660 = vpop.f32.mrf.mxu0
      %v5661 = vadd.f32 0.0, %v5660
      %v5662 = vpop.f32.mrf.mxu0
      %5663 = vdwg.mxu0
      %5664 = vst.msk [vmem:[#allocation2] sm:$0xff] %vm290, %v5661
    $region101: #{seq2seq_forward.1} parent=1 // pred_fallthru
      _
    %v5665 = vld [vmem:[#allocation2] sm:$0xff]
    %v5666 = vld [vmem:[%s11] sm:$0xff]
    %v5667 = vld [vmem:[%s11 + $0x8] sm:$0xff]
    %v5668 = vld [vmem:[%s11 + $0x10] sm:$0xff]
    %v5669 = vld [vmem:[%s11 + $0x18] sm:$0xff]
    %v5670 = vld [vmem:[%s13] sm:$0xff]
    %v5671 = vld [vmem:[%s13 + $0x8] sm:$0xff]
    %v5672 = vld [vmem:[%s13 + $0x10] sm:$0xff]
    %v5673 = vld [vmem:[%s13 + $0x18] sm:$0xff]
    %5674 = vmatprep.subr.mxu0 0.0
    %5675 = vmatpush1.msra.mxu0 0.0
    %5676 = vmatprep.subr.mxu0 0.0
    %5677 = vmatpush1.msra.mxu0 0.0
    %5678 = vmatprep.subr.mxu0 0.0
    %5679 = vmatpush1.msra.mxu0 0.0
    %5680 = vmatprep.subr.mxu0 0.0
    %5681 = vmatpush1.msra.mxu0 0.0
    %5682 = vmatprep.subr.mxu0 0.0
    %5683 = vmatpush1.msra.mxu0 0.0
    %5684 = vmatprep.subr.mxu0 0.0
    %5685 = vmatpush1.msra.mxu0 0.0
    %5686 = vmatprep.subr.mxu0 0.0
    %5687 = vmatpush1.msra.mxu0 0.0
    %5688 = vmatprep.subr.mxu0 0.0
    %5689 = vmatpush1.msra.mxu0 0.0
    %5690 = vmatprep.subr.mxu0 0.0
    %5691 = vmatpush1.msra.mxu0 0.0
    %5692 = vmatprep.subr.mxu0 0.0
    %5693 = vmatpush1.msra.mxu0 0.0
    %5694 = vmatprep.subr.mxu0 0.0
    %5695 = vmatpush1.msra.mxu0 0.0
    %5696 = vmatprep.subr.mxu0 0.0
    %5697 = vmatpush1.msra.mxu0 0.0
    %5698 = vmatprep.subr.mxu0 0.0
    %5699 = vmatpush1.msra.mxu0 %v5673
    %5700 = vmatprep.subr.mxu0 0.0
    %5701 = vmatpush1.msra.mxu0 %v5672
    %5702 = vmatprep.subr.mxu0 0.0
    %5703 = vmatpush1.msra.mxu0 %v5671
    %5704 = vmatprep.subr.mxu0 0.0
    %5705 = vmatpush1.msra.mxu0 %v5670
    %5706 = vmatprep.subr.mxu0 0.0
    %5707 = vmatpush2.msra.mxu0 0.0
    %5708 = vmatprep.subr.mxu0 0.0
    %5709 = vmatpush2.msra.mxu0 0.0
    %5710 = vmatprep.subr.mxu0 0.0
    %5711 = vmatpush2.msra.mxu0 0.0
    %5712 = vmatprep.subr.mxu0 0.0
    %5713 = vmatpush2.msra.mxu0 0.0
    %5714 = vmatprep.subr.mxu0 0.0
    %5715 = vmatpush2.msra.mxu0 0.0
    %5716 = vmatprep.subr.mxu0 0.0
    %5717 = vmatpush2.msra.mxu0 0.0
    %5718 = vmatprep.subr.mxu0 0.0
    %5719 = vmatpush2.msra.mxu0 0.0
    %5720 = vmatprep.subr.mxu0 0.0
    %5721 = vmatpush2.msra.mxu0 0.0
    %5722 = vmatprep.subr.mxu0 0.0
    %5723 = vmatpush2.msra.mxu0 0.0
    %5724 = vmatprep.subr.mxu0 0.0
    %5725 = vmatpush2.msra.mxu0 0.0
    %5726 = vmatprep.subr.mxu0 0.0
    %5727 = vmatpush2.msra.mxu0 0.0
    %5728 = vmatprep.subr.mxu0 0.0
    %5729 = vmatpush2.msra.mxu0 0.0
    %5730 = vmatprep.subr.mxu0 0.0
    %5731 = vmatpush2.msra.mxu0 0.0
    %5732 = vmatprep.subr.mxu0 0.0
    %5733 = vmatpush2.msra.mxu0 0.0
    %5734 = vmatprep.subr.mxu0 0.0
    %5735 = vmatpush2.msra.mxu0 0.0
    %5736 = vmatprep.subr.mxu0 0.0
    %5737 = vmatpush2.msra.mxu0 0.0
    %5738 = vmatprep.mubr.f32.mxu0 0.0
    %5739 = vmatmul.mubr.f32.gmra.mxu0 %v5371
    %v5740 = vpop.f32.mrf.mxu0
    %v5741 = vadd.f32 0.0, %v5740
    %v5742 = vpop.f32.mrf.mxu0
    %5743 = vdwg.mxu0
    %v5745 = vsel %vm290, %v5665, 0
    %5747 = vmatprep.subr.mxu0 0.0
    %5748 = vmatpush1.msra.mxu0 0.0
    %5749 = vmatprep.subr.mxu0 0.0
    %5750 = vmatpush1.msra.mxu0 0.0
    %5751 = vmatprep.subr.mxu0 0.0
    %5752 = vmatpush1.msra.mxu0 0.0
    %5753 = vmatprep.subr.mxu0 0.0
    %5754 = vmatpush1.msra.mxu0 0.0
    %5755 = vmatprep.subr.mxu0 0.0
    %5756 = vmatpush1.msra.mxu0 0.0
    %5757 = vmatprep.subr.mxu0 0.0
    %5758 = vmatpush1.msra.mxu0 0.0
    %5759 = vmatprep.subr.mxu0 0.0
    %5760 = vmatpush1.msra.mxu0 0.0
    %5761 = vmatprep.subr.mxu0 0.0
    %5762 = vmatpush1.msra.mxu0 0.0
    %5763 = vmatprep.subr.mxu0 0.0
    %5764 = vmatpush1.msra.mxu0 0.0
    %5765 = vmatprep.subr.mxu0 0.0
    %5766 = vmatpush1.msra.mxu0 0.0
    %5767 = vmatprep.subr.mxu0 0.0
    %5768 = vmatpush1.msra.mxu0 0.0
    %5769 = vmatprep.subr.mxu0 0.0
    %5770 = vmatpush1.msra.mxu0 0.0
    %5771 = vmatprep.subr.mxu0 0.0
    %5772 = vmatpush1.msra.mxu0 %v5669
    %5773 = vmatprep.subr.mxu0 0.0
    %5774 = vmatpush1.msra.mxu0 %v5668
    %5775 = vmatprep.subr.mxu0 0.0
    %5776 = vmatpush1.msra.mxu0 %v5667
    %5777 = vmatprep.subr.mxu0 0.0
    %5778 = vmatpush1.msra.mxu0 %v5666
    %5779 = vmatprep.subr.mxu0 0.0
    %5780 = vmatpush2.msra.mxu0 0.0
    %5781 = vmatprep.subr.mxu0 0.0
    %5782 = vmatpush2.msra.mxu0 0.0
    %5783 = vmatprep.subr.mxu0 0.0
    %5784 = vmatpush2.msra.mxu0 0.0
    %5785 = vmatprep.subr.mxu0 0.0
    %5786 = vmatpush2.msra.mxu0 0.0
    %5787 = vmatprep.subr.mxu0 0.0
    %5788 = vmatpush2.msra.mxu0 0.0
    %5789 = vmatprep.subr.mxu0 0.0
    %5790 = vmatpush2.msra.mxu0 0.0
    %5791 = vmatprep.subr.mxu0 0.0
    %5792 = vmatpush2.msra.mxu0 0.0
    %5793 = vmatprep.subr.mxu0 0.0
    %5794 = vmatpush2.msra.mxu0 0.0
    %5795 = vmatprep.subr.mxu0 0.0
    %5796 = vmatpush2.msra.mxu0 0.0
    %5797 = vmatprep.subr.mxu0 0.0
    %5798 = vmatpush2.msra.mxu0 0.0
    %5799 = vmatprep.subr.mxu0 0.0
    %5800 = vmatpush2.msra.mxu0 0.0
    %5801 = vmatprep.subr.mxu0 0.0
    %5802 = vmatpush2.msra.mxu0 0.0
    %5803 = vmatprep.subr.mxu0 0.0
    %5804 = vmatpush2.msra.mxu0 0.0
    %5805 = vmatprep.subr.mxu0 0.0
    %5806 = vmatpush2.msra.mxu0 0.0
    %5807 = vmatprep.subr.mxu0 0.0
    %5808 = vmatpush2.msra.mxu0 0.0
    %5809 = vmatprep.subr.mxu0 0.0
    %5810 = vmatpush2.msra.mxu0 0.0
    %5811 = vmatprep.mubr.f32.mxu0 0.0
    %5812 = vmatmul.mubr.f32.gmra.mxu0 %v5745
    %v5813 = vpop.f32.mrf.mxu0
    %v5814 = vadd.f32 %v5741, %v5813
    %v5815 = vpop.f32.mrf.mxu0
    %5816 = vdwg.mxu0
    %v5817 = vld [vmem:[%s15] sm:$0x1]
    %v5819 = vlaneseq
    %v5820 = vshrl.u32 %v5819, 7
    %v5821 = vsub.s32 0, %v5820
    %v5822 = vrot.slane %v5817, %v5821
    %v5824 = vadd.f32 %v5814, %v5822
    %v5825 = vxor.u32 %v5824, 2147483648
    %v5826 = vmul.f32 %v5825, 1.442695
    %v5827 = vpow.pop %v5826
    %v5828 = vadd.f32 %v5827, 1.0
    %v5829 = vrcp.pop %v5828
    %v5830 = vmul.f32 1.0, %v5829
    %v5831 = vtanh.pop %v5824
    %v5832 = vmul.f32 %v5830, %v5283
    %5834 = vrot.lane.b32.xlu0 %v5831, 64
    %v5835 = vpop.permute.xlu0 %5834
    %v5837 = vmul.f32 %v5830, %v5835
    %5839 = vrot.lane.b32.xlu0 %v5837, 32
    %v5840 = vpop.permute.xlu0 %5839
    %v5842 = vadd.f32 %v5832, %v5840
    %v5843 = vtanh.pop %v5842
    %5845 = vrot.lane.b32.xlu0 %v5843, 64
    %v5846 = vpop.permute.xlu0 %5845
    %v5848 = vmul.f32 %v5830, %v5846
    %v5849 = vld [vmem:[%s12] sm:$0xff]
    %v5850 = vld [vmem:[%s12 + $0x8] sm:$0xff]
    %v5851 = vld [vmem:[%s12 + $0x10] sm:$0xff]
    %v5852 = vld [vmem:[%s12 + $0x18] sm:$0xff]
    %v5853 = vld [vmem:[%s14] sm:$0xff]
    %v5854 = vld [vmem:[%s14 + $0x8] sm:$0xff]
    %v5855 = vld [vmem:[%s14 + $0x10] sm:$0xff]
    %v5856 = vld [vmem:[%s14 + $0x18] sm:$0xff]
    %5857 = vmatprep.subr.mxu0 0.0
    %5858 = vmatpush1.msra.mxu0 0.0
    %5859 = vmatprep.subr.mxu0 0.0
    %5860 = vmatpush1.msra.mxu0 0.0
    %5861 = vmatprep.subr.mxu0 0.0
    %5862 = vmatpush1.msra.mxu0 0.0
    %5863 = vmatprep.subr.mxu0 0.0
    %5864 = vmatpush1.msra.mxu0 0.0
    %5865 = vmatprep.subr.mxu0 0.0
    %5866 = vmatpush1.msra.mxu0 0.0
    %5867 = vmatprep.subr.mxu0 0.0
    %5868 = vmatpush1.msra.mxu0 0.0
    %5869 = vmatprep.subr.mxu0 0.0
    %5870 = vmatpush1.msra.mxu0 0.0
    %5871 = vmatprep.subr.mxu0 0.0
    %5872 = vmatpush1.msra.mxu0 0.0
    %5873 = vmatprep.subr.mxu0 0.0
    %5874 = vmatpush1.msra.mxu0 0.0
    %5875 = vmatprep.subr.mxu0 0.0
    %5876 = vmatpush1.msra.mxu0 0.0
    %5877 = vmatprep.subr.mxu0 0.0
    %5878 = vmatpush1.msra.mxu0 0.0
    %5879 = vmatprep.subr.mxu0 0.0
    %5880 = vmatpush1.msra.mxu0 0.0
    %5881 = vmatprep.subr.mxu0 0.0
    %5882 = vmatpush1.msra.mxu0 %v5856
    %5883 = vmatprep.subr.mxu0 0.0
    %5884 = vmatpush1.msra.mxu0 %v5855
    %5885 = vmatprep.subr.mxu0 0.0
    %5886 = vmatpush1.msra.mxu0 %v5854
    %5887 = vmatprep.subr.mxu0 0.0
    %5888 = vmatpush1.msra.mxu0 %v5853
    %5889 = vmatprep.subr.mxu0 0.0
    %5890 = vmatpush2.msra.mxu0 0.0
    %5891 = vmatprep.subr.mxu0 0.0
    %5892 = vmatpush2.msra.mxu0 0.0
    %5893 = vmatprep.subr.mxu0 0.0
    %5894 = vmatpush2.msra.mxu0 0.0
    %5895 = vmatprep.subr.mxu0 0.0
    %5896 = vmatpush2.msra.mxu0 0.0
    %5897 = vmatprep.subr.mxu0 0.0
    %5898 = vmatpush2.msra.mxu0 0.0
    %5899 = vmatprep.subr.mxu0 0.0
    %5900 = vmatpush2.msra.mxu0 0.0
    %5901 = vmatprep.subr.mxu0 0.0
    %5902 = vmatpush2.msra.mxu0 0.0
    %5903 = vmatprep.subr.mxu0 0.0
    %5904 = vmatpush2.msra.mxu0 0.0
    %5905 = vmatprep.subr.mxu0 0.0
    %5906 = vmatpush2.msra.mxu0 0.0
    %5907 = vmatprep.subr.mxu0 0.0
    %5908 = vmatpush2.msra.mxu0 0.0
    %5909 = vmatprep.subr.mxu0 0.0
    %5910 = vmatpush2.msra.mxu0 0.0
    %5911 = vmatprep.subr.mxu0 0.0
    %5912 = vmatpush2.msra.mxu0 0.0
    %5913 = vmatprep.subr.mxu0 0.0
    %5914 = vmatpush2.msra.mxu0 0.0
    %5915 = vmatprep.subr.mxu0 0.0
    %5916 = vmatpush2.msra.mxu0 0.0
    %5917 = vmatprep.subr.mxu0 0.0
    %5918 = vmatpush2.msra.mxu0 0.0
    %5919 = vmatprep.subr.mxu0 0.0
    %5920 = vmatpush2.msra.mxu0 0.0
    %5921 = vmatprep.mubr.f32.mxu0 0.0
    %5922 = vmatmul.mubr.f32.gmra.mxu0 %v5489
    %v5923 = vpop.f32.mrf.mxu0
    %v5924 = vadd.f32 0.0, %v5923
    %v5925 = vpop.f32.mrf.mxu0
    %5926 = vdwg.mxu0
    %5928 = vrot.lane.b32.xlu0 %v5848, 32
    %v5929 = vpop.permute.xlu0 %5928
    %v5930 = vsel %vm290, %v5929, 0
    %5932 = vmatprep.subr.mxu0 0.0
    %5933 = vmatpush1.msra.mxu0 0.0
    %5934 = vmatprep.subr.mxu0 0.0
    %5935 = vmatpush1.msra.mxu0 0.0
    %5936 = vmatprep.subr.mxu0 0.0
    %5937 = vmatpush1.msra.mxu0 0.0
    %5938 = vmatprep.subr.mxu0 0.0
    %5939 = vmatpush1.msra.mxu0 0.0
    %5940 = vmatprep.subr.mxu0 0.0
    %5941 = vmatpush1.msra.mxu0 0.0
    %5942 = vmatprep.subr.mxu0 0.0
    %5943 = vmatpush1.msra.mxu0 0.0
    %5944 = vmatprep.subr.mxu0 0.0
    %5945 = vmatpush1.msra.mxu0 0.0
    %5946 = vmatprep.subr.mxu0 0.0
    %5947 = vmatpush1.msra.mxu0 0.0
    %5948 = vmatprep.subr.mxu0 0.0
    %5949 = vmatpush1.msra.mxu0 0.0
    %5950 = vmatprep.subr.mxu0 0.0
    %5951 = vmatpush1.msra.mxu0 0.0
    %5952 = vmatprep.subr.mxu0 0.0
    %5953 = vmatpush1.msra.mxu0 0.0
    %5954 = vmatprep.subr.mxu0 0.0
    %5955 = vmatpush1.msra.mxu0 0.0
    %5956 = vmatprep.subr.mxu0 0.0
    %5957 = vmatpush1.msra.mxu0 %v5852
    %5958 = vmatprep.subr.mxu0 0.0
    %5959 = vmatpush1.msra.mxu0 %v5851
    %5960 = vmatprep.subr.mxu0 0.0
    %5961 = vmatpush1.msra.mxu0 %v5850
    %5962 = vmatprep.subr.mxu0 0.0
    %5963 = vmatpush1.msra.mxu0 %v5849
    %5964 = vmatprep.subr.mxu0 0.0
    %5965 = vmatpush2.msra.mxu0 0.0
    %5966 = vmatprep.subr.mxu0 0.0
    %5967 = vmatpush2.msra.mxu0 0.0
    %5968 = vmatprep.subr.mxu0 0.0
    %5969 = vmatpush2.msra.mxu0 0.0
    %5970 = vmatprep.subr.mxu0 0.0
    %5971 = vmatpush2.msra.mxu0 0.0
    %5972 = vmatprep.subr.mxu0 0.0
    %5973 = vmatpush2.msra.mxu0 0.0
    %5974 = vmatprep.subr.mxu0 0.0
    %5975 = vmatpush2.msra.mxu0 0.0
    %5976 = vmatprep.subr.mxu0 0.0
    %5977 = vmatpush2.msra.mxu0 0.0
    %5978 = vmatprep.subr.mxu0 0.0
    %5979 = vmatpush2.msra.mxu0 0.0
    %5980 = vmatprep.subr.mxu0 0.0
    %5981 = vmatpush2.msra.mxu0 0.0
    %5982 = vmatprep.subr.mxu0 0.0
    %5983 = vmatpush2.msra.mxu0 0.0
    %5984 = vmatprep.subr.mxu0 0.0
    %5985 = vmatpush2.msra.mxu0 0.0
    %5986 = vmatprep.subr.mxu0 0.0
    %5987 = vmatpush2.msra.mxu0 0.0
    %5988 = vmatprep.subr.mxu0 0.0
    %5989 = vmatpush2.msra.mxu0 0.0
    %5990 = vmatprep.subr.mxu0 0.0
    %5991 = vmatpush2.msra.mxu0 0.0
    %5992 = vmatprep.subr.mxu0 0.0
    %5993 = vmatpush2.msra.mxu0 0.0
    %5994 = vmatprep.subr.mxu0 0.0
    %5995 = vmatpush2.msra.mxu0 0.0
    %5996 = vmatprep.mubr.f32.mxu0 0.0
    %5997 = vmatmul.mubr.f32.gmra.mxu0 %v5930
    %v5998 = vpop.f32.mrf.mxu0
    %v5999 = vadd.f32 %v5924, %v5998
    %v6000 = vpop.f32.mrf.mxu0
    %6001 = vdwg.mxu0
    %v6002 = vld [vmem:[%s16] sm:$0x1]
    %v6004 = vlaneseq
    %v6005 = vshrl.u32 %v6004, 7
    %v6006 = vsub.s32 0, %v6005
    %v6007 = vrot.slane %v6002, %v6006
    %v6009 = vadd.f32 %v5999, %v6007
    %v6010 = vxor.u32 %v6009, 2147483648
    %v6011 = vmul.f32 %v6010, 1.442695
    %v6012 = vpow.pop %v6011
    %v6013 = vadd.f32 %v6012, 1.0
    %v6014 = vrcp.pop %v6013
    %v6015 = vmul.f32 1.0, %v6014
    %v6016 = vtanh.pop %v6009
    %v6017 = vmul.f32 %v6015, %v5468
    %6019 = vrot.lane.b32.xlu0 %v6016, 64
    %v6020 = vpop.permute.xlu0 %6019
    %v6022 = vmul.f32 %v6015, %v6020
    %6024 = vrot.lane.b32.xlu0 %v6022, 32
    %v6025 = vpop.permute.xlu0 %6024
    %v6027 = vadd.f32 %v6017, %v6025
    %v6028 = vtanh.pop %v6027
    %6030 = vrot.lane.b32.xlu0 %v6028, 64
    %v6031 = vpop.permute.xlu0 %6030
    %v6033 = vmul.f32 %v6015, %v6031
    %v6034 = vld [vmem:[%s17] sm:$0xff]
    %v6035 = vld [vmem:[%s17 + $0x8] sm:$0xff]
    %v6036 = vld [vmem:[%s17 + $0x10] sm:$0xff]
    %v6037 = vld [vmem:[%s17 + $0x18] sm:$0xff]
    %v6038 = vld [vmem:[%s18] sm:$0x1]
    %v6040 = vlaneseq
    %v6041 = vshrl.u32 %v6040, 7
    %v6042 = vsub.s32 0, %v6041
    %v6043 = vrot.slane %v6038, %v6042
    %6046 = vrot.lane.b32.xlu0 %v6033, 32
    %v6047 = vpop.permute.xlu0 %6046
    %v6048 = vsel %vm290, %v6047, 0
    %6050 = vmatprep.subr.mxu0 0.0
    %6051 = vmatpush1.msra.mxu0 0.0
    %6052 = vmatprep.subr.mxu0 0.0
    %6053 = vmatpush1.msra.mxu0 0.0
    %6054 = vmatprep.subr.mxu0 0.0
    %6055 = vmatpush1.msra.mxu0 0.0
    %6056 = vmatprep.subr.mxu0 0.0
    %6057 = vmatpush1.msra.mxu0 0.0
    %6058 = vmatprep.subr.mxu0 0.0
    %6059 = vmatpush1.msra.mxu0 0.0
    %6060 = vmatprep.subr.mxu0 0.0
    %6061 = vmatpush1.msra.mxu0 0.0
    %6062 = vmatprep.subr.mxu0 0.0
    %6063 = vmatpush1.msra.mxu0 0.0
    %6064 = vmatprep.subr.mxu0 0.0
    %6065 = vmatpush1.msra.mxu0 0.0
    %6066 = vmatprep.subr.mxu0 0.0
    %6067 = vmatpush1.msra.mxu0 0.0
    %6068 = vmatprep.subr.mxu0 0.0
    %6069 = vmatpush1.msra.mxu0 0.0
    %6070 = vmatprep.subr.mxu0 0.0
    %6071 = vmatpush1.msra.mxu0 0.0
    %6072 = vmatprep.subr.mxu0 0.0
    %6073 = vmatpush1.msra.mxu0 0.0
    %6074 = vmatprep.subr.mxu0 0.0
    %6075 = vmatpush1.msra.mxu0 %v6037
    %6076 = vmatprep.subr.mxu0 0.0
    %6077 = vmatpush1.msra.mxu0 %v6036
    %6078 = vmatprep.subr.mxu0 0.0
    %6079 = vmatpush1.msra.mxu0 %v6035
    %6080 = vmatprep.subr.mxu0 0.0
    %6081 = vmatpush1.msra.mxu0 %v6034
    %6082 = vmatprep.subr.mxu0 0.0
    %6083 = vmatpush2.msra.mxu0 0.0
    %6084 = vmatprep.subr.mxu0 0.0
    %6085 = vmatpush2.msra.mxu0 0.0
    %6086 = vmatprep.subr.mxu0 0.0
    %6087 = vmatpush2.msra.mxu0 0.0
    %6088 = vmatprep.subr.mxu0 0.0
    %6089 = vmatpush2.msra.mxu0 0.0
    %6090 = vmatprep.subr.mxu0 0.0
    %6091 = vmatpush2.msra.mxu0 0.0
    %6092 = vmatprep.subr.mxu0 0.0
    %6093 = vmatpush2.msra.mxu0 0.0
    %6094 = vmatprep.subr.mxu0 0.0
    %6095 = vmatpush2.msra.mxu0 0.0
    %6096 = vmatprep.subr.mxu0 0.0
    %6097 = vmatpush2.msra.mxu0 0.0
    %6098 = vmatprep.subr.mxu0 0.0
    %6099 = vmatpush2.msra.mxu0 0.0
    %6100 = vmatprep.subr.mxu0 0.0
    %6101 = vmatpush2.msra.mxu0 0.0
    %6102 = vmatprep.subr.mxu0 0.0
    %6103 = vmatpush2.msra.mxu0 0.0
    %6104 = vmatprep.subr.mxu0 0.0
    %6105 = vmatpush2.msra.mxu0 0.0
    %6106 = vmatprep.subr.mxu0 0.0
    %6107 = vmatpush2.msra.mxu0 0.0
    %6108 = vmatprep.subr.mxu0 0.0
    %6109 = vmatpush2.msra.mxu0 0.0
    %6110 = vmatprep.subr.mxu0 0.0
    %6111 = vmatpush2.msra.mxu0 0.0
    %6112 = vmatprep.subr.mxu0 0.0
    %6113 = vmatpush2.msra.mxu0 0.0
    %6114 = vmatprep.mubr.f32.mxu0 0.0
    %6115 = vmatmul.mubr.f32.gmra.mxu0 %v6048
    %v6116 = vpop.f32.mrf.mxu0
    %v6117 = vadd.f32 %v6043, %v6116
    %v6118 = vpop.f32.mrf.mxu0
    %6119 = vdwg.mxu0
    %s6120 = scalar_lea.vmem %s19, 40
    %6121 = vst [vmem:[%s6120] sm:$0xff] %v6117
    %6122 = vst.msk [vmem:[#allocation2] sm:$0xff] %vm290, %v2785
    %s6123 = sld [smem:[#allocation3 + $0x5]]
    %p6124 = scmp.eq.s32.totalorder %s6123, 0
    // Predicated region
    $region102: #{seq2seq_forward.1} parent=1 // pred_check
      %p6125 = pneg %p6124
    $region103: #{seq2seq_forward.1} parent=1 // pred_check_branch
      %6127 = sbr.rel (%p6125) target = $region105
    $region104: #{seq2seq_forward.1} parent=1 // pred_region
      %6128 = vmax.xlane.f32.xlu0 %v6117
      %v6129 = vpop.xlane.xlu0 %6128
      %vm6130 = vcmp.ge.f32.partialorder %v6117, %v6129
      %v6131 = vsel %vm6130, %v93, 128.0
      %6132 = vmin.xlane.f32.xlu0 %v6131
      %v6133 = vpop.xlane.xlu0 %6132
      %vm6134 = vcmp.eq.f32.partialorder %v93, %v6133
      %v6135 = vsel %vm6134, 1, 0
      %v6136 = vcvt.s32.f32 %v6135
      %v6137 = vld [vmem:[%s4] sm:$0xff]
      %v6138 = vld [vmem:[%s4 + $0x8] sm:$0xff]
      %v6139 = vld [vmem:[%s4 + $0x10] sm:$0xff]
      %v6140 = vld [vmem:[%s4 + $0x18] sm:$0xff]
      %v6141 = vld [vmem:[%s4 + $0x20] sm:$0xff]
      %v6142 = vld [vmem:[%s4 + $0x28] sm:$0xff]
      %v6143 = vld [vmem:[%s4 + $0x30] sm:$0xff]
      %v6144 = vld [vmem:[%s4 + $0x38] sm:$0xff]
      %v6145 = vld [vmem:[%s4 + $0x40] sm:$0xff]
      %v6146 = vld [vmem:[%s4 + $0x48] sm:$0xff]
      %v6147 = vld [vmem:[%s4 + $0x50] sm:$0xff]
      %v6148 = vld [vmem:[%s4 + $0x58] sm:$0xff]
      %v6149 = vld [vmem:[%s4 + $0x60] sm:$0xff]
      %v6150 = vld [vmem:[%s4 + $0x68] sm:$0xff]
      %v6151 = vld [vmem:[%s4 + $0x70] sm:$0xff]
      %v6152 = vld [vmem:[%s4 + $0x78] sm:$0xff]
      %6153 = vmatprep.subr.mxu0 0.0
      %6154 = vmatpush1.msra.mxu0 %v6152
      %6155 = vmatprep.subr.mxu0 0.0
      %6156 = vmatpush1.msra.mxu0 %v6151
      %6157 = vmatprep.subr.mxu0 0.0
      %6158 = vmatpush1.msra.mxu0 %v6150
      %6159 = vmatprep.subr.mxu0 0.0
      %6160 = vmatpush1.msra.mxu0 %v6149
      %6161 = vmatprep.subr.mxu0 0.0
      %6162 = vmatpush1.msra.mxu0 %v6148
      %6163 = vmatprep.subr.mxu0 0.0
      %6164 = vmatpush1.msra.mxu0 %v6147
      %6165 = vmatprep.subr.mxu0 0.0
      %6166 = vmatpush1.msra.mxu0 %v6146
      %6167 = vmatprep.subr.mxu0 0.0
      %6168 = vmatpush1.msra.mxu0 %v6145
      %6169 = vmatprep.subr.mxu0 0.0
      %6170 = vmatpush1.msra.mxu0 %v6144
      %6171 = vmatprep.subr.mxu0 0.0
      %6172 = vmatpush1.msra.mxu0 %v6143
      %6173 = vmatprep.subr.mxu0 0.0
      %6174 = vmatpush1.msra.mxu0 %v6142
      %6175 = vmatprep.subr.mxu0 0.0
      %6176 = vmatpush1.msra.mxu0 %v6141
      %6177 = vmatprep.subr.mxu0 0.0
      %6178 = vmatpush1.msra.mxu0 %v6140
      %6179 = vmatprep.subr.mxu0 0.0
      %6180 = vmatpush1.msra.mxu0 %v6139
      %6181 = vmatprep.subr.mxu0 0.0
      %6182 = vmatpush1.msra.mxu0 %v6138
      %6183 = vmatprep.subr.mxu0 0.0
      %6184 = vmatpush1.msra.mxu0 %v6137
      %6185 = vmatprep.subr.mxu0 0.0
      %6186 = vmatpush2.msra.mxu0 0.0
      %6187 = vmatprep.subr.mxu0 0.0
      %6188 = vmatpush2.msra.mxu0 0.0
      %6189 = vmatprep.subr.mxu0 0.0
      %6190 = vmatpush2.msra.mxu0 0.0
      %6191 = vmatprep.subr.mxu0 0.0
      %6192 = vmatpush2.msra.mxu0 0.0
      %6193 = vmatprep.subr.mxu0 0.0
      %6194 = vmatpush2.msra.mxu0 0.0
      %6195 = vmatprep.subr.mxu0 0.0
      %6196 = vmatpush2.msra.mxu0 0.0
      %6197 = vmatprep.subr.mxu0 0.0
      %6198 = vmatpush2.msra.mxu0 0.0
      %6199 = vmatprep.subr.mxu0 0.0
      %6200 = vmatpush2.msra.mxu0 0.0
      %6201 = vmatprep.subr.mxu0 0.0
      %6202 = vmatpush2.msra.mxu0 0.0
      %6203 = vmatprep.subr.mxu0 0.0
      %6204 = vmatpush2.msra.mxu0 0.0
      %6205 = vmatprep.subr.mxu0 0.0
      %6206 = vmatpush2.msra.mxu0 0.0
      %6207 = vmatprep.subr.mxu0 0.0
      %6208 = vmatpush2.msra.mxu0 0.0
      %6209 = vmatprep.subr.mxu0 0.0
      %6210 = vmatpush2.msra.mxu0 0.0
      %6211 = vmatprep.subr.mxu0 0.0
      %6212 = vmatpush2.msra.mxu0 0.0
      %6213 = vmatprep.subr.mxu0 0.0
      %6214 = vmatpush2.msra.mxu0 0.0
      %6215 = vmatprep.subr.mxu0 0.0
      %6216 = vmatpush2.msra.mxu0 0.0
      %6217 = vmatprep.mubr.f32.mxu0 0.0
      %6218 = vmatmul.mubr.f32.gmra.mxu0 %v6136
      %v6219 = vpop.f32.mrf.mxu0
      %v6220 = vadd.f32 0.0, %v6219
      %v6221 = vpop.f32.mrf.mxu0
      %6222 = vdwg.mxu0
      %6223 = vst.msk [vmem:[#allocation2] sm:$0xff] %vm290, %v6220
    $region105: #{seq2seq_forward.1} parent=1 // pred_fallthru
      _
    %v6224 = vld [vmem:[#allocation2] sm:$0xff]
    %v6225 = vld [vmem:[%s11] sm:$0xff]
    %v6226 = vld [vmem:[%s11 + $0x8] sm:$0xff]
    %v6227 = vld [vmem:[%s11 + $0x10] sm:$0xff]
    %v6228 = vld [vmem:[%s11 + $0x18] sm:$0xff]
    %v6229 = vld [vmem:[%s13] sm:$0xff]
    %v6230 = vld [vmem:[%s13 + $0x8] sm:$0xff]
    %v6231 = vld [vmem:[%s13 + $0x10] sm:$0xff]
    %v6232 = vld [vmem:[%s13 + $0x18] sm:$0xff]
    %6233 = vmatprep.subr.mxu0 0.0
    %6234 = vmatpush1.msra.mxu0 0.0
    %6235 = vmatprep.subr.mxu0 0.0
    %6236 = vmatpush1.msra.mxu0 0.0
    %6237 = vmatprep.subr.mxu0 0.0
    %6238 = vmatpush1.msra.mxu0 0.0
    %6239 = vmatprep.subr.mxu0 0.0
    %6240 = vmatpush1.msra.mxu0 0.0
    %6241 = vmatprep.subr.mxu0 0.0
    %6242 = vmatpush1.msra.mxu0 0.0
    %6243 = vmatprep.subr.mxu0 0.0
    %6244 = vmatpush1.msra.mxu0 0.0
    %6245 = vmatprep.subr.mxu0 0.0
    %6246 = vmatpush1.msra.mxu0 0.0
    %6247 = vmatprep.subr.mxu0 0.0
    %6248 = vmatpush1.msra.mxu0 0.0
    %6249 = vmatprep.subr.mxu0 0.0
    %6250 = vmatpush1.msra.mxu0 0.0
    %6251 = vmatprep.subr.mxu0 0.0
    %6252 = vmatpush1.msra.mxu0 0.0
    %6253 = vmatprep.subr.mxu0 0.0
    %6254 = vmatpush1.msra.mxu0 0.0
    %6255 = vmatprep.subr.mxu0 0.0
    %6256 = vmatpush1.msra.mxu0 0.0
    %6257 = vmatprep.subr.mxu0 0.0
    %6258 = vmatpush1.msra.mxu0 %v6232
    %6259 = vmatprep.subr.mxu0 0.0
    %6260 = vmatpush1.msra.mxu0 %v6231
    %6261 = vmatprep.subr.mxu0 0.0
    %6262 = vmatpush1.msra.mxu0 %v6230
    %6263 = vmatprep.subr.mxu0 0.0
    %6264 = vmatpush1.msra.mxu0 %v6229
    %6265 = vmatprep.subr.mxu0 0.0
    %6266 = vmatpush2.msra.mxu0 0.0
    %6267 = vmatprep.subr.mxu0 0.0
    %6268 = vmatpush2.msra.mxu0 0.0
    %6269 = vmatprep.subr.mxu0 0.0
    %6270 = vmatpush2.msra.mxu0 0.0
    %6271 = vmatprep.subr.mxu0 0.0
    %6272 = vmatpush2.msra.mxu0 0.0
    %6273 = vmatprep.subr.mxu0 0.0
    %6274 = vmatpush2.msra.mxu0 0.0
    %6275 = vmatprep.subr.mxu0 0.0
    %6276 = vmatpush2.msra.mxu0 0.0
    %6277 = vmatprep.subr.mxu0 0.0
    %6278 = vmatpush2.msra.mxu0 0.0
    %6279 = vmatprep.subr.mxu0 0.0
    %6280 = vmatpush2.msra.mxu0 0.0
    %6281 = vmatprep.subr.mxu0 0.0
    %6282 = vmatpush2.msra.mxu0 0.0
    %6283 = vmatprep.subr.mxu0 0.0
    %6284 = vmatpush2.msra.mxu0 0.0
    %6285 = vmatprep.subr.mxu0 0.0
    %6286 = vmatpush2.msra.mxu0 0.0
    %6287 = vmatprep.subr.mxu0 0.0
    %6288 = vmatpush2.msra.mxu0 0.0
    %6289 = vmatprep.subr.mxu0 0.0
    %6290 = vmatpush2.msra.mxu0 0.0
    %6291 = vmatprep.subr.mxu0 0.0
    %6292 = vmatpush2.msra.mxu0 0.0
    %6293 = vmatprep.subr.mxu0 0.0
    %6294 = vmatpush2.msra.mxu0 0.0
    %6295 = vmatprep.subr.mxu0 0.0
    %6296 = vmatpush2.msra.mxu0 0.0
    %6297 = vmatprep.mubr.f32.mxu0 0.0
    %6298 = vmatmul.mubr.f32.gmra.mxu0 %v5930
    %v6299 = vpop.f32.mrf.mxu0
    %v6300 = vadd.f32 0.0, %v6299
    %v6301 = vpop.f32.mrf.mxu0
    %6302 = vdwg.mxu0
    %v6304 = vsel %vm290, %v6224, 0
    %6306 = vmatprep.subr.mxu0 0.0
    %6307 = vmatpush1.msra.mxu0 0.0
    %6308 = vmatprep.subr.mxu0 0.0
    %6309 = vmatpush1.msra.mxu0 0.0
    %6310 = vmatprep.subr.mxu0 0.0
    %6311 = vmatpush1.msra.mxu0 0.0
    %6312 = vmatprep.subr.mxu0 0.0
    %6313 = vmatpush1.msra.mxu0 0.0
    %6314 = vmatprep.subr.mxu0 0.0
    %6315 = vmatpush1.msra.mxu0 0.0
    %6316 = vmatprep.subr.mxu0 0.0
    %6317 = vmatpush1.msra.mxu0 0.0
    %6318 = vmatprep.subr.mxu0 0.0
    %6319 = vmatpush1.msra.mxu0 0.0
    %6320 = vmatprep.subr.mxu0 0.0
    %6321 = vmatpush1.msra.mxu0 0.0
    %6322 = vmatprep.subr.mxu0 0.0
    %6323 = vmatpush1.msra.mxu0 0.0
    %6324 = vmatprep.subr.mxu0 0.0
    %6325 = vmatpush1.msra.mxu0 0.0
    %6326 = vmatprep.subr.mxu0 0.0
    %6327 = vmatpush1.msra.mxu0 0.0
    %6328 = vmatprep.subr.mxu0 0.0
    %6329 = vmatpush1.msra.mxu0 0.0
    %6330 = vmatprep.subr.mxu0 0.0
    %6331 = vmatpush1.msra.mxu0 %v6228
    %6332 = vmatprep.subr.mxu0 0.0
    %6333 = vmatpush1.msra.mxu0 %v6227
    %6334 = vmatprep.subr.mxu0 0.0
    %6335 = vmatpush1.msra.mxu0 %v6226
    %6336 = vmatprep.subr.mxu0 0.0
    %6337 = vmatpush1.msra.mxu0 %v6225
    %6338 = vmatprep.subr.mxu0 0.0
    %6339 = vmatpush2.msra.mxu0 0.0
    %6340 = vmatprep.subr.mxu0 0.0
    %6341 = vmatpush2.msra.mxu0 0.0
    %6342 = vmatprep.subr.mxu0 0.0
    %6343 = vmatpush2.msra.mxu0 0.0
    %6344 = vmatprep.subr.mxu0 0.0
    %6345 = vmatpush2.msra.mxu0 0.0
    %6346 = vmatprep.subr.mxu0 0.0
    %6347 = vmatpush2.msra.mxu0 0.0
    %6348 = vmatprep.subr.mxu0 0.0
    %6349 = vmatpush2.msra.mxu0 0.0
    %6350 = vmatprep.subr.mxu0 0.0
    %6351 = vmatpush2.msra.mxu0 0.0
    %6352 = vmatprep.subr.mxu0 0.0
    %6353 = vmatpush2.msra.mxu0 0.0
    %6354 = vmatprep.subr.mxu0 0.0
    %6355 = vmatpush2.msra.mxu0 0.0
    %6356 = vmatprep.subr.mxu0 0.0
    %6357 = vmatpush2.msra.mxu0 0.0
    %6358 = vmatprep.subr.mxu0 0.0
    %6359 = vmatpush2.msra.mxu0 0.0
    %6360 = vmatprep.subr.mxu0 0.0
    %6361 = vmatpush2.msra.mxu0 0.0
    %6362 = vmatprep.subr.mxu0 0.0
    %6363 = vmatpush2.msra.mxu0 0.0
    %6364 = vmatprep.subr.mxu0 0.0
    %6365 = vmatpush2.msra.mxu0 0.0
    %6366 = vmatprep.subr.mxu0 0.0
    %6367 = vmatpush2.msra.mxu0 0.0
    %6368 = vmatprep.subr.mxu0 0.0
    %6369 = vmatpush2.msra.mxu0 0.0
    %6370 = vmatprep.mubr.f32.mxu0 0.0
    %6371 = vmatmul.mubr.f32.gmra.mxu0 %v6304
    %v6372 = vpop.f32.mrf.mxu0
    %v6373 = vadd.f32 %v6300, %v6372
    %v6374 = vpop.f32.mrf.mxu0
    %6375 = vdwg.mxu0
    %v6376 = vld [vmem:[%s15] sm:$0x1]
    %v6378 = vlaneseq
    %v6379 = vshrl.u32 %v6378, 7
    %v6380 = vsub.s32 0, %v6379
    %v6381 = vrot.slane %v6376, %v6380
    %v6383 = vadd.f32 %v6373, %v6381
    %v6384 = vxor.u32 %v6383, 2147483648
    %v6385 = vmul.f32 %v6384, 1.442695
    %v6386 = vpow.pop %v6385
    %v6387 = vadd.f32 %v6386, 1.0
    %v6388 = vrcp.pop %v6387
    %v6389 = vmul.f32 1.0, %v6388
    %v6390 = vtanh.pop %v6383
    %v6391 = vmul.f32 %v6389, %v5842
    %6393 = vrot.lane.b32.xlu0 %v6390, 64
    %v6394 = vpop.permute.xlu0 %6393
    %v6396 = vmul.f32 %v6389, %v6394
    %6398 = vrot.lane.b32.xlu0 %v6396, 32
    %v6399 = vpop.permute.xlu0 %6398
    %v6401 = vadd.f32 %v6391, %v6399
    %v6402 = vtanh.pop %v6401
    %6404 = vrot.lane.b32.xlu0 %v6402, 64
    %v6405 = vpop.permute.xlu0 %6404
    %v6407 = vmul.f32 %v6389, %v6405
    %v6408 = vld [vmem:[%s12] sm:$0xff]
    %v6409 = vld [vmem:[%s12 + $0x8] sm:$0xff]
    %v6410 = vld [vmem:[%s12 + $0x10] sm:$0xff]
    %v6411 = vld [vmem:[%s12 + $0x18] sm:$0xff]
    %v6412 = vld [vmem:[%s14] sm:$0xff]
    %v6413 = vld [vmem:[%s14 + $0x8] sm:$0xff]
    %v6414 = vld [vmem:[%s14 + $0x10] sm:$0xff]
    %v6415 = vld [vmem:[%s14 + $0x18] sm:$0xff]
    %6416 = vmatprep.subr.mxu0 0.0
    %6417 = vmatpush1.msra.mxu0 0.0
    %6418 = vmatprep.subr.mxu0 0.0
    %6419 = vmatpush1.msra.mxu0 0.0
    %6420 = vmatprep.subr.mxu0 0.0
    %6421 = vmatpush1.msra.mxu0 0.0
    %6422 = vmatprep.subr.mxu0 0.0
    %6423 = vmatpush1.msra.mxu0 0.0
    %6424 = vmatprep.subr.mxu0 0.0
    %6425 = vmatpush1.msra.mxu0 0.0
    %6426 = vmatprep.subr.mxu0 0.0
    %6427 = vmatpush1.msra.mxu0 0.0
    %6428 = vmatprep.subr.mxu0 0.0
    %6429 = vmatpush1.msra.mxu0 0.0
    %6430 = vmatprep.subr.mxu0 0.0
    %6431 = vmatpush1.msra.mxu0 0.0
    %6432 = vmatprep.subr.mxu0 0.0
    %6433 = vmatpush1.msra.mxu0 0.0
    %6434 = vmatprep.subr.mxu0 0.0
    %6435 = vmatpush1.msra.mxu0 0.0
    %6436 = vmatprep.subr.mxu0 0.0
    %6437 = vmatpush1.msra.mxu0 0.0
    %6438 = vmatprep.subr.mxu0 0.0
    %6439 = vmatpush1.msra.mxu0 0.0
    %6440 = vmatprep.subr.mxu0 0.0
    %6441 = vmatpush1.msra.mxu0 %v6415
    %6442 = vmatprep.subr.mxu0 0.0
    %6443 = vmatpush1.msra.mxu0 %v6414
    %6444 = vmatprep.subr.mxu0 0.0
    %6445 = vmatpush1.msra.mxu0 %v6413
    %6446 = vmatprep.subr.mxu0 0.0
    %6447 = vmatpush1.msra.mxu0 %v6412
    %6448 = vmatprep.subr.mxu0 0.0
    %6449 = vmatpush2.msra.mxu0 0.0
    %6450 = vmatprep.subr.mxu0 0.0
    %6451 = vmatpush2.msra.mxu0 0.0
    %6452 = vmatprep.subr.mxu0 0.0
    %6453 = vmatpush2.msra.mxu0 0.0
    %6454 = vmatprep.subr.mxu0 0.0
    %6455 = vmatpush2.msra.mxu0 0.0
    %6456 = vmatprep.subr.mxu0 0.0
    %6457 = vmatpush2.msra.mxu0 0.0
    %6458 = vmatprep.subr.mxu0 0.0
    %6459 = vmatpush2.msra.mxu0 0.0
    %6460 = vmatprep.subr.mxu0 0.0
    %6461 = vmatpush2.msra.mxu0 0.0
    %6462 = vmatprep.subr.mxu0 0.0
    %6463 = vmatpush2.msra.mxu0 0.0
    %6464 = vmatprep.subr.mxu0 0.0
    %6465 = vmatpush2.msra.mxu0 0.0
    %6466 = vmatprep.subr.mxu0 0.0
    %6467 = vmatpush2.msra.mxu0 0.0
    %6468 = vmatprep.subr.mxu0 0.0
    %6469 = vmatpush2.msra.mxu0 0.0
    %6470 = vmatprep.subr.mxu0 0.0
    %6471 = vmatpush2.msra.mxu0 0.0
    %6472 = vmatprep.subr.mxu0 0.0
    %6473 = vmatpush2.msra.mxu0 0.0
    %6474 = vmatprep.subr.mxu0 0.0
    %6475 = vmatpush2.msra.mxu0 0.0
    %6476 = vmatprep.subr.mxu0 0.0
    %6477 = vmatpush2.msra.mxu0 0.0
    %6478 = vmatprep.subr.mxu0 0.0
    %6479 = vmatpush2.msra.mxu0 0.0
    %6480 = vmatprep.mubr.f32.mxu0 0.0
    %6481 = vmatmul.mubr.f32.gmra.mxu0 %v6048
    %v6482 = vpop.f32.mrf.mxu0
    %v6483 = vadd.f32 0.0, %v6482
    %v6484 = vpop.f32.mrf.mxu0
    %6485 = vdwg.mxu0
    %6487 = vrot.lane.b32.xlu0 %v6407, 32
    %v6488 = vpop.permute.xlu0 %6487
    %v6489 = vsel %vm290, %v6488, 0
    %6491 = vmatprep.subr.mxu0 0.0
    %6492 = vmatpush1.msra.mxu0 0.0
    %6493 = vmatprep.subr.mxu0 0.0
    %6494 = vmatpush1.msra.mxu0 0.0
    %6495 = vmatprep.subr.mxu0 0.0
    %6496 = vmatpush1.msra.mxu0 0.0
    %6497 = vmatprep.subr.mxu0 0.0
    %6498 = vmatpush1.msra.mxu0 0.0
    %6499 = vmatprep.subr.mxu0 0.0
    %6500 = vmatpush1.msra.mxu0 0.0
    %6501 = vmatprep.subr.mxu0 0.0
    %6502 = vmatpush1.msra.mxu0 0.0
    %6503 = vmatprep.subr.mxu0 0.0
    %6504 = vmatpush1.msra.mxu0 0.0
    %6505 = vmatprep.subr.mxu0 0.0
    %6506 = vmatpush1.msra.mxu0 0.0
    %6507 = vmatprep.subr.mxu0 0.0
    %6508 = vmatpush1.msra.mxu0 0.0
    %6509 = vmatprep.subr.mxu0 0.0
    %6510 = vmatpush1.msra.mxu0 0.0
    %6511 = vmatprep.subr.mxu0 0.0
    %6512 = vmatpush1.msra.mxu0 0.0
    %6513 = vmatprep.subr.mxu0 0.0
    %6514 = vmatpush1.msra.mxu0 0.0
    %6515 = vmatprep.subr.mxu0 0.0
    %6516 = vmatpush1.msra.mxu0 %v6411
    %6517 = vmatprep.subr.mxu0 0.0
    %6518 = vmatpush1.msra.mxu0 %v6410
    %6519 = vmatprep.subr.mxu0 0.0
    %6520 = vmatpush1.msra.mxu0 %v6409
    %6521 = vmatprep.subr.mxu0 0.0
    %6522 = vmatpush1.msra.mxu0 %v6408
    %6523 = vmatprep.subr.mxu0 0.0
    %6524 = vmatpush2.msra.mxu0 0.0
    %6525 = vmatprep.subr.mxu0 0.0
    %6526 = vmatpush2.msra.mxu0 0.0
    %6527 = vmatprep.subr.mxu0 0.0
    %6528 = vmatpush2.msra.mxu0 0.0
    %6529 = vmatprep.subr.mxu0 0.0
    %6530 = vmatpush2.msra.mxu0 0.0
    %6531 = vmatprep.subr.mxu0 0.0
    %6532 = vmatpush2.msra.mxu0 0.0
    %6533 = vmatprep.subr.mxu0 0.0
    %6534 = vmatpush2.msra.mxu0 0.0
    %6535 = vmatprep.subr.mxu0 0.0
    %6536 = vmatpush2.msra.mxu0 0.0
    %6537 = vmatprep.subr.mxu0 0.0
    %6538 = vmatpush2.msra.mxu0 0.0
    %6539 = vmatprep.subr.mxu0 0.0
    %6540 = vmatpush2.msra.mxu0 0.0
    %6541 = vmatprep.subr.mxu0 0.0
    %6542 = vmatpush2.msra.mxu0 0.0
    %6543 = vmatprep.subr.mxu0 0.0
    %6544 = vmatpush2.msra.mxu0 0.0
    %6545 = vmatprep.subr.mxu0 0.0
    %6546 = vmatpush2.msra.mxu0 0.0
    %6547 = vmatprep.subr.mxu0 0.0
    %6548 = vmatpush2.msra.mxu0 0.0
    %6549 = vmatprep.subr.mxu0 0.0
    %6550 = vmatpush2.msra.mxu0 0.0
    %6551 = vmatprep.subr.mxu0 0.0
    %6552 = vmatpush2.msra.mxu0 0.0
    %6553 = vmatprep.subr.mxu0 0.0
    %6554 = vmatpush2.msra.mxu0 0.0
    %6555 = vmatprep.mubr.f32.mxu0 0.0
    %6556 = vmatmul.mubr.f32.gmra.mxu0 %v6489
    %v6557 = vpop.f32.mrf.mxu0
    %v6558 = vadd.f32 %v6483, %v6557
    %v6559 = vpop.f32.mrf.mxu0
    %6560 = vdwg.mxu0
    %v6561 = vld [vmem:[%s16] sm:$0x1]
    %v6563 = vlaneseq
    %v6564 = vshrl.u32 %v6563, 7
    %v6565 = vsub.s32 0, %v6564
    %v6566 = vrot.slane %v6561, %v6565
    %v6568 = vadd.f32 %v6558, %v6566
    %v6569 = vxor.u32 %v6568, 2147483648
    %v6570 = vmul.f32 %v6569, 1.442695
    %v6571 = vpow.pop %v6570
    %v6572 = vadd.f32 %v6571, 1.0
    %v6573 = vrcp.pop %v6572
    %v6574 = vmul.f32 1.0, %v6573
    %v6575 = vtanh.pop %v6568
    %v6576 = vmul.f32 %v6574, %v6027
    %6578 = vrot.lane.b32.xlu0 %v6575, 64
    %v6579 = vpop.permute.xlu0 %6578
    %v6581 = vmul.f32 %v6574, %v6579
    %6583 = vrot.lane.b32.xlu0 %v6581, 32
    %v6584 = vpop.permute.xlu0 %6583
    %v6586 = vadd.f32 %v6576, %v6584
    %v6587 = vtanh.pop %v6586
    %6589 = vrot.lane.b32.xlu0 %v6587, 64
    %v6590 = vpop.permute.xlu0 %6589
    %v6592 = vmul.f32 %v6574, %v6590
    %v6593 = vld [vmem:[%s17] sm:$0xff]
    %v6594 = vld [vmem:[%s17 + $0x8] sm:$0xff]
    %v6595 = vld [vmem:[%s17 + $0x10] sm:$0xff]
    %v6596 = vld [vmem:[%s17 + $0x18] sm:$0xff]
    %v6597 = vld [vmem:[%s18] sm:$0x1]
    %v6599 = vlaneseq
    %v6600 = vshrl.u32 %v6599, 7
    %v6601 = vsub.s32 0, %v6600
    %v6602 = vrot.slane %v6597, %v6601
    %6605 = vrot.lane.b32.xlu0 %v6592, 32
    %v6606 = vpop.permute.xlu0 %6605
    %v6607 = vsel %vm290, %v6606, 0
    %6609 = vmatprep.subr.mxu0 0.0
    %6610 = vmatpush1.msra.mxu0 0.0
    %6611 = vmatprep.subr.mxu0 0.0
    %6612 = vmatpush1.msra.mxu0 0.0
    %6613 = vmatprep.subr.mxu0 0.0
    %6614 = vmatpush1.msra.mxu0 0.0
    %6615 = vmatprep.subr.mxu0 0.0
    %6616 = vmatpush1.msra.mxu0 0.0
    %6617 = vmatprep.subr.mxu0 0.0
    %6618 = vmatpush1.msra.mxu0 0.0
    %6619 = vmatprep.subr.mxu0 0.0
    %6620 = vmatpush1.msra.mxu0 0.0
    %6621 = vmatprep.subr.mxu0 0.0
    %6622 = vmatpush1.msra.mxu0 0.0
    %6623 = vmatprep.subr.mxu0 0.0
    %6624 = vmatpush1.msra.mxu0 0.0
    %6625 = vmatprep.subr.mxu0 0.0
    %6626 = vmatpush1.msra.mxu0 0.0
    %6627 = vmatprep.subr.mxu0 0.0
    %6628 = vmatpush1.msra.mxu0 0.0
    %6629 = vmatprep.subr.mxu0 0.0
    %6630 = vmatpush1.msra.mxu0 0.0
    %6631 = vmatprep.subr.mxu0 0.0
    %6632 = vmatpush1.msra.mxu0 0.0
    %6633 = vmatprep.subr.mxu0 0.0
    %6634 = vmatpush1.msra.mxu0 %v6596
    %6635 = vmatprep.subr.mxu0 0.0
    %6636 = vmatpush1.msra.mxu0 %v6595
    %6637 = vmatprep.subr.mxu0 0.0
    %6638 = vmatpush1.msra.mxu0 %v6594
    %6639 = vmatprep.subr.mxu0 0.0
    %6640 = vmatpush1.msra.mxu0 %v6593
    %6641 = vmatprep.subr.mxu0 0.0
    %6642 = vmatpush2.msra.mxu0 0.0
    %6643 = vmatprep.subr.mxu0 0.0
    %6644 = vmatpush2.msra.mxu0 0.0
    %6645 = vmatprep.subr.mxu0 0.0
    %6646 = vmatpush2.msra.mxu0 0.0
    %6647 = vmatprep.subr.mxu0 0.0
    %6648 = vmatpush2.msra.mxu0 0.0
    %6649 = vmatprep.subr.mxu0 0.0
    %6650 = vmatpush2.msra.mxu0 0.0
    %6651 = vmatprep.subr.mxu0 0.0
    %6652 = vmatpush2.msra.mxu0 0.0
    %6653 = vmatprep.subr.mxu0 0.0
    %6654 = vmatpush2.msra.mxu0 0.0
    %6655 = vmatprep.subr.mxu0 0.0
    %6656 = vmatpush2.msra.mxu0 0.0
    %6657 = vmatprep.subr.mxu0 0.0
    %6658 = vmatpush2.msra.mxu0 0.0
    %6659 = vmatprep.subr.mxu0 0.0
    %6660 = vmatpush2.msra.mxu0 0.0
    %6661 = vmatprep.subr.mxu0 0.0
    %6662 = vmatpush2.msra.mxu0 0.0
    %6663 = vmatprep.subr.mxu0 0.0
    %6664 = vmatpush2.msra.mxu0 0.0
    %6665 = vmatprep.subr.mxu0 0.0
    %6666 = vmatpush2.msra.mxu0 0.0
    %6667 = vmatprep.subr.mxu0 0.0
    %6668 = vmatpush2.msra.mxu0 0.0
    %6669 = vmatprep.subr.mxu0 0.0
    %6670 = vmatpush2.msra.mxu0 0.0
    %6671 = vmatprep.subr.mxu0 0.0
    %6672 = vmatpush2.msra.mxu0 0.0
    %6673 = vmatprep.mubr.f32.mxu0 0.0
    %6674 = vmatmul.mubr.f32.gmra.mxu0 %v6607
    %v6675 = vpop.f32.mrf.mxu0
    %v6676 = vadd.f32 %v6602, %v6675
    %v6677 = vpop.f32.mrf.mxu0
    %6678 = vdwg.mxu0
    %s6679 = scalar_lea.vmem %s19, 48
    %6680 = vst [vmem:[%s6679] sm:$0xff] %v6676
    %6681 = vst.msk [vmem:[#allocation2] sm:$0xff] %vm290, %v2790
    %s6682 = sld [smem:[#allocation3 + $0x6]]
    %p6683 = scmp.eq.s32.totalorder %s6682, 0
    // Predicated region
    $region106: #{seq2seq_forward.1} parent=1 // pred_check
      %p6684 = pneg %p6683
    $region107: #{seq2seq_forward.1} parent=1 // pred_check_branch
      %6686 = sbr.rel (%p6684) target = $region109
    $region108: #{seq2seq_forward.1} parent=1 // pred_region
      %6687 = vmax.xlane.f32.xlu0 %v6676
      %v6688 = vpop.xlane.xlu0 %6687
      %vm6689 = vcmp.ge.f32.partialorder %v6676, %v6688
      %v6690 = vsel %vm6689, %v93, 128.0
      %6691 = vmin.xlane.f32.xlu0 %v6690
      %v6692 = vpop.xlane.xlu0 %6691
      %vm6693 = vcmp.eq.f32.partialorder %v93, %v6692
      %v6694 = vsel %vm6693, 1, 0
      %v6695 = vcvt.s32.f32 %v6694
      %v6696 = vld [vmem:[%s4] sm:$0xff]
      %v6697 = vld [vmem:[%s4 + $0x8] sm:$0xff]
      %v6698 = vld [vmem:[%s4 + $0x10] sm:$0xff]
      %v6699 = vld [vmem:[%s4 + $0x18] sm:$0xff]
      %v6700 = vld [vmem:[%s4 + $0x20] sm:$0xff]
      %v6701 = vld [vmem:[%s4 + $0x28] sm:$0xff]
      %v6702 = vld [vmem:[%s4 + $0x30] sm:$0xff]
      %v6703 = vld [vmem:[%s4 + $0x38] sm:$0xff]
      %v6704 = vld [vmem:[%s4 + $0x40] sm:$0xff]
      %v6705 = vld [vmem:[%s4 + $0x48] sm:$0xff]
      %v6706 = vld [vmem:[%s4 + $0x50] sm:$0xff]
      %v6707 = vld [vmem:[%s4 + $0x58] sm:$0xff]
      %v6708 = vld [vmem:[%s4 + $0x60] sm:$0xff]
      %v6709 = vld [vmem:[%s4 + $0x68] sm:$0xff]
      %v6710 = vld [vmem:[%s4 + $0x70] sm:$0xff]
      %v6711 = vld [vmem:[%s4 + $0x78] sm:$0xff]
      %6712 = vmatprep.subr.mxu0 0.0
      %6713 = vmatpush1.msra.mxu0 %v6711
      %6714 = vmatprep.subr.mxu0 0.0
      %6715 = vmatpush1.msra.mxu0 %v6710
      %6716 = vmatprep.subr.mxu0 0.0
      %6717 = vmatpush1.msra.mxu0 %v6709
      %6718 = vmatprep.subr.mxu0 0.0
      %6719 = vmatpush1.msra.mxu0 %v6708
      %6720 = vmatprep.subr.mxu0 0.0
      %6721 = vmatpush1.msra.mxu0 %v6707
      %6722 = vmatprep.subr.mxu0 0.0
      %6723 = vmatpush1.msra.mxu0 %v6706
      %6724 = vmatprep.subr.mxu0 0.0
      %6725 = vmatpush1.msra.mxu0 %v6705
      %6726 = vmatprep.subr.mxu0 0.0
      %6727 = vmatpush1.msra.mxu0 %v6704
      %6728 = vmatprep.subr.mxu0 0.0
      %6729 = vmatpush1.msra.mxu0 %v6703
      %6730 = vmatprep.subr.mxu0 0.0
      %6731 = vmatpush1.msra.mxu0 %v6702
      %6732 = vmatprep.subr.mxu0 0.0
      %6733 = vmatpush1.msra.mxu0 %v6701
      %6734 = vmatprep.subr.mxu0 0.0
      %6735 = vmatpush1.msra.mxu0 %v6700
      %6736 = vmatprep.subr.mxu0 0.0
      %6737 = vmatpush1.msra.mxu0 %v6699
      %6738 = vmatprep.subr.mxu0 0.0
      %6739 = vmatpush1.msra.mxu0 %v6698
      %6740 = vmatprep.subr.mxu0 0.0
      %6741 = vmatpush1.msra.mxu0 %v6697
      %6742 = vmatprep.subr.mxu0 0.0
      %6743 = vmatpush1.msra.mxu0 %v6696
      %6744 = vmatprep.subr.mxu0 0.0
      %6745 = vmatpush2.msra.mxu0 0.0
      %6746 = vmatprep.subr.mxu0 0.0
      %6747 = vmatpush2.msra.mxu0 0.0
      %6748 = vmatprep.subr.mxu0 0.0
      %6749 = vmatpush2.msra.mxu0 0.0
      %6750 = vmatprep.subr.mxu0 0.0
      %6751 = vmatpush2.msra.mxu0 0.0
      %6752 = vmatprep.subr.mxu0 0.0
      %6753 = vmatpush2.msra.mxu0 0.0
      %6754 = vmatprep.subr.mxu0 0.0
      %6755 = vmatpush2.msra.mxu0 0.0
      %6756 = vmatprep.subr.mxu0 0.0
      %6757 = vmatpush2.msra.mxu0 0.0
      %6758 = vmatprep.subr.mxu0 0.0
      %6759 = vmatpush2.msra.mxu0 0.0
      %6760 = vmatprep.subr.mxu0 0.0
      %6761 = vmatpush2.msra.mxu0 0.0
      %6762 = vmatprep.subr.mxu0 0.0
      %6763 = vmatpush2.msra.mxu0 0.0
      %6764 = vmatprep.subr.mxu0 0.0
      %6765 = vmatpush2.msra.mxu0 0.0
      %6766 = vmatprep.subr.mxu0 0.0
      %6767 = vmatpush2.msra.mxu0 0.0
      %6768 = vmatprep.subr.mxu0 0.0
      %6769 = vmatpush2.msra.mxu0 0.0
      %6770 = vmatprep.subr.mxu0 0.0
      %6771 = vmatpush2.msra.mxu0 0.0
      %6772 = vmatprep.subr.mxu0 0.0
      %6773 = vmatpush2.msra.mxu0 0.0
      %6774 = vmatprep.subr.mxu0 0.0
      %6775 = vmatpush2.msra.mxu0 0.0
      %6776 = vmatprep.mubr.f32.mxu0 0.0
      %6777 = vmatmul.mubr.f32.gmra.mxu0 %v6695
      %v6778 = vpop.f32.mrf.mxu0
      %v6779 = vadd.f32 0.0, %v6778
      %v6780 = vpop.f32.mrf.mxu0
      %6781 = vdwg.mxu0
      %6782 = vst.msk [vmem:[#allocation2] sm:$0xff] %vm290, %v6779
    $region109: #{seq2seq_forward.1} parent=1 // pred_fallthru
      _
    %v6783 = vld [vmem:[#allocation2] sm:$0xff]
    %v6784 = vld [vmem:[%s11] sm:$0xff]
    %v6785 = vld [vmem:[%s11 + $0x8] sm:$0xff]
    %v6786 = vld [vmem:[%s11 + $0x10] sm:$0xff]
    %v6787 = vld [vmem:[%s11 + $0x18] sm:$0xff]
    %v6788 = vld [vmem:[%s13] sm:$0xff]
    %v6789 = vld [vmem:[%s13 + $0x8] sm:$0xff]
    %v6790 = vld [vmem:[%s13 + $0x10] sm:$0xff]
    %v6791 = vld [vmem:[%s13 + $0x18] sm:$0xff]
    %6792 = vmatprep.subr.mxu0 0.0
    %6793 = vmatpush1.msra.mxu0 0.0
    %6794 = vmatprep.subr.mxu0 0.0
    %6795 = vmatpush1.msra.mxu0 0.0
    %6796 = vmatprep.subr.mxu0 0.0
    %6797 = vmatpush1.msra.mxu0 0.0
    %6798 = vmatprep.subr.mxu0 0.0
    %6799 = vmatpush1.msra.mxu0 0.0
    %6800 = vmatprep.subr.mxu0 0.0
    %6801 = vmatpush1.msra.mxu0 0.0
    %6802 = vmatprep.subr.mxu0 0.0
    %6803 = vmatpush1.msra.mxu0 0.0
    %6804 = vmatprep.subr.mxu0 0.0
    %6805 = vmatpush1.msra.mxu0 0.0
    %6806 = vmatprep.subr.mxu0 0.0
    %6807 = vmatpush1.msra.mxu0 0.0
    %6808 = vmatprep.subr.mxu0 0.0
    %6809 = vmatpush1.msra.mxu0 0.0
    %6810 = vmatprep.subr.mxu0 0.0
    %6811 = vmatpush1.msra.mxu0 0.0
    %6812 = vmatprep.subr.mxu0 0.0
    %6813 = vmatpush1.msra.mxu0 0.0
    %6814 = vmatprep.subr.mxu0 0.0
    %6815 = vmatpush1.msra.mxu0 0.0
    %6816 = vmatprep.subr.mxu0 0.0
    %6817 = vmatpush1.msra.mxu0 %v6791
    %6818 = vmatprep.subr.mxu0 0.0
    %6819 = vmatpush1.msra.mxu0 %v6790
    %6820 = vmatprep.subr.mxu0 0.0
    %6821 = vmatpush1.msra.mxu0 %v6789
    %6822 = vmatprep.subr.mxu0 0.0
    %6823 = vmatpush1.msra.mxu0 %v6788
    %6824 = vmatprep.subr.mxu0 0.0
    %6825 = vmatpush2.msra.mxu0 0.0
    %6826 = vmatprep.subr.mxu0 0.0
    %6827 = vmatpush2.msra.mxu0 0.0
    %6828 = vmatprep.subr.mxu0 0.0
    %6829 = vmatpush2.msra.mxu0 0.0
    %6830 = vmatprep.subr.mxu0 0.0
    %6831 = vmatpush2.msra.mxu0 0.0
    %6832 = vmatprep.subr.mxu0 0.0
    %6833 = vmatpush2.msra.mxu0 0.0
    %6834 = vmatprep.subr.mxu0 0.0
    %6835 = vmatpush2.msra.mxu0 0.0
    %6836 = vmatprep.subr.mxu0 0.0
    %6837 = vmatpush2.msra.mxu0 0.0
    %6838 = vmatprep.subr.mxu0 0.0
    %6839 = vmatpush2.msra.mxu0 0.0
    %6840 = vmatprep.subr.mxu0 0.0
    %6841 = vmatpush2.msra.mxu0 0.0
    %6842 = vmatprep.subr.mxu0 0.0
    %6843 = vmatpush2.msra.mxu0 0.0
    %6844 = vmatprep.subr.mxu0 0.0
    %6845 = vmatpush2.msra.mxu0 0.0
    %6846 = vmatprep.subr.mxu0 0.0
    %6847 = vmatpush2.msra.mxu0 0.0
    %6848 = vmatprep.subr.mxu0 0.0
    %6849 = vmatpush2.msra.mxu0 0.0
    %6850 = vmatprep.subr.mxu0 0.0
    %6851 = vmatpush2.msra.mxu0 0.0
    %6852 = vmatprep.subr.mxu0 0.0
    %6853 = vmatpush2.msra.mxu0 0.0
    %6854 = vmatprep.subr.mxu0 0.0
    %6855 = vmatpush2.msra.mxu0 0.0
    %6856 = vmatprep.mubr.f32.mxu0 0.0
    %6857 = vmatmul.mubr.f32.gmra.mxu0 %v6489
    %v6858 = vpop.f32.mrf.mxu0
    %v6859 = vadd.f32 0.0, %v6858
    %v6860 = vpop.f32.mrf.mxu0
    %6861 = vdwg.mxu0
    %v6863 = vsel %vm290, %v6783, 0
    %6865 = vmatprep.subr.mxu0 0.0
    %6866 = vmatpush1.msra.mxu0 0.0
    %6867 = vmatprep.subr.mxu0 0.0
    %6868 = vmatpush1.msra.mxu0 0.0
    %6869 = vmatprep.subr.mxu0 0.0
    %6870 = vmatpush1.msra.mxu0 0.0
    %6871 = vmatprep.subr.mxu0 0.0
    %6872 = vmatpush1.msra.mxu0 0.0
    %6873 = vmatprep.subr.mxu0 0.0
    %6874 = vmatpush1.msra.mxu0 0.0
    %6875 = vmatprep.subr.mxu0 0.0
    %6876 = vmatpush1.msra.mxu0 0.0
    %6877 = vmatprep.subr.mxu0 0.0
    %6878 = vmatpush1.msra.mxu0 0.0
    %6879 = vmatprep.subr.mxu0 0.0
    %6880 = vmatpush1.msra.mxu0 0.0
    %6881 = vmatprep.subr.mxu0 0.0
    %6882 = vmatpush1.msra.mxu0 0.0
    %6883 = vmatprep.subr.mxu0 0.0
    %6884 = vmatpush1.msra.mxu0 0.0
    %6885 = vmatprep.subr.mxu0 0.0
    %6886 = vmatpush1.msra.mxu0 0.0
    %6887 = vmatprep.subr.mxu0 0.0
    %6888 = vmatpush1.msra.mxu0 0.0
    %6889 = vmatprep.subr.mxu0 0.0
    %6890 = vmatpush1.msra.mxu0 %v6787
    %6891 = vmatprep.subr.mxu0 0.0
    %6892 = vmatpush1.msra.mxu0 %v6786
    %6893 = vmatprep.subr.mxu0 0.0
    %6894 = vmatpush1.msra.mxu0 %v6785
    %6895 = vmatprep.subr.mxu0 0.0
    %6896 = vmatpush1.msra.mxu0 %v6784
    %6897 = vmatprep.subr.mxu0 0.0
    %6898 = vmatpush2.msra.mxu0 0.0
    %6899 = vmatprep.subr.mxu0 0.0
    %6900 = vmatpush2.msra.mxu0 0.0
    %6901 = vmatprep.subr.mxu0 0.0
    %6902 = vmatpush2.msra.mxu0 0.0
    %6903 = vmatprep.subr.mxu0 0.0
    %6904 = vmatpush2.msra.mxu0 0.0
    %6905 = vmatprep.subr.mxu0 0.0
    %6906 = vmatpush2.msra.mxu0 0.0
    %6907 = vmatprep.subr.mxu0 0.0
    %6908 = vmatpush2.msra.mxu0 0.0
    %6909 = vmatprep.subr.mxu0 0.0
    %6910 = vmatpush2.msra.mxu0 0.0
    %6911 = vmatprep.subr.mxu0 0.0
    %6912 = vmatpush2.msra.mxu0 0.0
    %6913 = vmatprep.subr.mxu0 0.0
    %6914 = vmatpush2.msra.mxu0 0.0
    %6915 = vmatprep.subr.mxu0 0.0
    %6916 = vmatpush2.msra.mxu0 0.0
    %6917 = vmatprep.subr.mxu0 0.0
    %6918 = vmatpush2.msra.mxu0 0.0
    %6919 = vmatprep.subr.mxu0 0.0
    %6920 = vmatpush2.msra.mxu0 0.0
    %6921 = vmatprep.subr.mxu0 0.0
    %6922 = vmatpush2.msra.mxu0 0.0
    %6923 = vmatprep.subr.mxu0 0.0
    %6924 = vmatpush2.msra.mxu0 0.0
    %6925 = vmatprep.subr.mxu0 0.0
    %6926 = vmatpush2.msra.mxu0 0.0
    %6927 = vmatprep.subr.mxu0 0.0
    %6928 = vmatpush2.msra.mxu0 0.0
    %6929 = vmatprep.mubr.f32.mxu0 0.0
    %6930 = vmatmul.mubr.f32.gmra.mxu0 %v6863
    %v6931 = vpop.f32.mrf.mxu0
    %v6932 = vadd.f32 %v6859, %v6931
    %v6933 = vpop.f32.mrf.mxu0
    %6934 = vdwg.mxu0
    %v6935 = vld [vmem:[%s15] sm:$0x1]
    %v6937 = vlaneseq
    %v6938 = vshrl.u32 %v6937, 7
    %v6939 = vsub.s32 0, %v6938
    %v6940 = vrot.slane %v6935, %v6939
    %v6942 = vadd.f32 %v6932, %v6940
    %v6943 = vxor.u32 %v6942, 2147483648
    %v6944 = vmul.f32 %v6943, 1.442695
    %v6945 = vpow.pop %v6944
    %v6946 = vadd.f32 %v6945, 1.0
    %v6947 = vrcp.pop %v6946
    %v6948 = vmul.f32 1.0, %v6947
    %v6949 = vtanh.pop %v6942
    %v6950 = vmul.f32 %v6948, %v6401
    %6952 = vrot.lane.b32.xlu0 %v6949, 64
    %v6953 = vpop.permute.xlu0 %6952
    %v6955 = vmul.f32 %v6948, %v6953
    %6957 = vrot.lane.b32.xlu0 %v6955, 32
    %v6958 = vpop.permute.xlu0 %6957
    %v6960 = vadd.f32 %v6950, %v6958
    %v6961 = vtanh.pop %v6960
    %6963 = vrot.lane.b32.xlu0 %v6961, 64
    %v6964 = vpop.permute.xlu0 %6963
    %v6966 = vmul.f32 %v6948, %v6964
    %v6967 = vld [vmem:[%s12] sm:$0xff]
    %v6968 = vld [vmem:[%s12 + $0x8] sm:$0xff]
    %v6969 = vld [vmem:[%s12 + $0x10] sm:$0xff]
    %v6970 = vld [vmem:[%s12 + $0x18] sm:$0xff]
    %v6971 = vld [vmem:[%s14] sm:$0xff]
    %v6972 = vld [vmem:[%s14 + $0x8] sm:$0xff]
    %v6973 = vld [vmem:[%s14 + $0x10] sm:$0xff]
    %v6974 = vld [vmem:[%s14 + $0x18] sm:$0xff]
    %6975 = vmatprep.subr.mxu0 0.0
    %6976 = vmatpush1.msra.mxu0 0.0
    %6977 = vmatprep.subr.mxu0 0.0
    %6978 = vmatpush1.msra.mxu0 0.0
    %6979 = vmatprep.subr.mxu0 0.0
    %6980 = vmatpush1.msra.mxu0 0.0
    %6981 = vmatprep.subr.mxu0 0.0
    %6982 = vmatpush1.msra.mxu0 0.0
    %6983 = vmatprep.subr.mxu0 0.0
    %6984 = vmatpush1.msra.mxu0 0.0
    %6985 = vmatprep.subr.mxu0 0.0
    %6986 = vmatpush1.msra.mxu0 0.0
    %6987 = vmatprep.subr.mxu0 0.0
    %6988 = vmatpush1.msra.mxu0 0.0
    %6989 = vmatprep.subr.mxu0 0.0
    %6990 = vmatpush1.msra.mxu0 0.0
    %6991 = vmatprep.subr.mxu0 0.0
    %6992 = vmatpush1.msra.mxu0 0.0
    %6993 = vmatprep.subr.mxu0 0.0
    %6994 = vmatpush1.msra.mxu0 0.0
    %6995 = vmatprep.subr.mxu0 0.0
    %6996 = vmatpush1.msra.mxu0 0.0
    %6997 = vmatprep.subr.mxu0 0.0
    %6998 = vmatpush1.msra.mxu0 0.0
    %6999 = vmatprep.subr.mxu0 0.0
    %7000 = vmatpush1.msra.mxu0 %v6974
    %7001 = vmatprep.subr.mxu0 0.0
    %7002 = vmatpush1.msra.mxu0 %v6973
    %7003 = vmatprep.subr.mxu0 0.0
    %7004 = vmatpush1.msra.mxu0 %v6972
    %7005 = vmatprep.subr.mxu0 0.0
    %7006 = vmatpush1.msra.mxu0 %v6971
    %7007 = vmatprep.subr.mxu0 0.0
    %7008 = vmatpush2.msra.mxu0 0.0
    %7009 = vmatprep.subr.mxu0 0.0
    %7010 = vmatpush2.msra.mxu0 0.0
    %7011 = vmatprep.subr.mxu0 0.0
    %7012 = vmatpush2.msra.mxu0 0.0
    %7013 = vmatprep.subr.mxu0 0.0
    %7014 = vmatpush2.msra.mxu0 0.0
    %7015 = vmatprep.subr.mxu0 0.0
    %7016 = vmatpush2.msra.mxu0 0.0
    %7017 = vmatprep.subr.mxu0 0.0
    %7018 = vmatpush2.msra.mxu0 0.0
    %7019 = vmatprep.subr.mxu0 0.0
    %7020 = vmatpush2.msra.mxu0 0.0
    %7021 = vmatprep.subr.mxu0 0.0
    %7022 = vmatpush2.msra.mxu0 0.0
    %7023 = vmatprep.subr.mxu0 0.0
    %7024 = vmatpush2.msra.mxu0 0.0
    %7025 = vmatprep.subr.mxu0 0.0
    %7026 = vmatpush2.msra.mxu0 0.0
    %7027 = vmatprep.subr.mxu0 0.0
    %7028 = vmatpush2.msra.mxu0 0.0
    %7029 = vmatprep.subr.mxu0 0.0
    %7030 = vmatpush2.msra.mxu0 0.0
    %7031 = vmatprep.subr.mxu0 0.0
    %7032 = vmatpush2.msra.mxu0 0.0
    %7033 = vmatprep.subr.mxu0 0.0
    %7034 = vmatpush2.msra.mxu0 0.0
    %7035 = vmatprep.subr.mxu0 0.0
    %7036 = vmatpush2.msra.mxu0 0.0
    %7037 = vmatprep.subr.mxu0 0.0
    %7038 = vmatpush2.msra.mxu0 0.0
    %7039 = vmatprep.mubr.f32.mxu0 0.0
    %7040 = vmatmul.mubr.f32.gmra.mxu0 %v6607
    %v7041 = vpop.f32.mrf.mxu0
    %v7042 = vadd.f32 0.0, %v7041
    %v7043 = vpop.f32.mrf.mxu0
    %7044 = vdwg.mxu0
    %7046 = vrot.lane.b32.xlu0 %v6966, 32
    %v7047 = vpop.permute.xlu0 %7046
    %v7048 = vsel %vm290, %v7047, 0
    %7050 = vmatprep.subr.mxu0 0.0
    %7051 = vmatpush1.msra.mxu0 0.0
    %7052 = vmatprep.subr.mxu0 0.0
    %7053 = vmatpush1.msra.mxu0 0.0
    %7054 = vmatprep.subr.mxu0 0.0
    %7055 = vmatpush1.msra.mxu0 0.0
    %7056 = vmatprep.subr.mxu0 0.0
    %7057 = vmatpush1.msra.mxu0 0.0
    %7058 = vmatprep.subr.mxu0 0.0
    %7059 = vmatpush1.msra.mxu0 0.0
    %7060 = vmatprep.subr.mxu0 0.0
    %7061 = vmatpush1.msra.mxu0 0.0
    %7062 = vmatprep.subr.mxu0 0.0
    %7063 = vmatpush1.msra.mxu0 0.0
    %7064 = vmatprep.subr.mxu0 0.0
    %7065 = vmatpush1.msra.mxu0 0.0
    %7066 = vmatprep.subr.mxu0 0.0
    %7067 = vmatpush1.msra.mxu0 0.0
    %7068 = vmatprep.subr.mxu0 0.0
    %7069 = vmatpush1.msra.mxu0 0.0
    %7070 = vmatprep.subr.mxu0 0.0
    %7071 = vmatpush1.msra.mxu0 0.0
    %7072 = vmatprep.subr.mxu0 0.0
    %7073 = vmatpush1.msra.mxu0 0.0
    %7074 = vmatprep.subr.mxu0 0.0
    %7075 = vmatpush1.msra.mxu0 %v6970
    %7076 = vmatprep.subr.mxu0 0.0
    %7077 = vmatpush1.msra.mxu0 %v6969
    %7078 = vmatprep.subr.mxu0 0.0
    %7079 = vmatpush1.msra.mxu0 %v6968
    %7080 = vmatprep.subr.mxu0 0.0
    %7081 = vmatpush1.msra.mxu0 %v6967
    %7082 = vmatprep.subr.mxu0 0.0
    %7083 = vmatpush2.msra.mxu0 0.0
    %7084 = vmatprep.subr.mxu0 0.0
    %7085 = vmatpush2.msra.mxu0 0.0
    %7086 = vmatprep.subr.mxu0 0.0
    %7087 = vmatpush2.msra.mxu0 0.0
    %7088 = vmatprep.subr.mxu0 0.0
    %7089 = vmatpush2.msra.mxu0 0.0
    %7090 = vmatprep.subr.mxu0 0.0
    %7091 = vmatpush2.msra.mxu0 0.0
    %7092 = vmatprep.subr.mxu0 0.0
    %7093 = vmatpush2.msra.mxu0 0.0
    %7094 = vmatprep.subr.mxu0 0.0
    %7095 = vmatpush2.msra.mxu0 0.0
    %7096 = vmatprep.subr.mxu0 0.0
    %7097 = vmatpush2.msra.mxu0 0.0
    %7098 = vmatprep.subr.mxu0 0.0
    %7099 = vmatpush2.msra.mxu0 0.0
    %7100 = vmatprep.subr.mxu0 0.0
    %7101 = vmatpush2.msra.mxu0 0.0
    %7102 = vmatprep.subr.mxu0 0.0
    %7103 = vmatpush2.msra.mxu0 0.0
    %7104 = vmatprep.subr.mxu0 0.0
    %7105 = vmatpush2.msra.mxu0 0.0
    %7106 = vmatprep.subr.mxu0 0.0
    %7107 = vmatpush2.msra.mxu0 0.0
    %7108 = vmatprep.subr.mxu0 0.0
    %7109 = vmatpush2.msra.mxu0 0.0
    %7110 = vmatprep.subr.mxu0 0.0
    %7111 = vmatpush2.msra.mxu0 0.0
    %7112 = vmatprep.subr.mxu0 0.0
    %7113 = vmatpush2.msra.mxu0 0.0
    %7114 = vmatprep.mubr.f32.mxu0 0.0
    %7115 = vmatmul.mubr.f32.gmra.mxu0 %v7048
    %v7116 = vpop.f32.mrf.mxu0
    %v7117 = vadd.f32 %v7042, %v7116
    %v7118 = vpop.f32.mrf.mxu0
    %7119 = vdwg.mxu0
    %v7120 = vld [vmem:[%s16] sm:$0x1]
    %v7122 = vlaneseq
    %v7123 = vshrl.u32 %v7122, 7
    %v7124 = vsub.s32 0, %v7123
    %v7125 = vrot.slane %v7120, %v7124
    %v7127 = vadd.f32 %v7117, %v7125
    %v7128 = vxor.u32 %v7127, 2147483648
    %v7129 = vmul.f32 %v7128, 1.442695
    %v7130 = vpow.pop %v7129
    %v7131 = vadd.f32 %v7130, 1.0
    %v7132 = vrcp.pop %v7131
    %v7133 = vmul.f32 1.0, %v7132
    %v7134 = vtanh.pop %v7127
    %v7135 = vmul.f32 %v7133, %v6586
    %7137 = vrot.lane.b32.xlu0 %v7134, 64
    %v7138 = vpop.permute.xlu0 %7137
    %v7140 = vmul.f32 %v7133, %v7138
    %7142 = vrot.lane.b32.xlu0 %v7140, 32
    %v7143 = vpop.permute.xlu0 %7142
    %v7145 = vadd.f32 %v7135, %v7143
    %v7146 = vtanh.pop %v7145
    %7148 = vrot.lane.b32.xlu0 %v7146, 64
    %v7149 = vpop.permute.xlu0 %7148
    %v7151 = vmul.f32 %v7133, %v7149
    %v7152 = vld [vmem:[%s17] sm:$0xff]
    %v7153 = vld [vmem:[%s17 + $0x8] sm:$0xff]
    %v7154 = vld [vmem:[%s17 + $0x10] sm:$0xff]
    %v7155 = vld [vmem:[%s17 + $0x18] sm:$0xff]
    %v7156 = vld [vmem:[%s18] sm:$0x1]
    %v7158 = vlaneseq
    %v7159 = vshrl.u32 %v7158, 7
    %v7160 = vsub.s32 0, %v7159
    %v7161 = vrot.slane %v7156, %v7160
    %7164 = vrot.lane.b32.xlu0 %v7151, 32
    %v7165 = vpop.permute.xlu0 %7164
    %v7166 = vsel %vm290, %v7165, 0
    %7168 = vmatprep.subr.mxu0 0.0
    %7169 = vmatpush1.msra.mxu0 0.0
    %7170 = vmatprep.subr.mxu0 0.0
    %7171 = vmatpush1.msra.mxu0 0.0
    %7172 = vmatprep.subr.mxu0 0.0
    %7173 = vmatpush1.msra.mxu0 0.0
    %7174 = vmatprep.subr.mxu0 0.0
    %7175 = vmatpush1.msra.mxu0 0.0
    %7176 = vmatprep.subr.mxu0 0.0
    %7177 = vmatpush1.msra.mxu0 0.0
    %7178 = vmatprep.subr.mxu0 0.0
    %7179 = vmatpush1.msra.mxu0 0.0
    %7180 = vmatprep.subr.mxu0 0.0
    %7181 = vmatpush1.msra.mxu0 0.0
    %7182 = vmatprep.subr.mxu0 0.0
    %7183 = vmatpush1.msra.mxu0 0.0
    %7184 = vmatprep.subr.mxu0 0.0
    %7185 = vmatpush1.msra.mxu0 0.0
    %7186 = vmatprep.subr.mxu0 0.0
    %7187 = vmatpush1.msra.mxu0 0.0
    %7188 = vmatprep.subr.mxu0 0.0
    %7189 = vmatpush1.msra.mxu0 0.0
    %7190 = vmatprep.subr.mxu0 0.0
    %7191 = vmatpush1.msra.mxu0 0.0
    %7192 = vmatprep.subr.mxu0 0.0
    %7193 = vmatpush1.msra.mxu0 %v7155
    %7194 = vmatprep.subr.mxu0 0.0
    %7195 = vmatpush1.msra.mxu0 %v7154
    %7196 = vmatprep.subr.mxu0 0.0
    %7197 = vmatpush1.msra.mxu0 %v7153
    %7198 = vmatprep.subr.mxu0 0.0
    %7199 = vmatpush1.msra.mxu0 %v7152
    %7200 = vmatprep.subr.mxu0 0.0
    %7201 = vmatpush2.msra.mxu0 0.0
    %7202 = vmatprep.subr.mxu0 0.0
    %7203 = vmatpush2.msra.mxu0 0.0
    %7204 = vmatprep.subr.mxu0 0.0
    %7205 = vmatpush2.msra.mxu0 0.0
    %7206 = vmatprep.subr.mxu0 0.0
    %7207 = vmatpush2.msra.mxu0 0.0
    %7208 = vmatprep.subr.mxu0 0.0
    %7209 = vmatpush2.msra.mxu0 0.0
    %7210 = vmatprep.subr.mxu0 0.0
    %7211 = vmatpush2.msra.mxu0 0.0
    %7212 = vmatprep.subr.mxu0 0.0
    %7213 = vmatpush2.msra.mxu0 0.0
    %7214 = vmatprep.subr.mxu0 0.0
    %7215 = vmatpush2.msra.mxu0 0.0
    %7216 = vmatprep.subr.mxu0 0.0
    %7217 = vmatpush2.msra.mxu0 0.0
    %7218 = vmatprep.subr.mxu0 0.0
    %7219 = vmatpush2.msra.mxu0 0.0
    %7220 = vmatprep.subr.mxu0 0.0
    %7221 = vmatpush2.msra.mxu0 0.0
    %7222 = vmatprep.subr.mxu0 0.0
    %7223 = vmatpush2.msra.mxu0 0.0
    %7224 = vmatprep.subr.mxu0 0.0
    %7225 = vmatpush2.msra.mxu0 0.0
    %7226 = vmatprep.subr.mxu0 0.0
    %7227 = vmatpush2.msra.mxu0 0.0
    %7228 = vmatprep.subr.mxu0 0.0
    %7229 = vmatpush2.msra.mxu0 0.0
    %7230 = vmatprep.subr.mxu0 0.0
    %7231 = vmatpush2.msra.mxu0 0.0
    %7232 = vmatprep.mubr.f32.mxu0 0.0
    %7233 = vmatmul.mubr.f32.gmra.mxu0 %v7166
    %v7234 = vpop.f32.mrf.mxu0
    %v7235 = vadd.f32 %v7161, %v7234
    %v7236 = vpop.f32.mrf.mxu0
    %7237 = vdwg.mxu0
    %s7238 = scalar_lea.vmem %s19, 56
    %7239 = vst [vmem:[%s7238] sm:$0xff] %v7235
    // Predicated region
    $region110: #{seq2seq_forward.1} parent=1 // pred_check
      _
    $region111: #{seq2seq_forward.1} parent=1 // pred_check_branch
      %7241 = sbr.rel (0) target = $region113
    $region112: #{seq2seq_forward.1} parent=1 // pred_region
      _
    $region113: #{seq2seq_forward.1} parent=1 // pred_fallthru
      _
    // Predicated region
    $region114: #{seq2seq_forward.1} parent=1 // pred_check
      _
    $region115: #{seq2seq_forward.1} parent=1 // pred_check_branch
      %7243 = sbr.rel (0) target = $region117
    $region116: #{seq2seq_forward.1} parent=1 // pred_region
      _
    $region117: #{seq2seq_forward.1} parent=1 // pred_fallthru
      _
    %7244 = vsyncpa [#allocation4], 1

</llo_original>
